<compile_context>
chip_gen: v6e
topology: v6e:2x2x1
jax: 0.10.0
libtpu: 0.0.40
codegen_flags: <defaults>
</compile_context>

<pallas_src>
import functools

import numpy as np
import jax
import jax.numpy as jnp
from jax.experimental import pallas as pl
from jax.experimental.pallas import tpu as pltpu

EPS = 1e-5
INV_SQRT2 = 0.7071067811865476
NEG_INF = -1e9  # cross-window mask value (exp underflows to exactly 0 in f32)


def _pick_strips_per_block(n_strips, target):
    """Largest divisor of n_strips that is <= target and keeps >= 2 grid steps."""
    best = 1
    for t in range(1, n_strips + 1):
        if n_strips % t == 0 and t <= target and (n_strips // t) >= 2:
            best = t
    return best


# --------------------------------------------------------------------------
# The single fused kernel.
# One grid step = `strips_per_block` strips; one strip = window_size image rows
# x full width = (window_size * W) pixels = one row of attention windows.
# --------------------------------------------------------------------------
def _attn_block_kernel(x_ref, w_skip_ref, s_sft_ref, w_conv_ref, c_sft_ref,
                       w_qkv_ref, mask_ref, w_o_ref, o_sft_ref, o_ref,
                       *, heads, dim_head, rows_per_strip, strips_per_block):
    inner = heads * dim_head
    mask = mask_ref[...]                                   # (R, R) packed-window bias

    for s in range(strips_per_block):
        r0 = s * rows_per_strip
        x = x_ref[r0:r0 + rows_per_strip, :]               # (R, Cin)

        # shortcut conv1x1 + BN (scale folded into the weights)
        skip = (jnp.dot(x, w_skip_ref[...], preferred_element_type=jnp.float32)
                + s_sft_ref[...])                           # (R, out_ch)

        # conv1x1 + BN + exact erf-GELU (never leaves registers)
        h = (jnp.dot(x, w_conv_ref[...], preferred_element_type=jnp.float32)
             + c_sft_ref[...])                              # (R, width)
        h = 0.5 * h * (1.0 + jax.lax.erf(h * INV_SQRT2))

        # combined q|k|v projection (softmax scale folded into q columns)
        qkv = jnp.dot(h, w_qkv_ref[...],
                      preferred_element_type=jnp.float32)   # (R, 3*inner)

        head_out = []
        for hd in range(heads):
            q = qkv[:, hd * dim_head:(hd + 1) * dim_head]                       # (R, dh)
            k = qkv[:, inner + hd * dim_head:inner + (hd + 1) * dim_head]
            v = qkv[:, 2 * inner + hd * dim_head:2 * inner + (hd + 1) * dim_head]

            # lane-dense packed-window scores; cross-window entries masked -1e9
            sc = jax.lax.dot_general(q, k, (((1,), (1,)), ((), ())),
                                     preferred_element_type=jnp.float32) + mask  # (R, R)
            m = jnp.max(sc, axis=-1, keepdims=True)
            p = jnp.exp(sc - m)
            denom = jnp.sum(p, axis=-1, keepdims=True)
            p = p * pl.reciprocal(denom, approx=True)        # EUP, not VALU divide
            head_out.append(jnp.dot(p, v, preferred_element_type=jnp.float32))   # (R, dh)

        # fused to_out across heads + bias + final BN + residual, one store
        oh = jnp.concatenate(head_out, axis=-1)              # (R, inner)
        y = (jnp.dot(oh, w_o_ref[...], preferred_element_type=jnp.float32)
             + o_sft_ref[...] + skip)
        o_ref[r0:r0 + rows_per_strip, :] = y
        # TODO(synk): out_ch=64 < 128 lanes -> masked vst; could transpose to
        # (out_ch, R) in-kernel for fully dense stores if store-bound.


def fused_attention_block(x_flat, w_skip, s_sft, w_conv, c_sft, w_qkv, mask,
                          w_o, o_sft, *, heads, dim_head, rows_per_strip,
                          strips_per_block=4):
    N, Cin = x_flat.shape
    out_ch = w_skip.shape[1]
    width = w_conv.shape[1]
    inner = heads * dim_head
    R = rows_per_strip
    n_strips = N // R
    spb = _pick_strips_per_block(n_strips, strips_per_block)
    TM = spb * R

    kern = functools.partial(_attn_block_kernel, heads=heads, dim_head=dim_head,
                             rows_per_strip=R, strips_per_block=spb)
    return pl.pallas_call(
        kern,
        out_shape=jax.ShapeDtypeStruct((N, out_ch), jnp.float32),
        grid=(n_strips // spb,),
        in_specs=[
            pl.BlockSpec((TM, Cin), lambda i: (i, 0)),
            pl.BlockSpec((Cin, out_ch), lambda i: (0, 0)),
            pl.BlockSpec((1, out_ch), lambda i: (0, 0)),
            pl.BlockSpec((Cin, width), lambda i: (0, 0)),
            pl.BlockSpec((1, width), lambda i: (0, 0)),
            pl.BlockSpec((width, 3 * inner), lambda i: (0, 0)),
            pl.BlockSpec((R, R), lambda i: (0, 0)),
            pl.BlockSpec((inner, out_ch), lambda i: (0, 0)),
            pl.BlockSpec((1, out_ch), lambda i: (0, 0)),
        ],
        out_specs=pl.BlockSpec((TM, out_ch), lambda i: (i, 0)),
        compiler_params=pltpu.CompilerParams(
            dimension_semantics=("parallel",),
            vmem_limit_bytes=32 * 1024 * 1024),
    )(x_flat, w_skip, s_sft, w_conv, c_sft, w_qkv, mask, w_o, o_sft)


# --------------------------------------------------------------------------
# Parameters (deterministic init), strip mask, and forward glue.
# --------------------------------------------------------------------------
def rel_index(window_size):
    coords = np.array([[x, y] for x in range(window_size) for y in range(window_size)])
    d = coords[None, :, :] - coords[:, None, :]
    return d + window_size - 1  # (p^2, p^2, 2) ints


def build_strip_mask(pos_embedding, rel_idx, window_size, W):
    """(p*W, p*W) bias: rel-pos bias inside a window, -1e9 across windows."""
    p = window_size
    Sr = p * W
    pos_bias = pos_embedding[rel_idx[:, :, 0], rel_idx[:, :, 1]]      # (p^2, p^2)
    r = np.arange(Sr)
    p1 = r // W
    x = r % W
    n2 = x // p                              # which window along the strip
    iw = p1 * p + (x % p)                    # within-window flat index (p1,p2)
    same = (n2[:, None] == n2[None, :])
    gathered = pos_bias[iw[:, None], iw[None, :]]                     # (Sr, Sr)
    return jnp.where(jnp.asarray(same), gathered, jnp.float32(NEG_INF))


def init_params(key, dim_in, dim_out, heads, dim_head, window_size):
    expansion = 4
    width = dim_in // expansion
    inner = heads * dim_head
    out_ch = dim_out * expansion
    ks = jax.random.split(key, 12)
    p = {}
    # shortcut (dim_in != out_ch here): conv1x1 + BN
    p["sc_w"] = 0.05 * jax.random.normal(ks[0], (out_ch, dim_in), jnp.float32)
    p["sc_g"] = 1.0 + 0.1 * jax.random.normal(ks[1], (out_ch,), jnp.float32)
    p["sc_b"] = 0.1 * jax.random.normal(ks[2], (out_ch,), jnp.float32)
    # conv: conv1x1 + BN (+ GELU)
    p["conv_w"] = 0.05 * jax.random.normal(ks[3], (width, dim_in), jnp.float32)
    p["conv_g"] = 1.0 + 0.1 * jax.random.normal(ks[4], (width,), jnp.float32)
    p["conv_b"] = 0.1 * jax.random.normal(ks[5], (width,), jnp.float32)
    # LocalAttention / Attention2d
    p["pos_embedding"] = 0.02 * jax.random.normal(
        ks[6], (2 * window_size - 1, 2 * window_size - 1), jnp.float32)
    p["wq"] = 0.05 * jax.random.normal(ks[7], (inner, width), jnp.float32)
    p["wkv"] = 0.05 * jax.random.normal(ks[8], (2 * inner, width), jnp.float32)
    p["wo"] = 0.05 * jax.random.normal(ks[9], (out_ch, inner), jnp.float32)
    p["bo"] = 0.05 * jax.random.normal(ks[10], (out_ch,), jnp.float32)
    # final norm
    p["n_g"] = 1.0 + 0.1 * jax.random.normal(ks[11], (out_ch,), jnp.float32)
    p["n_b"] = jnp.zeros((out_ch,), jnp.float32)
    return p


def attention_block_a_forward(x, params, rel_idx, *, heads, dim_head, window_size,
                              strips_per_block=4):
    B, C, H, W = x.shape
    p = window_size
    assert H % p == 0 and W % p == 0
    inv_bn = 1.0 / np.sqrt(1.0 + EPS)
    out_ch = params["sc_w"].shape[0]
    width = params["conv_w"].shape[0]
    inner = heads * dim_head
    N = B * H * W
    rows_per_strip = p * W               # one strip = one row of windows
    assert rows_per_strip % 8 == 0       # sublane alignment of row tiles
    scale = float(dim_head) ** -0.5

    # channels-last pixel rows in natural (b, y, x) order
    x_flat = x.transpose(0, 2, 3, 1).reshape(N, C)

    # Fold BN / bias / softmax-scale into the weights (done once, tiny).
    w_skip = params["sc_w"].T * (params["sc_g"] * inv_bn)[None, :]       # (C, out_ch)
    s_sft = params["sc_b"].reshape(1, out_ch)
    w_conv = params["conv_w"].T * (params["conv_g"] * inv_bn)[None, :]   # (C, width)
    c_sft = params["conv_b"].reshape(1, width)
    w_qkv = jnp.concatenate([params["wq"] * scale, params["wkv"]],
                            axis=0).T                                    # (width, 3*inner)
    o_scale = params["n_g"] * inv_bn
    w_o = params["wo"].T * o_scale[None, :]                              # (inner, out_ch)
    o_sft = (params["bo"] * o_scale + params["n_b"]).reshape(1, out_ch)

    # precomputed packed-window relative-position mask (128x128 here)
    mask = build_strip_mask(params["pos_embedding"], rel_idx, p, W)

    out_flat = fused_attention_block(
        x_flat, w_skip, s_sft, w_conv, c_sft, w_qkv, mask, w_o, o_sft,
        heads=heads, dim_head=dim_head, rows_per_strip=rows_per_strip,
        strips_per_block=strips_per_block)                               # (N, out_ch)

    # rows already come out in pixel order; only NHWC->NCHW remains
    return out_flat.reshape(B, H, W, out_ch).transpose(0, 3, 1, 2)


# --------------------------------------------------------------------------
# Pure-JAX reference for verification.
# --------------------------------------------------------------------------
def reference_forward(x, params, *, heads, dim_head, window_size, rel_idx):
    inv_bn = 1.0 / np.sqrt(1.0 + EPS)

    def bn(z, g, b):
        return z * (g * inv_bn)[None, :, None, None] + b[None, :, None, None]

    def conv1x1(z, w, bias=None):
        y = jnp.einsum("bchw,oc->bohw", z, w)
        if bias is not None:
            y = y + bias[None, :, None, None]
        return y

    def gelu(z):
        return 0.5 * z * (1.0 + jax.lax.erf(z * INV_SQRT2))

    skip = bn(conv1x1(x, params["sc_w"]), params["sc_g"], params["sc_b"])
    y = gelu(bn(conv1x1(x, params["conv_w"]), params["conv_g"], params["conv_b"]))

    b, c, h, w = y.shape
    p_ = window_size
    n1, n2 = h // p_, w // p_
    mask = params["pos_embedding"][rel_idx[:, :, 0], rel_idx[:, :, 1]]
    xw = (y.reshape(b, c, n1, p_, n2, p_).transpose(0, 2, 4, 1, 3, 5)
          .reshape(b * n1 * n2, c, p_, p_))
    q = conv1x1(xw, params["wq"])
    kv = conv1x1(xw, params["wkv"])
    k_, v_ = jnp.split(kv, 2, axis=1)

    def rearr(t):
        bb = t.shape[0]
        return t.reshape(bb, heads, dim_head, p_ * p_).transpose(0, 1, 3, 2)

    q, k_, v_ = rearr(q), rearr(k_), rearr(v_)
    dots = jnp.einsum("bhid,bhjd->bhij", q, k_) * (float(dim_head) ** -0.5) + mask
    attn = jax.nn.softmax(dots, axis=-1)
    out = jnp.einsum("bhij,bhjd->bhid", attn, v_)
    out = out.transpose(0, 1, 3, 2).reshape(b * n1 * n2, heads * dim_head, p_, p_)
    out = conv1x1(out, params["wo"], params["bo"])
    out = (out.reshape(b, n1, n2, -1, p_, p_).transpose(0, 3, 1, 4, 2, 5)
           .reshape(b, -1, h, w))
    out = bn(out, params["n_g"], params["n_b"])
    return out + skip


# --------------------------------------------------------------------------
if __name__ == "__main__":
    # AttentionBlockA config:
    #   dim_in=16, dim_out=None -> 16, expansion=4 -> out_ch=64, width=4,
    #   heads=2, dim_head=8, window_size=4, k=1, stride=1.
    B, dim_in, H, W = 2, 16, 32, 32
    dim_out = dim_in          # module default (dim_out=None)
    heads, dim_head = 2, 8
    window_size = 4

    key = jax.random.PRNGKey(0)
    kx, kp = jax.random.split(key)
    x = jax.random.normal(kx, (B, dim_in, H, W), jnp.float32)
    params = init_params(kp, dim_in, dim_out, heads, dim_head, window_size)
    rel_idx = jnp.asarray(rel_index(window_size), dtype=jnp.int32)

    fwd = jax.jit(functools.partial(
        attention_block_a_forward, heads=heads, dim_head=dim_head,
        window_size=window_size))
    out = jax.block_until_ready(fwd(x, params, rel_idx))

    ref = jax.block_until_ready(reference_forward(
        x, params, heads=heads, dim_head=dim_head,
        window_size=window_size, rel_idx=rel_idx))

    assert out.shape == (B, dim_out * 4, H, W), out.shape
    np.testing.assert_allclose(np.asarray(out), np.asarray(ref), rtol=2e-3, atol=2e-3)

    # TODO(synk): BatchNorm is eval-mode (running_mean=0, running_var=1); training-mode
    # batch statistics are not reproduced. Dropout/DropPath are identities (p=0, sd=0).
    print("KERNEL_OK")
</pallas_src>

<mosaic_0001>
module attributes {stable_mosaic.version = 11 : i64} {
  func.func @_attn_block_kernel(%arg0: i32, %arg1: memref<512x16xf32, #tpu.memory_space<vmem>>, %arg2: memref<16x64xf32, #tpu.memory_space<vmem>>, %arg3: memref<1x64xf32, #tpu.memory_space<vmem>>, %arg4: memref<16x4xf32, #tpu.memory_space<vmem>>, %arg5: memref<1x4xf32, #tpu.memory_space<vmem>>, %arg6: memref<4x48xf32, #tpu.memory_space<vmem>>, %arg7: memref<128x128xf32, #tpu.memory_space<vmem>>, %arg8: memref<16x64xf32, #tpu.memory_space<vmem>>, %arg9: memref<1x64xf32, #tpu.memory_space<vmem>>, %arg10: memref<512x64xf32, #tpu.memory_space<vmem>>) attributes {dimension_semantics = [#tpu.dimension_semantics<parallel>], iteration_bounds = array<i64: 4>, scalar_prefetch = 0 : i64, scratch_operands = 0 : i64, tpu.core_type = #tpu.core_type<tc>, window_params = [{transform_indices = @transform_0, window_bounds = array<i64: 512, 16>}, {pipeline_mode = #tpu.pipeline_mode<synchronous>, transform_indices = @transform_1, window_bounds = array<i64: 16, 64>}, {pipeline_mode = #tpu.pipeline_mode<synchronous>, transform_indices = @transform_2, window_bounds = array<i64: 1, 64>}, {pipeline_mode = #tpu.pipeline_mode<synchronous>, transform_indices = @transform_3, window_bounds = array<i64: 16, 4>}, {pipeline_mode = #tpu.pipeline_mode<synchronous>, transform_indices = @transform_4, window_bounds = array<i64: 1, 4>}, {pipeline_mode = #tpu.pipeline_mode<synchronous>, transform_indices = @transform_5, window_bounds = array<i64: 4, 48>}, {pipeline_mode = #tpu.pipeline_mode<synchronous>, transform_indices = @transform_6, window_bounds = array<i64: 128, 128>}, {pipeline_mode = #tpu.pipeline_mode<synchronous>, transform_indices = @transform_7, window_bounds = array<i64: 16, 64>}, {pipeline_mode = #tpu.pipeline_mode<synchronous>, transform_indices = @transform_8, window_bounds = array<i64: 1, 64>}, {transform_indices = @transform_9, window_bounds = array<i64: 512, 64>}]} {
    %c0 = arith.constant 0 : index
    %c0_0 = arith.constant 0 : index
    %0 = vector.load %arg7[%c0, %c0_0] : memref<128x128xf32, #tpu.memory_space<vmem>>, vector<128x128xf32>
    %c0_1 = arith.constant 0 : index
    %c0_2 = arith.constant 0 : index
    %1 = vector.load %arg1[%c0_1, %c0_2] : memref<512x16xf32, #tpu.memory_space<vmem>>, vector<128x16xf32>
    %c0_3 = arith.constant 0 : index
    %c0_4 = arith.constant 0 : index
    %2 = vector.load %arg2[%c0_3, %c0_4] : memref<16x64xf32, #tpu.memory_space<vmem>>, vector<16x64xf32>
    %cst = arith.constant dense<0.000000e+00> : vector<128x64xf32>
    %3 = tpu.matmul %1, %2, %cst {dimension_numbers = #tpu.dot_dimension_numbers<[1], [0], [0], [1], [0, 0, 1, 1], [], []>} : vector<128x16xf32>, vector<16x64xf32>, vector<128x64xf32> -> vector<128x64xf32>
    %c0_5 = arith.constant 0 : index
    %c0_6 = arith.constant 0 : index
    %4 = vector.load %arg3[%c0_5, %c0_6] : memref<1x64xf32, #tpu.memory_space<vmem>>, vector<1x64xf32>
    %5 = vector.broadcast %4 : vector<1x64xf32> to vector<128x64xf32>
    %6 = arith.addf %3, %5 : vector<128x64xf32>
    %c0_7 = arith.constant 0 : index
    %c0_8 = arith.constant 0 : index
    %7 = vector.load %arg4[%c0_7, %c0_8] : memref<16x4xf32, #tpu.memory_space<vmem>>, vector<16x4xf32>
    %cst_9 = arith.constant dense<0.000000e+00> : vector<128x4xf32>
    %8 = tpu.matmul %1, %7, %cst_9 {dimension_numbers = #tpu.dot_dimension_numbers<[1], [0], [0], [1], [0, 0, 1, 1], [], []>} : vector<128x16xf32>, vector<16x4xf32>, vector<128x4xf32> -> vector<128x4xf32>
    %c0_10 = arith.constant 0 : index
    %c0_11 = arith.constant 0 : index
    %9 = vector.load %arg5[%c0_10, %c0_11] : memref<1x4xf32, #tpu.memory_space<vmem>>, vector<1x4xf32>
    %10 = vector.broadcast %9 : vector<1x4xf32> to vector<128x4xf32>
    %11 = arith.addf %8, %10 : vector<128x4xf32>
    %cst_12 = arith.constant 5.000000e-01 : f32
    %12 = vector.broadcast %cst_12 : f32 to vector<128x4xf32>
    %13 = arith.mulf %12, %11 : vector<128x4xf32>
    %cst_13 = arith.constant 0.707106769 : f32
    %14 = vector.broadcast %cst_13 : f32 to vector<128x4xf32>
    %15 = arith.mulf %11, %14 : vector<128x4xf32>
    %16 = math.erf %15 : vector<128x4xf32>
    %cst_14 = arith.constant 1.000000e+00 : f32
    %17 = vector.broadcast %cst_14 : f32 to vector<128x4xf32>
    %18 = arith.addf %17, %16 : vector<128x4xf32>
    %19 = arith.mulf %13, %18 : vector<128x4xf32>
    %c0_15 = arith.constant 0 : index
    %c0_16 = arith.constant 0 : index
    %20 = vector.load %arg6[%c0_15, %c0_16] : memref<4x48xf32, #tpu.memory_space<vmem>>, vector<4x48xf32>
    %cst_17 = arith.constant dense<0.000000e+00> : vector<128x48xf32>
    %21 = tpu.matmul %19, %20, %cst_17 {dimension_numbers = #tpu.dot_dimension_numbers<[1], [0], [0], [1], [0, 0, 1, 1], [], []>} : vector<128x4xf32>, vector<4x48xf32>, vector<128x48xf32> -> vector<128x48xf32>
    %22 = vector.extract_strided_slice %21 {offsets = [0, 0], sizes = [128, 8], strides = [1, 1]} : vector<128x48xf32> to vector<128x8xf32>
    %23 = vector.extract_strided_slice %21 {offsets = [0, 16], sizes = [128, 8], strides = [1, 1]} : vector<128x48xf32> to vector<128x8xf32>
    %24 = vector.extract_strided_slice %21 {offsets = [0, 32], sizes = [128, 8], strides = [1, 1]} : vector<128x48xf32> to vector<128x8xf32>
    %cst_18 = arith.constant dense<0.000000e+00> : vector<128x128xf32>
    %25 = tpu.matmul %22, %23, %cst_18 {dimension_numbers = #tpu.dot_dimension_numbers<[1], [1], [0], [0], [0, 0, 1, 0], [], []>} : vector<128x8xf32>, vector<128x8xf32>, vector<128x128xf32> -> vector<128x128xf32>
    %26 = arith.addf %25, %0 : vector<128x128xf32>
    %cst_19 = arith.constant dense<0xFF800000> : vector<128xf32>
    %27 = vector.multi_reduction <maximumf>, %26, %cst_19 [1] : vector<128x128xf32> to vector<128xf32>
    %28 = vector.shape_cast %27 : vector<128xf32> to vector<128x1xf32>
    %29 = vector.broadcast %28 : vector<128x1xf32> to vector<128x128xf32>
    %30 = arith.subf %26, %29 : vector<128x128xf32>
    %31 = math.exp %30 : vector<128x128xf32>
    %cst_20 = arith.constant dense<0.000000e+00> : vector<128xf32>
    %32 = vector.multi_reduction <add>, %31, %cst_20 [1] : vector<128x128xf32> to vector<128xf32>
    %33 = vector.shape_cast %32 : vector<128xf32> to vector<128x1xf32>
    %34 = tpu.reciprocal %33 {approx = true} : vector<128x1xf32> -> vector<128x1xf32>
    %35 = vector.broadcast %34 : vector<128x1xf32> to vector<128x128xf32>
    %36 = arith.mulf %31, %35 : vector<128x128xf32>
    %cst_21 = arith.constant dense<0.000000e+00> : vector<128x8xf32>
    %37 = tpu.matmul %36, %24, %cst_21 {dimension_numbers = #tpu.dot_dimension_numbers<[1], [0], [0], [1], [0, 0, 1, 1], [], []>} : vector<128x128xf32>, vector<128x8xf32>, vector<128x8xf32> -> vector<128x8xf32>
    %38 = vector.extract_strided_slice %21 {offsets = [0, 8], sizes = [128, 8], strides = [1, 1]} : vector<128x48xf32> to vector<128x8xf32>
    %39 = vector.extract_strided_slice %21 {offsets = [0, 24], sizes = [128, 8], strides = [1, 1]} : vector<128x48xf32> to vector<128x8xf32>
    %40 = vector.extract_strided_slice %21 {offsets = [0, 40], sizes = [128, 8], strides = [1, 1]} : vector<128x48xf32> to vector<128x8xf32>
    %cst_22 = arith.constant dense<0.000000e+00> : vector<128x128xf32>
    %41 = tpu.matmul %38, %39, %cst_22 {dimension_numbers = #tpu.dot_dimension_numbers<[1], [1], [0], [0], [0, 0, 1, 0], [], []>} : vector<128x8xf32>, vector<128x8xf32>, vector<128x128xf32> -> vector<128x128xf32>
    %42 = arith.addf %41, %0 : vector<128x128xf32>
    %cst_23 = arith.constant dense<0xFF800000> : vector<128xf32>
    %43 = vector.multi_reduction <maximumf>, %42, %cst_23 [1] : vector<128x128xf32> to vector<128xf32>
    %44 = vector.shape_cast %43 : vector<128xf32> to vector<128x1xf32>
    %45 = vector.broadcast %44 : vector<128x1xf32> to vector<128x128xf32>
    %46 = arith.subf %42, %45 : vector<128x128xf32>
    %47 = math.exp %46 : vector<128x128xf32>
    %cst_24 = arith.constant dense<0.000000e+00> : vector<128xf32>
    %48 = vector.multi_reduction <add>, %47, %cst_24 [1] : vector<128x128xf32> to vector<128xf32>
    %49 = vector.shape_cast %48 : vector<128xf32> to vector<128x1xf32>
    %50 = tpu.reciprocal %49 {approx = true} : vector<128x1xf32> -> vector<128x1xf32>
    %51 = vector.broadcast %50 : vector<128x1xf32> to vector<128x128xf32>
    %52 = arith.mulf %47, %51 : vector<128x128xf32>
    %cst_25 = arith.constant dense<0.000000e+00> : vector<128x8xf32>
    %53 = tpu.matmul %52, %40, %cst_25 {dimension_numbers = #tpu.dot_dimension_numbers<[1], [0], [0], [1], [0, 0, 1, 1], [], []>} : vector<128x128xf32>, vector<128x8xf32>, vector<128x8xf32> -> vector<128x8xf32>
    %54 = tpu.concatenate %37, %53 in 1 : vector<128x8xf32>, vector<128x8xf32> -> vector<128x16xf32>
    %c0_26 = arith.constant 0 : index
    %c0_27 = arith.constant 0 : index
    %55 = vector.load %arg8[%c0_26, %c0_27] : memref<16x64xf32, #tpu.memory_space<vmem>>, vector<16x64xf32>
    %cst_28 = arith.constant dense<0.000000e+00> : vector<128x64xf32>
    %56 = tpu.matmul %54, %55, %cst_28 {dimension_numbers = #tpu.dot_dimension_numbers<[1], [0], [0], [1], [0, 0, 1, 1], [], []>} : vector<128x16xf32>, vector<16x64xf32>, vector<128x64xf32> -> vector<128x64xf32>
    %c0_29 = arith.constant 0 : index
    %c0_30 = arith.constant 0 : index
    %57 = vector.load %arg9[%c0_29, %c0_30] : memref<1x64xf32, #tpu.memory_space<vmem>>, vector<1x64xf32>
    %58 = vector.broadcast %57 : vector<1x64xf32> to vector<128x64xf32>
    %59 = arith.addf %56, %58 : vector<128x64xf32>
    %60 = arith.addf %59, %6 : vector<128x64xf32>
    %c0_31 = arith.constant 0 : index
    %c0_32 = arith.constant 0 : index
    %61 = vector.load %arg10[%c0_31, %c0_32] : memref<512x64xf32, #tpu.memory_space<vmem>>, vector<128x64xf32>
    tpu.vector_store %arg10[%c0_31, %c0_32], %60 {strides = array<i32>} : memref<512x64xf32, #tpu.memory_space<vmem>>, vector<128x64xf32>,
    %c128 = arith.constant 128 : index
    %c0_33 = arith.constant 0 : index
    %62 = vector.load %arg1[%c128, %c0_33] : memref<512x16xf32, #tpu.memory_space<vmem>>, vector<128x16xf32>
    %c0_34 = arith.constant 0 : index
    %c0_35 = arith.constant 0 : index
    %63 = vector.load %arg2[%c0_34, %c0_35] : memref<16x64xf32, #tpu.memory_space<vmem>>, vector<16x64xf32>
    %cst_36 = arith.constant dense<0.000000e+00> : vector<128x64xf32>
    %64 = tpu.matmul %62, %63, %cst_36 {dimension_numbers = #tpu.dot_dimension_numbers<[1], [0], [0], [1], [0, 0, 1, 1], [], []>} : vector<128x16xf32>, vector<16x64xf32>, vector<128x64xf32> -> vector<128x64xf32>
    %c0_37 = arith.constant 0 : index
    %c0_38 = arith.constant 0 : index
    %65 = vector.load %arg3[%c0_37, %c0_38] : memref<1x64xf32, #tpu.memory_space<vmem>>, vector<1x64xf32>
    %66 = vector.broadcast %65 : vector<1x64xf32> to vector<128x64xf32>
    %67 = arith.addf %64, %66 : vector<128x64xf32>
    %c0_39 = arith.constant 0 : index
    %c0_40 = arith.constant 0 : index
    %68 = vector.load %arg4[%c0_39, %c0_40] : memref<16x4xf32, #tpu.memory_space<vmem>>, vector<16x4xf32>
    %cst_41 = arith.constant dense<0.000000e+00> : vector<128x4xf32>
    %69 = tpu.matmul %62, %68, %cst_41 {dimension_numbers = #tpu.dot_dimension_numbers<[1], [0], [0], [1], [0, 0, 1, 1], [], []>} : vector<128x16xf32>, vector<16x4xf32>, vector<128x4xf32> -> vector<128x4xf32>
    %c0_42 = arith.constant 0 : index
    %c0_43 = arith.constant 0 : index
    %70 = vector.load %arg5[%c0_42, %c0_43] : memref<1x4xf32, #tpu.memory_space<vmem>>, vector<1x4xf32>
    %71 = vector.broadcast %70 : vector<1x4xf32> to vector<128x4xf32>
    %72 = arith.addf %69, %71 : vector<128x4xf32>
    %cst_44 = arith.constant 5.000000e-01 : f32
    %73 = vector.broadcast %cst_44 : f32 to vector<128x4xf32>
    %74 = arith.mulf %73, %72 : vector<128x4xf32>
    %cst_45 = arith.constant 0.707106769 : f32
    %75 = vector.broadcast %cst_45 : f32 to vector<128x4xf32>
    %76 = arith.mulf %72, %75 : vector<128x4xf32>
    %77 = math.erf %76 : vector<128x4xf32>
    %cst_46 = arith.constant 1.000000e+00 : f32
    %78 = vector.broadcast %cst_46 : f32 to vector<128x4xf32>
    %79 = arith.addf %78, %77 : vector<128x4xf32>
    %80 = arith.mulf %74, %79 : vector<128x4xf32>
    %c0_47 = arith.constant 0 : index
    %c0_48 = arith.constant 0 : index
    %81 = vector.load %arg6[%c0_47, %c0_48] : memref<4x48xf32, #tpu.memory_space<vmem>>, vector<4x48xf32>
    %cst_49 = arith.constant dense<0.000000e+00> : vector<128x48xf32>
    %82 = tpu.matmul %80, %81, %cst_49 {dimension_numbers = #tpu.dot_dimension_numbers<[1], [0], [0], [1], [0, 0, 1, 1], [], []>} : vector<128x4xf32>, vector<4x48xf32>, vector<128x48xf32> -> vector<128x48xf32>
    %83 = vector.extract_strided_slice %82 {offsets = [0, 0], sizes = [128, 8], strides = [1, 1]} : vector<128x48xf32> to vector<128x8xf32>
    %84 = vector.extract_strided_slice %82 {offsets = [0, 16], sizes = [128, 8], strides = [1, 1]} : vector<128x48xf32> to vector<128x8xf32>
    %85 = vector.extract_strided_slice %82 {offsets = [0, 32], sizes = [128, 8], strides = [1, 1]} : vector<128x48xf32> to vector<128x8xf32>
    %cst_50 = arith.constant dense<0.000000e+00> : vector<128x128xf32>
    %86 = tpu.matmul %83, %84, %cst_50 {dimension_numbers = #tpu.dot_dimension_numbers<[1], [1], [0], [0], [0, 0, 1, 0], [], []>} : vector<128x8xf32>, vector<128x8xf32>, vector<128x128xf32> -> vector<128x128xf32>
    %87 = arith.addf %86, %0 : vector<128x128xf32>
    %cst_51 = arith.constant dense<0xFF800000> : vector<128xf32>
    %88 = vector.multi_reduction <maximumf>, %87, %cst_51 [1] : vector<128x128xf32> to vector<128xf32>
    %89 = vector.shape_cast %88 : vector<128xf32> to vector<128x1xf32>
    %90 = vector.broadcast %89 : vector<128x1xf32> to vector<128x128xf32>
    %91 = arith.subf %87, %90 : vector<128x128xf32>
    %92 = math.exp %91 : vector<128x128xf32>
    %cst_52 = arith.constant dense<0.000000e+00> : vector<128xf32>
    %93 = vector.multi_reduction <add>, %92, %cst_52 [1] : vector<128x128xf32> to vector<128xf32>
    %94 = vector.shape_cast %93 : vector<128xf32> to vector<128x1xf32>
    %95 = tpu.reciprocal %94 {approx = true} : vector<128x1xf32> -> vector<128x1xf32>
    %96 = vector.broadcast %95 : vector<128x1xf32> to vector<128x128xf32>
    %97 = arith.mulf %92, %96 : vector<128x128xf32>
    %cst_53 = arith.constant dense<0.000000e+00> : vector<128x8xf32>
    %98 = tpu.matmul %97, %85, %cst_53 {dimension_numbers = #tpu.dot_dimension_numbers<[1], [0], [0], [1], [0, 0, 1, 1], [], []>} : vector<128x128xf32>, vector<128x8xf32>, vector<128x8xf32> -> vector<128x8xf32>
    %99 = vector.extract_strided_slice %82 {offsets = [0, 8], sizes = [128, 8], strides = [1, 1]} : vector<128x48xf32> to vector<128x8xf32>
    %100 = vector.extract_strided_slice %82 {offsets = [0, 24], sizes = [128, 8], strides = [1, 1]} : vector<128x48xf32> to vector<128x8xf32>
    %101 = vector.extract_strided_slice %82 {offsets = [0, 40], sizes = [128, 8], strides = [1, 1]} : vector<128x48xf32> to vector<128x8xf32>
    %cst_54 = arith.constant dense<0.000000e+00> : vector<128x128xf32>
    %102 = tpu.matmul %99, %100, %cst_54 {dimension_numbers = #tpu.dot_dimension_numbers<[1], [1], [0], [0], [0, 0, 1, 0], [], []>} : vector<128x8xf32>, vector<128x8xf32>, vector<128x128xf32> -> vector<128x128xf32>
    %103 = arith.addf %102, %0 : vector<128x128xf32>
    %cst_55 = arith.constant dense<0xFF800000> : vector<128xf32>
    %104 = vector.multi_reduction <maximumf>, %103, %cst_55 [1] : vector<128x128xf32> to vector<128xf32>
    %105 = vector.shape_cast %104 : vector<128xf32> to vector<128x1xf32>
    %106 = vector.broadcast %105 : vector<128x1xf32> to vector<128x128xf32>
    %107 = arith.subf %103, %106 : vector<128x128xf32>
    %108 = math.exp %107 : vector<128x128xf32>
    %cst_56 = arith.constant dense<0.000000e+00> : vector<128xf32>
    %109 = vector.multi_reduction <add>, %108, %cst_56 [1] : vector<128x128xf32> to vector<128xf32>
    %110 = vector.shape_cast %109 : vector<128xf32> to vector<128x1xf32>
    %111 = tpu.reciprocal %110 {approx = true} : vector<128x1xf32> -> vector<128x1xf32>
    %112 = vector.broadcast %111 : vector<128x1xf32> to vector<128x128xf32>
    %113 = arith.mulf %108, %112 : vector<128x128xf32>
    %cst_57 = arith.constant dense<0.000000e+00> : vector<128x8xf32>
    %114 = tpu.matmul %113, %101, %cst_57 {dimension_numbers = #tpu.dot_dimension_numbers<[1], [0], [0], [1], [0, 0, 1, 1], [], []>} : vector<128x128xf32>, vector<128x8xf32>, vector<128x8xf32> -> vector<128x8xf32>
    %115 = tpu.concatenate %98, %114 in 1 : vector<128x8xf32>, vector<128x8xf32> -> vector<128x16xf32>
    %c0_58 = arith.constant 0 : index
    %c0_59 = arith.constant 0 : index
    %116 = vector.load %arg8[%c0_58, %c0_59] : memref<16x64xf32, #tpu.memory_space<vmem>>, vector<16x64xf32>
    %cst_60 = arith.constant dense<0.000000e+00> : vector<128x64xf32>
    %117 = tpu.matmul %115, %116, %cst_60 {dimension_numbers = #tpu.dot_dimension_numbers<[1], [0], [0], [1], [0, 0, 1, 1], [], []>} : vector<128x16xf32>, vector<16x64xf32>, vector<128x64xf32> -> vector<128x64xf32>
    %c0_61 = arith.constant 0 : index
    %c0_62 = arith.constant 0 : index
    %118 = vector.load %arg9[%c0_61, %c0_62] : memref<1x64xf32, #tpu.memory_space<vmem>>, vector<1x64xf32>
    %119 = vector.broadcast %118 : vector<1x64xf32> to vector<128x64xf32>
    %120 = arith.addf %117, %119 : vector<128x64xf32>
    %121 = arith.addf %120, %67 : vector<128x64xf32>
    %c128_63 = arith.constant 128 : index
    %c0_64 = arith.constant 0 : index
    %122 = vector.load %arg10[%c128_63, %c0_64] : memref<512x64xf32, #tpu.memory_space<vmem>>, vector<128x64xf32>
    tpu.vector_store %arg10[%c128_63, %c0_64], %121 {strides = array<i32>} : memref<512x64xf32, #tpu.memory_space<vmem>>, vector<128x64xf32>,
    %c256 = arith.constant 256 : index
    %c0_65 = arith.constant 0 : index
    %123 = vector.load %arg1[%c256, %c0_65] : memref<512x16xf32, #tpu.memory_space<vmem>>, vector<128x16xf32>
    %c0_66 = arith.constant 0 : index
    %c0_67 = arith.constant 0 : index
    %124 = vector.load %arg2[%c0_66, %c0_67] : memref<16x64xf32, #tpu.memory_space<vmem>>, vector<16x64xf32>
    %cst_68 = arith.constant dense<0.000000e+00> : vector<128x64xf32>
    %125 = tpu.matmul %123, %124, %cst_68 {dimension_numbers = #tpu.dot_dimension_numbers<[1], [0], [0], [1], [0, 0, 1, 1], [], []>} : vector<128x16xf32>, vector<16x64xf32>, vector<128x64xf32> -> vector<128x64xf32>
    %c0_69 = arith.constant 0 : index
    %c0_70 = arith.constant 0 : index
    %126 = vector.load %arg3[%c0_69, %c0_70] : memref<1x64xf32, #tpu.memory_space<vmem>>, vector<1x64xf32>
    %127 = vector.broadcast %126 : vector<1x64xf32> to vector<128x64xf32>
    %128 = arith.addf %125, %127 : vector<128x64xf32>
    %c0_71 = arith.constant 0 : index
    %c0_72 = arith.constant 0 : index
    %129 = vector.load %arg4[%c0_71, %c0_72] : memref<16x4xf32, #tpu.memory_space<vmem>>, vector<16x4xf32>
    %cst_73 = arith.constant dense<0.000000e+00> : vector<128x4xf32>
    %130 = tpu.matmul %123, %129, %cst_73 {dimension_numbers = #tpu.dot_dimension_numbers<[1], [0], [0], [1], [0, 0, 1, 1], [], []>} : vector<128x16xf32>, vector<16x4xf32>, vector<128x4xf32> -> vector<128x4xf32>
    %c0_74 = arith.constant 0 : index
    %c0_75 = arith.constant 0 : index
    %131 = vector.load %arg5[%c0_74, %c0_75] : memref<1x4xf32, #tpu.memory_space<vmem>>, vector<1x4xf32>
    %132 = vector.broadcast %131 : vector<1x4xf32> to vector<128x4xf32>
    %133 = arith.addf %130, %132 : vector<128x4xf32>
    %cst_76 = arith.constant 5.000000e-01 : f32
    %134 = vector.broadcast %cst_76 : f32 to vector<128x4xf32>
    %135 = arith.mulf %134, %133 : vector<128x4xf32>
    %cst_77 = arith.constant 0.707106769 : f32
    %136 = vector.broadcast %cst_77 : f32 to vector<128x4xf32>
    %137 = arith.mulf %133, %136 : vector<128x4xf32>
    %138 = math.erf %137 : vector<128x4xf32>
    %cst_78 = arith.constant 1.000000e+00 : f32
    %139 = vector.broadcast %cst_78 : f32 to vector<128x4xf32>
    %140 = arith.addf %139, %138 : vector<128x4xf32>
    %141 = arith.mulf %135, %140 : vector<128x4xf32>
    %c0_79 = arith.constant 0 : index
    %c0_80 = arith.constant 0 : index
    %142 = vector.load %arg6[%c0_79, %c0_80] : memref<4x48xf32, #tpu.memory_space<vmem>>, vector<4x48xf32>
    %cst_81 = arith.constant dense<0.000000e+00> : vector<128x48xf32>
    %143 = tpu.matmul %141, %142, %cst_81 {dimension_numbers = #tpu.dot_dimension_numbers<[1], [0], [0], [1], [0, 0, 1, 1], [], []>} : vector<128x4xf32>, vector<4x48xf32>, vector<128x48xf32> -> vector<128x48xf32>
    %144 = vector.extract_strided_slice %143 {offsets = [0, 0], sizes = [128, 8], strides = [1, 1]} : vector<128x48xf32> to vector<128x8xf32>
    %145 = vector.extract_strided_slice %143 {offsets = [0, 16], sizes = [128, 8], strides = [1, 1]} : vector<128x48xf32> to vector<128x8xf32>
    %146 = vector.extract_strided_slice %143 {offsets = [0, 32], sizes = [128, 8], strides = [1, 1]} : vector<128x48xf32> to vector<128x8xf32>
    %cst_82 = arith.constant dense<0.000000e+00> : vector<128x128xf32>
    %147 = tpu.matmul %144, %145, %cst_82 {dimension_numbers = #tpu.dot_dimension_numbers<[1], [1], [0], [0], [0, 0, 1, 0], [], []>} : vector<128x8xf32>, vector<128x8xf32>, vector<128x128xf32> -> vector<128x128xf32>
    %148 = arith.addf %147, %0 : vector<128x128xf32>
    %cst_83 = arith.constant dense<0xFF800000> : vector<128xf32>
    %149 = vector.multi_reduction <maximumf>, %148, %cst_83 [1] : vector<128x128xf32> to vector<128xf32>
    %150 = vector.shape_cast %149 : vector<128xf32> to vector<128x1xf32>
    %151 = vector.broadcast %150 : vector<128x1xf32> to vector<128x128xf32>
    %152 = arith.subf %148, %151 : vector<128x128xf32>
    %153 = math.exp %152 : vector<128x128xf32>
    %cst_84 = arith.constant dense<0.000000e+00> : vector<128xf32>
    %154 = vector.multi_reduction <add>, %153, %cst_84 [1] : vector<128x128xf32> to vector<128xf32>
    %155 = vector.shape_cast %154 : vector<128xf32> to vector<128x1xf32>
    %156 = tpu.reciprocal %155 {approx = true} : vector<128x1xf32> -> vector<128x1xf32>
    %157 = vector.broadcast %156 : vector<128x1xf32> to vector<128x128xf32>
    %158 = arith.mulf %153, %157 : vector<128x128xf32>
    %cst_85 = arith.constant dense<0.000000e+00> : vector<128x8xf32>
    %159 = tpu.matmul %158, %146, %cst_85 {dimension_numbers = #tpu.dot_dimension_numbers<[1], [0], [0], [1], [0, 0, 1, 1], [], []>} : vector<128x128xf32>, vector<128x8xf32>, vector<128x8xf32> -> vector<128x8xf32>
    %160 = vector.extract_strided_slice %143 {offsets = [0, 8], sizes = [128, 8], strides = [1, 1]} : vector<128x48xf32> to vector<128x8xf32>
    %161 = vector.extract_strided_slice %143 {offsets = [0, 24], sizes = [128, 8], strides = [1, 1]} : vector<128x48xf32> to vector<128x8xf32>
    %162 = vector.extract_strided_slice %143 {offsets = [0, 40], sizes = [128, 8], strides = [1, 1]} : vector<128x48xf32> to vector<128x8xf32>
    %cst_86 = arith.constant dense<0.000000e+00> : vector<128x128xf32>
    %163 = tpu.matmul %160, %161, %cst_86 {dimension_numbers = #tpu.dot_dimension_numbers<[1], [1], [0], [0], [0, 0, 1, 0], [], []>} : vector<128x8xf32>, vector<128x8xf32>, vector<128x128xf32> -> vector<128x128xf32>
    %164 = arith.addf %163, %0 : vector<128x128xf32>
    %cst_87 = arith.constant dense<0xFF800000> : vector<128xf32>
    %165 = vector.multi_reduction <maximumf>, %164, %cst_87 [1] : vector<128x128xf32> to vector<128xf32>
    %166 = vector.shape_cast %165 : vector<128xf32> to vector<128x1xf32>
    %167 = vector.broadcast %166 : vector<128x1xf32> to vector<128x128xf32>
    %168 = arith.subf %164, %167 : vector<128x128xf32>
    %169 = math.exp %168 : vector<128x128xf32>
    %cst_88 = arith.constant dense<0.000000e+00> : vector<128xf32>
    %170 = vector.multi_reduction <add>, %169, %cst_88 [1] : vector<128x128xf32> to vector<128xf32>
    %171 = vector.shape_cast %170 : vector<128xf32> to vector<128x1xf32>
    %172 = tpu.reciprocal %171 {approx = true} : vector<128x1xf32> -> vector<128x1xf32>
    %173 = vector.broadcast %172 : vector<128x1xf32> to vector<128x128xf32>
    %174 = arith.mulf %169, %173 : vector<128x128xf32>
    %cst_89 = arith.constant dense<0.000000e+00> : vector<128x8xf32>
    %175 = tpu.matmul %174, %162, %cst_89 {dimension_numbers = #tpu.dot_dimension_numbers<[1], [0], [0], [1], [0, 0, 1, 1], [], []>} : vector<128x128xf32>, vector<128x8xf32>, vector<128x8xf32> -> vector<128x8xf32>
    %176 = tpu.concatenate %159, %175 in 1 : vector<128x8xf32>, vector<128x8xf32> -> vector<128x16xf32>
    %c0_90 = arith.constant 0 : index
    %c0_91 = arith.constant 0 : index
    %177 = vector.load %arg8[%c0_90, %c0_91] : memref<16x64xf32, #tpu.memory_space<vmem>>, vector<16x64xf32>
    %cst_92 = arith.constant dense<0.000000e+00> : vector<128x64xf32>
    %178 = tpu.matmul %176, %177, %cst_92 {dimension_numbers = #tpu.dot_dimension_numbers<[1], [0], [0], [1], [0, 0, 1, 1], [], []>} : vector<128x16xf32>, vector<16x64xf32>, vector<128x64xf32> -> vector<128x64xf32>
    %c0_93 = arith.constant 0 : index
    %c0_94 = arith.constant 0 : index
    %179 = vector.load %arg9[%c0_93, %c0_94] : memref<1x64xf32, #tpu.memory_space<vmem>>, vector<1x64xf32>
    %180 = vector.broadcast %179 : vector<1x64xf32> to vector<128x64xf32>
    %181 = arith.addf %178, %180 : vector<128x64xf32>
    %182 = arith.addf %181, %128 : vector<128x64xf32>
    %c256_95 = arith.constant 256 : index
    %c0_96 = arith.constant 0 : index
    %183 = vector.load %arg10[%c256_95, %c0_96] : memref<512x64xf32, #tpu.memory_space<vmem>>, vector<128x64xf32>
    tpu.vector_store %arg10[%c256_95, %c0_96], %182 {strides = array<i32>} : memref<512x64xf32, #tpu.memory_space<vmem>>, vector<128x64xf32>,
    %c384 = arith.constant 384 : index
    %c0_97 = arith.constant 0 : index
    %184 = vector.load %arg1[%c384, %c0_97] : memref<512x16xf32, #tpu.memory_space<vmem>>, vector<128x16xf32>
    %c0_98 = arith.constant 0 : index
    %c0_99 = arith.constant 0 : index
    %185 = vector.load %arg2[%c0_98, %c0_99] : memref<16x64xf32, #tpu.memory_space<vmem>>, vector<16x64xf32>
    %cst_100 = arith.constant dense<0.000000e+00> : vector<128x64xf32>
    %186 = tpu.matmul %184, %185, %cst_100 {dimension_numbers = #tpu.dot_dimension_numbers<[1], [0], [0], [1], [0, 0, 1, 1], [], []>} : vector<128x16xf32>, vector<16x64xf32>, vector<128x64xf32> -> vector<128x64xf32>
    %c0_101 = arith.constant 0 : index
    %c0_102 = arith.constant 0 : index
    %187 = vector.load %arg3[%c0_101, %c0_102] : memref<1x64xf32, #tpu.memory_space<vmem>>, vector<1x64xf32>
    %188 = vector.broadcast %187 : vector<1x64xf32> to vector<128x64xf32>
    %189 = arith.addf %186, %188 : vector<128x64xf32>
    %c0_103 = arith.constant 0 : index
    %c0_104 = arith.constant 0 : index
    %190 = vector.load %arg4[%c0_103, %c0_104] : memref<16x4xf32, #tpu.memory_space<vmem>>, vector<16x4xf32>
    %cst_105 = arith.constant dense<0.000000e+00> : vector<128x4xf32>
    %191 = tpu.matmul %184, %190, %cst_105 {dimension_numbers = #tpu.dot_dimension_numbers<[1], [0], [0], [1], [0, 0, 1, 1], [], []>} : vector<128x16xf32>, vector<16x4xf32>, vector<128x4xf32> -> vector<128x4xf32>
    %c0_106 = arith.constant 0 : index
    %c0_107 = arith.constant 0 : index
    %192 = vector.load %arg5[%c0_106, %c0_107] : memref<1x4xf32, #tpu.memory_space<vmem>>, vector<1x4xf32>
    %193 = vector.broadcast %192 : vector<1x4xf32> to vector<128x4xf32>
    %194 = arith.addf %191, %193 : vector<128x4xf32>
    %cst_108 = arith.constant 5.000000e-01 : f32
    %195 = vector.broadcast %cst_108 : f32 to vector<128x4xf32>
    %196 = arith.mulf %195, %194 : vector<128x4xf32>
    %cst_109 = arith.constant 0.707106769 : f32
    %197 = vector.broadcast %cst_109 : f32 to vector<128x4xf32>
    %198 = arith.mulf %194, %197 : vector<128x4xf32>
    %199 = math.erf %198 : vector<128x4xf32>
    %cst_110 = arith.constant 1.000000e+00 : f32
    %200 = vector.broadcast %cst_110 : f32 to vector<128x4xf32>
    %201 = arith.addf %200, %199 : vector<128x4xf32>
    %202 = arith.mulf %196, %201 : vector<128x4xf32>
    %c0_111 = arith.constant 0 : index
    %c0_112 = arith.constant 0 : index
    %203 = vector.load %arg6[%c0_111, %c0_112] : memref<4x48xf32, #tpu.memory_space<vmem>>, vector<4x48xf32>
    %cst_113 = arith.constant dense<0.000000e+00> : vector<128x48xf32>
    %204 = tpu.matmul %202, %203, %cst_113 {dimension_numbers = #tpu.dot_dimension_numbers<[1], [0], [0], [1], [0, 0, 1, 1], [], []>} : vector<128x4xf32>, vector<4x48xf32>, vector<128x48xf32> -> vector<128x48xf32>
    %205 = vector.extract_strided_slice %204 {offsets = [0, 0], sizes = [128, 8], strides = [1, 1]} : vector<128x48xf32> to vector<128x8xf32>
    %206 = vector.extract_strided_slice %204 {offsets = [0, 16], sizes = [128, 8], strides = [1, 1]} : vector<128x48xf32> to vector<128x8xf32>
    %207 = vector.extract_strided_slice %204 {offsets = [0, 32], sizes = [128, 8], strides = [1, 1]} : vector<128x48xf32> to vector<128x8xf32>
    %cst_114 = arith.constant dense<0.000000e+00> : vector<128x128xf32>
    %208 = tpu.matmul %205, %206, %cst_114 {dimension_numbers = #tpu.dot_dimension_numbers<[1], [1], [0], [0], [0, 0, 1, 0], [], []>} : vector<128x8xf32>, vector<128x8xf32>, vector<128x128xf32> -> vector<128x128xf32>
    %209 = arith.addf %208, %0 : vector<128x128xf32>
    %cst_115 = arith.constant dense<0xFF800000> : vector<128xf32>
    %210 = vector.multi_reduction <maximumf>, %209, %cst_115 [1] : vector<128x128xf32> to vector<128xf32>
    %211 = vector.shape_cast %210 : vector<128xf32> to vector<128x1xf32>
    %212 = vector.broadcast %211 : vector<128x1xf32> to vector<128x128xf32>
    %213 = arith.subf %209, %212 : vector<128x128xf32>
    %214 = math.exp %213 : vector<128x128xf32>
    %cst_116 = arith.constant dense<0.000000e+00> : vector<128xf32>
    %215 = vector.multi_reduction <add>, %214, %cst_116 [1] : vector<128x128xf32> to vector<128xf32>
    %216 = vector.shape_cast %215 : vector<128xf32> to vector<128x1xf32>
    %217 = tpu.reciprocal %216 {approx = true} : vector<128x1xf32> -> vector<128x1xf32>
    %218 = vector.broadcast %217 : vector<128x1xf32> to vector<128x128xf32>
    %219 = arith.mulf %214, %218 : vector<128x128xf32>
    %cst_117 = arith.constant dense<0.000000e+00> : vector<128x8xf32>
    %220 = tpu.matmul %219, %207, %cst_117 {dimension_numbers = #tpu.dot_dimension_numbers<[1], [0], [0], [1], [0, 0, 1, 1], [], []>} : vector<128x128xf32>, vector<128x8xf32>, vector<128x8xf32> -> vector<128x8xf32>
    %221 = vector.extract_strided_slice %204 {offsets = [0, 8], sizes = [128, 8], strides = [1, 1]} : vector<128x48xf32> to vector<128x8xf32>
    %222 = vector.extract_strided_slice %204 {offsets = [0, 24], sizes = [128, 8], strides = [1, 1]} : vector<128x48xf32> to vector<128x8xf32>
    %223 = vector.extract_strided_slice %204 {offsets = [0, 40], sizes = [128, 8], strides = [1, 1]} : vector<128x48xf32> to vector<128x8xf32>
    %cst_118 = arith.constant dense<0.000000e+00> : vector<128x128xf32>
    %224 = tpu.matmul %221, %222, %cst_118 {dimension_numbers = #tpu.dot_dimension_numbers<[1], [1], [0], [0], [0, 0, 1, 0], [], []>} : vector<128x8xf32>, vector<128x8xf32>, vector<128x128xf32> -> vector<128x128xf32>
    %225 = arith.addf %224, %0 : vector<128x128xf32>
    %cst_119 = arith.constant dense<0xFF800000> : vector<128xf32>
    %226 = vector.multi_reduction <maximumf>, %225, %cst_119 [1] : vector<128x128xf32> to vector<128xf32>
    %227 = vector.shape_cast %226 : vector<128xf32> to vector<128x1xf32>
    %228 = vector.broadcast %227 : vector<128x1xf32> to vector<128x128xf32>
    %229 = arith.subf %225, %228 : vector<128x128xf32>
    %230 = math.exp %229 : vector<128x128xf32>
    %cst_120 = arith.constant dense<0.000000e+00> : vector<128xf32>
    %231 = vector.multi_reduction <add>, %230, %cst_120 [1] : vector<128x128xf32> to vector<128xf32>
    %232 = vector.shape_cast %231 : vector<128xf32> to vector<128x1xf32>
    %233 = tpu.reciprocal %232 {approx = true} : vector<128x1xf32> -> vector<128x1xf32>
    %234 = vector.broadcast %233 : vector<128x1xf32> to vector<128x128xf32>
    %235 = arith.mulf %230, %234 : vector<128x128xf32>
    %cst_121 = arith.constant dense<0.000000e+00> : vector<128x8xf32>
    %236 = tpu.matmul %235, %223, %cst_121 {dimension_numbers = #tpu.dot_dimension_numbers<[1], [0], [0], [1], [0, 0, 1, 1], [], []>} : vector<128x128xf32>, vector<128x8xf32>, vector<128x8xf32> -> vector<128x8xf32>
    %237 = tpu.concatenate %220, %236 in 1 : vector<128x8xf32>, vector<128x8xf32> -> vector<128x16xf32>
    %c0_122 = arith.constant 0 : index
    %c0_123 = arith.constant 0 : index
    %238 = vector.load %arg8[%c0_122, %c0_123] : memref<16x64xf32, #tpu.memory_space<vmem>>, vector<16x64xf32>
    %cst_124 = arith.constant dense<0.000000e+00> : vector<128x64xf32>
    %239 = tpu.matmul %237, %238, %cst_124 {dimension_numbers = #tpu.dot_dimension_numbers<[1], [0], [0], [1], [0, 0, 1, 1], [], []>} : vector<128x16xf32>, vector<16x64xf32>, vector<128x64xf32> -> vector<128x64xf32>
    %c0_125 = arith.constant 0 : index
    %c0_126 = arith.constant 0 : index
    %240 = vector.load %arg9[%c0_125, %c0_126] : memref<1x64xf32, #tpu.memory_space<vmem>>, vector<1x64xf32>
    %241 = vector.broadcast %240 : vector<1x64xf32> to vector<128x64xf32>
    %242 = arith.addf %239, %241 : vector<128x64xf32>
    %243 = arith.addf %242, %189 : vector<128x64xf32>
    %c384_127 = arith.constant 384 : index
    %c0_128 = arith.constant 0 : index
    %244 = vector.load %arg10[%c384_127, %c0_128] : memref<512x64xf32, #tpu.memory_space<vmem>>, vector<128x64xf32>
    tpu.vector_store %arg10[%c384_127, %c0_128], %243 {strides = array<i32>} : memref<512x64xf32, #tpu.memory_space<vmem>>, vector<128x64xf32>,
    return
  }
  func.func @transform_0(%arg0: i32) -> (i32, i32) {
    %c0_i32 = arith.constant 0 : i32
    %c0_i32_0 = arith.constant 0 : i32
    return %arg0, %c0_i32 : i32, i32
  }
  func.func @transform_1(%arg0: i32) -> (i32, i32) {
    %c0_i32 = arith.constant 0 : i32
    %c0_i32_0 = arith.constant 0 : i32
    %c0_i32_1 = arith.constant 0 : i32
    return %c0_i32, %c0_i32_0 : i32, i32
  }
  func.func @transform_2(%arg0: i32) -> (i32, i32) {
    %c0_i32 = arith.constant 0 : i32
    %c0_i32_0 = arith.constant 0 : i32
    %c0_i32_1 = arith.constant 0 : i32
    return %c0_i32, %c0_i32_0 : i32, i32
  }
  func.func @transform_3(%arg0: i32) -> (i32, i32) {
    %c0_i32 = arith.constant 0 : i32
    %c0_i32_0 = arith.constant 0 : i32
    %c0_i32_1 = arith.constant 0 : i32
    return %c0_i32, %c0_i32_0 : i32, i32
  }
  func.func @transform_4(%arg0: i32) -> (i32, i32) {
    %c0_i32 = arith.constant 0 : i32
    %c0_i32_0 = arith.constant 0 : i32
    %c0_i32_1 = arith.constant 0 : i32
    return %c0_i32, %c0_i32_0 : i32, i32
  }
  func.func @transform_5(%arg0: i32) -> (i32, i32) {
    %c0_i32 = arith.constant 0 : i32
    %c0_i32_0 = arith.constant 0 : i32
    %c0_i32_1 = arith.constant 0 : i32
    return %c0_i32, %c0_i32_0 : i32, i32
  }
  func.func @transform_6(%arg0: i32) -> (i32, i32) {
    %c0_i32 = arith.constant 0 : i32
    %c0_i32_0 = arith.constant 0 : i32
    %c0_i32_1 = arith.constant 0 : i32
    return %c0_i32, %c0_i32_0 : i32, i32
  }
  func.func @transform_7(%arg0: i32) -> (i32, i32) {
    %c0_i32 = arith.constant 0 : i32
    %c0_i32_0 = arith.constant 0 : i32
    %c0_i32_1 = arith.constant 0 : i32
    return %c0_i32, %c0_i32_0 : i32, i32
  }
  func.func @transform_8(%arg0: i32) -> (i32, i32) {
    %c0_i32 = arith.constant 0 : i32
    %c0_i32_0 = arith.constant 0 : i32
    %c0_i32_1 = arith.constant 0 : i32
    return %c0_i32, %c0_i32_0 : i32, i32
  }
  func.func @transform_9(%arg0: i32) -> (i32, i32) {
    %c0_i32 = arith.constant 0 : i32
    %c0_i32_0 = arith.constant 0 : i32
    return %arg0, %c0_i32 : i32, i32
  }
}

</mosaic_0001>

<llo_original>
// kernel: attention_block_a_forward.1
$region0: #{attention_block_a_forward.1}
  #allocation0 [shape = 'u32[]', space=smem, size = 0x4, offset = 0x4, fixed_abs, tag = 'smem constant byte address 0x4 - core index']
  #allocation1 [shape = 'u32[144,128]{1,0:T(1,128)}', space=vmem, size = 0x12000, scoped, tag = 'internal scratch']
  %s0 = inlined_call_operand.vmem [shape: f32[2048,16], index: 0, kind: input, shape index: {}]
  %s1 = inlined_call_operand.vmem [shape: f32[16,64], index: 1, kind: input, shape index: {}]
  %s2 = inlined_call_operand.vmem [shape: f32[1,64], index: 2, kind: input, shape index: {}]
  %s3 = inlined_call_operand.vmem [shape: f32[16,4], index: 3, kind: input, shape index: {}]
  %s4 = inlined_call_operand.vmem [shape: f32[1,4], index: 4, kind: input, shape index: {}]
  %s5 = inlined_call_operand.vmem [shape: f32[4,48], index: 5, kind: input, shape index: {}]
  %s6 = inlined_call_operand.vmem [shape: f32[128,128], index: 6, kind: input, shape index: {}]
  %s7 = inlined_call_operand.vmem [shape: f32[16,64], index: 7, kind: input, shape index: {}]
  %s8 = inlined_call_operand.vmem [shape: f32[1,64], index: 8, kind: input, shape index: {}]
  %s9 = inlined_call_operand.hbm [shape: f32[2048,64], index: 9, kind: output, shape index: {}]
  %s10 = sld [smem:[#allocation0]]
  $region69: #{attention_block_a_forward.1} parent=0
    _
  %s12 = ssub.s32 1, %s10
  %s13 = scalar_select 0, %s12, %s10
  $region1: #{attention_block_a_forward.1} parent=0
    #allocation2 [shape = 'u8[524288]{0}', space=vmem, size = 0x80000, scoped, tag = 'output window, operand 0']
    #allocation3 [shape = 's32[2]{0}', space=sflag, size = 0x8, scoped, tag = 'scoped memory for attention_block_a_forward.1']
    %14 = vsyncpa [#allocation3], 0
    %s15 = scalar_lea.sflag [#allocation3], 1
    %16 = vsyncpa %s15, 0
    loop: start=0, step=1, limit=6
    $region2: #{attention_block_a_forward.1} parent=1 // loop_pre_header
      _
    $region3: #{attention_block_a_forward.1} parent=1 // loop_header
      %s18 = sphi 0, %s22
      %p19 = scmp.ge.s32.totalorder %s18, 6
      %s28 = sphi 0, %s30
      %s31 = sphi 0, %s28
      %s32 = sphi 0, %s31
      %s48 = sphi 0, %s32
      %s52 = sphi 0, %s52
      %s54 = sphi 0, %s52
      %s55 = sphi 0, %s54
      %s69 = sphi 0, %s55
      %s73 = sphi 0, %s73
      %s75 = sphi 0, %s73
      %s76 = sphi 0, %s75
      %s90 = sphi 0, %s76
      %s94 = sphi 0, %s94
      %s96 = sphi 0, %s94
      %s97 = sphi 0, %s96
      %s111 = sphi 0, %s97
      %s115 = sphi 0, %s115
      %s117 = sphi 0, %s115
      %s118 = sphi 0, %s117
      %s132 = sphi 0, %s118
      %s136 = sphi 0, %s136
      %s138 = sphi 0, %s136
      %s139 = sphi 0, %s138
      %s153 = sphi 0, %s139
      %s157 = sphi 0, %s157
      %s159 = sphi 0, %s157
      %s160 = sphi 0, %s159
      %s174 = sphi 0, %s160
      %s178 = sphi 0, %s178
      %s180 = sphi 0, %s178
      %s181 = sphi 0, %s180
      %s195 = sphi 0, %s181
      %s199 = sphi 0, %s199
      %s201 = sphi 0, %s199
      %s202 = sphi 0, %s201
      %s216 = sphi 0, %s202
      %s222 = sphi 0, %s224
      %s225 = sphi 0, %s222
      %s226 = sphi 0, %s225
      %s242 = sphi 0, %s226
    $region4: #{attention_block_a_forward.1} parent=1 // loop_header_branch
      %21 = sbr.rel (%p19) target = $region8
    $region5: #{attention_block_a_forward.1} parent=1 // loop_body
      %s23 = ssub.s32 %s18, 1
      %s24 = ssub.s32 %s18, 2
      %s25 = sadd.s32 %s18, 1
      %s26 = ssub.s32 %s18, %s25
      %p27 = scmp.eq.s32.totalorder %s26, 0
      %s29 = sadd.s32 %s28, 1
      %s30 = scalar_select %p27, %s28, %s29
      %p33 = pneg %p27
      %p34 = scmp.eq.s32.totalorder %s18, 3
      %p35 = por %p33, %p34
      %p36 = scmp.ne.s32.totalorder %s28, %s31
      %p37 = scmp.eq.s32.totalorder %s18, 0
      %p38 = por %p36, %p37
      %p39 = scmp.ne.s32.totalorder %s28, %s31
      %p40 = scmp.eq.s32.totalorder %s23, 3
      %p41 = por %p39, %p40
      %p42 = scmp.ne.s32.totalorder %s31, %s32
      %p43 = scmp.eq.s32.totalorder %s23, 0
      %p44 = por %p42, %p43
      %p45 = scmp.ne.s32.totalorder %s31, %s32
      %p46 = scmp.eq.s32.totalorder %s24, 3
      %p47 = por %p45, %p46
      %p49 = scmp.ne.s32.totalorder %s32, %s48
      %p50 = scmp.eq.s32.totalorder %s24, 0
      %p51 = por %p49, %p50
      %s53 = sadd.s32 %s52, 1
      %p56 = scmp.eq.s32.totalorder %s18, 3
      %p57 = scmp.ne.s32.totalorder %s52, %s54
      %p58 = scmp.eq.s32.totalorder %s18, 0
      %p59 = por %p57, %p58
      %p60 = scmp.ne.s32.totalorder %s52, %s54
      %p61 = scmp.eq.s32.totalorder %s23, 3
      %p62 = por %p60, %p61
      %p63 = scmp.ne.s32.totalorder %s54, %s55
      %p64 = scmp.eq.s32.totalorder %s23, 0
      %p65 = por %p63, %p64
      %p66 = scmp.ne.s32.totalorder %s54, %s55
      %p67 = scmp.eq.s32.totalorder %s24, 3
      %p68 = por %p66, %p67
      %p70 = scmp.ne.s32.totalorder %s55, %s69
      %p71 = scmp.eq.s32.totalorder %s24, 0
      %p72 = por %p70, %p71
      %s74 = sadd.s32 %s73, 1
      %p77 = scmp.eq.s32.totalorder %s18, 3
      %p78 = scmp.ne.s32.totalorder %s73, %s75
      %p79 = scmp.eq.s32.totalorder %s18, 0
      %p80 = por %p78, %p79
      %p81 = scmp.ne.s32.totalorder %s73, %s75
      %p82 = scmp.eq.s32.totalorder %s23, 3
      %p83 = por %p81, %p82
      %p84 = scmp.ne.s32.totalorder %s75, %s76
      %p85 = scmp.eq.s32.totalorder %s23, 0
      %p86 = por %p84, %p85
      %p87 = scmp.ne.s32.totalorder %s75, %s76
      %p88 = scmp.eq.s32.totalorder %s24, 3
      %p89 = por %p87, %p88
      %p91 = scmp.ne.s32.totalorder %s76, %s90
      %p92 = scmp.eq.s32.totalorder %s24, 0
      %p93 = por %p91, %p92
      %s95 = sadd.s32 %s94, 1
      %p98 = scmp.eq.s32.totalorder %s18, 3
      %p99 = scmp.ne.s32.totalorder %s94, %s96
      %p100 = scmp.eq.s32.totalorder %s18, 0
      %p101 = por %p99, %p100
      %p102 = scmp.ne.s32.totalorder %s94, %s96
      %p103 = scmp.eq.s32.totalorder %s23, 3
      %p104 = por %p102, %p103
      %p105 = scmp.ne.s32.totalorder %s96, %s97
      %p106 = scmp.eq.s32.totalorder %s23, 0
      %p107 = por %p105, %p106
      %p108 = scmp.ne.s32.totalorder %s96, %s97
      %p109 = scmp.eq.s32.totalorder %s24, 3
      %p110 = por %p108, %p109
      %p112 = scmp.ne.s32.totalorder %s97, %s111
      %p113 = scmp.eq.s32.totalorder %s24, 0
      %p114 = por %p112, %p113
      %s116 = sadd.s32 %s115, 1
      %p119 = scmp.eq.s32.totalorder %s18, 3
      %p120 = scmp.ne.s32.totalorder %s115, %s117
      %p121 = scmp.eq.s32.totalorder %s18, 0
      %p122 = por %p120, %p121
      %p123 = scmp.ne.s32.totalorder %s115, %s117
      %p124 = scmp.eq.s32.totalorder %s23, 3
      %p125 = por %p123, %p124
      %p126 = scmp.ne.s32.totalorder %s117, %s118
      %p127 = scmp.eq.s32.totalorder %s23, 0
      %p128 = por %p126, %p127
      %p129 = scmp.ne.s32.totalorder %s117, %s118
      %p130 = scmp.eq.s32.totalorder %s24, 3
      %p131 = por %p129, %p130
      %p133 = scmp.ne.s32.totalorder %s118, %s132
      %p134 = scmp.eq.s32.totalorder %s24, 0
      %p135 = por %p133, %p134
      %s137 = sadd.s32 %s136, 1
      %p140 = scmp.eq.s32.totalorder %s18, 3
      %p141 = scmp.ne.s32.totalorder %s136, %s138
      %p142 = scmp.eq.s32.totalorder %s18, 0
      %p143 = por %p141, %p142
      %p144 = scmp.ne.s32.totalorder %s136, %s138
      %p145 = scmp.eq.s32.totalorder %s23, 3
      %p146 = por %p144, %p145
      %p147 = scmp.ne.s32.totalorder %s138, %s139
      %p148 = scmp.eq.s32.totalorder %s23, 0
      %p149 = por %p147, %p148
      %p150 = scmp.ne.s32.totalorder %s138, %s139
      %p151 = scmp.eq.s32.totalorder %s24, 3
      %p152 = por %p150, %p151
      %p154 = scmp.ne.s32.totalorder %s139, %s153
      %p155 = scmp.eq.s32.totalorder %s24, 0
      %p156 = por %p154, %p155
      %s158 = sadd.s32 %s157, 1
      %p161 = scmp.eq.s32.totalorder %s18, 3
      %p162 = scmp.ne.s32.totalorder %s157, %s159
      %p163 = scmp.eq.s32.totalorder %s18, 0
      %p164 = por %p162, %p163
      %p165 = scmp.ne.s32.totalorder %s157, %s159
      %p166 = scmp.eq.s32.totalorder %s23, 3
      %p167 = por %p165, %p166
      %p168 = scmp.ne.s32.totalorder %s159, %s160
      %p169 = scmp.eq.s32.totalorder %s23, 0
      %p170 = por %p168, %p169
      %p171 = scmp.ne.s32.totalorder %s159, %s160
      %p172 = scmp.eq.s32.totalorder %s24, 3
      %p173 = por %p171, %p172
      %p175 = scmp.ne.s32.totalorder %s160, %s174
      %p176 = scmp.eq.s32.totalorder %s24, 0
      %p177 = por %p175, %p176
      %s179 = sadd.s32 %s178, 1
      %p182 = scmp.eq.s32.totalorder %s18, 3
      %p183 = scmp.ne.s32.totalorder %s178, %s180
      %p184 = scmp.eq.s32.totalorder %s18, 0
      %p185 = por %p183, %p184
      %p186 = scmp.ne.s32.totalorder %s178, %s180
      %p187 = scmp.eq.s32.totalorder %s23, 3
      %p188 = por %p186, %p187
      %p189 = scmp.ne.s32.totalorder %s180, %s181
      %p190 = scmp.eq.s32.totalorder %s23, 0
      %p191 = por %p189, %p190
      %p192 = scmp.ne.s32.totalorder %s180, %s181
      %p193 = scmp.eq.s32.totalorder %s24, 3
      %p194 = por %p192, %p193
      %p196 = scmp.ne.s32.totalorder %s181, %s195
      %p197 = scmp.eq.s32.totalorder %s24, 0
      %p198 = por %p196, %p197
      %s200 = sadd.s32 %s199, 1
      %p203 = scmp.eq.s32.totalorder %s18, 3
      %p204 = scmp.ne.s32.totalorder %s199, %s201
      %p205 = scmp.eq.s32.totalorder %s18, 0
      %p206 = por %p204, %p205
      %p207 = scmp.ne.s32.totalorder %s199, %s201
      %p208 = scmp.eq.s32.totalorder %s23, 3
      %p209 = por %p207, %p208
      %p210 = scmp.ne.s32.totalorder %s201, %s202
      %p211 = scmp.eq.s32.totalorder %s23, 0
      %p212 = por %p210, %p211
      %p213 = scmp.ne.s32.totalorder %s201, %s202
      %p214 = scmp.eq.s32.totalorder %s24, 3
      %p215 = por %p213, %p214
      %p217 = scmp.ne.s32.totalorder %s202, %s216
      %p218 = scmp.eq.s32.totalorder %s24, 0
      %p219 = por %p217, %p218
      %s220 = ssub.s32 %s18, %s25
      %p221 = scmp.eq.s32.totalorder %s220, 0
      %s223 = sadd.s32 %s222, 1
      %s224 = scalar_select %p221, %s222, %s223
      %p227 = pneg %p221
      %p228 = scmp.eq.s32.totalorder %s18, 3
      %p229 = por %p227, %p228
      %p230 = scmp.ne.s32.totalorder %s222, %s225
      %p231 = scmp.eq.s32.totalorder %s18, 0
      %p232 = por %p230, %p231
      %p233 = scmp.ne.s32.totalorder %s222, %s225
      %p234 = scmp.eq.s32.totalorder %s23, 3
      %p235 = por %p233, %p234
      %p236 = scmp.ne.s32.totalorder %s225, %s226
      %p237 = scmp.eq.s32.totalorder %s23, 0
      %p238 = por %p236, %p237
      %p239 = scmp.ne.s32.totalorder %s225, %s226
      %p240 = scmp.eq.s32.totalorder %s24, 3
      %p241 = por %p239, %p240
      %p243 = scmp.ne.s32.totalorder %s226, %s242
      %p244 = scmp.eq.s32.totalorder %s24, 0
      %p245 = por %p243, %p244
      %p246 = scmp.le.s32.totalorder 1, %s18
      %p247 = scmp.lt.s32.totalorder %s18, 5
      %p248 = pnand %p246, %p247
      %p249 = pneg %p248
      // Predicated region
      $region9: #{attention_block_a_forward.1} parent=5 // pred_check
        _
      $region10: #{attention_block_a_forward.1} parent=5 // pred_check_branch
        %251 = sbr.rel (%p248) target = $region12
      $region11: #{attention_block_a_forward.1} parent=5 // pred_region
        %s252 = ssub.s32 %s18, 1
        // Predicated region
        $region13: #{attention_block_a_forward.1} parent=11 // pred_check
          %p253 = pneg %p65
        $region14: #{attention_block_a_forward.1} parent=11 // pred_check_branch
          %255 = sbr.rel (%p253) target = $region16
        $region15: #{attention_block_a_forward.1} parent=11 // pred_region
          _
        $region16: #{attention_block_a_forward.1} parent=11 // pred_fallthru
          _
        // Predicated region
        $region17: #{attention_block_a_forward.1} parent=11 // pred_check
          %p256 = pneg %p86
        $region18: #{attention_block_a_forward.1} parent=11 // pred_check_branch
          %258 = sbr.rel (%p256) target = $region20
        $region19: #{attention_block_a_forward.1} parent=11 // pred_region
          _
        $region20: #{attention_block_a_forward.1} parent=11 // pred_fallthru
          _
        // Predicated region
        $region21: #{attention_block_a_forward.1} parent=11 // pred_check
          %p259 = pneg %p107
        $region22: #{attention_block_a_forward.1} parent=11 // pred_check_branch
          %261 = sbr.rel (%p259) target = $region24
        $region23: #{attention_block_a_forward.1} parent=11 // pred_region
          _
        $region24: #{attention_block_a_forward.1} parent=11 // pred_fallthru
          _
        // Predicated region
        $region25: #{attention_block_a_forward.1} parent=11 // pred_check
          %p262 = pneg %p128
        $region26: #{attention_block_a_forward.1} parent=11 // pred_check_branch
          %264 = sbr.rel (%p262) target = $region28
        $region27: #{attention_block_a_forward.1} parent=11 // pred_region
          _
        $region28: #{attention_block_a_forward.1} parent=11 // pred_fallthru
          _
        // Predicated region
        $region29: #{attention_block_a_forward.1} parent=11 // pred_check
          %p265 = pneg %p149
        $region30: #{attention_block_a_forward.1} parent=11 // pred_check_branch
          %267 = sbr.rel (%p265) target = $region32
        $region31: #{attention_block_a_forward.1} parent=11 // pred_region
          _
        $region32: #{attention_block_a_forward.1} parent=11 // pred_fallthru
          _
        // Predicated region
        $region33: #{attention_block_a_forward.1} parent=11 // pred_check
          %p268 = pneg %p170
        $region34: #{attention_block_a_forward.1} parent=11 // pred_check_branch
          %270 = sbr.rel (%p268) target = $region36
        $region35: #{attention_block_a_forward.1} parent=11 // pred_region
          _
        $region36: #{attention_block_a_forward.1} parent=11 // pred_fallthru
          _
        // Predicated region
        $region37: #{attention_block_a_forward.1} parent=11 // pred_check
          %p271 = pneg %p191
        $region38: #{attention_block_a_forward.1} parent=11 // pred_check_branch
          %273 = sbr.rel (%p271) target = $region40
        $region39: #{attention_block_a_forward.1} parent=11 // pred_region
          _
        $region40: #{attention_block_a_forward.1} parent=11 // pred_fallthru
          _
        // Predicated region
        $region41: #{attention_block_a_forward.1} parent=11 // pred_check
          %p274 = pneg %p212
        $region42: #{attention_block_a_forward.1} parent=11 // pred_check_branch
          %276 = sbr.rel (%p274) target = $region44
        $region43: #{attention_block_a_forward.1} parent=11 // pred_region
          _
        $region44: #{attention_block_a_forward.1} parent=11 // pred_fallthru
          _
      $region12: #{attention_block_a_forward.1} parent=5 // pred_fallthru
        _
      %p277 = scmp.lt.s32.totalorder %s18, 4
      // Predicated region
      $region45: #{attention_block_a_forward.1} parent=5 // pred_check
        %p278 = pneg %p277
      $region46: #{attention_block_a_forward.1} parent=5 // pred_check_branch
        %280 = sbr.rel (%p278) target = $region48
      $region47: #{attention_block_a_forward.1} parent=5 // pred_region
        // Predicated region
        $region49: #{attention_block_a_forward.1} parent=47 // pred_check
          %p281 = pneg %p38
        $region50: #{attention_block_a_forward.1} parent=47 // pred_check_branch
          %283 = sbr.rel (%p281) target = $region52
        $region51: #{attention_block_a_forward.1} parent=47 // pred_region
          %s284 = smul.u32 64, %s18
          %p285 = scmp.lt.s32.totalorder %s284, 255
          %s286 = scalar_select %p285, %s284, 255
          %s287 = smul.addr %s286, 8
          %s288 = scalar_lea.vmem %s0, %s287
          %s289 = smul.u32 64, %s18
        $region52: #{attention_block_a_forward.1} parent=47 // pred_fallthru
          _
      $region48: #{attention_block_a_forward.1} parent=5 // pred_fallthru
        _
      %p290 = scmp.le.s32.totalorder 1, %s18
      %p291 = scmp.lt.s32.totalorder %s18, 5
      %p292 = pnand %p290, %p291
      %p293 = pneg %p292
      // Predicated region
      $region53: #{attention_block_a_forward.1} parent=5 // pred_check
        _
      $region54: #{attention_block_a_forward.1} parent=5 // pred_check_branch
        %295 = sbr.rel (%p292) target = $region56
      $region55: #{attention_block_a_forward.1} parent=5 // pred_region
        %s296 = ssub.s32 %s18, 1
        %s297 = smul.u32 64, %s23
        %p298 = scmp.lt.s32.totalorder %s297, 255
        %s299 = scalar_select %p298, %s297, 255
        %s300 = smul.addr %s299, 8
        %s301 = scalar_lea.vmem %s0, %s300
        %p302 = pneg %p44
        %p303 = pneg %p41
        %p304 = pneg %p65
        %p305 = pneg %p62
        %p306 = pneg %p86
        %p307 = pneg %p83
        %p308 = pneg %p107
        %p309 = pneg %p104
        %p310 = pneg %p128
        %p311 = pneg %p125
        %p312 = pneg %p149
        %p313 = pneg %p146
        %p314 = pneg %p170
        %p315 = pneg %p167
        %p316 = pneg %p191
        %p317 = pneg %p188
        %p318 = pneg %p212
        %p319 = pneg %p209
        %p320 = pneg %p238
        %p321 = pneg %p235
        %s322 = sand.u32 %s225, 1
        %s323 = scalar_lea.sflag [#allocation3], %s322
        %s324 = sand.u32 %s225, 1
        %s325 = smul.addr %s324, 512
        %s326 = scalar_lea.vmem [#allocation2], %s325
        %s327 = smul.u32 64, %s23
        %p328 = scmp.lt.s32.totalorder %s327, 255
        %s329 = scalar_select %p328, %s327, 255
        %s330 = smul.addr %s329, 8
        %s331 = scalar_lea.vmem %s0, %s330
        %s332 = smul.u32 64, %s23
        %s333 = smul.u32 64, %s23
        %v334 = vld [vmem:[%s6] sm:$0xff]
        %v335 = vld [vmem:[%s6 + $0x8] sm:$0xff]
        %v336 = vld [vmem:[%s6 + $0x10] sm:$0xff]
        %v337 = vld [vmem:[%s6 + $0x18] sm:$0xff]
        %v338 = vld [vmem:[%s6 + $0x20] sm:$0xff]
        %v339 = vld [vmem:[%s6 + $0x28] sm:$0xff]
        %v340 = vld [vmem:[%s6 + $0x30] sm:$0xff]
        %v341 = vld [vmem:[%s6 + $0x38] sm:$0xff]
        %v342 = vld [vmem:[%s6 + $0x40] sm:$0xff]
        %v343 = vld [vmem:[%s6 + $0x48] sm:$0xff]
        %v344 = vld [vmem:[%s6 + $0x50] sm:$0xff]
        %v345 = vld [vmem:[%s6 + $0x58] sm:$0xff]
        %v346 = vld [vmem:[%s6 + $0x60] sm:$0xff]
        %v347 = vld [vmem:[%s6 + $0x68] sm:$0xff]
        %v348 = vld [vmem:[%s6 + $0x70] sm:$0xff]
        %v349 = vld [vmem:[%s6 + $0x78] sm:$0xff]
        %v350 = vld [vmem:[%s331] sm:$0xff]
        %v351 = vld [vmem:[%s331 + $0x8] sm:$0xff]
        %v352 = vld [vmem:[%s331 + $0x10] sm:$0xff]
        %v353 = vld [vmem:[%s331 + $0x18] sm:$0xff]
        %v354 = vld [vmem:[%s331 + $0x20] sm:$0xff]
        %v355 = vld [vmem:[%s331 + $0x28] sm:$0xff]
        %v356 = vld [vmem:[%s331 + $0x30] sm:$0xff]
        %v357 = vld [vmem:[%s331 + $0x38] sm:$0xff]
        %v358 = vld [vmem:[%s331 + $0x40] sm:$0xff]
        %v359 = vld [vmem:[%s331 + $0x48] sm:$0xff]
        %v360 = vld [vmem:[%s331 + $0x50] sm:$0xff]
        %v361 = vld [vmem:[%s331 + $0x58] sm:$0xff]
        %v362 = vld [vmem:[%s331 + $0x60] sm:$0xff]
        %v363 = vld [vmem:[%s331 + $0x68] sm:$0xff]
        %v364 = vld [vmem:[%s331 + $0x70] sm:$0xff]
        %v365 = vld [vmem:[%s331 + $0x78] sm:$0xff]
        %v366 = vld [vmem:[%s1] sm:$0xff]
        %v367 = vld [vmem:[%s1 + $0x8] sm:$0xff]
        %v368 = vld [vmem:[%s2] sm:$0x1]
        %v370 = vlaneseq
        %v371 = vshrl.u32 %v370, 7
        %v372 = vsub.s32 0, %v371
        %v373 = vrot.slane %v368, %v372
        %vm375 = vcmask 130048
        %v377 = vsel %vm375, %v350, 0
        %v380 = vsel %vm375, %v351, 0
        %v383 = vsel %vm375, %v352, 0
        %v386 = vsel %vm375, %v353, 0
        %v389 = vsel %vm375, %v354, 0
        %v392 = vsel %vm375, %v355, 0
        %v395 = vsel %vm375, %v356, 0
        %v398 = vsel %vm375, %v357, 0
        %v401 = vsel %vm375, %v358, 0
        %v404 = vsel %vm375, %v359, 0
        %v407 = vsel %vm375, %v360, 0
        %v410 = vsel %vm375, %v361, 0
        %v413 = vsel %vm375, %v362, 0
        %v416 = vsel %vm375, %v363, 0
        %v419 = vsel %vm375, %v364, 0
        %v422 = vsel %vm375, %v365, 0
        %424 = vmatprep.subr.mxu0 0.0
        %425 = vmatpush1.msra.mxu0 0.0
        %426 = vmatprep.subr.mxu0 0.0
        %427 = vmatpush1.msra.mxu0 0.0
        %428 = vmatprep.subr.mxu0 0.0
        %429 = vmatpush1.msra.mxu0 0.0
        %430 = vmatprep.subr.mxu0 0.0
        %431 = vmatpush1.msra.mxu0 0.0
        %432 = vmatprep.subr.mxu0 0.0
        %433 = vmatpush1.msra.mxu0 0.0
        %434 = vmatprep.subr.mxu0 0.0
        %435 = vmatpush1.msra.mxu0 0.0
        %436 = vmatprep.subr.mxu0 0.0
        %437 = vmatpush1.msra.mxu0 0.0
        %438 = vmatprep.subr.mxu0 0.0
        %439 = vmatpush1.msra.mxu0 0.0
        %440 = vmatprep.subr.mxu0 0.0
        %441 = vmatpush1.msra.mxu0 0.0
        %442 = vmatprep.subr.mxu0 0.0
        %443 = vmatpush1.msra.mxu0 0.0
        %444 = vmatprep.subr.mxu0 0.0
        %445 = vmatpush1.msra.mxu0 0.0
        %446 = vmatprep.subr.mxu0 0.0
        %447 = vmatpush1.msra.mxu0 0.0
        %448 = vmatprep.subr.mxu0 0.0
        %449 = vmatpush1.msra.mxu0 0.0
        %450 = vmatprep.subr.mxu0 0.0
        %451 = vmatpush1.msra.mxu0 0.0
        %452 = vmatprep.subr.mxu0 0.0
        %453 = vmatpush1.msra.mxu0 %v367
        %454 = vmatprep.subr.mxu0 0.0
        %455 = vmatpush1.msra.mxu0 %v366
        %456 = vmatprep.subr.mxu0 0.0
        %457 = vmatpush2.msra.mxu0 0.0
        %458 = vmatprep.subr.mxu0 0.0
        %459 = vmatpush2.msra.mxu0 0.0
        %460 = vmatprep.subr.mxu0 0.0
        %461 = vmatpush2.msra.mxu0 0.0
        %462 = vmatprep.subr.mxu0 0.0
        %463 = vmatpush2.msra.mxu0 0.0
        %464 = vmatprep.subr.mxu0 0.0
        %465 = vmatpush2.msra.mxu0 0.0
        %466 = vmatprep.subr.mxu0 0.0
        %467 = vmatpush2.msra.mxu0 0.0
        %468 = vmatprep.subr.mxu0 0.0
        %469 = vmatpush2.msra.mxu0 0.0
        %470 = vmatprep.subr.mxu0 0.0
        %471 = vmatpush2.msra.mxu0 0.0
        %472 = vmatprep.subr.mxu0 0.0
        %473 = vmatpush2.msra.mxu0 0.0
        %474 = vmatprep.subr.mxu0 0.0
        %475 = vmatpush2.msra.mxu0 0.0
        %476 = vmatprep.subr.mxu0 0.0
        %477 = vmatpush2.msra.mxu0 0.0
        %478 = vmatprep.subr.mxu0 0.0
        %479 = vmatpush2.msra.mxu0 0.0
        %480 = vmatprep.subr.mxu0 0.0
        %481 = vmatpush2.msra.mxu0 0.0
        %482 = vmatprep.subr.mxu0 0.0
        %483 = vmatpush2.msra.mxu0 0.0
        %484 = vmatprep.subr.mxu0 0.0
        %485 = vmatpush2.msra.mxu0 0.0
        %486 = vmatprep.subr.mxu0 0.0
        %487 = vmatpush2.msra.mxu0 0.0
        %488 = vmatprep.mubr.f32.mxu0 0.0
        %489 = vmatmul.mubr.f32.gmra.mxu0 %v377
        %v490 = vpop.f32.mrf.mxu0
        %v491 = vadd.f32 %v373, %v490
        %v492 = vpop.f32.mrf.mxu0
        %493 = vmatprep.mubr.f32.mxu0 0.0
        %494 = vmatmul.mubr.f32.gmra.mxu0 %v380
        %v495 = vpop.f32.mrf.mxu0
        %v496 = vadd.f32 %v373, %v495
        %v497 = vpop.f32.mrf.mxu0
        %498 = vmatprep.mubr.f32.mxu0 0.0
        %499 = vmatmul.mubr.f32.gmra.mxu0 %v383
        %v500 = vpop.f32.mrf.mxu0
        %v501 = vadd.f32 %v373, %v500
        %v502 = vpop.f32.mrf.mxu0
        %503 = vmatprep.mubr.f32.mxu0 0.0
        %504 = vmatmul.mubr.f32.gmra.mxu0 %v386
        %v505 = vpop.f32.mrf.mxu0
        %v506 = vadd.f32 %v373, %v505
        %v507 = vpop.f32.mrf.mxu0
        %508 = vmatprep.mubr.f32.mxu0 0.0
        %509 = vmatmul.mubr.f32.gmra.mxu0 %v389
        %v510 = vpop.f32.mrf.mxu0
        %v511 = vadd.f32 %v373, %v510
        %v512 = vpop.f32.mrf.mxu0
        %513 = vmatprep.mubr.f32.mxu0 0.0
        %514 = vmatmul.mubr.f32.gmra.mxu0 %v392
        %v515 = vpop.f32.mrf.mxu0
        %v516 = vadd.f32 %v373, %v515
        %v517 = vpop.f32.mrf.mxu0
        %518 = vmatprep.mubr.f32.mxu0 0.0
        %519 = vmatmul.mubr.f32.gmra.mxu0 %v395
        %v520 = vpop.f32.mrf.mxu0
        %v521 = vadd.f32 %v373, %v520
        %v522 = vpop.f32.mrf.mxu0
        %523 = vmatprep.mubr.f32.mxu0 0.0
        %524 = vmatmul.mubr.f32.gmra.mxu0 %v398
        %v525 = vpop.f32.mrf.mxu0
        %v526 = vadd.f32 %v373, %v525
        %v527 = vpop.f32.mrf.mxu0
        %528 = vmatprep.mubr.f32.mxu0 0.0
        %529 = vmatmul.mubr.f32.gmra.mxu0 %v401
        %v530 = vpop.f32.mrf.mxu0
        %v531 = vadd.f32 %v373, %v530
        %v532 = vpop.f32.mrf.mxu0
        %533 = vmatprep.mubr.f32.mxu0 0.0
        %534 = vmatmul.mubr.f32.gmra.mxu0 %v404
        %v535 = vpop.f32.mrf.mxu0
        %v536 = vadd.f32 %v373, %v535
        %v537 = vpop.f32.mrf.mxu0
        %538 = vmatprep.mubr.f32.mxu0 0.0
        %539 = vmatmul.mubr.f32.gmra.mxu0 %v407
        %v540 = vpop.f32.mrf.mxu0
        %v541 = vadd.f32 %v373, %v540
        %v542 = vpop.f32.mrf.mxu0
        %543 = vmatprep.mubr.f32.mxu0 0.0
        %544 = vmatmul.mubr.f32.gmra.mxu0 %v410
        %v545 = vpop.f32.mrf.mxu0
        %v546 = vadd.f32 %v373, %v545
        %v547 = vpop.f32.mrf.mxu0
        %548 = vmatprep.mubr.f32.mxu0 0.0
        %549 = vmatmul.mubr.f32.gmra.mxu0 %v413
        %v550 = vpop.f32.mrf.mxu0
        %v551 = vadd.f32 %v373, %v550
        %v552 = vpop.f32.mrf.mxu0
        %553 = vmatprep.mubr.f32.mxu0 0.0
        %554 = vmatmul.mubr.f32.gmra.mxu0 %v416
        %v555 = vpop.f32.mrf.mxu0
        %v556 = vadd.f32 %v373, %v555
        %v557 = vpop.f32.mrf.mxu0
        %558 = vmatprep.mubr.f32.mxu0 0.0
        %559 = vmatmul.mubr.f32.gmra.mxu0 %v419
        %v560 = vpop.f32.mrf.mxu0
        %v561 = vadd.f32 %v373, %v560
        %v562 = vpop.f32.mrf.mxu0
        %563 = vmatprep.mubr.f32.mxu0 0.0
        %564 = vmatmul.mubr.f32.gmra.mxu0 %v422
        %v565 = vpop.f32.mrf.mxu0
        %v566 = vadd.f32 %v373, %v565
        %v567 = vpop.f32.mrf.mxu0
        %568 = vdwg.mxu0
        %v569 = vld [vmem:[%s3] sm:$0xff]
        %v570 = vld [vmem:[%s3 + $0x8] sm:$0xff]
        %v571 = vld [vmem:[%s4] sm:$0x1]
        %v573 = vlaneseq
        %v574 = vshrl.u32 %v573, 7
        %v575 = vsub.s32 0, %v574
        %v576 = vrot.slane %v571, %v575
        %578 = vmatprep.subr.mxu0 0.0
        %579 = vmatpush1.msra.mxu0 0.0
        %580 = vmatprep.subr.mxu0 0.0
        %581 = vmatpush1.msra.mxu0 0.0
        %582 = vmatprep.subr.mxu0 0.0
        %583 = vmatpush1.msra.mxu0 0.0
        %584 = vmatprep.subr.mxu0 0.0
        %585 = vmatpush1.msra.mxu0 0.0
        %586 = vmatprep.subr.mxu0 0.0
        %587 = vmatpush1.msra.mxu0 0.0
        %588 = vmatprep.subr.mxu0 0.0
        %589 = vmatpush1.msra.mxu0 0.0
        %590 = vmatprep.subr.mxu0 0.0
        %591 = vmatpush1.msra.mxu0 0.0
        %592 = vmatprep.subr.mxu0 0.0
        %593 = vmatpush1.msra.mxu0 0.0
        %594 = vmatprep.subr.mxu0 0.0
        %595 = vmatpush1.msra.mxu0 0.0
        %596 = vmatprep.subr.mxu0 0.0
        %597 = vmatpush1.msra.mxu0 0.0
        %598 = vmatprep.subr.mxu0 0.0
        %599 = vmatpush1.msra.mxu0 0.0
        %600 = vmatprep.subr.mxu0 0.0
        %601 = vmatpush1.msra.mxu0 0.0
        %602 = vmatprep.subr.mxu0 0.0
        %603 = vmatpush1.msra.mxu0 0.0
        %604 = vmatprep.subr.mxu0 0.0
        %605 = vmatpush1.msra.mxu0 0.0
        %606 = vmatprep.subr.mxu0 0.0
        %607 = vmatpush1.msra.mxu0 %v570
        %608 = vmatprep.subr.mxu0 0.0
        %609 = vmatpush1.msra.mxu0 %v569
        %610 = vmatprep.subr.mxu0 0.0
        %611 = vmatpush2.msra.mxu0 0.0
        %612 = vmatprep.subr.mxu0 0.0
        %613 = vmatpush2.msra.mxu0 0.0
        %614 = vmatprep.subr.mxu0 0.0
        %615 = vmatpush2.msra.mxu0 0.0
        %616 = vmatprep.subr.mxu0 0.0
        %617 = vmatpush2.msra.mxu0 0.0
        %618 = vmatprep.subr.mxu0 0.0
        %619 = vmatpush2.msra.mxu0 0.0
        %620 = vmatprep.subr.mxu0 0.0
        %621 = vmatpush2.msra.mxu0 0.0
        %622 = vmatprep.subr.mxu0 0.0
        %623 = vmatpush2.msra.mxu0 0.0
        %624 = vmatprep.subr.mxu0 0.0
        %625 = vmatpush2.msra.mxu0 0.0
        %626 = vmatprep.subr.mxu0 0.0
        %627 = vmatpush2.msra.mxu0 0.0
        %628 = vmatprep.subr.mxu0 0.0
        %629 = vmatpush2.msra.mxu0 0.0
        %630 = vmatprep.subr.mxu0 0.0
        %631 = vmatpush2.msra.mxu0 0.0
        %632 = vmatprep.subr.mxu0 0.0
        %633 = vmatpush2.msra.mxu0 0.0
        %634 = vmatprep.subr.mxu0 0.0
        %635 = vmatpush2.msra.mxu0 0.0
        %636 = vmatprep.subr.mxu0 0.0
        %637 = vmatpush2.msra.mxu0 0.0
        %638 = vmatprep.subr.mxu0 0.0
        %639 = vmatpush2.msra.mxu0 0.0
        %640 = vmatprep.subr.mxu0 0.0
        %641 = vmatpush2.msra.mxu0 0.0
        %642 = vmatprep.mubr.f32.mxu0 0.0
        %643 = vmatmul.mubr.f32.gmra.mxu0 %v377
        %v644 = vpop.f32.mrf.mxu0
        %v645 = vadd.f32 %v576, %v644
        %v646 = vpop.f32.mrf.mxu0
        %647 = vmatprep.mubr.f32.mxu0 0.0
        %648 = vmatmul.mubr.f32.gmra.mxu0 %v380
        %v649 = vpop.f32.mrf.mxu0
        %v650 = vadd.f32 %v576, %v649
        %v651 = vpop.f32.mrf.mxu0
        %652 = vmatprep.mubr.f32.mxu0 0.0
        %653 = vmatmul.mubr.f32.gmra.mxu0 %v383
        %v654 = vpop.f32.mrf.mxu0
        %v655 = vadd.f32 %v576, %v654
        %v656 = vpop.f32.mrf.mxu0
        %657 = vmatprep.mubr.f32.mxu0 0.0
        %658 = vmatmul.mubr.f32.gmra.mxu0 %v386
        %v659 = vpop.f32.mrf.mxu0
        %v660 = vadd.f32 %v576, %v659
        %v661 = vpop.f32.mrf.mxu0
        %662 = vmatprep.mubr.f32.mxu0 0.0
        %663 = vmatmul.mubr.f32.gmra.mxu0 %v389
        %v664 = vpop.f32.mrf.mxu0
        %v665 = vadd.f32 %v576, %v664
        %v666 = vpop.f32.mrf.mxu0
        %667 = vmatprep.mubr.f32.mxu0 0.0
        %668 = vmatmul.mubr.f32.gmra.mxu0 %v392
        %v669 = vpop.f32.mrf.mxu0
        %v670 = vadd.f32 %v576, %v669
        %v671 = vpop.f32.mrf.mxu0
        %672 = vmatprep.mubr.f32.mxu0 0.0
        %673 = vmatmul.mubr.f32.gmra.mxu0 %v395
        %v674 = vpop.f32.mrf.mxu0
        %v675 = vadd.f32 %v576, %v674
        %v676 = vpop.f32.mrf.mxu0
        %677 = vmatprep.mubr.f32.mxu0 0.0
        %678 = vmatmul.mubr.f32.gmra.mxu0 %v398
        %v679 = vpop.f32.mrf.mxu0
        %v680 = vadd.f32 %v576, %v679
        %v681 = vpop.f32.mrf.mxu0
        %682 = vmatprep.mubr.f32.mxu0 0.0
        %683 = vmatmul.mubr.f32.gmra.mxu0 %v401
        %v684 = vpop.f32.mrf.mxu0
        %v685 = vadd.f32 %v576, %v684
        %v686 = vpop.f32.mrf.mxu0
        %687 = vmatprep.mubr.f32.mxu0 0.0
        %688 = vmatmul.mubr.f32.gmra.mxu0 %v404
        %v689 = vpop.f32.mrf.mxu0
        %v690 = vadd.f32 %v576, %v689
        %v691 = vpop.f32.mrf.mxu0
        %692 = vmatprep.mubr.f32.mxu0 0.0
        %693 = vmatmul.mubr.f32.gmra.mxu0 %v407
        %v694 = vpop.f32.mrf.mxu0
        %v695 = vadd.f32 %v576, %v694
        %v696 = vpop.f32.mrf.mxu0
        %697 = vmatprep.mubr.f32.mxu0 0.0
        %698 = vmatmul.mubr.f32.gmra.mxu0 %v410
        %v699 = vpop.f32.mrf.mxu0
        %v700 = vadd.f32 %v576, %v699
        %v701 = vpop.f32.mrf.mxu0
        %702 = vmatprep.mubr.f32.mxu0 0.0
        %703 = vmatmul.mubr.f32.gmra.mxu0 %v413
        %v704 = vpop.f32.mrf.mxu0
        %v705 = vadd.f32 %v576, %v704
        %v706 = vpop.f32.mrf.mxu0
        %707 = vmatprep.mubr.f32.mxu0 0.0
        %708 = vmatmul.mubr.f32.gmra.mxu0 %v416
        %v709 = vpop.f32.mrf.mxu0
        %v710 = vadd.f32 %v576, %v709
        %v711 = vpop.f32.mrf.mxu0
        %712 = vmatprep.mubr.f32.mxu0 0.0
        %713 = vmatmul.mubr.f32.gmra.mxu0 %v419
        %v714 = vpop.f32.mrf.mxu0
        %v715 = vadd.f32 %v576, %v714
        %v716 = vpop.f32.mrf.mxu0
        %717 = vmatprep.mubr.f32.mxu0 0.0
        %718 = vmatmul.mubr.f32.gmra.mxu0 %v422
        %v719 = vpop.f32.mrf.mxu0
        %v720 = vadd.f32 %v576, %v719
        %v721 = vpop.f32.mrf.mxu0
        %722 = vdwg.mxu0
        %v723 = vmul.f32 %v645, 0.5
        %v724 = vmul.f32 %v650, 0.5
        %v725 = vmul.f32 %v655, 0.5
        %v726 = vmul.f32 %v660, 0.5
        %v727 = vmul.f32 %v665, 0.5
        %v728 = vmul.f32 %v670, 0.5
        %v729 = vmul.f32 %v675, 0.5
        %v730 = vmul.f32 %v680, 0.5
        %v731 = vmul.f32 %v685, 0.5
        %v732 = vmul.f32 %v690, 0.5
        %v733 = vmul.f32 %v695, 0.5
        %v734 = vmul.f32 %v700, 0.5
        %v735 = vmul.f32 %v705, 0.5
        %v736 = vmul.f32 %v710, 0.5
        %v737 = vmul.f32 %v715, 0.5
        %v738 = vmul.f32 %v720, 0.5
        %v739 = vmul.f32 %v645, 0.70710677
        %v740 = vmul.f32 %v650, 0.70710677
        %v741 = vmul.f32 %v655, 0.70710677
        %v742 = vmul.f32 %v660, 0.70710677
        %v743 = vmul.f32 %v665, 0.70710677
        %v744 = vmul.f32 %v670, 0.70710677
        %v745 = vmul.f32 %v675, 0.70710677
        %v746 = vmul.f32 %v680, 0.70710677
        %v747 = vmul.f32 %v685, 0.70710677
        %v748 = vmul.f32 %v690, 0.70710677
        %v749 = vmul.f32 %v695, 0.70710677
        %v750 = vmul.f32 %v700, 0.70710677
        %v751 = vmul.f32 %v705, 0.70710677
        %v752 = vmul.f32 %v710, 0.70710677
        %v753 = vmul.f32 %v715, 0.70710677
        %v754 = vmul.f32 %v720, 0.70710677
        %v755 = verf.f32.pop %v739
        %v756 = verf.f32.pop %v740
        %v757 = verf.f32.pop %v741
        %v758 = verf.f32.pop %v742
        %v759 = verf.f32.pop %v743
        %v760 = verf.f32.pop %v744
        %v761 = verf.f32.pop %v745
        %v762 = verf.f32.pop %v746
        %v763 = verf.f32.pop %v747
        %v764 = verf.f32.pop %v748
        %v765 = verf.f32.pop %v749
        %v766 = verf.f32.pop %v750
        %v767 = verf.f32.pop %v751
        %v768 = verf.f32.pop %v752
        %v769 = verf.f32.pop %v753
        %v770 = verf.f32.pop %v754
        %v771 = vadd.f32 %v755, 1.0
        %v772 = vadd.f32 %v756, 1.0
        %v773 = vadd.f32 %v757, 1.0
        %v774 = vadd.f32 %v758, 1.0
        %v775 = vadd.f32 %v759, 1.0
        %v776 = vadd.f32 %v760, 1.0
        %v777 = vadd.f32 %v761, 1.0
        %v778 = vadd.f32 %v762, 1.0
        %v779 = vadd.f32 %v763, 1.0
        %v780 = vadd.f32 %v764, 1.0
        %v781 = vadd.f32 %v765, 1.0
        %v782 = vadd.f32 %v766, 1.0
        %v783 = vadd.f32 %v767, 1.0
        %v784 = vadd.f32 %v768, 1.0
        %v785 = vadd.f32 %v769, 1.0
        %v786 = vadd.f32 %v770, 1.0
        %v787 = vmul.f32 %v723, %v771
        %v788 = vmul.f32 %v724, %v772
        %v789 = vmul.f32 %v725, %v773
        %v790 = vmul.f32 %v726, %v774
        %v791 = vmul.f32 %v727, %v775
        %v792 = vmul.f32 %v728, %v776
        %v793 = vmul.f32 %v729, %v777
        %v794 = vmul.f32 %v730, %v778
        %v795 = vmul.f32 %v731, %v779
        %v796 = vmul.f32 %v732, %v780
        %v797 = vmul.f32 %v733, %v781
        %v798 = vmul.f32 %v734, %v782
        %v799 = vmul.f32 %v735, %v783
        %v800 = vmul.f32 %v736, %v784
        %v801 = vmul.f32 %v737, %v785
        %v802 = vmul.f32 %v738, %v786
        %v803 = vld [vmem:[%s5] sm:$0xf]
        %vm804 = vcmask 31744
        %v806 = vsel %vm804, %v787, 0
        %v809 = vsel %vm804, %v788, 0
        %v812 = vsel %vm804, %v789, 0
        %v815 = vsel %vm804, %v790, 0
        %v818 = vsel %vm804, %v791, 0
        %v821 = vsel %vm804, %v792, 0
        %v824 = vsel %vm804, %v793, 0
        %v827 = vsel %vm804, %v794, 0
        %v830 = vsel %vm804, %v795, 0
        %v833 = vsel %vm804, %v796, 0
        %v836 = vsel %vm804, %v797, 0
        %v839 = vsel %vm804, %v798, 0
        %v842 = vsel %vm804, %v799, 0
        %v845 = vsel %vm804, %v800, 0
        %v848 = vsel %vm804, %v801, 0
        %v851 = vsel %vm804, %v802, 0
        %vm853 = vcmask 1043456
        %v855 = vsel %vm853, %v803, 0
        %857 = vmatprep.subr.mxu0 0.0
        %858 = vmatpush1.msra.mxu0 0.0
        %859 = vmatprep.subr.mxu0 0.0
        %860 = vmatpush1.msra.mxu0 0.0
        %861 = vmatprep.subr.mxu0 0.0
        %862 = vmatpush1.msra.mxu0 0.0
        %863 = vmatprep.subr.mxu0 0.0
        %864 = vmatpush1.msra.mxu0 0.0
        %865 = vmatprep.subr.mxu0 0.0
        %866 = vmatpush1.msra.mxu0 0.0
        %867 = vmatprep.subr.mxu0 0.0
        %868 = vmatpush1.msra.mxu0 0.0
        %869 = vmatprep.subr.mxu0 0.0
        %870 = vmatpush1.msra.mxu0 0.0
        %871 = vmatprep.subr.mxu0 0.0
        %872 = vmatpush1.msra.mxu0 0.0
        %873 = vmatprep.subr.mxu0 0.0
        %874 = vmatpush1.msra.mxu0 0.0
        %875 = vmatprep.subr.mxu0 0.0
        %876 = vmatpush1.msra.mxu0 0.0
        %877 = vmatprep.subr.mxu0 0.0
        %878 = vmatpush1.msra.mxu0 0.0
        %879 = vmatprep.subr.mxu0 0.0
        %880 = vmatpush1.msra.mxu0 0.0
        %881 = vmatprep.subr.mxu0 0.0
        %882 = vmatpush1.msra.mxu0 0.0
        %883 = vmatprep.subr.mxu0 0.0
        %884 = vmatpush1.msra.mxu0 0.0
        %885 = vmatprep.subr.mxu0 0.0
        %886 = vmatpush1.msra.mxu0 0.0
        %887 = vmatprep.subr.mxu0 0.0
        %888 = vmatpush1.msra.mxu0 %v855
        %889 = vmatprep.subr.mxu0 0.0
        %890 = vmatpush2.msra.mxu0 0.0
        %891 = vmatprep.subr.mxu0 0.0
        %892 = vmatpush2.msra.mxu0 0.0
        %893 = vmatprep.subr.mxu0 0.0
        %894 = vmatpush2.msra.mxu0 0.0
        %895 = vmatprep.subr.mxu0 0.0
        %896 = vmatpush2.msra.mxu0 0.0
        %897 = vmatprep.subr.mxu0 0.0
        %898 = vmatpush2.msra.mxu0 0.0
        %899 = vmatprep.subr.mxu0 0.0
        %900 = vmatpush2.msra.mxu0 0.0
        %901 = vmatprep.subr.mxu0 0.0
        %902 = vmatpush2.msra.mxu0 0.0
        %903 = vmatprep.subr.mxu0 0.0
        %904 = vmatpush2.msra.mxu0 0.0
        %905 = vmatprep.subr.mxu0 0.0
        %906 = vmatpush2.msra.mxu0 0.0
        %907 = vmatprep.subr.mxu0 0.0
        %908 = vmatpush2.msra.mxu0 0.0
        %909 = vmatprep.subr.mxu0 0.0
        %910 = vmatpush2.msra.mxu0 0.0
        %911 = vmatprep.subr.mxu0 0.0
        %912 = vmatpush2.msra.mxu0 0.0
        %913 = vmatprep.subr.mxu0 0.0
        %914 = vmatpush2.msra.mxu0 0.0
        %915 = vmatprep.subr.mxu0 0.0
        %916 = vmatpush2.msra.mxu0 0.0
        %917 = vmatprep.subr.mxu0 0.0
        %918 = vmatpush2.msra.mxu0 0.0
        %919 = vmatprep.subr.mxu0 0.0
        %920 = vmatpush2.msra.mxu0 0.0
        %921 = vmatprep.mubr.f32.mxu0 0.0
        %922 = vmatmul.mubr.f32.gmra.mxu0 %v806
        %v923 = vpop.f32.mrf.mxu0
        %v924 = vadd.f32 0.0, %v923
        %v925 = vpop.f32.mrf.mxu0
        %926 = vmatprep.mubr.f32.mxu0 0.0
        %927 = vmatmul.mubr.f32.gmra.mxu0 %v809
        %v928 = vpop.f32.mrf.mxu0
        %v929 = vadd.f32 0.0, %v928
        %v930 = vpop.f32.mrf.mxu0
        %931 = vmatprep.mubr.f32.mxu0 0.0
        %932 = vmatmul.mubr.f32.gmra.mxu0 %v812
        %v933 = vpop.f32.mrf.mxu0
        %v934 = vadd.f32 0.0, %v933
        %v935 = vpop.f32.mrf.mxu0
        %936 = vmatprep.mubr.f32.mxu0 0.0
        %937 = vmatmul.mubr.f32.gmra.mxu0 %v815
        %v938 = vpop.f32.mrf.mxu0
        %v939 = vadd.f32 0.0, %v938
        %v940 = vpop.f32.mrf.mxu0
        %941 = vmatprep.mubr.f32.mxu0 0.0
        %942 = vmatmul.mubr.f32.gmra.mxu0 %v818
        %v943 = vpop.f32.mrf.mxu0
        %v944 = vadd.f32 0.0, %v943
        %v945 = vpop.f32.mrf.mxu0
        %946 = vmatprep.mubr.f32.mxu0 0.0
        %947 = vmatmul.mubr.f32.gmra.mxu0 %v821
        %v948 = vpop.f32.mrf.mxu0
        %v949 = vadd.f32 0.0, %v948
        %v950 = vpop.f32.mrf.mxu0
        %951 = vmatprep.mubr.f32.mxu0 0.0
        %952 = vmatmul.mubr.f32.gmra.mxu0 %v824
        %v953 = vpop.f32.mrf.mxu0
        %v954 = vadd.f32 0.0, %v953
        %v955 = vpop.f32.mrf.mxu0
        %956 = vmatprep.mubr.f32.mxu0 0.0
        %957 = vmatmul.mubr.f32.gmra.mxu0 %v827
        %v958 = vpop.f32.mrf.mxu0
        %v959 = vadd.f32 0.0, %v958
        %v960 = vpop.f32.mrf.mxu0
        %961 = vmatprep.mubr.f32.mxu0 0.0
        %962 = vmatmul.mubr.f32.gmra.mxu0 %v830
        %v963 = vpop.f32.mrf.mxu0
        %v964 = vadd.f32 0.0, %v963
        %v965 = vpop.f32.mrf.mxu0
        %966 = vmatprep.mubr.f32.mxu0 0.0
        %967 = vmatmul.mubr.f32.gmra.mxu0 %v833
        %v968 = vpop.f32.mrf.mxu0
        %v969 = vadd.f32 0.0, %v968
        %v970 = vpop.f32.mrf.mxu0
        %971 = vmatprep.mubr.f32.mxu0 0.0
        %972 = vmatmul.mubr.f32.gmra.mxu0 %v836
        %v973 = vpop.f32.mrf.mxu0
        %v974 = vadd.f32 0.0, %v973
        %v975 = vpop.f32.mrf.mxu0
        %976 = vmatprep.mubr.f32.mxu0 0.0
        %977 = vmatmul.mubr.f32.gmra.mxu0 %v839
        %v978 = vpop.f32.mrf.mxu0
        %v979 = vadd.f32 0.0, %v978
        %v980 = vpop.f32.mrf.mxu0
        %981 = vmatprep.mubr.f32.mxu0 0.0
        %982 = vmatmul.mubr.f32.gmra.mxu0 %v842
        %v983 = vpop.f32.mrf.mxu0
        %v984 = vadd.f32 0.0, %v983
        %v985 = vpop.f32.mrf.mxu0
        %986 = vmatprep.mubr.f32.mxu0 0.0
        %987 = vmatmul.mubr.f32.gmra.mxu0 %v845
        %v988 = vpop.f32.mrf.mxu0
        %v989 = vadd.f32 0.0, %v988
        %v990 = vpop.f32.mrf.mxu0
        %991 = vmatprep.mubr.f32.mxu0 0.0
        %992 = vmatmul.mubr.f32.gmra.mxu0 %v848
        %v993 = vpop.f32.mrf.mxu0
        %v994 = vadd.f32 0.0, %v993
        %v995 = vpop.f32.mrf.mxu0
        %996 = vmatprep.mubr.f32.mxu0 0.0
        %997 = vmatmul.mubr.f32.gmra.mxu0 %v851
        %v998 = vpop.f32.mrf.mxu0
        %v999 = vadd.f32 0.0, %v998
        %v1000 = vpop.f32.mrf.mxu0
        %1001 = vdwg.mxu0
        %1018 = vrot.lane.b32.xlu0 %v924, 112
        %v1019 = vpop.permute.xlu0 %1018
        %1020 = vrot.lane.b32.xlu0 %v929, 112
        %v1021 = vpop.permute.xlu0 %1020
        %1022 = vrot.lane.b32.xlu0 %v934, 112
        %v1023 = vpop.permute.xlu0 %1022
        %1024 = vrot.lane.b32.xlu0 %v939, 112
        %v1025 = vpop.permute.xlu0 %1024
        %1026 = vrot.lane.b32.xlu0 %v944, 112
        %v1027 = vpop.permute.xlu0 %1026
        %1028 = vrot.lane.b32.xlu0 %v949, 112
        %v1029 = vpop.permute.xlu0 %1028
        %1030 = vrot.lane.b32.xlu0 %v954, 112
        %v1031 = vpop.permute.xlu0 %1030
        %1032 = vrot.lane.b32.xlu0 %v959, 112
        %v1033 = vpop.permute.xlu0 %1032
        %1034 = vrot.lane.b32.xlu0 %v964, 112
        %v1035 = vpop.permute.xlu0 %1034
        %1036 = vrot.lane.b32.xlu0 %v969, 112
        %v1037 = vpop.permute.xlu0 %1036
        %1038 = vrot.lane.b32.xlu0 %v974, 112
        %v1039 = vpop.permute.xlu0 %1038
        %1040 = vrot.lane.b32.xlu0 %v979, 112
        %v1041 = vpop.permute.xlu0 %1040
        %1042 = vrot.lane.b32.xlu0 %v984, 112
        %v1043 = vpop.permute.xlu0 %1042
        %1044 = vrot.lane.b32.xlu0 %v989, 112
        %v1045 = vpop.permute.xlu0 %1044
        %1046 = vrot.lane.b32.xlu0 %v994, 112
        %v1047 = vpop.permute.xlu0 %1046
        %1048 = vrot.lane.b32.xlu0 %v999, 112
        %v1049 = vpop.permute.xlu0 %1048
        %vm1050 = vcmask 64512
        %v1051 = vsel %vm1050, %v924, 0
        %v1053 = vsel %vm1050, %v929, 0
        %v1055 = vsel %vm1050, %v934, 0
        %v1057 = vsel %vm1050, %v939, 0
        %v1059 = vsel %vm1050, %v944, 0
        %v1061 = vsel %vm1050, %v949, 0
        %v1063 = vsel %vm1050, %v954, 0
        %v1065 = vsel %vm1050, %v959, 0
        %v1067 = vsel %vm1050, %v964, 0
        %v1069 = vsel %vm1050, %v969, 0
        %v1071 = vsel %vm1050, %v974, 0
        %v1073 = vsel %vm1050, %v979, 0
        %v1075 = vsel %vm1050, %v984, 0
        %v1077 = vsel %vm1050, %v989, 0
        %v1079 = vsel %vm1050, %v994, 0
        %v1081 = vsel %vm1050, %v999, 0
        %v1083 = vsel %vm1050, %v1019, 0
        %v1085 = vsel %vm1050, %v1021, 0
        %v1087 = vsel %vm1050, %v1023, 0
        %v1089 = vsel %vm1050, %v1025, 0
        %v1091 = vsel %vm1050, %v1027, 0
        %v1093 = vsel %vm1050, %v1029, 0
        %v1095 = vsel %vm1050, %v1031, 0
        %v1097 = vsel %vm1050, %v1033, 0
        %v1099 = vsel %vm1050, %v1035, 0
        %v1101 = vsel %vm1050, %v1037, 0
        %v1103 = vsel %vm1050, %v1039, 0
        %v1105 = vsel %vm1050, %v1041, 0
        %v1107 = vsel %vm1050, %v1043, 0
        %v1109 = vsel %vm1050, %v1045, 0
        %v1111 = vsel %vm1050, %v1047, 0
        %v1113 = vsel %vm1050, %v1049, 0
        %1115 = vmatprep.subr.mxu0 0.0
        %1116 = vmatpush1.xpose.msra.mxu0 %v1113
        %1117 = vmatprep.subr.mxu0 0.0
        %1118 = vmatpush1.xpose.msra.mxu0 %v1111
        %1119 = vmatprep.subr.mxu0 0.0
        %1120 = vmatpush1.xpose.msra.mxu0 %v1109
        %1121 = vmatprep.subr.mxu0 0.0
        %1122 = vmatpush1.xpose.msra.mxu0 %v1107
        %1123 = vmatprep.subr.mxu0 0.0
        %1124 = vmatpush1.xpose.msra.mxu0 %v1105
        %1125 = vmatprep.subr.mxu0 0.0
        %1126 = vmatpush1.xpose.msra.mxu0 %v1103
        %1127 = vmatprep.subr.mxu0 0.0
        %1128 = vmatpush1.xpose.msra.mxu0 %v1101
        %1129 = vmatprep.subr.mxu0 0.0
        %1130 = vmatpush1.xpose.msra.mxu0 %v1099
        %1131 = vmatprep.subr.mxu0 0.0
        %1132 = vmatpush1.xpose.msra.mxu0 %v1097
        %1133 = vmatprep.subr.mxu0 0.0
        %1134 = vmatpush1.xpose.msra.mxu0 %v1095
        %1135 = vmatprep.subr.mxu0 0.0
        %1136 = vmatpush1.xpose.msra.mxu0 %v1093
        %1137 = vmatprep.subr.mxu0 0.0
        %1138 = vmatpush1.xpose.msra.mxu0 %v1091
        %1139 = vmatprep.subr.mxu0 0.0
        %1140 = vmatpush1.xpose.msra.mxu0 %v1089
        %1141 = vmatprep.subr.mxu0 0.0
        %1142 = vmatpush1.xpose.msra.mxu0 %v1087
        %1143 = vmatprep.subr.mxu0 0.0
        %1144 = vmatpush1.xpose.msra.mxu0 %v1085
        %1145 = vmatprep.subr.mxu0 0.0
        %1146 = vmatpush1.xpose.msra.mxu0 %v1083
        %1147 = vmatprep.subr.mxu0 0.0
        %1148 = vmatpush2.xpose.msra.mxu0 0.0
        %1149 = vmatprep.subr.mxu0 0.0
        %1150 = vmatpush2.xpose.msra.mxu0 0.0
        %1151 = vmatprep.subr.mxu0 0.0
        %1152 = vmatpush2.xpose.msra.mxu0 0.0
        %1153 = vmatprep.subr.mxu0 0.0
        %1154 = vmatpush2.xpose.msra.mxu0 0.0
        %1155 = vmatprep.subr.mxu0 0.0
        %1156 = vmatpush2.xpose.msra.mxu0 0.0
        %1157 = vmatprep.subr.mxu0 0.0
        %1158 = vmatpush2.xpose.msra.mxu0 0.0
        %1159 = vmatprep.subr.mxu0 0.0
        %1160 = vmatpush2.xpose.msra.mxu0 0.0
        %1161 = vmatprep.subr.mxu0 0.0
        %1162 = vmatpush2.xpose.msra.mxu0 0.0
        %1163 = vmatprep.subr.mxu0 0.0
        %1164 = vmatpush2.xpose.msra.mxu0 0.0
        %1165 = vmatprep.subr.mxu0 0.0
        %1166 = vmatpush2.xpose.msra.mxu0 0.0
        %1167 = vmatprep.subr.mxu0 0.0
        %1168 = vmatpush2.xpose.msra.mxu0 0.0
        %1169 = vmatprep.subr.mxu0 0.0
        %1170 = vmatpush2.xpose.msra.mxu0 0.0
        %1171 = vmatprep.subr.mxu0 0.0
        %1172 = vmatpush2.xpose.msra.mxu0 0.0
        %1173 = vmatprep.subr.mxu0 0.0
        %1174 = vmatpush2.xpose.msra.mxu0 0.0
        %1175 = vmatprep.subr.mxu0 0.0
        %1176 = vmatpush2.xpose.msra.mxu0 0.0
        %1177 = vmatprep.subr.mxu0 0.0
        %1178 = vmatpush2.xpose.msra.mxu0 0.0
        %1179 = vmatprep.mubr.f32.mxu0 0.0
        %1180 = vmatmul.mubr.f32.gmra.mxu0 %v1051
        %v1181 = vpop.f32.mrf.mxu0
        %v1182 = vadd.f32 %v334, %v1181
        %v1183 = vpop.f32.mrf.mxu0
        %1184 = vmatprep.mubr.f32.mxu0 0.0
        %1185 = vmatmul.mubr.f32.gmra.mxu0 %v1053
        %v1186 = vpop.f32.mrf.mxu0
        %v1187 = vadd.f32 %v335, %v1186
        %v1188 = vpop.f32.mrf.mxu0
        %1189 = vmatprep.mubr.f32.mxu0 0.0
        %1190 = vmatmul.mubr.f32.gmra.mxu0 %v1055
        %v1191 = vpop.f32.mrf.mxu0
        %v1192 = vadd.f32 %v336, %v1191
        %v1193 = vpop.f32.mrf.mxu0
        %1194 = vmatprep.mubr.f32.mxu0 0.0
        %1195 = vmatmul.mubr.f32.gmra.mxu0 %v1057
        %v1196 = vpop.f32.mrf.mxu0
        %v1197 = vadd.f32 %v337, %v1196
        %v1198 = vpop.f32.mrf.mxu0
        %1199 = vmatprep.mubr.f32.mxu0 0.0
        %1200 = vmatmul.mubr.f32.gmra.mxu0 %v1059
        %v1201 = vpop.f32.mrf.mxu0
        %v1202 = vadd.f32 %v338, %v1201
        %v1203 = vpop.f32.mrf.mxu0
        %1204 = vmatprep.mubr.f32.mxu0 0.0
        %1205 = vmatmul.mubr.f32.gmra.mxu0 %v1061
        %v1206 = vpop.f32.mrf.mxu0
        %v1207 = vadd.f32 %v339, %v1206
        %v1208 = vpop.f32.mrf.mxu0
        %1209 = vmatprep.mubr.f32.mxu0 0.0
        %1210 = vmatmul.mubr.f32.gmra.mxu0 %v1063
        %v1211 = vpop.f32.mrf.mxu0
        %v1212 = vadd.f32 %v340, %v1211
        %v1213 = vpop.f32.mrf.mxu0
        %1214 = vmatprep.mubr.f32.mxu0 0.0
        %1215 = vmatmul.mubr.f32.gmra.mxu0 %v1065
        %v1216 = vpop.f32.mrf.mxu0
        %v1217 = vadd.f32 %v341, %v1216
        %v1218 = vpop.f32.mrf.mxu0
        %1219 = vmatprep.mubr.f32.mxu0 0.0
        %1220 = vmatmul.mubr.f32.gmra.mxu0 %v1067
        %v1221 = vpop.f32.mrf.mxu0
        %v1222 = vadd.f32 %v342, %v1221
        %v1223 = vpop.f32.mrf.mxu0
        %1224 = vmatprep.mubr.f32.mxu0 0.0
        %1225 = vmatmul.mubr.f32.gmra.mxu0 %v1069
        %v1226 = vpop.f32.mrf.mxu0
        %v1227 = vadd.f32 %v343, %v1226
        %v1228 = vpop.f32.mrf.mxu0
        %1229 = vmatprep.mubr.f32.mxu0 0.0
        %1230 = vmatmul.mubr.f32.gmra.mxu0 %v1071
        %v1231 = vpop.f32.mrf.mxu0
        %v1232 = vadd.f32 %v344, %v1231
        %v1233 = vpop.f32.mrf.mxu0
        %1234 = vmatprep.mubr.f32.mxu0 0.0
        %1235 = vmatmul.mubr.f32.gmra.mxu0 %v1073
        %v1236 = vpop.f32.mrf.mxu0
        %v1237 = vadd.f32 %v345, %v1236
        %v1238 = vpop.f32.mrf.mxu0
        %1239 = vmatprep.mubr.f32.mxu0 0.0
        %1240 = vmatmul.mubr.f32.gmra.mxu0 %v1075
        %v1241 = vpop.f32.mrf.mxu0
        %v1242 = vadd.f32 %v346, %v1241
        %v1243 = vpop.f32.mrf.mxu0
        %1244 = vmatprep.mubr.f32.mxu0 0.0
        %1245 = vmatmul.mubr.f32.gmra.mxu0 %v1077
        %v1246 = vpop.f32.mrf.mxu0
        %v1247 = vadd.f32 %v347, %v1246
        %v1248 = vpop.f32.mrf.mxu0
        %1249 = vmatprep.mubr.f32.mxu0 0.0
        %1250 = vmatmul.mubr.f32.gmra.mxu0 %v1079
        %v1251 = vpop.f32.mrf.mxu0
        %v1252 = vadd.f32 %v348, %v1251
        %v1253 = vpop.f32.mrf.mxu0
        %1254 = vmatprep.mubr.f32.mxu0 0.0
        %1255 = vmatmul.mubr.f32.gmra.mxu0 %v1081
        %v1256 = vpop.f32.mrf.mxu0
        %v1257 = vadd.f32 %v349, %v1256
        %v1258 = vpop.f32.mrf.mxu0
        %1259 = vdwg.mxu0
        %1260 = vmax.xlane.f32.xlu0 %v1182
        %v1261 = vpop.xlane.xlu0 %1260
        %1262 = vmax.xlane.f32.xlu0 %v1187
        %v1263 = vpop.xlane.xlu0 %1262
        %1264 = vmax.xlane.f32.xlu0 %v1192
        %v1265 = vpop.xlane.xlu0 %1264
        %1266 = vmax.xlane.f32.xlu0 %v1197
        %v1267 = vpop.xlane.xlu0 %1266
        %1268 = vmax.xlane.f32.xlu0 %v1202
        %v1269 = vpop.xlane.xlu0 %1268
        %1270 = vmax.xlane.f32.xlu0 %v1207
        %v1271 = vpop.xlane.xlu0 %1270
        %1272 = vmax.xlane.f32.xlu0 %v1212
        %v1273 = vpop.xlane.xlu0 %1272
        %1274 = vmax.xlane.f32.xlu0 %v1217
        %v1275 = vpop.xlane.xlu0 %1274
        %1276 = vmax.xlane.f32.xlu0 %v1222
        %v1277 = vpop.xlane.xlu0 %1276
        %1278 = vmax.xlane.f32.xlu0 %v1227
        %v1279 = vpop.xlane.xlu0 %1278
        %1280 = vmax.xlane.f32.xlu0 %v1232
        %v1281 = vpop.xlane.xlu0 %1280
        %1282 = vmax.xlane.f32.xlu0 %v1237
        %v1283 = vpop.xlane.xlu0 %1282
        %1284 = vmax.xlane.f32.xlu0 %v1242
        %v1285 = vpop.xlane.xlu0 %1284
        %1286 = vmax.xlane.f32.xlu0 %v1247
        %v1287 = vpop.xlane.xlu0 %1286
        %1288 = vmax.xlane.f32.xlu0 %v1252
        %v1289 = vpop.xlane.xlu0 %1288
        %1290 = vmax.xlane.f32.xlu0 %v1257
        %v1291 = vpop.xlane.xlu0 %1290
        %v1292 = vsub.f32 %v1182, %v1261
        %v1293 = vsub.f32 %v1187, %v1263
        %v1294 = vsub.f32 %v1192, %v1265
        %v1295 = vsub.f32 %v1197, %v1267
        %v1296 = vsub.f32 %v1202, %v1269
        %v1297 = vsub.f32 %v1207, %v1271
        %v1298 = vsub.f32 %v1212, %v1273
        %v1299 = vsub.f32 %v1217, %v1275
        %v1300 = vsub.f32 %v1222, %v1277
        %v1301 = vsub.f32 %v1227, %v1279
        %v1302 = vsub.f32 %v1232, %v1281
        %v1303 = vsub.f32 %v1237, %v1283
        %v1304 = vsub.f32 %v1242, %v1285
        %v1305 = vsub.f32 %v1247, %v1287
        %v1306 = vsub.f32 %v1252, %v1289
        %v1307 = vsub.f32 %v1257, %v1291
        %v1308 = vmul.f32 %v1292, 1.442695
        %v1309 = vpow.pop %v1308
        %v1310 = vmul.f32 %v1293, 1.442695
        %v1311 = vpow.pop %v1310
        %v1312 = vmul.f32 %v1294, 1.442695
        %v1313 = vpow.pop %v1312
        %v1314 = vmul.f32 %v1295, 1.442695
        %v1315 = vpow.pop %v1314
        %v1316 = vmul.f32 %v1296, 1.442695
        %v1317 = vpow.pop %v1316
        %v1318 = vmul.f32 %v1297, 1.442695
        %v1319 = vpow.pop %v1318
        %v1320 = vmul.f32 %v1298, 1.442695
        %v1321 = vpow.pop %v1320
        %v1322 = vmul.f32 %v1299, 1.442695
        %v1323 = vpow.pop %v1322
        %v1324 = vmul.f32 %v1300, 1.442695
        %v1325 = vpow.pop %v1324
        %v1326 = vmul.f32 %v1301, 1.442695
        %v1327 = vpow.pop %v1326
        %v1328 = vmul.f32 %v1302, 1.442695
        %v1329 = vpow.pop %v1328
        %v1330 = vmul.f32 %v1303, 1.442695
        %v1331 = vpow.pop %v1330
        %v1332 = vmul.f32 %v1304, 1.442695
        %v1333 = vpow.pop %v1332
        %v1334 = vmul.f32 %v1305, 1.442695
        %v1335 = vpow.pop %v1334
        %v1336 = vmul.f32 %v1306, 1.442695
        %v1337 = vpow.pop %v1336
        %v1338 = vmul.f32 %v1307, 1.442695
        %v1339 = vpow.pop %v1338
        %1340 = vadd.xlane.f32.xlu0 %v1309
        %v1341 = vpop.xlane.xlu0 %1340
        %1342 = vadd.xlane.f32.xlu0 %v1311
        %v1343 = vpop.xlane.xlu0 %1342
        %1344 = vadd.xlane.f32.xlu0 %v1313
        %v1345 = vpop.xlane.xlu0 %1344
        %1346 = vadd.xlane.f32.xlu0 %v1315
        %v1347 = vpop.xlane.xlu0 %1346
        %1348 = vadd.xlane.f32.xlu0 %v1317
        %v1349 = vpop.xlane.xlu0 %1348
        %1350 = vadd.xlane.f32.xlu0 %v1319
        %v1351 = vpop.xlane.xlu0 %1350
        %1352 = vadd.xlane.f32.xlu0 %v1321
        %v1353 = vpop.xlane.xlu0 %1352
        %1354 = vadd.xlane.f32.xlu0 %v1323
        %v1355 = vpop.xlane.xlu0 %1354
        %1356 = vadd.xlane.f32.xlu0 %v1325
        %v1357 = vpop.xlane.xlu0 %1356
        %1358 = vadd.xlane.f32.xlu0 %v1327
        %v1359 = vpop.xlane.xlu0 %1358
        %1360 = vadd.xlane.f32.xlu0 %v1329
        %v1361 = vpop.xlane.xlu0 %1360
        %1362 = vadd.xlane.f32.xlu0 %v1331
        %v1363 = vpop.xlane.xlu0 %1362
        %1364 = vadd.xlane.f32.xlu0 %v1333
        %v1365 = vpop.xlane.xlu0 %1364
        %1366 = vadd.xlane.f32.xlu0 %v1335
        %v1367 = vpop.xlane.xlu0 %1366
        %1368 = vadd.xlane.f32.xlu0 %v1337
        %v1369 = vpop.xlane.xlu0 %1368
        %1370 = vadd.xlane.f32.xlu0 %v1339
        %v1371 = vpop.xlane.xlu0 %1370
        %v1372 = vrcp.pop %v1341
        %v1373 = vrcp.pop %v1343
        %v1374 = vrcp.pop %v1345
        %v1375 = vrcp.pop %v1347
        %v1376 = vrcp.pop %v1349
        %v1377 = vrcp.pop %v1351
        %v1378 = vrcp.pop %v1353
        %v1379 = vrcp.pop %v1355
        %v1380 = vrcp.pop %v1357
        %v1381 = vrcp.pop %v1359
        %v1382 = vrcp.pop %v1361
        %v1383 = vrcp.pop %v1363
        %v1384 = vrcp.pop %v1365
        %v1385 = vrcp.pop %v1367
        %v1386 = vrcp.pop %v1369
        %v1387 = vrcp.pop %v1371
        %v1388 = vmul.f32 %v1309, %v1372
        %v1389 = vmul.f32 %v1311, %v1373
        %v1390 = vmul.f32 %v1313, %v1374
        %v1391 = vmul.f32 %v1315, %v1375
        %v1392 = vmul.f32 %v1317, %v1376
        %v1393 = vmul.f32 %v1319, %v1377
        %v1394 = vmul.f32 %v1321, %v1378
        %v1395 = vmul.f32 %v1323, %v1379
        %v1396 = vmul.f32 %v1325, %v1380
        %v1397 = vmul.f32 %v1327, %v1381
        %v1398 = vmul.f32 %v1329, %v1382
        %v1399 = vmul.f32 %v1331, %v1383
        %v1400 = vmul.f32 %v1333, %v1384
        %v1401 = vmul.f32 %v1335, %v1385
        %v1402 = vmul.f32 %v1337, %v1386
        %v1403 = vmul.f32 %v1339, %v1387
        %1404 = vrot.lane.b32.xlu0 %v924, 96
        %v1405 = vpop.permute.xlu0 %1404
        %1406 = vrot.lane.b32.xlu0 %v929, 96
        %v1407 = vpop.permute.xlu0 %1406
        %1408 = vrot.lane.b32.xlu0 %v934, 96
        %v1409 = vpop.permute.xlu0 %1408
        %1410 = vrot.lane.b32.xlu0 %v939, 96
        %v1411 = vpop.permute.xlu0 %1410
        %1412 = vrot.lane.b32.xlu0 %v944, 96
        %v1413 = vpop.permute.xlu0 %1412
        %1414 = vrot.lane.b32.xlu0 %v949, 96
        %v1415 = vpop.permute.xlu0 %1414
        %1416 = vrot.lane.b32.xlu0 %v954, 96
        %v1417 = vpop.permute.xlu0 %1416
        %1418 = vrot.lane.b32.xlu0 %v959, 96
        %v1419 = vpop.permute.xlu0 %1418
        %1420 = vrot.lane.b32.xlu0 %v964, 96
        %v1421 = vpop.permute.xlu0 %1420
        %1422 = vrot.lane.b32.xlu0 %v969, 96
        %v1423 = vpop.permute.xlu0 %1422
        %1424 = vrot.lane.b32.xlu0 %v974, 96
        %v1425 = vpop.permute.xlu0 %1424
        %1426 = vrot.lane.b32.xlu0 %v979, 96
        %v1427 = vpop.permute.xlu0 %1426
        %1428 = vrot.lane.b32.xlu0 %v984, 96
        %v1429 = vpop.permute.xlu0 %1428
        %1430 = vrot.lane.b32.xlu0 %v989, 96
        %v1431 = vpop.permute.xlu0 %1430
        %1432 = vrot.lane.b32.xlu0 %v994, 96
        %v1433 = vpop.permute.xlu0 %1432
        %1434 = vrot.lane.b32.xlu0 %v999, 96
        %v1435 = vpop.permute.xlu0 %1434
        %1452 = vmatprep.subr.mxu0 0.0
        %1453 = vmatpush1.msra.mxu0 %v1435
        %1454 = vmatprep.subr.mxu0 0.0
        %1455 = vmatpush1.msra.mxu0 %v1433
        %1456 = vmatprep.subr.mxu0 0.0
        %1457 = vmatpush1.msra.mxu0 %v1431
        %1458 = vmatprep.subr.mxu0 0.0
        %1459 = vmatpush1.msra.mxu0 %v1429
        %1460 = vmatprep.subr.mxu0 0.0
        %1461 = vmatpush1.msra.mxu0 %v1427
        %1462 = vmatprep.subr.mxu0 0.0
        %1463 = vmatpush1.msra.mxu0 %v1425
        %1464 = vmatprep.subr.mxu0 0.0
        %1465 = vmatpush1.msra.mxu0 %v1423
        %1466 = vmatprep.subr.mxu0 0.0
        %1467 = vmatpush1.msra.mxu0 %v1421
        %1468 = vmatprep.subr.mxu0 0.0
        %1469 = vmatpush1.msra.mxu0 %v1419
        %1470 = vmatprep.subr.mxu0 0.0
        %1471 = vmatpush1.msra.mxu0 %v1417
        %1472 = vmatprep.subr.mxu0 0.0
        %1473 = vmatpush1.msra.mxu0 %v1415
        %1474 = vmatprep.subr.mxu0 0.0
        %1475 = vmatpush1.msra.mxu0 %v1413
        %1476 = vmatprep.subr.mxu0 0.0
        %1477 = vmatpush1.msra.mxu0 %v1411
        %1478 = vmatprep.subr.mxu0 0.0
        %1479 = vmatpush1.msra.mxu0 %v1409
        %1480 = vmatprep.subr.mxu0 0.0
        %1481 = vmatpush1.msra.mxu0 %v1407
        %1482 = vmatprep.subr.mxu0 0.0
        %1483 = vmatpush1.msra.mxu0 %v1405
        %1484 = vmatprep.subr.mxu0 0.0
        %1485 = vmatpush2.msra.mxu0 0.0
        %1486 = vmatprep.subr.mxu0 0.0
        %1487 = vmatpush2.msra.mxu0 0.0
        %1488 = vmatprep.subr.mxu0 0.0
        %1489 = vmatpush2.msra.mxu0 0.0
        %1490 = vmatprep.subr.mxu0 0.0
        %1491 = vmatpush2.msra.mxu0 0.0
        %1492 = vmatprep.subr.mxu0 0.0
        %1493 = vmatpush2.msra.mxu0 0.0
        %1494 = vmatprep.subr.mxu0 0.0
        %1495 = vmatpush2.msra.mxu0 0.0
        %1496 = vmatprep.subr.mxu0 0.0
        %1497 = vmatpush2.msra.mxu0 0.0
        %1498 = vmatprep.subr.mxu0 0.0
        %1499 = vmatpush2.msra.mxu0 0.0
        %1500 = vmatprep.subr.mxu0 0.0
        %1501 = vmatpush2.msra.mxu0 0.0
        %1502 = vmatprep.subr.mxu0 0.0
        %1503 = vmatpush2.msra.mxu0 0.0
        %1504 = vmatprep.subr.mxu0 0.0
        %1505 = vmatpush2.msra.mxu0 0.0
        %1506 = vmatprep.subr.mxu0 0.0
        %1507 = vmatpush2.msra.mxu0 0.0
        %1508 = vmatprep.subr.mxu0 0.0
        %1509 = vmatpush2.msra.mxu0 0.0
        %1510 = vmatprep.subr.mxu0 0.0
        %1511 = vmatpush2.msra.mxu0 0.0
        %1512 = vmatprep.subr.mxu0 0.0
        %1513 = vmatpush2.msra.mxu0 0.0
        %1514 = vmatprep.subr.mxu0 0.0
        %1515 = vmatpush2.msra.mxu0 0.0
        %1516 = vmatprep.mubr.f32.mxu0 0.0
        %1517 = vmatmul.mubr.f32.gmra.mxu0 %v1388
        %v1518 = vpop.f32.mrf.mxu0
        %v1519 = vadd.f32 0.0, %v1518
        %v1520 = vpop.f32.mrf.mxu0
        %1521 = vmatprep.mubr.f32.mxu0 0.0
        %1522 = vmatmul.mubr.f32.gmra.mxu0 %v1389
        %v1523 = vpop.f32.mrf.mxu0
        %v1524 = vadd.f32 0.0, %v1523
        %v1525 = vpop.f32.mrf.mxu0
        %1526 = vmatprep.mubr.f32.mxu0 0.0
        %1527 = vmatmul.mubr.f32.gmra.mxu0 %v1390
        %v1528 = vpop.f32.mrf.mxu0
        %v1529 = vadd.f32 0.0, %v1528
        %v1530 = vpop.f32.mrf.mxu0
        %1531 = vmatprep.mubr.f32.mxu0 0.0
        %1532 = vmatmul.mubr.f32.gmra.mxu0 %v1391
        %v1533 = vpop.f32.mrf.mxu0
        %v1534 = vadd.f32 0.0, %v1533
        %v1535 = vpop.f32.mrf.mxu0
        %1536 = vmatprep.mubr.f32.mxu0 0.0
        %1537 = vmatmul.mubr.f32.gmra.mxu0 %v1392
        %v1538 = vpop.f32.mrf.mxu0
        %v1539 = vadd.f32 0.0, %v1538
        %v1540 = vpop.f32.mrf.mxu0
        %1541 = vmatprep.mubr.f32.mxu0 0.0
        %1542 = vmatmul.mubr.f32.gmra.mxu0 %v1393
        %v1543 = vpop.f32.mrf.mxu0
        %v1544 = vadd.f32 0.0, %v1543
        %v1545 = vpop.f32.mrf.mxu0
        %1546 = vmatprep.mubr.f32.mxu0 0.0
        %1547 = vmatmul.mubr.f32.gmra.mxu0 %v1394
        %v1548 = vpop.f32.mrf.mxu0
        %v1549 = vadd.f32 0.0, %v1548
        %v1550 = vpop.f32.mrf.mxu0
        %1551 = vmatprep.mubr.f32.mxu0 0.0
        %1552 = vmatmul.mubr.f32.gmra.mxu0 %v1395
        %v1553 = vpop.f32.mrf.mxu0
        %v1554 = vadd.f32 0.0, %v1553
        %v1555 = vpop.f32.mrf.mxu0
        %1556 = vmatprep.mubr.f32.mxu0 0.0
        %1557 = vmatmul.mubr.f32.gmra.mxu0 %v1396
        %v1558 = vpop.f32.mrf.mxu0
        %v1559 = vadd.f32 0.0, %v1558
        %v1560 = vpop.f32.mrf.mxu0
        %1561 = vmatprep.mubr.f32.mxu0 0.0
        %1562 = vmatmul.mubr.f32.gmra.mxu0 %v1397
        %v1563 = vpop.f32.mrf.mxu0
        %v1564 = vadd.f32 0.0, %v1563
        %v1565 = vpop.f32.mrf.mxu0
        %1566 = vmatprep.mubr.f32.mxu0 0.0
        %1567 = vmatmul.mubr.f32.gmra.mxu0 %v1398
        %v1568 = vpop.f32.mrf.mxu0
        %v1569 = vadd.f32 0.0, %v1568
        %v1570 = vpop.f32.mrf.mxu0
        %1571 = vmatprep.mubr.f32.mxu0 0.0
        %1572 = vmatmul.mubr.f32.gmra.mxu0 %v1399
        %v1573 = vpop.f32.mrf.mxu0
        %v1574 = vadd.f32 0.0, %v1573
        %v1575 = vpop.f32.mrf.mxu0
        %1576 = vmatprep.mubr.f32.mxu0 0.0
        %1577 = vmatmul.mubr.f32.gmra.mxu0 %v1400
        %v1578 = vpop.f32.mrf.mxu0
        %v1579 = vadd.f32 0.0, %v1578
        %v1580 = vpop.f32.mrf.mxu0
        %1581 = vmatprep.mubr.f32.mxu0 0.0
        %1582 = vmatmul.mubr.f32.gmra.mxu0 %v1401
        %v1583 = vpop.f32.mrf.mxu0
        %v1584 = vadd.f32 0.0, %v1583
        %v1585 = vpop.f32.mrf.mxu0
        %1586 = vmatprep.mubr.f32.mxu0 0.0
        %1587 = vmatmul.mubr.f32.gmra.mxu0 %v1402
        %v1588 = vpop.f32.mrf.mxu0
        %v1589 = vadd.f32 0.0, %v1588
        %v1590 = vpop.f32.mrf.mxu0
        %1591 = vmatprep.mubr.f32.mxu0 0.0
        %1592 = vmatmul.mubr.f32.gmra.mxu0 %v1403
        %v1593 = vpop.f32.mrf.mxu0
        %v1594 = vadd.f32 0.0, %v1593
        %v1595 = vpop.f32.mrf.mxu0
        %1596 = vdwg.mxu0
        %1597 = vrot.lane.b32.xlu0 %v924, 120
        %v1598 = vpop.permute.xlu0 %1597
        %1599 = vrot.lane.b32.xlu0 %v929, 120
        %v1600 = vpop.permute.xlu0 %1599
        %1601 = vrot.lane.b32.xlu0 %v934, 120
        %v1602 = vpop.permute.xlu0 %1601
        %1603 = vrot.lane.b32.xlu0 %v939, 120
        %v1604 = vpop.permute.xlu0 %1603
        %1605 = vrot.lane.b32.xlu0 %v944, 120
        %v1606 = vpop.permute.xlu0 %1605
        %1607 = vrot.lane.b32.xlu0 %v949, 120
        %v1608 = vpop.permute.xlu0 %1607
        %1609 = vrot.lane.b32.xlu0 %v954, 120
        %v1610 = vpop.permute.xlu0 %1609
        %1611 = vrot.lane.b32.xlu0 %v959, 120
        %v1612 = vpop.permute.xlu0 %1611
        %1613 = vrot.lane.b32.xlu0 %v964, 120
        %v1614 = vpop.permute.xlu0 %1613
        %1615 = vrot.lane.b32.xlu0 %v969, 120
        %v1616 = vpop.permute.xlu0 %1615
        %1617 = vrot.lane.b32.xlu0 %v974, 120
        %v1618 = vpop.permute.xlu0 %1617
        %1619 = vrot.lane.b32.xlu0 %v979, 120
        %v1620 = vpop.permute.xlu0 %1619
        %1621 = vrot.lane.b32.xlu0 %v984, 120
        %v1622 = vpop.permute.xlu0 %1621
        %1623 = vrot.lane.b32.xlu0 %v989, 120
        %v1624 = vpop.permute.xlu0 %1623
        %1625 = vrot.lane.b32.xlu0 %v994, 120
        %v1626 = vpop.permute.xlu0 %1625
        %1627 = vrot.lane.b32.xlu0 %v999, 120
        %v1628 = vpop.permute.xlu0 %1627
        %1629 = vrot.lane.b32.xlu0 %v924, 104
        %v1630 = vpop.permute.xlu0 %1629
        %1631 = vrot.lane.b32.xlu0 %v929, 104
        %v1632 = vpop.permute.xlu0 %1631
        %1633 = vrot.lane.b32.xlu0 %v934, 104
        %v1634 = vpop.permute.xlu0 %1633
        %1635 = vrot.lane.b32.xlu0 %v939, 104
        %v1636 = vpop.permute.xlu0 %1635
        %1637 = vrot.lane.b32.xlu0 %v944, 104
        %v1638 = vpop.permute.xlu0 %1637
        %1639 = vrot.lane.b32.xlu0 %v949, 104
        %v1640 = vpop.permute.xlu0 %1639
        %1641 = vrot.lane.b32.xlu0 %v954, 104
        %v1642 = vpop.permute.xlu0 %1641
        %1643 = vrot.lane.b32.xlu0 %v959, 104
        %v1644 = vpop.permute.xlu0 %1643
        %1645 = vrot.lane.b32.xlu0 %v964, 104
        %v1646 = vpop.permute.xlu0 %1645
        %1647 = vrot.lane.b32.xlu0 %v969, 104
        %v1648 = vpop.permute.xlu0 %1647
        %1649 = vrot.lane.b32.xlu0 %v974, 104
        %v1650 = vpop.permute.xlu0 %1649
        %1651 = vrot.lane.b32.xlu0 %v979, 104
        %v1652 = vpop.permute.xlu0 %1651
        %1653 = vrot.lane.b32.xlu0 %v984, 104
        %v1654 = vpop.permute.xlu0 %1653
        %1655 = vrot.lane.b32.xlu0 %v989, 104
        %v1656 = vpop.permute.xlu0 %1655
        %1657 = vrot.lane.b32.xlu0 %v994, 104
        %v1658 = vpop.permute.xlu0 %1657
        %1659 = vrot.lane.b32.xlu0 %v999, 104
        %v1660 = vpop.permute.xlu0 %1659
        %v1661 = vsel %vm1050, %v1598, 0
        %v1663 = vsel %vm1050, %v1600, 0
        %v1665 = vsel %vm1050, %v1602, 0
        %v1667 = vsel %vm1050, %v1604, 0
        %v1669 = vsel %vm1050, %v1606, 0
        %v1671 = vsel %vm1050, %v1608, 0
        %v1673 = vsel %vm1050, %v1610, 0
        %v1675 = vsel %vm1050, %v1612, 0
        %v1677 = vsel %vm1050, %v1614, 0
        %v1679 = vsel %vm1050, %v1616, 0
        %v1681 = vsel %vm1050, %v1618, 0
        %v1683 = vsel %vm1050, %v1620, 0
        %v1685 = vsel %vm1050, %v1622, 0
        %v1687 = vsel %vm1050, %v1624, 0
        %v1689 = vsel %vm1050, %v1626, 0
        %v1691 = vsel %vm1050, %v1628, 0
        %v1693 = vsel %vm1050, %v1630, 0
        %v1695 = vsel %vm1050, %v1632, 0
        %v1697 = vsel %vm1050, %v1634, 0
        %v1699 = vsel %vm1050, %v1636, 0
        %v1701 = vsel %vm1050, %v1638, 0
        %v1703 = vsel %vm1050, %v1640, 0
        %v1705 = vsel %vm1050, %v1642, 0
        %v1707 = vsel %vm1050, %v1644, 0
        %v1709 = vsel %vm1050, %v1646, 0
        %v1711 = vsel %vm1050, %v1648, 0
        %v1713 = vsel %vm1050, %v1650, 0
        %v1715 = vsel %vm1050, %v1652, 0
        %v1717 = vsel %vm1050, %v1654, 0
        %v1719 = vsel %vm1050, %v1656, 0
        %v1721 = vsel %vm1050, %v1658, 0
        %v1723 = vsel %vm1050, %v1660, 0
        %1725 = vmatprep.subr.mxu0 0.0
        %1726 = vmatpush1.xpose.msra.mxu0 %v1723
        %1727 = vmatprep.subr.mxu0 0.0
        %1728 = vmatpush1.xpose.msra.mxu0 %v1721
        %1729 = vmatprep.subr.mxu0 0.0
        %1730 = vmatpush1.xpose.msra.mxu0 %v1719
        %1731 = vmatprep.subr.mxu0 0.0
        %1732 = vmatpush1.xpose.msra.mxu0 %v1717
        %1733 = vmatprep.subr.mxu0 0.0
        %1734 = vmatpush1.xpose.msra.mxu0 %v1715
        %1735 = vmatprep.subr.mxu0 0.0
        %1736 = vmatpush1.xpose.msra.mxu0 %v1713
        %1737 = vmatprep.subr.mxu0 0.0
        %1738 = vmatpush1.xpose.msra.mxu0 %v1711
        %1739 = vmatprep.subr.mxu0 0.0
        %1740 = vmatpush1.xpose.msra.mxu0 %v1709
        %1741 = vmatprep.subr.mxu0 0.0
        %1742 = vmatpush1.xpose.msra.mxu0 %v1707
        %1743 = vmatprep.subr.mxu0 0.0
        %1744 = vmatpush1.xpose.msra.mxu0 %v1705
        %1745 = vmatprep.subr.mxu0 0.0
        %1746 = vmatpush1.xpose.msra.mxu0 %v1703
        %1747 = vmatprep.subr.mxu0 0.0
        %1748 = vmatpush1.xpose.msra.mxu0 %v1701
        %1749 = vmatprep.subr.mxu0 0.0
        %1750 = vmatpush1.xpose.msra.mxu0 %v1699
        %1751 = vmatprep.subr.mxu0 0.0
        %1752 = vmatpush1.xpose.msra.mxu0 %v1697
        %1753 = vmatprep.subr.mxu0 0.0
        %1754 = vmatpush1.xpose.msra.mxu0 %v1695
        %1755 = vmatprep.subr.mxu0 0.0
        %1756 = vmatpush1.xpose.msra.mxu0 %v1693
        %1757 = vmatprep.subr.mxu0 0.0
        %1758 = vmatpush2.xpose.msra.mxu0 0.0
        %1759 = vmatprep.subr.mxu0 0.0
        %1760 = vmatpush2.xpose.msra.mxu0 0.0
        %1761 = vmatprep.subr.mxu0 0.0
        %1762 = vmatpush2.xpose.msra.mxu0 0.0
        %1763 = vmatprep.subr.mxu0 0.0
        %1764 = vmatpush2.xpose.msra.mxu0 0.0
        %1765 = vmatprep.subr.mxu0 0.0
        %1766 = vmatpush2.xpose.msra.mxu0 0.0
        %1767 = vmatprep.subr.mxu0 0.0
        %1768 = vmatpush2.xpose.msra.mxu0 0.0
        %1769 = vmatprep.subr.mxu0 0.0
        %1770 = vmatpush2.xpose.msra.mxu0 0.0
        %1771 = vmatprep.subr.mxu0 0.0
        %1772 = vmatpush2.xpose.msra.mxu0 0.0
        %1773 = vmatprep.subr.mxu0 0.0
        %1774 = vmatpush2.xpose.msra.mxu0 0.0
        %1775 = vmatprep.subr.mxu0 0.0
        %1776 = vmatpush2.xpose.msra.mxu0 0.0
        %1777 = vmatprep.subr.mxu0 0.0
        %1778 = vmatpush2.xpose.msra.mxu0 0.0
        %1779 = vmatprep.subr.mxu0 0.0
        %1780 = vmatpush2.xpose.msra.mxu0 0.0
        %1781 = vmatprep.subr.mxu0 0.0
        %1782 = vmatpush2.xpose.msra.mxu0 0.0
        %1783 = vmatprep.subr.mxu0 0.0
        %1784 = vmatpush2.xpose.msra.mxu0 0.0
        %1785 = vmatprep.subr.mxu0 0.0
        %1786 = vmatpush2.xpose.msra.mxu0 0.0
        %1787 = vmatprep.subr.mxu0 0.0
        %1788 = vmatpush2.xpose.msra.mxu0 0.0
        %1789 = vmatprep.mubr.f32.mxu0 0.0
        %1790 = vmatmul.mubr.f32.gmra.mxu0 %v1661
        %v1791 = vpop.f32.mrf.mxu0
        %v1792 = vadd.f32 %v334, %v1791
        %v1793 = vpop.f32.mrf.mxu0
        %1794 = vmatprep.mubr.f32.mxu0 0.0
        %1795 = vmatmul.mubr.f32.gmra.mxu0 %v1663
        %v1796 = vpop.f32.mrf.mxu0
        %v1797 = vadd.f32 %v335, %v1796
        %v1798 = vpop.f32.mrf.mxu0
        %1799 = vmatprep.mubr.f32.mxu0 0.0
        %1800 = vmatmul.mubr.f32.gmra.mxu0 %v1665
        %v1801 = vpop.f32.mrf.mxu0
        %v1802 = vadd.f32 %v336, %v1801
        %v1803 = vpop.f32.mrf.mxu0
        %1804 = vmatprep.mubr.f32.mxu0 0.0
        %1805 = vmatmul.mubr.f32.gmra.mxu0 %v1667
        %v1806 = vpop.f32.mrf.mxu0
        %v1807 = vadd.f32 %v337, %v1806
        %v1808 = vpop.f32.mrf.mxu0
        %1809 = vmatprep.mubr.f32.mxu0 0.0
        %1810 = vmatmul.mubr.f32.gmra.mxu0 %v1669
        %v1811 = vpop.f32.mrf.mxu0
        %v1812 = vadd.f32 %v338, %v1811
        %v1813 = vpop.f32.mrf.mxu0
        %1814 = vmatprep.mubr.f32.mxu0 0.0
        %1815 = vmatmul.mubr.f32.gmra.mxu0 %v1671
        %v1816 = vpop.f32.mrf.mxu0
        %v1817 = vadd.f32 %v339, %v1816
        %v1818 = vpop.f32.mrf.mxu0
        %1819 = vmatprep.mubr.f32.mxu0 0.0
        %1820 = vmatmul.mubr.f32.gmra.mxu0 %v1673
        %v1821 = vpop.f32.mrf.mxu0
        %v1822 = vadd.f32 %v340, %v1821
        %v1823 = vpop.f32.mrf.mxu0
        %1824 = vmatprep.mubr.f32.mxu0 0.0
        %1825 = vmatmul.mubr.f32.gmra.mxu0 %v1675
        %v1826 = vpop.f32.mrf.mxu0
        %v1827 = vadd.f32 %v341, %v1826
        %v1828 = vpop.f32.mrf.mxu0
        %1829 = vmatprep.mubr.f32.mxu0 0.0
        %1830 = vmatmul.mubr.f32.gmra.mxu0 %v1677
        %v1831 = vpop.f32.mrf.mxu0
        %v1832 = vadd.f32 %v342, %v1831
        %v1833 = vpop.f32.mrf.mxu0
        %1834 = vmatprep.mubr.f32.mxu0 0.0
        %1835 = vmatmul.mubr.f32.gmra.mxu0 %v1679
        %v1836 = vpop.f32.mrf.mxu0
        %v1837 = vadd.f32 %v343, %v1836
        %v1838 = vpop.f32.mrf.mxu0
        %1839 = vmatprep.mubr.f32.mxu0 0.0
        %1840 = vmatmul.mubr.f32.gmra.mxu0 %v1681
        %v1841 = vpop.f32.mrf.mxu0
        %v1842 = vadd.f32 %v344, %v1841
        %v1843 = vpop.f32.mrf.mxu0
        %1844 = vmatprep.mubr.f32.mxu0 0.0
        %1845 = vmatmul.mubr.f32.gmra.mxu0 %v1683
        %v1846 = vpop.f32.mrf.mxu0
        %v1847 = vadd.f32 %v345, %v1846
        %v1848 = vpop.f32.mrf.mxu0
        %1849 = vmatprep.mubr.f32.mxu0 0.0
        %1850 = vmatmul.mubr.f32.gmra.mxu0 %v1685
        %v1851 = vpop.f32.mrf.mxu0
        %v1852 = vadd.f32 %v346, %v1851
        %v1853 = vpop.f32.mrf.mxu0
        %1854 = vmatprep.mubr.f32.mxu0 0.0
        %1855 = vmatmul.mubr.f32.gmra.mxu0 %v1687
        %v1856 = vpop.f32.mrf.mxu0
        %v1857 = vadd.f32 %v347, %v1856
        %v1858 = vpop.f32.mrf.mxu0
        %1859 = vmatprep.mubr.f32.mxu0 0.0
        %1860 = vmatmul.mubr.f32.gmra.mxu0 %v1689
        %v1861 = vpop.f32.mrf.mxu0
        %v1862 = vadd.f32 %v348, %v1861
        %v1863 = vpop.f32.mrf.mxu0
        %1864 = vmatprep.mubr.f32.mxu0 0.0
        %1865 = vmatmul.mubr.f32.gmra.mxu0 %v1691
        %v1866 = vpop.f32.mrf.mxu0
        %v1867 = vadd.f32 %v349, %v1866
        %v1868 = vpop.f32.mrf.mxu0
        %1869 = vdwg.mxu0
        %1870 = vmax.xlane.f32.xlu0 %v1792
        %v1871 = vpop.xlane.xlu0 %1870
        %1872 = vmax.xlane.f32.xlu0 %v1797
        %v1873 = vpop.xlane.xlu0 %1872
        %1874 = vmax.xlane.f32.xlu0 %v1802
        %v1875 = vpop.xlane.xlu0 %1874
        %1876 = vmax.xlane.f32.xlu0 %v1807
        %v1877 = vpop.xlane.xlu0 %1876
        %1878 = vmax.xlane.f32.xlu0 %v1812
        %v1879 = vpop.xlane.xlu0 %1878
        %1880 = vmax.xlane.f32.xlu0 %v1817
        %v1881 = vpop.xlane.xlu0 %1880
        %1882 = vmax.xlane.f32.xlu0 %v1822
        %v1883 = vpop.xlane.xlu0 %1882
        %1884 = vmax.xlane.f32.xlu0 %v1827
        %v1885 = vpop.xlane.xlu0 %1884
        %1886 = vmax.xlane.f32.xlu0 %v1832
        %v1887 = vpop.xlane.xlu0 %1886
        %1888 = vmax.xlane.f32.xlu0 %v1837
        %v1889 = vpop.xlane.xlu0 %1888
        %1890 = vmax.xlane.f32.xlu0 %v1842
        %v1891 = vpop.xlane.xlu0 %1890
        %1892 = vmax.xlane.f32.xlu0 %v1847
        %v1893 = vpop.xlane.xlu0 %1892
        %1894 = vmax.xlane.f32.xlu0 %v1852
        %v1895 = vpop.xlane.xlu0 %1894
        %1896 = vmax.xlane.f32.xlu0 %v1857
        %v1897 = vpop.xlane.xlu0 %1896
        %1898 = vmax.xlane.f32.xlu0 %v1862
        %v1899 = vpop.xlane.xlu0 %1898
        %1900 = vmax.xlane.f32.xlu0 %v1867
        %v1901 = vpop.xlane.xlu0 %1900
        %v1902 = vsub.f32 %v1792, %v1871
        %v1903 = vsub.f32 %v1797, %v1873
        %v1904 = vsub.f32 %v1802, %v1875
        %v1905 = vsub.f32 %v1807, %v1877
        %v1906 = vsub.f32 %v1812, %v1879
        %v1907 = vsub.f32 %v1817, %v1881
        %v1908 = vsub.f32 %v1822, %v1883
        %v1909 = vsub.f32 %v1827, %v1885
        %v1910 = vsub.f32 %v1832, %v1887
        %v1911 = vsub.f32 %v1837, %v1889
        %v1912 = vsub.f32 %v1842, %v1891
        %v1913 = vsub.f32 %v1847, %v1893
        %v1914 = vsub.f32 %v1852, %v1895
        %v1915 = vsub.f32 %v1857, %v1897
        %v1916 = vsub.f32 %v1862, %v1899
        %v1917 = vsub.f32 %v1867, %v1901
        %v1918 = vmul.f32 %v1902, 1.442695
        %v1919 = vpow.pop %v1918
        %v1920 = vmul.f32 %v1903, 1.442695
        %v1921 = vpow.pop %v1920
        %v1922 = vmul.f32 %v1904, 1.442695
        %v1923 = vpow.pop %v1922
        %v1924 = vmul.f32 %v1905, 1.442695
        %v1925 = vpow.pop %v1924
        %v1926 = vmul.f32 %v1906, 1.442695
        %v1927 = vpow.pop %v1926
        %v1928 = vmul.f32 %v1907, 1.442695
        %v1929 = vpow.pop %v1928
        %v1930 = vmul.f32 %v1908, 1.442695
        %v1931 = vpow.pop %v1930
        %v1932 = vmul.f32 %v1909, 1.442695
        %v1933 = vpow.pop %v1932
        %v1934 = vmul.f32 %v1910, 1.442695
        %v1935 = vpow.pop %v1934
        %v1936 = vmul.f32 %v1911, 1.442695
        %v1937 = vpow.pop %v1936
        %v1938 = vmul.f32 %v1912, 1.442695
        %v1939 = vpow.pop %v1938
        %v1940 = vmul.f32 %v1913, 1.442695
        %v1941 = vpow.pop %v1940
        %v1942 = vmul.f32 %v1914, 1.442695
        %v1943 = vpow.pop %v1942
        %v1944 = vmul.f32 %v1915, 1.442695
        %v1945 = vpow.pop %v1944
        %v1946 = vmul.f32 %v1916, 1.442695
        %v1947 = vpow.pop %v1946
        %v1948 = vmul.f32 %v1917, 1.442695
        %v1949 = vpow.pop %v1948
        %1950 = vadd.xlane.f32.xlu0 %v1919
        %v1951 = vpop.xlane.xlu0 %1950
        %1952 = vadd.xlane.f32.xlu0 %v1921
        %v1953 = vpop.xlane.xlu0 %1952
        %1954 = vadd.xlane.f32.xlu0 %v1923
        %v1955 = vpop.xlane.xlu0 %1954
        %1956 = vadd.xlane.f32.xlu0 %v1925
        %v1957 = vpop.xlane.xlu0 %1956
        %1958 = vadd.xlane.f32.xlu0 %v1927
        %v1959 = vpop.xlane.xlu0 %1958
        %1960 = vadd.xlane.f32.xlu0 %v1929
        %v1961 = vpop.xlane.xlu0 %1960
        %1962 = vadd.xlane.f32.xlu0 %v1931
        %v1963 = vpop.xlane.xlu0 %1962
        %1964 = vadd.xlane.f32.xlu0 %v1933
        %v1965 = vpop.xlane.xlu0 %1964
        %1966 = vadd.xlane.f32.xlu0 %v1935
        %v1967 = vpop.xlane.xlu0 %1966
        %1968 = vadd.xlane.f32.xlu0 %v1937
        %v1969 = vpop.xlane.xlu0 %1968
        %1970 = vadd.xlane.f32.xlu0 %v1939
        %v1971 = vpop.xlane.xlu0 %1970
        %1972 = vadd.xlane.f32.xlu0 %v1941
        %v1973 = vpop.xlane.xlu0 %1972
        %1974 = vadd.xlane.f32.xlu0 %v1943
        %v1975 = vpop.xlane.xlu0 %1974
        %1976 = vadd.xlane.f32.xlu0 %v1945
        %v1977 = vpop.xlane.xlu0 %1976
        %1978 = vadd.xlane.f32.xlu0 %v1947
        %v1979 = vpop.xlane.xlu0 %1978
        %1980 = vadd.xlane.f32.xlu0 %v1949
        %v1981 = vpop.xlane.xlu0 %1980
        %v1982 = vrcp.pop %v1951
        %v1983 = vrcp.pop %v1953
        %v1984 = vrcp.pop %v1955
        %v1985 = vrcp.pop %v1957
        %v1986 = vrcp.pop %v1959
        %v1987 = vrcp.pop %v1961
        %v1988 = vrcp.pop %v1963
        %v1989 = vrcp.pop %v1965
        %v1990 = vrcp.pop %v1967
        %v1991 = vrcp.pop %v1969
        %v1992 = vrcp.pop %v1971
        %v1993 = vrcp.pop %v1973
        %v1994 = vrcp.pop %v1975
        %v1995 = vrcp.pop %v1977
        %v1996 = vrcp.pop %v1979
        %v1997 = vrcp.pop %v1981
        %v1998 = vmul.f32 %v1919, %v1982
        %v1999 = vmul.f32 %v1921, %v1983
        %v2000 = vmul.f32 %v1923, %v1984
        %v2001 = vmul.f32 %v1925, %v1985
        %v2002 = vmul.f32 %v1927, %v1986
        %v2003 = vmul.f32 %v1929, %v1987
        %v2004 = vmul.f32 %v1931, %v1988
        %v2005 = vmul.f32 %v1933, %v1989
        %v2006 = vmul.f32 %v1935, %v1990
        %v2007 = vmul.f32 %v1937, %v1991
        %v2008 = vmul.f32 %v1939, %v1992
        %v2009 = vmul.f32 %v1941, %v1993
        %v2010 = vmul.f32 %v1943, %v1994
        %v2011 = vmul.f32 %v1945, %v1995
        %v2012 = vmul.f32 %v1947, %v1996
        %v2013 = vmul.f32 %v1949, %v1997
        %2014 = vrot.lane.b32.xlu0 %v924, 88
        %v2015 = vpop.permute.xlu0 %2014
        %2016 = vrot.lane.b32.xlu0 %v929, 88
        %v2017 = vpop.permute.xlu0 %2016
        %2018 = vrot.lane.b32.xlu0 %v934, 88
        %v2019 = vpop.permute.xlu0 %2018
        %2020 = vrot.lane.b32.xlu0 %v939, 88
        %v2021 = vpop.permute.xlu0 %2020
        %2022 = vrot.lane.b32.xlu0 %v944, 88
        %v2023 = vpop.permute.xlu0 %2022
        %2024 = vrot.lane.b32.xlu0 %v949, 88
        %v2025 = vpop.permute.xlu0 %2024
        %2026 = vrot.lane.b32.xlu0 %v954, 88
        %v2027 = vpop.permute.xlu0 %2026
        %2028 = vrot.lane.b32.xlu0 %v959, 88
        %v2029 = vpop.permute.xlu0 %2028
        %2030 = vrot.lane.b32.xlu0 %v964, 88
        %v2031 = vpop.permute.xlu0 %2030
        %2032 = vrot.lane.b32.xlu0 %v969, 88
        %v2033 = vpop.permute.xlu0 %2032
        %2034 = vrot.lane.b32.xlu0 %v974, 88
        %v2035 = vpop.permute.xlu0 %2034
        %2036 = vrot.lane.b32.xlu0 %v979, 88
        %v2037 = vpop.permute.xlu0 %2036
        %2038 = vrot.lane.b32.xlu0 %v984, 88
        %v2039 = vpop.permute.xlu0 %2038
        %2040 = vrot.lane.b32.xlu0 %v989, 88
        %v2041 = vpop.permute.xlu0 %2040
        %2042 = vrot.lane.b32.xlu0 %v994, 88
        %v2043 = vpop.permute.xlu0 %2042
        %2044 = vrot.lane.b32.xlu0 %v999, 88
        %v2045 = vpop.permute.xlu0 %2044
        %2062 = vmatprep.subr.mxu0 0.0
        %2063 = vmatpush1.msra.mxu0 %v2045
        %2064 = vmatprep.subr.mxu0 0.0
        %2065 = vmatpush1.msra.mxu0 %v2043
        %2066 = vmatprep.subr.mxu0 0.0
        %2067 = vmatpush1.msra.mxu0 %v2041
        %2068 = vmatprep.subr.mxu0 0.0
        %2069 = vmatpush1.msra.mxu0 %v2039
        %2070 = vmatprep.subr.mxu0 0.0
        %2071 = vmatpush1.msra.mxu0 %v2037
        %2072 = vmatprep.subr.mxu0 0.0
        %2073 = vmatpush1.msra.mxu0 %v2035
        %2074 = vmatprep.subr.mxu0 0.0
        %2075 = vmatpush1.msra.mxu0 %v2033
        %2076 = vmatprep.subr.mxu0 0.0
        %2077 = vmatpush1.msra.mxu0 %v2031
        %2078 = vmatprep.subr.mxu0 0.0
        %2079 = vmatpush1.msra.mxu0 %v2029
        %2080 = vmatprep.subr.mxu0 0.0
        %2081 = vmatpush1.msra.mxu0 %v2027
        %2082 = vmatprep.subr.mxu0 0.0
        %2083 = vmatpush1.msra.mxu0 %v2025
        %2084 = vmatprep.subr.mxu0 0.0
        %2085 = vmatpush1.msra.mxu0 %v2023
        %2086 = vmatprep.subr.mxu0 0.0
        %2087 = vmatpush1.msra.mxu0 %v2021
        %2088 = vmatprep.subr.mxu0 0.0
        %2089 = vmatpush1.msra.mxu0 %v2019
        %2090 = vmatprep.subr.mxu0 0.0
        %2091 = vmatpush1.msra.mxu0 %v2017
        %2092 = vmatprep.subr.mxu0 0.0
        %2093 = vmatpush1.msra.mxu0 %v2015
        %2094 = vmatprep.subr.mxu0 0.0
        %2095 = vmatpush2.msra.mxu0 0.0
        %2096 = vmatprep.subr.mxu0 0.0
        %2097 = vmatpush2.msra.mxu0 0.0
        %2098 = vmatprep.subr.mxu0 0.0
        %2099 = vmatpush2.msra.mxu0 0.0
        %2100 = vmatprep.subr.mxu0 0.0
        %2101 = vmatpush2.msra.mxu0 0.0
        %2102 = vmatprep.subr.mxu0 0.0
        %2103 = vmatpush2.msra.mxu0 0.0
        %2104 = vmatprep.subr.mxu0 0.0
        %2105 = vmatpush2.msra.mxu0 0.0
        %2106 = vmatprep.subr.mxu0 0.0
        %2107 = vmatpush2.msra.mxu0 0.0
        %2108 = vmatprep.subr.mxu0 0.0
        %2109 = vmatpush2.msra.mxu0 0.0
        %2110 = vmatprep.subr.mxu0 0.0
        %2111 = vmatpush2.msra.mxu0 0.0
        %2112 = vmatprep.subr.mxu0 0.0
        %2113 = vmatpush2.msra.mxu0 0.0
        %2114 = vmatprep.subr.mxu0 0.0
        %2115 = vmatpush2.msra.mxu0 0.0
        %2116 = vmatprep.subr.mxu0 0.0
        %2117 = vmatpush2.msra.mxu0 0.0
        %2118 = vmatprep.subr.mxu0 0.0
        %2119 = vmatpush2.msra.mxu0 0.0
        %2120 = vmatprep.subr.mxu0 0.0
        %2121 = vmatpush2.msra.mxu0 0.0
        %2122 = vmatprep.subr.mxu0 0.0
        %2123 = vmatpush2.msra.mxu0 0.0
        %2124 = vmatprep.subr.mxu0 0.0
        %2125 = vmatpush2.msra.mxu0 0.0
        %2126 = vmatprep.mubr.f32.mxu0 0.0
        %2127 = vmatmul.mubr.f32.gmra.mxu0 %v1998
        %v2128 = vpop.f32.mrf.mxu0
        %v2129 = vadd.f32 0.0, %v2128
        %v2130 = vpop.f32.mrf.mxu0
        %2131 = vmatprep.mubr.f32.mxu0 0.0
        %2132 = vmatmul.mubr.f32.gmra.mxu0 %v1999
        %v2133 = vpop.f32.mrf.mxu0
        %v2134 = vadd.f32 0.0, %v2133
        %v2135 = vpop.f32.mrf.mxu0
        %2136 = vmatprep.mubr.f32.mxu0 0.0
        %2137 = vmatmul.mubr.f32.gmra.mxu0 %v2000
        %v2138 = vpop.f32.mrf.mxu0
        %v2139 = vadd.f32 0.0, %v2138
        %v2140 = vpop.f32.mrf.mxu0
        %2141 = vmatprep.mubr.f32.mxu0 0.0
        %2142 = vmatmul.mubr.f32.gmra.mxu0 %v2001
        %v2143 = vpop.f32.mrf.mxu0
        %v2144 = vadd.f32 0.0, %v2143
        %v2145 = vpop.f32.mrf.mxu0
        %2146 = vmatprep.mubr.f32.mxu0 0.0
        %2147 = vmatmul.mubr.f32.gmra.mxu0 %v2002
        %v2148 = vpop.f32.mrf.mxu0
        %v2149 = vadd.f32 0.0, %v2148
        %v2150 = vpop.f32.mrf.mxu0
        %2151 = vmatprep.mubr.f32.mxu0 0.0
        %2152 = vmatmul.mubr.f32.gmra.mxu0 %v2003
        %v2153 = vpop.f32.mrf.mxu0
        %v2154 = vadd.f32 0.0, %v2153
        %v2155 = vpop.f32.mrf.mxu0
        %2156 = vmatprep.mubr.f32.mxu0 0.0
        %2157 = vmatmul.mubr.f32.gmra.mxu0 %v2004
        %v2158 = vpop.f32.mrf.mxu0
        %v2159 = vadd.f32 0.0, %v2158
        %v2160 = vpop.f32.mrf.mxu0
        %2161 = vmatprep.mubr.f32.mxu0 0.0
        %2162 = vmatmul.mubr.f32.gmra.mxu0 %v2005
        %v2163 = vpop.f32.mrf.mxu0
        %v2164 = vadd.f32 0.0, %v2163
        %v2165 = vpop.f32.mrf.mxu0
        %2166 = vmatprep.mubr.f32.mxu0 0.0
        %2167 = vmatmul.mubr.f32.gmra.mxu0 %v2006
        %v2168 = vpop.f32.mrf.mxu0
        %v2169 = vadd.f32 0.0, %v2168
        %v2170 = vpop.f32.mrf.mxu0
        %2171 = vmatprep.mubr.f32.mxu0 0.0
        %2172 = vmatmul.mubr.f32.gmra.mxu0 %v2007
        %v2173 = vpop.f32.mrf.mxu0
        %v2174 = vadd.f32 0.0, %v2173
        %v2175 = vpop.f32.mrf.mxu0
        %2176 = vmatprep.mubr.f32.mxu0 0.0
        %2177 = vmatmul.mubr.f32.gmra.mxu0 %v2008
        %v2178 = vpop.f32.mrf.mxu0
        %v2179 = vadd.f32 0.0, %v2178
        %v2180 = vpop.f32.mrf.mxu0
        %2181 = vmatprep.mubr.f32.mxu0 0.0
        %2182 = vmatmul.mubr.f32.gmra.mxu0 %v2009
        %v2183 = vpop.f32.mrf.mxu0
        %v2184 = vadd.f32 0.0, %v2183
        %v2185 = vpop.f32.mrf.mxu0
        %2186 = vmatprep.mubr.f32.mxu0 0.0
        %2187 = vmatmul.mubr.f32.gmra.mxu0 %v2010
        %v2188 = vpop.f32.mrf.mxu0
        %v2189 = vadd.f32 0.0, %v2188
        %v2190 = vpop.f32.mrf.mxu0
        %2191 = vmatprep.mubr.f32.mxu0 0.0
        %2192 = vmatmul.mubr.f32.gmra.mxu0 %v2011
        %v2193 = vpop.f32.mrf.mxu0
        %v2194 = vadd.f32 0.0, %v2193
        %v2195 = vpop.f32.mrf.mxu0
        %2196 = vmatprep.mubr.f32.mxu0 0.0
        %2197 = vmatmul.mubr.f32.gmra.mxu0 %v2012
        %v2198 = vpop.f32.mrf.mxu0
        %v2199 = vadd.f32 0.0, %v2198
        %v2200 = vpop.f32.mrf.mxu0
        %2201 = vmatprep.mubr.f32.mxu0 0.0
        %2202 = vmatmul.mubr.f32.gmra.mxu0 %v2013
        %v2203 = vpop.f32.mrf.mxu0
        %v2204 = vadd.f32 0.0, %v2203
        %v2205 = vpop.f32.mrf.mxu0
        %2206 = vdwg.mxu0
        %2223 = vrot.lane.b32.xlu0 %v2129, 8
        %v2224 = vpop.permute.xlu0 %2223
        %2225 = vrot.lane.b32.xlu0 %v2134, 8
        %v2226 = vpop.permute.xlu0 %2225
        %2227 = vrot.lane.b32.xlu0 %v2139, 8
        %v2228 = vpop.permute.xlu0 %2227
        %2229 = vrot.lane.b32.xlu0 %v2144, 8
        %v2230 = vpop.permute.xlu0 %2229
        %2231 = vrot.lane.b32.xlu0 %v2149, 8
        %v2232 = vpop.permute.xlu0 %2231
        %2233 = vrot.lane.b32.xlu0 %v2154, 8
        %v2234 = vpop.permute.xlu0 %2233
        %2235 = vrot.lane.b32.xlu0 %v2159, 8
        %v2236 = vpop.permute.xlu0 %2235
        %2237 = vrot.lane.b32.xlu0 %v2164, 8
        %v2238 = vpop.permute.xlu0 %2237
        %2239 = vrot.lane.b32.xlu0 %v2169, 8
        %v2240 = vpop.permute.xlu0 %2239
        %2241 = vrot.lane.b32.xlu0 %v2174, 8
        %v2242 = vpop.permute.xlu0 %2241
        %2243 = vrot.lane.b32.xlu0 %v2179, 8
        %v2244 = vpop.permute.xlu0 %2243
        %2245 = vrot.lane.b32.xlu0 %v2184, 8
        %v2246 = vpop.permute.xlu0 %2245
        %2247 = vrot.lane.b32.xlu0 %v2189, 8
        %v2248 = vpop.permute.xlu0 %2247
        %2249 = vrot.lane.b32.xlu0 %v2194, 8
        %v2250 = vpop.permute.xlu0 %2249
        %2251 = vrot.lane.b32.xlu0 %v2199, 8
        %v2252 = vpop.permute.xlu0 %2251
        %2253 = vrot.lane.b32.xlu0 %v2204, 8
        %v2254 = vpop.permute.xlu0 %2253
        %v2271 = vsel %vm1050, %v1519, %v2224
        %v2272 = vsel %vm1050, %v1524, %v2226
        %v2273 = vsel %vm1050, %v1529, %v2228
        %v2274 = vsel %vm1050, %v1534, %v2230
        %v2275 = vsel %vm1050, %v1539, %v2232
        %v2276 = vsel %vm1050, %v1544, %v2234
        %v2277 = vsel %vm1050, %v1549, %v2236
        %v2278 = vsel %vm1050, %v1554, %v2238
        %v2279 = vsel %vm1050, %v1559, %v2240
        %v2280 = vsel %vm1050, %v1564, %v2242
        %v2281 = vsel %vm1050, %v1569, %v2244
        %v2282 = vsel %vm1050, %v1574, %v2246
        %v2283 = vsel %vm1050, %v1579, %v2248
        %v2284 = vsel %vm1050, %v1584, %v2250
        %v2285 = vsel %vm1050, %v1589, %v2252
        %v2286 = vsel %vm1050, %v1594, %v2254
        %v2287 = vld [vmem:[%s7] sm:$0xff]
        %v2288 = vld [vmem:[%s7 + $0x8] sm:$0xff]
        %v2289 = vld [vmem:[%s8] sm:$0x1]
        %v2291 = vlaneseq
        %v2292 = vshrl.u32 %v2291, 7
        %v2293 = vsub.s32 0, %v2292
        %v2294 = vrot.slane %v2289, %v2293
        %v2297 = vsel %vm375, %v2271, 0
        %v2300 = vsel %vm375, %v2272, 0
        %v2303 = vsel %vm375, %v2273, 0
        %v2306 = vsel %vm375, %v2274, 0
        %v2309 = vsel %vm375, %v2275, 0
        %v2312 = vsel %vm375, %v2276, 0
        %v2315 = vsel %vm375, %v2277, 0
        %v2318 = vsel %vm375, %v2278, 0
        %v2321 = vsel %vm375, %v2279, 0
        %v2324 = vsel %vm375, %v2280, 0
        %v2327 = vsel %vm375, %v2281, 0
        %v2330 = vsel %vm375, %v2282, 0
        %v2333 = vsel %vm375, %v2283, 0
        %v2336 = vsel %vm375, %v2284, 0
        %v2339 = vsel %vm375, %v2285, 0
        %v2342 = vsel %vm375, %v2286, 0
        %2344 = vmatprep.subr.mxu0 0.0
        %2345 = vmatpush1.msra.mxu0 0.0
        %2346 = vmatprep.subr.mxu0 0.0
        %2347 = vmatpush1.msra.mxu0 0.0
        %2348 = vmatprep.subr.mxu0 0.0
        %2349 = vmatpush1.msra.mxu0 0.0
        %2350 = vmatprep.subr.mxu0 0.0
        %2351 = vmatpush1.msra.mxu0 0.0
        %2352 = vmatprep.subr.mxu0 0.0
        %2353 = vmatpush1.msra.mxu0 0.0
        %2354 = vmatprep.subr.mxu0 0.0
        %2355 = vmatpush1.msra.mxu0 0.0
        %2356 = vmatprep.subr.mxu0 0.0
        %2357 = vmatpush1.msra.mxu0 0.0
        %2358 = vmatprep.subr.mxu0 0.0
        %2359 = vmatpush1.msra.mxu0 0.0
        %2360 = vmatprep.subr.mxu0 0.0
        %2361 = vmatpush1.msra.mxu0 0.0
        %2362 = vmatprep.subr.mxu0 0.0
        %2363 = vmatpush1.msra.mxu0 0.0
        %2364 = vmatprep.subr.mxu0 0.0
        %2365 = vmatpush1.msra.mxu0 0.0
        %2366 = vmatprep.subr.mxu0 0.0
        %2367 = vmatpush1.msra.mxu0 0.0
        %2368 = vmatprep.subr.mxu0 0.0
        %2369 = vmatpush1.msra.mxu0 0.0
        %2370 = vmatprep.subr.mxu0 0.0
        %2371 = vmatpush1.msra.mxu0 0.0
        %2372 = vmatprep.subr.mxu0 0.0
        %2373 = vmatpush1.msra.mxu0 %v2288
        %2374 = vmatprep.subr.mxu0 0.0
        %2375 = vmatpush1.msra.mxu0 %v2287
        %2376 = vmatprep.subr.mxu0 0.0
        %2377 = vmatpush2.msra.mxu0 0.0
        %2378 = vmatprep.subr.mxu0 0.0
        %2379 = vmatpush2.msra.mxu0 0.0
        %2380 = vmatprep.subr.mxu0 0.0
        %2381 = vmatpush2.msra.mxu0 0.0
        %2382 = vmatprep.subr.mxu0 0.0
        %2383 = vmatpush2.msra.mxu0 0.0
        %2384 = vmatprep.subr.mxu0 0.0
        %2385 = vmatpush2.msra.mxu0 0.0
        %2386 = vmatprep.subr.mxu0 0.0
        %2387 = vmatpush2.msra.mxu0 0.0
        %2388 = vmatprep.subr.mxu0 0.0
        %2389 = vmatpush2.msra.mxu0 0.0
        %2390 = vmatprep.subr.mxu0 0.0
        %2391 = vmatpush2.msra.mxu0 0.0
        %2392 = vmatprep.subr.mxu0 0.0
        %2393 = vmatpush2.msra.mxu0 0.0
        %2394 = vmatprep.subr.mxu0 0.0
        %2395 = vmatpush2.msra.mxu0 0.0
        %2396 = vmatprep.subr.mxu0 0.0
        %2397 = vmatpush2.msra.mxu0 0.0
        %2398 = vmatprep.subr.mxu0 0.0
        %2399 = vmatpush2.msra.mxu0 0.0
        %2400 = vmatprep.subr.mxu0 0.0
        %2401 = vmatpush2.msra.mxu0 0.0
        %2402 = vmatprep.subr.mxu0 0.0
        %2403 = vmatpush2.msra.mxu0 0.0
        %2404 = vmatprep.subr.mxu0 0.0
        %2405 = vmatpush2.msra.mxu0 0.0
        %2406 = vmatprep.subr.mxu0 0.0
        %2407 = vmatpush2.msra.mxu0 0.0
        %2408 = vmatprep.mubr.f32.mxu0 0.0
        %2409 = vmatmul.mubr.f32.gmra.mxu0 %v2297
        %v2410 = vpop.f32.mrf.mxu0
        %v2411 = vadd.f32 %v2294, %v2410
        %v2412 = vpop.f32.mrf.mxu0
        %2413 = vmatprep.mubr.f32.mxu0 0.0
        %2414 = vmatmul.mubr.f32.gmra.mxu0 %v2300
        %v2415 = vpop.f32.mrf.mxu0
        %v2416 = vadd.f32 %v2294, %v2415
        %v2417 = vpop.f32.mrf.mxu0
        %2418 = vmatprep.mubr.f32.mxu0 0.0
        %2419 = vmatmul.mubr.f32.gmra.mxu0 %v2303
        %v2420 = vpop.f32.mrf.mxu0
        %v2421 = vadd.f32 %v2294, %v2420
        %v2422 = vpop.f32.mrf.mxu0
        %2423 = vmatprep.mubr.f32.mxu0 0.0
        %2424 = vmatmul.mubr.f32.gmra.mxu0 %v2306
        %v2425 = vpop.f32.mrf.mxu0
        %v2426 = vadd.f32 %v2294, %v2425
        %v2427 = vpop.f32.mrf.mxu0
        %2428 = vmatprep.mubr.f32.mxu0 0.0
        %2429 = vmatmul.mubr.f32.gmra.mxu0 %v2309
        %v2430 = vpop.f32.mrf.mxu0
        %v2431 = vadd.f32 %v2294, %v2430
        %v2432 = vpop.f32.mrf.mxu0
        %2433 = vmatprep.mubr.f32.mxu0 0.0
        %2434 = vmatmul.mubr.f32.gmra.mxu0 %v2312
        %v2435 = vpop.f32.mrf.mxu0
        %v2436 = vadd.f32 %v2294, %v2435
        %v2437 = vpop.f32.mrf.mxu0
        %2438 = vmatprep.mubr.f32.mxu0 0.0
        %2439 = vmatmul.mubr.f32.gmra.mxu0 %v2315
        %v2440 = vpop.f32.mrf.mxu0
        %v2441 = vadd.f32 %v2294, %v2440
        %v2442 = vpop.f32.mrf.mxu0
        %2443 = vmatprep.mubr.f32.mxu0 0.0
        %2444 = vmatmul.mubr.f32.gmra.mxu0 %v2318
        %v2445 = vpop.f32.mrf.mxu0
        %v2446 = vadd.f32 %v2294, %v2445
        %v2447 = vpop.f32.mrf.mxu0
        %2448 = vmatprep.mubr.f32.mxu0 0.0
        %2449 = vmatmul.mubr.f32.gmra.mxu0 %v2321
        %v2450 = vpop.f32.mrf.mxu0
        %v2451 = vadd.f32 %v2294, %v2450
        %v2452 = vpop.f32.mrf.mxu0
        %2453 = vmatprep.mubr.f32.mxu0 0.0
        %2454 = vmatmul.mubr.f32.gmra.mxu0 %v2324
        %v2455 = vpop.f32.mrf.mxu0
        %v2456 = vadd.f32 %v2294, %v2455
        %v2457 = vpop.f32.mrf.mxu0
        %2458 = vmatprep.mubr.f32.mxu0 0.0
        %2459 = vmatmul.mubr.f32.gmra.mxu0 %v2327
        %v2460 = vpop.f32.mrf.mxu0
        %v2461 = vadd.f32 %v2294, %v2460
        %v2462 = vpop.f32.mrf.mxu0
        %2463 = vmatprep.mubr.f32.mxu0 0.0
        %2464 = vmatmul.mubr.f32.gmra.mxu0 %v2330
        %v2465 = vpop.f32.mrf.mxu0
        %v2466 = vadd.f32 %v2294, %v2465
        %v2467 = vpop.f32.mrf.mxu0
        %2468 = vmatprep.mubr.f32.mxu0 0.0
        %2469 = vmatmul.mubr.f32.gmra.mxu0 %v2333
        %v2470 = vpop.f32.mrf.mxu0
        %v2471 = vadd.f32 %v2294, %v2470
        %v2472 = vpop.f32.mrf.mxu0
        %2473 = vmatprep.mubr.f32.mxu0 0.0
        %2474 = vmatmul.mubr.f32.gmra.mxu0 %v2336
        %v2475 = vpop.f32.mrf.mxu0
        %v2476 = vadd.f32 %v2294, %v2475
        %v2477 = vpop.f32.mrf.mxu0
        %2478 = vmatprep.mubr.f32.mxu0 0.0
        %2479 = vmatmul.mubr.f32.gmra.mxu0 %v2339
        %v2480 = vpop.f32.mrf.mxu0
        %v2481 = vadd.f32 %v2294, %v2480
        %v2482 = vpop.f32.mrf.mxu0
        %2483 = vmatprep.mubr.f32.mxu0 0.0
        %2484 = vmatmul.mubr.f32.gmra.mxu0 %v2342
        %v2485 = vpop.f32.mrf.mxu0
        %v2486 = vadd.f32 %v2294, %v2485
        %v2487 = vpop.f32.mrf.mxu0
        %2488 = vdwg.mxu0
        %v2489 = vadd.f32 %v2411, %v491
        %v2490 = vadd.f32 %v2416, %v496
        %v2491 = vadd.f32 %v2421, %v501
        %v2492 = vadd.f32 %v2426, %v506
        %v2493 = vadd.f32 %v2431, %v511
        %v2494 = vadd.f32 %v2436, %v516
        %v2495 = vadd.f32 %v2441, %v521
        %v2496 = vadd.f32 %v2446, %v526
        %v2497 = vadd.f32 %v2451, %v531
        %v2498 = vadd.f32 %v2456, %v536
        %v2499 = vadd.f32 %v2461, %v541
        %v2500 = vadd.f32 %v2466, %v546
        %v2501 = vadd.f32 %v2471, %v551
        %v2502 = vadd.f32 %v2476, %v556
        %v2503 = vadd.f32 %v2481, %v561
        %v2504 = vadd.f32 %v2486, %v566
        %vm2505 = vcmask 523264
        %2506 = vst.msk [vmem:[%s326] sm:$0xff] %vm2505, %v2489
        %2507 = vst.msk [vmem:[%s326 + $0x8] sm:$0xff] %vm2505, %v2490
        %2508 = vst.msk [vmem:[%s326 + $0x10] sm:$0xff] %vm2505, %v2491
        %2509 = vst.msk [vmem:[%s326 + $0x18] sm:$0xff] %vm2505, %v2492
        %2510 = vst.msk [vmem:[%s326 + $0x20] sm:$0xff] %vm2505, %v2493
        %2511 = vst.msk [vmem:[%s326 + $0x28] sm:$0xff] %vm2505, %v2494
        %2512 = vst.msk [vmem:[%s326 + $0x30] sm:$0xff] %vm2505, %v2495
        %2513 = vst.msk [vmem:[%s326 + $0x38] sm:$0xff] %vm2505, %v2496
        %2514 = vst.msk [vmem:[%s326 + $0x40] sm:$0xff] %vm2505, %v2497
        %2515 = vst.msk [vmem:[%s326 + $0x48] sm:$0xff] %vm2505, %v2498
        %2516 = vst.msk [vmem:[%s326 + $0x50] sm:$0xff] %vm2505, %v2499
        %2517 = vst.msk [vmem:[%s326 + $0x58] sm:$0xff] %vm2505, %v2500
        %2518 = vst.msk [vmem:[%s326 + $0x60] sm:$0xff] %vm2505, %v2501
        %2519 = vst.msk [vmem:[%s326 + $0x68] sm:$0xff] %vm2505, %v2502
        %2520 = vst.msk [vmem:[%s326 + $0x70] sm:$0xff] %vm2505, %v2503
        %2521 = vst.msk [vmem:[%s326 + $0x78] sm:$0xff] %vm2505, %v2504
        %v2522 = vld [vmem:[%s331 + $0x80] sm:$0xff]
        %v2523 = vld [vmem:[%s331 + $0x88] sm:$0xff]
        %v2524 = vld [vmem:[%s331 + $0x90] sm:$0xff]
        %v2525 = vld [vmem:[%s331 + $0x98] sm:$0xff]
        %v2526 = vld [vmem:[%s331 + $0xa0] sm:$0xff]
        %v2527 = vld [vmem:[%s331 + $0xa8] sm:$0xff]
        %v2528 = vld [vmem:[%s331 + $0xb0] sm:$0xff]
        %v2529 = vld [vmem:[%s331 + $0xb8] sm:$0xff]
        %v2530 = vld [vmem:[%s331 + $0xc0] sm:$0xff]
        %v2531 = vld [vmem:[%s331 + $0xc8] sm:$0xff]
        %v2532 = vld [vmem:[%s331 + $0xd0] sm:$0xff]
        %v2533 = vld [vmem:[%s331 + $0xd8] sm:$0xff]
        %v2534 = vld [vmem:[%s331 + $0xe0] sm:$0xff]
        %v2535 = vld [vmem:[%s331 + $0xe8] sm:$0xff]
        %v2536 = vld [vmem:[%s331 + $0xf0] sm:$0xff]
        %v2537 = vld [vmem:[%s331 + $0xf8] sm:$0xff]
        %v2538 = vld [vmem:[%s1] sm:$0xff]
        %v2539 = vld [vmem:[%s1 + $0x8] sm:$0xff]
        %v2540 = vld [vmem:[%s2] sm:$0x1]
        %v2542 = vlaneseq
        %v2543 = vshrl.u32 %v2542, 7
        %v2544 = vsub.s32 0, %v2543
        %v2545 = vrot.slane %v2540, %v2544
        %v2548 = vsel %vm375, %v2522, 0
        %v2551 = vsel %vm375, %v2523, 0
        %v2554 = vsel %vm375, %v2524, 0
        %v2557 = vsel %vm375, %v2525, 0
        %v2560 = vsel %vm375, %v2526, 0
        %v2563 = vsel %vm375, %v2527, 0
        %v2566 = vsel %vm375, %v2528, 0
        %v2569 = vsel %vm375, %v2529, 0
        %v2572 = vsel %vm375, %v2530, 0
        %v2575 = vsel %vm375, %v2531, 0
        %v2578 = vsel %vm375, %v2532, 0
        %v2581 = vsel %vm375, %v2533, 0
        %v2584 = vsel %vm375, %v2534, 0
        %v2587 = vsel %vm375, %v2535, 0
        %v2590 = vsel %vm375, %v2536, 0
        %v2593 = vsel %vm375, %v2537, 0
        %2595 = vmatprep.subr.mxu0 0.0
        %2596 = vmatpush1.msra.mxu0 0.0
        %2597 = vmatprep.subr.mxu0 0.0
        %2598 = vmatpush1.msra.mxu0 0.0
        %2599 = vmatprep.subr.mxu0 0.0
        %2600 = vmatpush1.msra.mxu0 0.0
        %2601 = vmatprep.subr.mxu0 0.0
        %2602 = vmatpush1.msra.mxu0 0.0
        %2603 = vmatprep.subr.mxu0 0.0
        %2604 = vmatpush1.msra.mxu0 0.0
        %2605 = vmatprep.subr.mxu0 0.0
        %2606 = vmatpush1.msra.mxu0 0.0
        %2607 = vmatprep.subr.mxu0 0.0
        %2608 = vmatpush1.msra.mxu0 0.0
        %2609 = vmatprep.subr.mxu0 0.0
        %2610 = vmatpush1.msra.mxu0 0.0
        %2611 = vmatprep.subr.mxu0 0.0
        %2612 = vmatpush1.msra.mxu0 0.0
        %2613 = vmatprep.subr.mxu0 0.0
        %2614 = vmatpush1.msra.mxu0 0.0
        %2615 = vmatprep.subr.mxu0 0.0
        %2616 = vmatpush1.msra.mxu0 0.0
        %2617 = vmatprep.subr.mxu0 0.0
        %2618 = vmatpush1.msra.mxu0 0.0
        %2619 = vmatprep.subr.mxu0 0.0
        %2620 = vmatpush1.msra.mxu0 0.0
        %2621 = vmatprep.subr.mxu0 0.0
        %2622 = vmatpush1.msra.mxu0 0.0
        %2623 = vmatprep.subr.mxu0 0.0
        %2624 = vmatpush1.msra.mxu0 %v2539
        %2625 = vmatprep.subr.mxu0 0.0
        %2626 = vmatpush1.msra.mxu0 %v2538
        %2627 = vmatprep.subr.mxu0 0.0
        %2628 = vmatpush2.msra.mxu0 0.0
        %2629 = vmatprep.subr.mxu0 0.0
        %2630 = vmatpush2.msra.mxu0 0.0
        %2631 = vmatprep.subr.mxu0 0.0
        %2632 = vmatpush2.msra.mxu0 0.0
        %2633 = vmatprep.subr.mxu0 0.0
        %2634 = vmatpush2.msra.mxu0 0.0
        %2635 = vmatprep.subr.mxu0 0.0
        %2636 = vmatpush2.msra.mxu0 0.0
        %2637 = vmatprep.subr.mxu0 0.0
        %2638 = vmatpush2.msra.mxu0 0.0
        %2639 = vmatprep.subr.mxu0 0.0
        %2640 = vmatpush2.msra.mxu0 0.0
        %2641 = vmatprep.subr.mxu0 0.0
        %2642 = vmatpush2.msra.mxu0 0.0
        %2643 = vmatprep.subr.mxu0 0.0
        %2644 = vmatpush2.msra.mxu0 0.0
        %2645 = vmatprep.subr.mxu0 0.0
        %2646 = vmatpush2.msra.mxu0 0.0
        %2647 = vmatprep.subr.mxu0 0.0
        %2648 = vmatpush2.msra.mxu0 0.0
        %2649 = vmatprep.subr.mxu0 0.0
        %2650 = vmatpush2.msra.mxu0 0.0
        %2651 = vmatprep.subr.mxu0 0.0
        %2652 = vmatpush2.msra.mxu0 0.0
        %2653 = vmatprep.subr.mxu0 0.0
        %2654 = vmatpush2.msra.mxu0 0.0
        %2655 = vmatprep.subr.mxu0 0.0
        %2656 = vmatpush2.msra.mxu0 0.0
        %2657 = vmatprep.subr.mxu0 0.0
        %2658 = vmatpush2.msra.mxu0 0.0
        %2659 = vmatprep.mubr.f32.mxu0 0.0
        %2660 = vmatmul.mubr.f32.gmra.mxu0 %v2548
        %v2661 = vpop.f32.mrf.mxu0
        %v2662 = vadd.f32 %v2545, %v2661
        %v2663 = vpop.f32.mrf.mxu0
        %2664 = vmatprep.mubr.f32.mxu0 0.0
        %2665 = vmatmul.mubr.f32.gmra.mxu0 %v2551
        %v2666 = vpop.f32.mrf.mxu0
        %v2667 = vadd.f32 %v2545, %v2666
        %v2668 = vpop.f32.mrf.mxu0
        %2669 = vmatprep.mubr.f32.mxu0 0.0
        %2670 = vmatmul.mubr.f32.gmra.mxu0 %v2554
        %v2671 = vpop.f32.mrf.mxu0
        %v2672 = vadd.f32 %v2545, %v2671
        %v2673 = vpop.f32.mrf.mxu0
        %2674 = vmatprep.mubr.f32.mxu0 0.0
        %2675 = vmatmul.mubr.f32.gmra.mxu0 %v2557
        %v2676 = vpop.f32.mrf.mxu0
        %v2677 = vadd.f32 %v2545, %v2676
        %v2678 = vpop.f32.mrf.mxu0
        %2679 = vmatprep.mubr.f32.mxu0 0.0
        %2680 = vmatmul.mubr.f32.gmra.mxu0 %v2560
        %v2681 = vpop.f32.mrf.mxu0
        %v2682 = vadd.f32 %v2545, %v2681
        %v2683 = vpop.f32.mrf.mxu0
        %2684 = vmatprep.mubr.f32.mxu0 0.0
        %2685 = vmatmul.mubr.f32.gmra.mxu0 %v2563
        %v2686 = vpop.f32.mrf.mxu0
        %v2687 = vadd.f32 %v2545, %v2686
        %v2688 = vpop.f32.mrf.mxu0
        %2689 = vmatprep.mubr.f32.mxu0 0.0
        %2690 = vmatmul.mubr.f32.gmra.mxu0 %v2566
        %v2691 = vpop.f32.mrf.mxu0
        %v2692 = vadd.f32 %v2545, %v2691
        %v2693 = vpop.f32.mrf.mxu0
        %2694 = vmatprep.mubr.f32.mxu0 0.0
        %2695 = vmatmul.mubr.f32.gmra.mxu0 %v2569
        %v2696 = vpop.f32.mrf.mxu0
        %v2697 = vadd.f32 %v2545, %v2696
        %v2698 = vpop.f32.mrf.mxu0
        %2699 = vmatprep.mubr.f32.mxu0 0.0
        %2700 = vmatmul.mubr.f32.gmra.mxu0 %v2572
        %v2701 = vpop.f32.mrf.mxu0
        %v2702 = vadd.f32 %v2545, %v2701
        %v2703 = vpop.f32.mrf.mxu0
        %2704 = vmatprep.mubr.f32.mxu0 0.0
        %2705 = vmatmul.mubr.f32.gmra.mxu0 %v2575
        %v2706 = vpop.f32.mrf.mxu0
        %v2707 = vadd.f32 %v2545, %v2706
        %v2708 = vpop.f32.mrf.mxu0
        %2709 = vmatprep.mubr.f32.mxu0 0.0
        %2710 = vmatmul.mubr.f32.gmra.mxu0 %v2578
        %v2711 = vpop.f32.mrf.mxu0
        %v2712 = vadd.f32 %v2545, %v2711
        %v2713 = vpop.f32.mrf.mxu0
        %2714 = vmatprep.mubr.f32.mxu0 0.0
        %2715 = vmatmul.mubr.f32.gmra.mxu0 %v2581
        %v2716 = vpop.f32.mrf.mxu0
        %v2717 = vadd.f32 %v2545, %v2716
        %v2718 = vpop.f32.mrf.mxu0
        %2719 = vmatprep.mubr.f32.mxu0 0.0
        %2720 = vmatmul.mubr.f32.gmra.mxu0 %v2584
        %v2721 = vpop.f32.mrf.mxu0
        %v2722 = vadd.f32 %v2545, %v2721
        %v2723 = vpop.f32.mrf.mxu0
        %2724 = vmatprep.mubr.f32.mxu0 0.0
        %2725 = vmatmul.mubr.f32.gmra.mxu0 %v2587
        %v2726 = vpop.f32.mrf.mxu0
        %v2727 = vadd.f32 %v2545, %v2726
        %v2728 = vpop.f32.mrf.mxu0
        %2729 = vmatprep.mubr.f32.mxu0 0.0
        %2730 = vmatmul.mubr.f32.gmra.mxu0 %v2590
        %v2731 = vpop.f32.mrf.mxu0
        %v2732 = vadd.f32 %v2545, %v2731
        %v2733 = vpop.f32.mrf.mxu0
        %2734 = vmatprep.mubr.f32.mxu0 0.0
        %2735 = vmatmul.mubr.f32.gmra.mxu0 %v2593
        %v2736 = vpop.f32.mrf.mxu0
        %v2737 = vadd.f32 %v2545, %v2736
        %v2738 = vpop.f32.mrf.mxu0
        %2739 = vdwg.mxu0
        %v2740 = vld [vmem:[%s3] sm:$0xff]
        %v2741 = vld [vmem:[%s3 + $0x8] sm:$0xff]
        %v2742 = vld [vmem:[%s4] sm:$0x1]
        %v2744 = vlaneseq
        %v2745 = vshrl.u32 %v2744, 7
        %v2746 = vsub.s32 0, %v2745
        %v2747 = vrot.slane %v2742, %v2746
        %2749 = vmatprep.subr.mxu0 0.0
        %2750 = vmatpush1.msra.mxu0 0.0
        %2751 = vmatprep.subr.mxu0 0.0
        %2752 = vmatpush1.msra.mxu0 0.0
        %2753 = vmatprep.subr.mxu0 0.0
        %2754 = vmatpush1.msra.mxu0 0.0
        %2755 = vmatprep.subr.mxu0 0.0
        %2756 = vmatpush1.msra.mxu0 0.0
        %2757 = vmatprep.subr.mxu0 0.0
        %2758 = vmatpush1.msra.mxu0 0.0
        %2759 = vmatprep.subr.mxu0 0.0
        %2760 = vmatpush1.msra.mxu0 0.0
        %2761 = vmatprep.subr.mxu0 0.0
        %2762 = vmatpush1.msra.mxu0 0.0
        %2763 = vmatprep.subr.mxu0 0.0
        %2764 = vmatpush1.msra.mxu0 0.0
        %2765 = vmatprep.subr.mxu0 0.0
        %2766 = vmatpush1.msra.mxu0 0.0
        %2767 = vmatprep.subr.mxu0 0.0
        %2768 = vmatpush1.msra.mxu0 0.0
        %2769 = vmatprep.subr.mxu0 0.0
        %2770 = vmatpush1.msra.mxu0 0.0
        %2771 = vmatprep.subr.mxu0 0.0
        %2772 = vmatpush1.msra.mxu0 0.0
        %2773 = vmatprep.subr.mxu0 0.0
        %2774 = vmatpush1.msra.mxu0 0.0
        %2775 = vmatprep.subr.mxu0 0.0
        %2776 = vmatpush1.msra.mxu0 0.0
        %2777 = vmatprep.subr.mxu0 0.0
        %2778 = vmatpush1.msra.mxu0 %v2741
        %2779 = vmatprep.subr.mxu0 0.0
        %2780 = vmatpush1.msra.mxu0 %v2740
        %2781 = vmatprep.subr.mxu0 0.0
        %2782 = vmatpush2.msra.mxu0 0.0
        %2783 = vmatprep.subr.mxu0 0.0
        %2784 = vmatpush2.msra.mxu0 0.0
        %2785 = vmatprep.subr.mxu0 0.0
        %2786 = vmatpush2.msra.mxu0 0.0
        %2787 = vmatprep.subr.mxu0 0.0
        %2788 = vmatpush2.msra.mxu0 0.0
        %2789 = vmatprep.subr.mxu0 0.0
        %2790 = vmatpush2.msra.mxu0 0.0
        %2791 = vmatprep.subr.mxu0 0.0
        %2792 = vmatpush2.msra.mxu0 0.0
        %2793 = vmatprep.subr.mxu0 0.0
        %2794 = vmatpush2.msra.mxu0 0.0
        %2795 = vmatprep.subr.mxu0 0.0
        %2796 = vmatpush2.msra.mxu0 0.0
        %2797 = vmatprep.subr.mxu0 0.0
        %2798 = vmatpush2.msra.mxu0 0.0
        %2799 = vmatprep.subr.mxu0 0.0
        %2800 = vmatpush2.msra.mxu0 0.0
        %2801 = vmatprep.subr.mxu0 0.0
        %2802 = vmatpush2.msra.mxu0 0.0
        %2803 = vmatprep.subr.mxu0 0.0
        %2804 = vmatpush2.msra.mxu0 0.0
        %2805 = vmatprep.subr.mxu0 0.0
        %2806 = vmatpush2.msra.mxu0 0.0
        %2807 = vmatprep.subr.mxu0 0.0
        %2808 = vmatpush2.msra.mxu0 0.0
        %2809 = vmatprep.subr.mxu0 0.0
        %2810 = vmatpush2.msra.mxu0 0.0
        %2811 = vmatprep.subr.mxu0 0.0
        %2812 = vmatpush2.msra.mxu0 0.0
        %2813 = vmatprep.mubr.f32.mxu0 0.0
        %2814 = vmatmul.mubr.f32.gmra.mxu0 %v2548
        %v2815 = vpop.f32.mrf.mxu0
        %v2816 = vadd.f32 %v2747, %v2815
        %v2817 = vpop.f32.mrf.mxu0
        %2818 = vmatprep.mubr.f32.mxu0 0.0
        %2819 = vmatmul.mubr.f32.gmra.mxu0 %v2551
        %v2820 = vpop.f32.mrf.mxu0
        %v2821 = vadd.f32 %v2747, %v2820
        %v2822 = vpop.f32.mrf.mxu0
        %2823 = vmatprep.mubr.f32.mxu0 0.0
        %2824 = vmatmul.mubr.f32.gmra.mxu0 %v2554
        %v2825 = vpop.f32.mrf.mxu0
        %v2826 = vadd.f32 %v2747, %v2825
        %v2827 = vpop.f32.mrf.mxu0
        %2828 = vmatprep.mubr.f32.mxu0 0.0
        %2829 = vmatmul.mubr.f32.gmra.mxu0 %v2557
        %v2830 = vpop.f32.mrf.mxu0
        %v2831 = vadd.f32 %v2747, %v2830
        %v2832 = vpop.f32.mrf.mxu0
        %2833 = vmatprep.mubr.f32.mxu0 0.0
        %2834 = vmatmul.mubr.f32.gmra.mxu0 %v2560
        %v2835 = vpop.f32.mrf.mxu0
        %v2836 = vadd.f32 %v2747, %v2835
        %v2837 = vpop.f32.mrf.mxu0
        %2838 = vmatprep.mubr.f32.mxu0 0.0
        %2839 = vmatmul.mubr.f32.gmra.mxu0 %v2563
        %v2840 = vpop.f32.mrf.mxu0
        %v2841 = vadd.f32 %v2747, %v2840
        %v2842 = vpop.f32.mrf.mxu0
        %2843 = vmatprep.mubr.f32.mxu0 0.0
        %2844 = vmatmul.mubr.f32.gmra.mxu0 %v2566
        %v2845 = vpop.f32.mrf.mxu0
        %v2846 = vadd.f32 %v2747, %v2845
        %v2847 = vpop.f32.mrf.mxu0
        %2848 = vmatprep.mubr.f32.mxu0 0.0
        %2849 = vmatmul.mubr.f32.gmra.mxu0 %v2569
        %v2850 = vpop.f32.mrf.mxu0
        %v2851 = vadd.f32 %v2747, %v2850
        %v2852 = vpop.f32.mrf.mxu0
        %2853 = vmatprep.mubr.f32.mxu0 0.0
        %2854 = vmatmul.mubr.f32.gmra.mxu0 %v2572
        %v2855 = vpop.f32.mrf.mxu0
        %v2856 = vadd.f32 %v2747, %v2855
        %v2857 = vpop.f32.mrf.mxu0
        %2858 = vmatprep.mubr.f32.mxu0 0.0
        %2859 = vmatmul.mubr.f32.gmra.mxu0 %v2575
        %v2860 = vpop.f32.mrf.mxu0
        %v2861 = vadd.f32 %v2747, %v2860
        %v2862 = vpop.f32.mrf.mxu0
        %2863 = vmatprep.mubr.f32.mxu0 0.0
        %2864 = vmatmul.mubr.f32.gmra.mxu0 %v2578
        %v2865 = vpop.f32.mrf.mxu0
        %v2866 = vadd.f32 %v2747, %v2865
        %v2867 = vpop.f32.mrf.mxu0
        %2868 = vmatprep.mubr.f32.mxu0 0.0
        %2869 = vmatmul.mubr.f32.gmra.mxu0 %v2581
        %v2870 = vpop.f32.mrf.mxu0
        %v2871 = vadd.f32 %v2747, %v2870
        %v2872 = vpop.f32.mrf.mxu0
        %2873 = vmatprep.mubr.f32.mxu0 0.0
        %2874 = vmatmul.mubr.f32.gmra.mxu0 %v2584
        %v2875 = vpop.f32.mrf.mxu0
        %v2876 = vadd.f32 %v2747, %v2875
        %v2877 = vpop.f32.mrf.mxu0
        %2878 = vmatprep.mubr.f32.mxu0 0.0
        %2879 = vmatmul.mubr.f32.gmra.mxu0 %v2587
        %v2880 = vpop.f32.mrf.mxu0
        %v2881 = vadd.f32 %v2747, %v2880
        %v2882 = vpop.f32.mrf.mxu0
        %2883 = vmatprep.mubr.f32.mxu0 0.0
        %2884 = vmatmul.mubr.f32.gmra.mxu0 %v2590
        %v2885 = vpop.f32.mrf.mxu0
        %v2886 = vadd.f32 %v2747, %v2885
        %v2887 = vpop.f32.mrf.mxu0
        %2888 = vmatprep.mubr.f32.mxu0 0.0
        %2889 = vmatmul.mubr.f32.gmra.mxu0 %v2593
        %v2890 = vpop.f32.mrf.mxu0
        %v2891 = vadd.f32 %v2747, %v2890
        %v2892 = vpop.f32.mrf.mxu0
        %2893 = vdwg.mxu0
        %v2894 = vmul.f32 %v2816, 0.5
        %v2895 = vmul.f32 %v2821, 0.5
        %v2896 = vmul.f32 %v2826, 0.5
        %v2897 = vmul.f32 %v2831, 0.5
        %v2898 = vmul.f32 %v2836, 0.5
        %v2899 = vmul.f32 %v2841, 0.5
        %v2900 = vmul.f32 %v2846, 0.5
        %v2901 = vmul.f32 %v2851, 0.5
        %v2902 = vmul.f32 %v2856, 0.5
        %v2903 = vmul.f32 %v2861, 0.5
        %v2904 = vmul.f32 %v2866, 0.5
        %v2905 = vmul.f32 %v2871, 0.5
        %v2906 = vmul.f32 %v2876, 0.5
        %v2907 = vmul.f32 %v2881, 0.5
        %v2908 = vmul.f32 %v2886, 0.5
        %v2909 = vmul.f32 %v2891, 0.5
        %v2910 = vmul.f32 %v2816, 0.70710677
        %v2911 = vmul.f32 %v2821, 0.70710677
        %v2912 = vmul.f32 %v2826, 0.70710677
        %v2913 = vmul.f32 %v2831, 0.70710677
        %v2914 = vmul.f32 %v2836, 0.70710677
        %v2915 = vmul.f32 %v2841, 0.70710677
        %v2916 = vmul.f32 %v2846, 0.70710677
        %v2917 = vmul.f32 %v2851, 0.70710677
        %v2918 = vmul.f32 %v2856, 0.70710677
        %v2919 = vmul.f32 %v2861, 0.70710677
        %v2920 = vmul.f32 %v2866, 0.70710677
        %v2921 = vmul.f32 %v2871, 0.70710677
        %v2922 = vmul.f32 %v2876, 0.70710677
        %v2923 = vmul.f32 %v2881, 0.70710677
        %v2924 = vmul.f32 %v2886, 0.70710677
        %v2925 = vmul.f32 %v2891, 0.70710677
        %v2926 = verf.f32.pop %v2910
        %v2927 = verf.f32.pop %v2911
        %v2928 = verf.f32.pop %v2912
        %v2929 = verf.f32.pop %v2913
        %v2930 = verf.f32.pop %v2914
        %v2931 = verf.f32.pop %v2915
        %v2932 = verf.f32.pop %v2916
        %v2933 = verf.f32.pop %v2917
        %v2934 = verf.f32.pop %v2918
        %v2935 = verf.f32.pop %v2919
        %v2936 = verf.f32.pop %v2920
        %v2937 = verf.f32.pop %v2921
        %v2938 = verf.f32.pop %v2922
        %v2939 = verf.f32.pop %v2923
        %v2940 = verf.f32.pop %v2924
        %v2941 = verf.f32.pop %v2925
        %v2942 = vadd.f32 %v2926, 1.0
        %v2943 = vadd.f32 %v2927, 1.0
        %v2944 = vadd.f32 %v2928, 1.0
        %v2945 = vadd.f32 %v2929, 1.0
        %v2946 = vadd.f32 %v2930, 1.0
        %v2947 = vadd.f32 %v2931, 1.0
        %v2948 = vadd.f32 %v2932, 1.0
        %v2949 = vadd.f32 %v2933, 1.0
        %v2950 = vadd.f32 %v2934, 1.0
        %v2951 = vadd.f32 %v2935, 1.0
        %v2952 = vadd.f32 %v2936, 1.0
        %v2953 = vadd.f32 %v2937, 1.0
        %v2954 = vadd.f32 %v2938, 1.0
        %v2955 = vadd.f32 %v2939, 1.0
        %v2956 = vadd.f32 %v2940, 1.0
        %v2957 = vadd.f32 %v2941, 1.0
        %v2958 = vmul.f32 %v2894, %v2942
        %v2959 = vmul.f32 %v2895, %v2943
        %v2960 = vmul.f32 %v2896, %v2944
        %v2961 = vmul.f32 %v2897, %v2945
        %v2962 = vmul.f32 %v2898, %v2946
        %v2963 = vmul.f32 %v2899, %v2947
        %v2964 = vmul.f32 %v2900, %v2948
        %v2965 = vmul.f32 %v2901, %v2949
        %v2966 = vmul.f32 %v2902, %v2950
        %v2967 = vmul.f32 %v2903, %v2951
        %v2968 = vmul.f32 %v2904, %v2952
        %v2969 = vmul.f32 %v2905, %v2953
        %v2970 = vmul.f32 %v2906, %v2954
        %v2971 = vmul.f32 %v2907, %v2955
        %v2972 = vmul.f32 %v2908, %v2956
        %v2973 = vmul.f32 %v2909, %v2957
        %v2974 = vld [vmem:[%s5] sm:$0xf]
        %v2976 = vsel %vm804, %v2958, 0
        %v2979 = vsel %vm804, %v2959, 0
        %v2982 = vsel %vm804, %v2960, 0
        %v2985 = vsel %vm804, %v2961, 0
        %v2988 = vsel %vm804, %v2962, 0
        %v2991 = vsel %vm804, %v2963, 0
        %v2994 = vsel %vm804, %v2964, 0
        %v2997 = vsel %vm804, %v2965, 0
        %v3000 = vsel %vm804, %v2966, 0
        %v3003 = vsel %vm804, %v2967, 0
        %v3006 = vsel %vm804, %v2968, 0
        %v3009 = vsel %vm804, %v2969, 0
        %v3012 = vsel %vm804, %v2970, 0
        %v3015 = vsel %vm804, %v2971, 0
        %v3018 = vsel %vm804, %v2972, 0
        %v3021 = vsel %vm804, %v2973, 0
        %v3024 = vsel %vm853, %v2974, 0
        %3026 = vmatprep.subr.mxu0 0.0
        %3027 = vmatpush1.msra.mxu0 0.0
        %3028 = vmatprep.subr.mxu0 0.0
        %3029 = vmatpush1.msra.mxu0 0.0
        %3030 = vmatprep.subr.mxu0 0.0
        %3031 = vmatpush1.msra.mxu0 0.0
        %3032 = vmatprep.subr.mxu0 0.0
        %3033 = vmatpush1.msra.mxu0 0.0
        %3034 = vmatprep.subr.mxu0 0.0
        %3035 = vmatpush1.msra.mxu0 0.0
        %3036 = vmatprep.subr.mxu0 0.0
        %3037 = vmatpush1.msra.mxu0 0.0
        %3038 = vmatprep.subr.mxu0 0.0
        %3039 = vmatpush1.msra.mxu0 0.0
        %3040 = vmatprep.subr.mxu0 0.0
        %3041 = vmatpush1.msra.mxu0 0.0
        %3042 = vmatprep.subr.mxu0 0.0
        %3043 = vmatpush1.msra.mxu0 0.0
        %3044 = vmatprep.subr.mxu0 0.0
        %3045 = vmatpush1.msra.mxu0 0.0
        %3046 = vmatprep.subr.mxu0 0.0
        %3047 = vmatpush1.msra.mxu0 0.0
        %3048 = vmatprep.subr.mxu0 0.0
        %3049 = vmatpush1.msra.mxu0 0.0
        %3050 = vmatprep.subr.mxu0 0.0
        %3051 = vmatpush1.msra.mxu0 0.0
        %3052 = vmatprep.subr.mxu0 0.0
        %3053 = vmatpush1.msra.mxu0 0.0
        %3054 = vmatprep.subr.mxu0 0.0
        %3055 = vmatpush1.msra.mxu0 0.0
        %3056 = vmatprep.subr.mxu0 0.0
        %3057 = vmatpush1.msra.mxu0 %v3024
        %3058 = vmatprep.subr.mxu0 0.0
        %3059 = vmatpush2.msra.mxu0 0.0
        %3060 = vmatprep.subr.mxu0 0.0
        %3061 = vmatpush2.msra.mxu0 0.0
        %3062 = vmatprep.subr.mxu0 0.0
        %3063 = vmatpush2.msra.mxu0 0.0
        %3064 = vmatprep.subr.mxu0 0.0
        %3065 = vmatpush2.msra.mxu0 0.0
        %3066 = vmatprep.subr.mxu0 0.0
        %3067 = vmatpush2.msra.mxu0 0.0
        %3068 = vmatprep.subr.mxu0 0.0
        %3069 = vmatpush2.msra.mxu0 0.0
        %3070 = vmatprep.subr.mxu0 0.0
        %3071 = vmatpush2.msra.mxu0 0.0
        %3072 = vmatprep.subr.mxu0 0.0
        %3073 = vmatpush2.msra.mxu0 0.0
        %3074 = vmatprep.subr.mxu0 0.0
        %3075 = vmatpush2.msra.mxu0 0.0
        %3076 = vmatprep.subr.mxu0 0.0
        %3077 = vmatpush2.msra.mxu0 0.0
        %3078 = vmatprep.subr.mxu0 0.0
        %3079 = vmatpush2.msra.mxu0 0.0
        %3080 = vmatprep.subr.mxu0 0.0
        %3081 = vmatpush2.msra.mxu0 0.0
        %3082 = vmatprep.subr.mxu0 0.0
        %3083 = vmatpush2.msra.mxu0 0.0
        %3084 = vmatprep.subr.mxu0 0.0
        %3085 = vmatpush2.msra.mxu0 0.0
        %3086 = vmatprep.subr.mxu0 0.0
        %3087 = vmatpush2.msra.mxu0 0.0
        %3088 = vmatprep.subr.mxu0 0.0
        %3089 = vmatpush2.msra.mxu0 0.0
        %3090 = vmatprep.mubr.f32.mxu0 0.0
        %3091 = vmatmul.mubr.f32.gmra.mxu0 %v2976
        %v3092 = vpop.f32.mrf.mxu0
        %v3093 = vadd.f32 0.0, %v3092
        %v3094 = vpop.f32.mrf.mxu0
        %3095 = vmatprep.mubr.f32.mxu0 0.0
        %3096 = vmatmul.mubr.f32.gmra.mxu0 %v2979
        %v3097 = vpop.f32.mrf.mxu0
        %v3098 = vadd.f32 0.0, %v3097
        %v3099 = vpop.f32.mrf.mxu0
        %3100 = vmatprep.mubr.f32.mxu0 0.0
        %3101 = vmatmul.mubr.f32.gmra.mxu0 %v2982
        %v3102 = vpop.f32.mrf.mxu0
        %v3103 = vadd.f32 0.0, %v3102
        %v3104 = vpop.f32.mrf.mxu0
        %3105 = vmatprep.mubr.f32.mxu0 0.0
        %3106 = vmatmul.mubr.f32.gmra.mxu0 %v2985
        %v3107 = vpop.f32.mrf.mxu0
        %v3108 = vadd.f32 0.0, %v3107
        %v3109 = vpop.f32.mrf.mxu0
        %3110 = vmatprep.mubr.f32.mxu0 0.0
        %3111 = vmatmul.mubr.f32.gmra.mxu0 %v2988
        %v3112 = vpop.f32.mrf.mxu0
        %v3113 = vadd.f32 0.0, %v3112
        %v3114 = vpop.f32.mrf.mxu0
        %3115 = vmatprep.mubr.f32.mxu0 0.0
        %3116 = vmatmul.mubr.f32.gmra.mxu0 %v2991
        %v3117 = vpop.f32.mrf.mxu0
        %v3118 = vadd.f32 0.0, %v3117
        %v3119 = vpop.f32.mrf.mxu0
        %3120 = vmatprep.mubr.f32.mxu0 0.0
        %3121 = vmatmul.mubr.f32.gmra.mxu0 %v2994
        %v3122 = vpop.f32.mrf.mxu0
        %v3123 = vadd.f32 0.0, %v3122
        %v3124 = vpop.f32.mrf.mxu0
        %3125 = vmatprep.mubr.f32.mxu0 0.0
        %3126 = vmatmul.mubr.f32.gmra.mxu0 %v2997
        %v3127 = vpop.f32.mrf.mxu0
        %v3128 = vadd.f32 0.0, %v3127
        %v3129 = vpop.f32.mrf.mxu0
        %3130 = vmatprep.mubr.f32.mxu0 0.0
        %3131 = vmatmul.mubr.f32.gmra.mxu0 %v3000
        %v3132 = vpop.f32.mrf.mxu0
        %v3133 = vadd.f32 0.0, %v3132
        %v3134 = vpop.f32.mrf.mxu0
        %3135 = vmatprep.mubr.f32.mxu0 0.0
        %3136 = vmatmul.mubr.f32.gmra.mxu0 %v3003
        %v3137 = vpop.f32.mrf.mxu0
        %v3138 = vadd.f32 0.0, %v3137
        %v3139 = vpop.f32.mrf.mxu0
        %3140 = vmatprep.mubr.f32.mxu0 0.0
        %3141 = vmatmul.mubr.f32.gmra.mxu0 %v3006
        %v3142 = vpop.f32.mrf.mxu0
        %v3143 = vadd.f32 0.0, %v3142
        %v3144 = vpop.f32.mrf.mxu0
        %3145 = vmatprep.mubr.f32.mxu0 0.0
        %3146 = vmatmul.mubr.f32.gmra.mxu0 %v3009
        %v3147 = vpop.f32.mrf.mxu0
        %v3148 = vadd.f32 0.0, %v3147
        %v3149 = vpop.f32.mrf.mxu0
        %3150 = vmatprep.mubr.f32.mxu0 0.0
        %3151 = vmatmul.mubr.f32.gmra.mxu0 %v3012
        %v3152 = vpop.f32.mrf.mxu0
        %v3153 = vadd.f32 0.0, %v3152
        %v3154 = vpop.f32.mrf.mxu0
        %3155 = vmatprep.mubr.f32.mxu0 0.0
        %3156 = vmatmul.mubr.f32.gmra.mxu0 %v3015
        %v3157 = vpop.f32.mrf.mxu0
        %v3158 = vadd.f32 0.0, %v3157
        %v3159 = vpop.f32.mrf.mxu0
        %3160 = vmatprep.mubr.f32.mxu0 0.0
        %3161 = vmatmul.mubr.f32.gmra.mxu0 %v3018
        %v3162 = vpop.f32.mrf.mxu0
        %v3163 = vadd.f32 0.0, %v3162
        %v3164 = vpop.f32.mrf.mxu0
        %3165 = vmatprep.mubr.f32.mxu0 0.0
        %3166 = vmatmul.mubr.f32.gmra.mxu0 %v3021
        %v3167 = vpop.f32.mrf.mxu0
        %v3168 = vadd.f32 0.0, %v3167
        %v3169 = vpop.f32.mrf.mxu0
        %3170 = vdwg.mxu0
        %3187 = vrot.lane.b32.xlu0 %v3093, 112
        %v3188 = vpop.permute.xlu0 %3187
        %3189 = vrot.lane.b32.xlu0 %v3098, 112
        %v3190 = vpop.permute.xlu0 %3189
        %3191 = vrot.lane.b32.xlu0 %v3103, 112
        %v3192 = vpop.permute.xlu0 %3191
        %3193 = vrot.lane.b32.xlu0 %v3108, 112
        %v3194 = vpop.permute.xlu0 %3193
        %3195 = vrot.lane.b32.xlu0 %v3113, 112
        %v3196 = vpop.permute.xlu0 %3195
        %3197 = vrot.lane.b32.xlu0 %v3118, 112
        %v3198 = vpop.permute.xlu0 %3197
        %3199 = vrot.lane.b32.xlu0 %v3123, 112
        %v3200 = vpop.permute.xlu0 %3199
        %3201 = vrot.lane.b32.xlu0 %v3128, 112
        %v3202 = vpop.permute.xlu0 %3201
        %3203 = vrot.lane.b32.xlu0 %v3133, 112
        %v3204 = vpop.permute.xlu0 %3203
        %3205 = vrot.lane.b32.xlu0 %v3138, 112
        %v3206 = vpop.permute.xlu0 %3205
        %3207 = vrot.lane.b32.xlu0 %v3143, 112
        %v3208 = vpop.permute.xlu0 %3207
        %3209 = vrot.lane.b32.xlu0 %v3148, 112
        %v3210 = vpop.permute.xlu0 %3209
        %3211 = vrot.lane.b32.xlu0 %v3153, 112
        %v3212 = vpop.permute.xlu0 %3211
        %3213 = vrot.lane.b32.xlu0 %v3158, 112
        %v3214 = vpop.permute.xlu0 %3213
        %3215 = vrot.lane.b32.xlu0 %v3163, 112
        %v3216 = vpop.permute.xlu0 %3215
        %3217 = vrot.lane.b32.xlu0 %v3168, 112
        %v3218 = vpop.permute.xlu0 %3217
        %v3219 = vsel %vm1050, %v3093, 0
        %v3221 = vsel %vm1050, %v3098, 0
        %v3223 = vsel %vm1050, %v3103, 0
        %v3225 = vsel %vm1050, %v3108, 0
        %v3227 = vsel %vm1050, %v3113, 0
        %v3229 = vsel %vm1050, %v3118, 0
        %v3231 = vsel %vm1050, %v3123, 0
        %v3233 = vsel %vm1050, %v3128, 0
        %v3235 = vsel %vm1050, %v3133, 0
        %v3237 = vsel %vm1050, %v3138, 0
        %v3239 = vsel %vm1050, %v3143, 0
        %v3241 = vsel %vm1050, %v3148, 0
        %v3243 = vsel %vm1050, %v3153, 0
        %v3245 = vsel %vm1050, %v3158, 0
        %v3247 = vsel %vm1050, %v3163, 0
        %v3249 = vsel %vm1050, %v3168, 0
        %v3251 = vsel %vm1050, %v3188, 0
        %v3253 = vsel %vm1050, %v3190, 0
        %v3255 = vsel %vm1050, %v3192, 0
        %v3257 = vsel %vm1050, %v3194, 0
        %v3259 = vsel %vm1050, %v3196, 0
        %v3261 = vsel %vm1050, %v3198, 0
        %v3263 = vsel %vm1050, %v3200, 0
        %v3265 = vsel %vm1050, %v3202, 0
        %v3267 = vsel %vm1050, %v3204, 0
        %v3269 = vsel %vm1050, %v3206, 0
        %v3271 = vsel %vm1050, %v3208, 0
        %v3273 = vsel %vm1050, %v3210, 0
        %v3275 = vsel %vm1050, %v3212, 0
        %v3277 = vsel %vm1050, %v3214, 0
        %v3279 = vsel %vm1050, %v3216, 0
        %v3281 = vsel %vm1050, %v3218, 0
        %3283 = vmatprep.subr.mxu0 0.0
        %3284 = vmatpush1.xpose.msra.mxu0 %v3281
        %3285 = vmatprep.subr.mxu0 0.0
        %3286 = vmatpush1.xpose.msra.mxu0 %v3279
        %3287 = vmatprep.subr.mxu0 0.0
        %3288 = vmatpush1.xpose.msra.mxu0 %v3277
        %3289 = vmatprep.subr.mxu0 0.0
        %3290 = vmatpush1.xpose.msra.mxu0 %v3275
        %3291 = vmatprep.subr.mxu0 0.0
        %3292 = vmatpush1.xpose.msra.mxu0 %v3273
        %3293 = vmatprep.subr.mxu0 0.0
        %3294 = vmatpush1.xpose.msra.mxu0 %v3271
        %3295 = vmatprep.subr.mxu0 0.0
        %3296 = vmatpush1.xpose.msra.mxu0 %v3269
        %3297 = vmatprep.subr.mxu0 0.0
        %3298 = vmatpush1.xpose.msra.mxu0 %v3267
        %3299 = vmatprep.subr.mxu0 0.0
        %3300 = vmatpush1.xpose.msra.mxu0 %v3265
        %3301 = vmatprep.subr.mxu0 0.0
        %3302 = vmatpush1.xpose.msra.mxu0 %v3263
        %3303 = vmatprep.subr.mxu0 0.0
        %3304 = vmatpush1.xpose.msra.mxu0 %v3261
        %3305 = vmatprep.subr.mxu0 0.0
        %3306 = vmatpush1.xpose.msra.mxu0 %v3259
        %3307 = vmatprep.subr.mxu0 0.0
        %3308 = vmatpush1.xpose.msra.mxu0 %v3257
        %3309 = vmatprep.subr.mxu0 0.0
        %3310 = vmatpush1.xpose.msra.mxu0 %v3255
        %3311 = vmatprep.subr.mxu0 0.0
        %3312 = vmatpush1.xpose.msra.mxu0 %v3253
        %3313 = vmatprep.subr.mxu0 0.0
        %3314 = vmatpush1.xpose.msra.mxu0 %v3251
        %3315 = vmatprep.subr.mxu0 0.0
        %3316 = vmatpush2.xpose.msra.mxu0 0.0
        %3317 = vmatprep.subr.mxu0 0.0
        %3318 = vmatpush2.xpose.msra.mxu0 0.0
        %3319 = vmatprep.subr.mxu0 0.0
        %3320 = vmatpush2.xpose.msra.mxu0 0.0
        %3321 = vmatprep.subr.mxu0 0.0
        %3322 = vmatpush2.xpose.msra.mxu0 0.0
        %3323 = vmatprep.subr.mxu0 0.0
        %3324 = vmatpush2.xpose.msra.mxu0 0.0
        %3325 = vmatprep.subr.mxu0 0.0
        %3326 = vmatpush2.xpose.msra.mxu0 0.0
        %3327 = vmatprep.subr.mxu0 0.0
        %3328 = vmatpush2.xpose.msra.mxu0 0.0
        %3329 = vmatprep.subr.mxu0 0.0
        %3330 = vmatpush2.xpose.msra.mxu0 0.0
        %3331 = vmatprep.subr.mxu0 0.0
        %3332 = vmatpush2.xpose.msra.mxu0 0.0
        %3333 = vmatprep.subr.mxu0 0.0
        %3334 = vmatpush2.xpose.msra.mxu0 0.0
        %3335 = vmatprep.subr.mxu0 0.0
        %3336 = vmatpush2.xpose.msra.mxu0 0.0
        %3337 = vmatprep.subr.mxu0 0.0
        %3338 = vmatpush2.xpose.msra.mxu0 0.0
        %3339 = vmatprep.subr.mxu0 0.0
        %3340 = vmatpush2.xpose.msra.mxu0 0.0
        %3341 = vmatprep.subr.mxu0 0.0
        %3342 = vmatpush2.xpose.msra.mxu0 0.0
        %3343 = vmatprep.subr.mxu0 0.0
        %3344 = vmatpush2.xpose.msra.mxu0 0.0
        %3345 = vmatprep.subr.mxu0 0.0
        %3346 = vmatpush2.xpose.msra.mxu0 0.0
        %3347 = vmatprep.mubr.f32.mxu0 0.0
        %3348 = vmatmul.mubr.f32.gmra.mxu0 %v3219
        %v3349 = vpop.f32.mrf.mxu0
        %v3350 = vadd.f32 %v334, %v3349
        %v3351 = vpop.f32.mrf.mxu0
        %3352 = vmatprep.mubr.f32.mxu0 0.0
        %3353 = vmatmul.mubr.f32.gmra.mxu0 %v3221
        %v3354 = vpop.f32.mrf.mxu0
        %v3355 = vadd.f32 %v335, %v3354
        %v3356 = vpop.f32.mrf.mxu0
        %3357 = vmatprep.mubr.f32.mxu0 0.0
        %3358 = vmatmul.mubr.f32.gmra.mxu0 %v3223
        %v3359 = vpop.f32.mrf.mxu0
        %v3360 = vadd.f32 %v336, %v3359
        %v3361 = vpop.f32.mrf.mxu0
        %3362 = vmatprep.mubr.f32.mxu0 0.0
        %3363 = vmatmul.mubr.f32.gmra.mxu0 %v3225
        %v3364 = vpop.f32.mrf.mxu0
        %v3365 = vadd.f32 %v337, %v3364
        %v3366 = vpop.f32.mrf.mxu0
        %3367 = vmatprep.mubr.f32.mxu0 0.0
        %3368 = vmatmul.mubr.f32.gmra.mxu0 %v3227
        %v3369 = vpop.f32.mrf.mxu0
        %v3370 = vadd.f32 %v338, %v3369
        %v3371 = vpop.f32.mrf.mxu0
        %3372 = vmatprep.mubr.f32.mxu0 0.0
        %3373 = vmatmul.mubr.f32.gmra.mxu0 %v3229
        %v3374 = vpop.f32.mrf.mxu0
        %v3375 = vadd.f32 %v339, %v3374
        %v3376 = vpop.f32.mrf.mxu0
        %3377 = vmatprep.mubr.f32.mxu0 0.0
        %3378 = vmatmul.mubr.f32.gmra.mxu0 %v3231
        %v3379 = vpop.f32.mrf.mxu0
        %v3380 = vadd.f32 %v340, %v3379
        %v3381 = vpop.f32.mrf.mxu0
        %3382 = vmatprep.mubr.f32.mxu0 0.0
        %3383 = vmatmul.mubr.f32.gmra.mxu0 %v3233
        %v3384 = vpop.f32.mrf.mxu0
        %v3385 = vadd.f32 %v341, %v3384
        %v3386 = vpop.f32.mrf.mxu0
        %3387 = vmatprep.mubr.f32.mxu0 0.0
        %3388 = vmatmul.mubr.f32.gmra.mxu0 %v3235
        %v3389 = vpop.f32.mrf.mxu0
        %v3390 = vadd.f32 %v342, %v3389
        %v3391 = vpop.f32.mrf.mxu0
        %3392 = vmatprep.mubr.f32.mxu0 0.0
        %3393 = vmatmul.mubr.f32.gmra.mxu0 %v3237
        %v3394 = vpop.f32.mrf.mxu0
        %v3395 = vadd.f32 %v343, %v3394
        %v3396 = vpop.f32.mrf.mxu0
        %3397 = vmatprep.mubr.f32.mxu0 0.0
        %3398 = vmatmul.mubr.f32.gmra.mxu0 %v3239
        %v3399 = vpop.f32.mrf.mxu0
        %v3400 = vadd.f32 %v344, %v3399
        %v3401 = vpop.f32.mrf.mxu0
        %3402 = vmatprep.mubr.f32.mxu0 0.0
        %3403 = vmatmul.mubr.f32.gmra.mxu0 %v3241
        %v3404 = vpop.f32.mrf.mxu0
        %v3405 = vadd.f32 %v345, %v3404
        %v3406 = vpop.f32.mrf.mxu0
        %3407 = vmatprep.mubr.f32.mxu0 0.0
        %3408 = vmatmul.mubr.f32.gmra.mxu0 %v3243
        %v3409 = vpop.f32.mrf.mxu0
        %v3410 = vadd.f32 %v346, %v3409
        %v3411 = vpop.f32.mrf.mxu0
        %3412 = vmatprep.mubr.f32.mxu0 0.0
        %3413 = vmatmul.mubr.f32.gmra.mxu0 %v3245
        %v3414 = vpop.f32.mrf.mxu0
        %v3415 = vadd.f32 %v347, %v3414
        %v3416 = vpop.f32.mrf.mxu0
        %3417 = vmatprep.mubr.f32.mxu0 0.0
        %3418 = vmatmul.mubr.f32.gmra.mxu0 %v3247
        %v3419 = vpop.f32.mrf.mxu0
        %v3420 = vadd.f32 %v348, %v3419
        %v3421 = vpop.f32.mrf.mxu0
        %3422 = vmatprep.mubr.f32.mxu0 0.0
        %3423 = vmatmul.mubr.f32.gmra.mxu0 %v3249
        %v3424 = vpop.f32.mrf.mxu0
        %v3425 = vadd.f32 %v349, %v3424
        %v3426 = vpop.f32.mrf.mxu0
        %3427 = vdwg.mxu0
        %3428 = vmax.xlane.f32.xlu0 %v3350
        %v3429 = vpop.xlane.xlu0 %3428
        %3430 = vmax.xlane.f32.xlu0 %v3355
        %v3431 = vpop.xlane.xlu0 %3430
        %3432 = vmax.xlane.f32.xlu0 %v3360
        %v3433 = vpop.xlane.xlu0 %3432
        %3434 = vmax.xlane.f32.xlu0 %v3365
        %v3435 = vpop.xlane.xlu0 %3434
        %3436 = vmax.xlane.f32.xlu0 %v3370
        %v3437 = vpop.xlane.xlu0 %3436
        %3438 = vmax.xlane.f32.xlu0 %v3375
        %v3439 = vpop.xlane.xlu0 %3438
        %3440 = vmax.xlane.f32.xlu0 %v3380
        %v3441 = vpop.xlane.xlu0 %3440
        %3442 = vmax.xlane.f32.xlu0 %v3385
        %v3443 = vpop.xlane.xlu0 %3442
        %3444 = vmax.xlane.f32.xlu0 %v3390
        %v3445 = vpop.xlane.xlu0 %3444
        %3446 = vmax.xlane.f32.xlu0 %v3395
        %v3447 = vpop.xlane.xlu0 %3446
        %3448 = vmax.xlane.f32.xlu0 %v3400
        %v3449 = vpop.xlane.xlu0 %3448
        %3450 = vmax.xlane.f32.xlu0 %v3405
        %v3451 = vpop.xlane.xlu0 %3450
        %3452 = vmax.xlane.f32.xlu0 %v3410
        %v3453 = vpop.xlane.xlu0 %3452
        %3454 = vmax.xlane.f32.xlu0 %v3415
        %v3455 = vpop.xlane.xlu0 %3454
        %3456 = vmax.xlane.f32.xlu0 %v3420
        %v3457 = vpop.xlane.xlu0 %3456
        %3458 = vmax.xlane.f32.xlu0 %v3425
        %v3459 = vpop.xlane.xlu0 %3458
        %v3460 = vsub.f32 %v3350, %v3429
        %v3461 = vsub.f32 %v3355, %v3431
        %v3462 = vsub.f32 %v3360, %v3433
        %v3463 = vsub.f32 %v3365, %v3435
        %v3464 = vsub.f32 %v3370, %v3437
        %v3465 = vsub.f32 %v3375, %v3439
        %v3466 = vsub.f32 %v3380, %v3441
        %v3467 = vsub.f32 %v3385, %v3443
        %v3468 = vsub.f32 %v3390, %v3445
        %v3469 = vsub.f32 %v3395, %v3447
        %v3470 = vsub.f32 %v3400, %v3449
        %v3471 = vsub.f32 %v3405, %v3451
        %v3472 = vsub.f32 %v3410, %v3453
        %v3473 = vsub.f32 %v3415, %v3455
        %v3474 = vsub.f32 %v3420, %v3457
        %v3475 = vsub.f32 %v3425, %v3459
        %v3476 = vmul.f32 %v3460, 1.442695
        %v3477 = vpow.pop %v3476
        %v3478 = vmul.f32 %v3461, 1.442695
        %v3479 = vpow.pop %v3478
        %v3480 = vmul.f32 %v3462, 1.442695
        %v3481 = vpow.pop %v3480
        %v3482 = vmul.f32 %v3463, 1.442695
        %v3483 = vpow.pop %v3482
        %v3484 = vmul.f32 %v3464, 1.442695
        %v3485 = vpow.pop %v3484
        %v3486 = vmul.f32 %v3465, 1.442695
        %v3487 = vpow.pop %v3486
        %v3488 = vmul.f32 %v3466, 1.442695
        %v3489 = vpow.pop %v3488
        %v3490 = vmul.f32 %v3467, 1.442695
        %v3491 = vpow.pop %v3490
        %v3492 = vmul.f32 %v3468, 1.442695
        %v3493 = vpow.pop %v3492
        %v3494 = vmul.f32 %v3469, 1.442695
        %v3495 = vpow.pop %v3494
        %v3496 = vmul.f32 %v3470, 1.442695
        %v3497 = vpow.pop %v3496
        %v3498 = vmul.f32 %v3471, 1.442695
        %v3499 = vpow.pop %v3498
        %v3500 = vmul.f32 %v3472, 1.442695
        %v3501 = vpow.pop %v3500
        %v3502 = vmul.f32 %v3473, 1.442695
        %v3503 = vpow.pop %v3502
        %v3504 = vmul.f32 %v3474, 1.442695
        %v3505 = vpow.pop %v3504
        %v3506 = vmul.f32 %v3475, 1.442695
        %v3507 = vpow.pop %v3506
        %3508 = vadd.xlane.f32.xlu0 %v3477
        %v3509 = vpop.xlane.xlu0 %3508
        %3510 = vadd.xlane.f32.xlu0 %v3479
        %v3511 = vpop.xlane.xlu0 %3510
        %3512 = vadd.xlane.f32.xlu0 %v3481
        %v3513 = vpop.xlane.xlu0 %3512
        %3514 = vadd.xlane.f32.xlu0 %v3483
        %v3515 = vpop.xlane.xlu0 %3514
        %3516 = vadd.xlane.f32.xlu0 %v3485
        %v3517 = vpop.xlane.xlu0 %3516
        %3518 = vadd.xlane.f32.xlu0 %v3487
        %v3519 = vpop.xlane.xlu0 %3518
        %3520 = vadd.xlane.f32.xlu0 %v3489
        %v3521 = vpop.xlane.xlu0 %3520
        %3522 = vadd.xlane.f32.xlu0 %v3491
        %v3523 = vpop.xlane.xlu0 %3522
        %3524 = vadd.xlane.f32.xlu0 %v3493
        %v3525 = vpop.xlane.xlu0 %3524
        %3526 = vadd.xlane.f32.xlu0 %v3495
        %v3527 = vpop.xlane.xlu0 %3526
        %3528 = vadd.xlane.f32.xlu0 %v3497
        %v3529 = vpop.xlane.xlu0 %3528
        %3530 = vadd.xlane.f32.xlu0 %v3499
        %v3531 = vpop.xlane.xlu0 %3530
        %3532 = vadd.xlane.f32.xlu0 %v3501
        %v3533 = vpop.xlane.xlu0 %3532
        %3534 = vadd.xlane.f32.xlu0 %v3503
        %v3535 = vpop.xlane.xlu0 %3534
        %3536 = vadd.xlane.f32.xlu0 %v3505
        %v3537 = vpop.xlane.xlu0 %3536
        %3538 = vadd.xlane.f32.xlu0 %v3507
        %v3539 = vpop.xlane.xlu0 %3538
        %v3540 = vrcp.pop %v3509
        %v3541 = vrcp.pop %v3511
        %v3542 = vrcp.pop %v3513
        %v3543 = vrcp.pop %v3515
        %v3544 = vrcp.pop %v3517
        %v3545 = vrcp.pop %v3519
        %v3546 = vrcp.pop %v3521
        %v3547 = vrcp.pop %v3523
        %v3548 = vrcp.pop %v3525
        %v3549 = vrcp.pop %v3527
        %v3550 = vrcp.pop %v3529
        %v3551 = vrcp.pop %v3531
        %v3552 = vrcp.pop %v3533
        %v3553 = vrcp.pop %v3535
        %v3554 = vrcp.pop %v3537
        %v3555 = vrcp.pop %v3539
        %v3556 = vmul.f32 %v3477, %v3540
        %v3557 = vmul.f32 %v3479, %v3541
        %v3558 = vmul.f32 %v3481, %v3542
        %v3559 = vmul.f32 %v3483, %v3543
        %v3560 = vmul.f32 %v3485, %v3544
        %v3561 = vmul.f32 %v3487, %v3545
        %v3562 = vmul.f32 %v3489, %v3546
        %v3563 = vmul.f32 %v3491, %v3547
        %v3564 = vmul.f32 %v3493, %v3548
        %v3565 = vmul.f32 %v3495, %v3549
        %v3566 = vmul.f32 %v3497, %v3550
        %v3567 = vmul.f32 %v3499, %v3551
        %v3568 = vmul.f32 %v3501, %v3552
        %v3569 = vmul.f32 %v3503, %v3553
        %v3570 = vmul.f32 %v3505, %v3554
        %v3571 = vmul.f32 %v3507, %v3555
        %3572 = vrot.lane.b32.xlu0 %v3093, 96
        %v3573 = vpop.permute.xlu0 %3572
        %3574 = vrot.lane.b32.xlu0 %v3098, 96
        %v3575 = vpop.permute.xlu0 %3574
        %3576 = vrot.lane.b32.xlu0 %v3103, 96
        %v3577 = vpop.permute.xlu0 %3576
        %3578 = vrot.lane.b32.xlu0 %v3108, 96
        %v3579 = vpop.permute.xlu0 %3578
        %3580 = vrot.lane.b32.xlu0 %v3113, 96
        %v3581 = vpop.permute.xlu0 %3580
        %3582 = vrot.lane.b32.xlu0 %v3118, 96
        %v3583 = vpop.permute.xlu0 %3582
        %3584 = vrot.lane.b32.xlu0 %v3123, 96
        %v3585 = vpop.permute.xlu0 %3584
        %3586 = vrot.lane.b32.xlu0 %v3128, 96
        %v3587 = vpop.permute.xlu0 %3586
        %3588 = vrot.lane.b32.xlu0 %v3133, 96
        %v3589 = vpop.permute.xlu0 %3588
        %3590 = vrot.lane.b32.xlu0 %v3138, 96
        %v3591 = vpop.permute.xlu0 %3590
        %3592 = vrot.lane.b32.xlu0 %v3143, 96
        %v3593 = vpop.permute.xlu0 %3592
        %3594 = vrot.lane.b32.xlu0 %v3148, 96
        %v3595 = vpop.permute.xlu0 %3594
        %3596 = vrot.lane.b32.xlu0 %v3153, 96
        %v3597 = vpop.permute.xlu0 %3596
        %3598 = vrot.lane.b32.xlu0 %v3158, 96
        %v3599 = vpop.permute.xlu0 %3598
        %3600 = vrot.lane.b32.xlu0 %v3163, 96
        %v3601 = vpop.permute.xlu0 %3600
        %3602 = vrot.lane.b32.xlu0 %v3168, 96
        %v3603 = vpop.permute.xlu0 %3602
        %3620 = vmatprep.subr.mxu0 0.0
        %3621 = vmatpush1.msra.mxu0 %v3603
        %3622 = vmatprep.subr.mxu0 0.0
        %3623 = vmatpush1.msra.mxu0 %v3601
        %3624 = vmatprep.subr.mxu0 0.0
        %3625 = vmatpush1.msra.mxu0 %v3599
        %3626 = vmatprep.subr.mxu0 0.0
        %3627 = vmatpush1.msra.mxu0 %v3597
        %3628 = vmatprep.subr.mxu0 0.0
        %3629 = vmatpush1.msra.mxu0 %v3595
        %3630 = vmatprep.subr.mxu0 0.0
        %3631 = vmatpush1.msra.mxu0 %v3593
        %3632 = vmatprep.subr.mxu0 0.0
        %3633 = vmatpush1.msra.mxu0 %v3591
        %3634 = vmatprep.subr.mxu0 0.0
        %3635 = vmatpush1.msra.mxu0 %v3589
        %3636 = vmatprep.subr.mxu0 0.0
        %3637 = vmatpush1.msra.mxu0 %v3587
        %3638 = vmatprep.subr.mxu0 0.0
        %3639 = vmatpush1.msra.mxu0 %v3585
        %3640 = vmatprep.subr.mxu0 0.0
        %3641 = vmatpush1.msra.mxu0 %v3583
        %3642 = vmatprep.subr.mxu0 0.0
        %3643 = vmatpush1.msra.mxu0 %v3581
        %3644 = vmatprep.subr.mxu0 0.0
        %3645 = vmatpush1.msra.mxu0 %v3579
        %3646 = vmatprep.subr.mxu0 0.0
        %3647 = vmatpush1.msra.mxu0 %v3577
        %3648 = vmatprep.subr.mxu0 0.0
        %3649 = vmatpush1.msra.mxu0 %v3575
        %3650 = vmatprep.subr.mxu0 0.0
        %3651 = vmatpush1.msra.mxu0 %v3573
        %3652 = vmatprep.subr.mxu0 0.0
        %3653 = vmatpush2.msra.mxu0 0.0
        %3654 = vmatprep.subr.mxu0 0.0
        %3655 = vmatpush2.msra.mxu0 0.0
        %3656 = vmatprep.subr.mxu0 0.0
        %3657 = vmatpush2.msra.mxu0 0.0
        %3658 = vmatprep.subr.mxu0 0.0
        %3659 = vmatpush2.msra.mxu0 0.0
        %3660 = vmatprep.subr.mxu0 0.0
        %3661 = vmatpush2.msra.mxu0 0.0
        %3662 = vmatprep.subr.mxu0 0.0
        %3663 = vmatpush2.msra.mxu0 0.0
        %3664 = vmatprep.subr.mxu0 0.0
        %3665 = vmatpush2.msra.mxu0 0.0
        %3666 = vmatprep.subr.mxu0 0.0
        %3667 = vmatpush2.msra.mxu0 0.0
        %3668 = vmatprep.subr.mxu0 0.0
        %3669 = vmatpush2.msra.mxu0 0.0
        %3670 = vmatprep.subr.mxu0 0.0
        %3671 = vmatpush2.msra.mxu0 0.0
        %3672 = vmatprep.subr.mxu0 0.0
        %3673 = vmatpush2.msra.mxu0 0.0
        %3674 = vmatprep.subr.mxu0 0.0
        %3675 = vmatpush2.msra.mxu0 0.0
        %3676 = vmatprep.subr.mxu0 0.0
        %3677 = vmatpush2.msra.mxu0 0.0
        %3678 = vmatprep.subr.mxu0 0.0
        %3679 = vmatpush2.msra.mxu0 0.0
        %3680 = vmatprep.subr.mxu0 0.0
        %3681 = vmatpush2.msra.mxu0 0.0
        %3682 = vmatprep.subr.mxu0 0.0
        %3683 = vmatpush2.msra.mxu0 0.0
        %3684 = vmatprep.mubr.f32.mxu0 0.0
        %3685 = vmatmul.mubr.f32.gmra.mxu0 %v3556
        %v3686 = vpop.f32.mrf.mxu0
        %v3687 = vadd.f32 0.0, %v3686
        %v3688 = vpop.f32.mrf.mxu0
        %3689 = vmatprep.mubr.f32.mxu0 0.0
        %3690 = vmatmul.mubr.f32.gmra.mxu0 %v3557
        %v3691 = vpop.f32.mrf.mxu0
        %v3692 = vadd.f32 0.0, %v3691
        %v3693 = vpop.f32.mrf.mxu0
        %3694 = vmatprep.mubr.f32.mxu0 0.0
        %3695 = vmatmul.mubr.f32.gmra.mxu0 %v3558
        %v3696 = vpop.f32.mrf.mxu0
        %v3697 = vadd.f32 0.0, %v3696
        %v3698 = vpop.f32.mrf.mxu0
        %3699 = vmatprep.mubr.f32.mxu0 0.0
        %3700 = vmatmul.mubr.f32.gmra.mxu0 %v3559
        %v3701 = vpop.f32.mrf.mxu0
        %v3702 = vadd.f32 0.0, %v3701
        %v3703 = vpop.f32.mrf.mxu0
        %3704 = vmatprep.mubr.f32.mxu0 0.0
        %3705 = vmatmul.mubr.f32.gmra.mxu0 %v3560
        %v3706 = vpop.f32.mrf.mxu0
        %v3707 = vadd.f32 0.0, %v3706
        %v3708 = vpop.f32.mrf.mxu0
        %3709 = vmatprep.mubr.f32.mxu0 0.0
        %3710 = vmatmul.mubr.f32.gmra.mxu0 %v3561
        %v3711 = vpop.f32.mrf.mxu0
        %v3712 = vadd.f32 0.0, %v3711
        %v3713 = vpop.f32.mrf.mxu0
        %3714 = vmatprep.mubr.f32.mxu0 0.0
        %3715 = vmatmul.mubr.f32.gmra.mxu0 %v3562
        %v3716 = vpop.f32.mrf.mxu0
        %v3717 = vadd.f32 0.0, %v3716
        %v3718 = vpop.f32.mrf.mxu0
        %3719 = vmatprep.mubr.f32.mxu0 0.0
        %3720 = vmatmul.mubr.f32.gmra.mxu0 %v3563
        %v3721 = vpop.f32.mrf.mxu0
        %v3722 = vadd.f32 0.0, %v3721
        %v3723 = vpop.f32.mrf.mxu0
        %3724 = vmatprep.mubr.f32.mxu0 0.0
        %3725 = vmatmul.mubr.f32.gmra.mxu0 %v3564
        %v3726 = vpop.f32.mrf.mxu0
        %v3727 = vadd.f32 0.0, %v3726
        %v3728 = vpop.f32.mrf.mxu0
        %3729 = vmatprep.mubr.f32.mxu0 0.0
        %3730 = vmatmul.mubr.f32.gmra.mxu0 %v3565
        %v3731 = vpop.f32.mrf.mxu0
        %v3732 = vadd.f32 0.0, %v3731
        %v3733 = vpop.f32.mrf.mxu0
        %3734 = vmatprep.mubr.f32.mxu0 0.0
        %3735 = vmatmul.mubr.f32.gmra.mxu0 %v3566
        %v3736 = vpop.f32.mrf.mxu0
        %v3737 = vadd.f32 0.0, %v3736
        %v3738 = vpop.f32.mrf.mxu0
        %3739 = vmatprep.mubr.f32.mxu0 0.0
        %3740 = vmatmul.mubr.f32.gmra.mxu0 %v3567
        %v3741 = vpop.f32.mrf.mxu0
        %v3742 = vadd.f32 0.0, %v3741
        %v3743 = vpop.f32.mrf.mxu0
        %3744 = vmatprep.mubr.f32.mxu0 0.0
        %3745 = vmatmul.mubr.f32.gmra.mxu0 %v3568
        %v3746 = vpop.f32.mrf.mxu0
        %v3747 = vadd.f32 0.0, %v3746
        %v3748 = vpop.f32.mrf.mxu0
        %3749 = vmatprep.mubr.f32.mxu0 0.0
        %3750 = vmatmul.mubr.f32.gmra.mxu0 %v3569
        %v3751 = vpop.f32.mrf.mxu0
        %v3752 = vadd.f32 0.0, %v3751
        %v3753 = vpop.f32.mrf.mxu0
        %3754 = vmatprep.mubr.f32.mxu0 0.0
        %3755 = vmatmul.mubr.f32.gmra.mxu0 %v3570
        %v3756 = vpop.f32.mrf.mxu0
        %v3757 = vadd.f32 0.0, %v3756
        %v3758 = vpop.f32.mrf.mxu0
        %3759 = vmatprep.mubr.f32.mxu0 0.0
        %3760 = vmatmul.mubr.f32.gmra.mxu0 %v3571
        %v3761 = vpop.f32.mrf.mxu0
        %v3762 = vadd.f32 0.0, %v3761
        %v3763 = vpop.f32.mrf.mxu0
        %3764 = vdwg.mxu0
        %3765 = vrot.lane.b32.xlu0 %v3093, 120
        %v3766 = vpop.permute.xlu0 %3765
        %3767 = vrot.lane.b32.xlu0 %v3098, 120
        %v3768 = vpop.permute.xlu0 %3767
        %3769 = vrot.lane.b32.xlu0 %v3103, 120
        %v3770 = vpop.permute.xlu0 %3769
        %3771 = vrot.lane.b32.xlu0 %v3108, 120
        %v3772 = vpop.permute.xlu0 %3771
        %3773 = vrot.lane.b32.xlu0 %v3113, 120
        %v3774 = vpop.permute.xlu0 %3773
        %3775 = vrot.lane.b32.xlu0 %v3118, 120
        %v3776 = vpop.permute.xlu0 %3775
        %3777 = vrot.lane.b32.xlu0 %v3123, 120
        %v3778 = vpop.permute.xlu0 %3777
        %3779 = vrot.lane.b32.xlu0 %v3128, 120
        %v3780 = vpop.permute.xlu0 %3779
        %3781 = vrot.lane.b32.xlu0 %v3133, 120
        %v3782 = vpop.permute.xlu0 %3781
        %3783 = vrot.lane.b32.xlu0 %v3138, 120
        %v3784 = vpop.permute.xlu0 %3783
        %3785 = vrot.lane.b32.xlu0 %v3143, 120
        %v3786 = vpop.permute.xlu0 %3785
        %3787 = vrot.lane.b32.xlu0 %v3148, 120
        %v3788 = vpop.permute.xlu0 %3787
        %3789 = vrot.lane.b32.xlu0 %v3153, 120
        %v3790 = vpop.permute.xlu0 %3789
        %3791 = vrot.lane.b32.xlu0 %v3158, 120
        %v3792 = vpop.permute.xlu0 %3791
        %3793 = vrot.lane.b32.xlu0 %v3163, 120
        %v3794 = vpop.permute.xlu0 %3793
        %3795 = vrot.lane.b32.xlu0 %v3168, 120
        %v3796 = vpop.permute.xlu0 %3795
        %3797 = vrot.lane.b32.xlu0 %v3093, 104
        %v3798 = vpop.permute.xlu0 %3797
        %3799 = vrot.lane.b32.xlu0 %v3098, 104
        %v3800 = vpop.permute.xlu0 %3799
        %3801 = vrot.lane.b32.xlu0 %v3103, 104
        %v3802 = vpop.permute.xlu0 %3801
        %3803 = vrot.lane.b32.xlu0 %v3108, 104
        %v3804 = vpop.permute.xlu0 %3803
        %3805 = vrot.lane.b32.xlu0 %v3113, 104
        %v3806 = vpop.permute.xlu0 %3805
        %3807 = vrot.lane.b32.xlu0 %v3118, 104
        %v3808 = vpop.permute.xlu0 %3807
        %3809 = vrot.lane.b32.xlu0 %v3123, 104
        %v3810 = vpop.permute.xlu0 %3809
        %3811 = vrot.lane.b32.xlu0 %v3128, 104
        %v3812 = vpop.permute.xlu0 %3811
        %3813 = vrot.lane.b32.xlu0 %v3133, 104
        %v3814 = vpop.permute.xlu0 %3813
        %3815 = vrot.lane.b32.xlu0 %v3138, 104
        %v3816 = vpop.permute.xlu0 %3815
        %3817 = vrot.lane.b32.xlu0 %v3143, 104
        %v3818 = vpop.permute.xlu0 %3817
        %3819 = vrot.lane.b32.xlu0 %v3148, 104
        %v3820 = vpop.permute.xlu0 %3819
        %3821 = vrot.lane.b32.xlu0 %v3153, 104
        %v3822 = vpop.permute.xlu0 %3821
        %3823 = vrot.lane.b32.xlu0 %v3158, 104
        %v3824 = vpop.permute.xlu0 %3823
        %3825 = vrot.lane.b32.xlu0 %v3163, 104
        %v3826 = vpop.permute.xlu0 %3825
        %3827 = vrot.lane.b32.xlu0 %v3168, 104
        %v3828 = vpop.permute.xlu0 %3827
        %v3829 = vsel %vm1050, %v3766, 0
        %v3831 = vsel %vm1050, %v3768, 0
        %v3833 = vsel %vm1050, %v3770, 0
        %v3835 = vsel %vm1050, %v3772, 0
        %v3837 = vsel %vm1050, %v3774, 0
        %v3839 = vsel %vm1050, %v3776, 0
        %v3841 = vsel %vm1050, %v3778, 0
        %v3843 = vsel %vm1050, %v3780, 0
        %v3845 = vsel %vm1050, %v3782, 0
        %v3847 = vsel %vm1050, %v3784, 0
        %v3849 = vsel %vm1050, %v3786, 0
        %v3851 = vsel %vm1050, %v3788, 0
        %v3853 = vsel %vm1050, %v3790, 0
        %v3855 = vsel %vm1050, %v3792, 0
        %v3857 = vsel %vm1050, %v3794, 0
        %v3859 = vsel %vm1050, %v3796, 0
        %v3861 = vsel %vm1050, %v3798, 0
        %v3863 = vsel %vm1050, %v3800, 0
        %v3865 = vsel %vm1050, %v3802, 0
        %v3867 = vsel %vm1050, %v3804, 0
        %v3869 = vsel %vm1050, %v3806, 0
        %v3871 = vsel %vm1050, %v3808, 0
        %v3873 = vsel %vm1050, %v3810, 0
        %v3875 = vsel %vm1050, %v3812, 0
        %v3877 = vsel %vm1050, %v3814, 0
        %v3879 = vsel %vm1050, %v3816, 0
        %v3881 = vsel %vm1050, %v3818, 0
        %v3883 = vsel %vm1050, %v3820, 0
        %v3885 = vsel %vm1050, %v3822, 0
        %v3887 = vsel %vm1050, %v3824, 0
        %v3889 = vsel %vm1050, %v3826, 0
        %v3891 = vsel %vm1050, %v3828, 0
        %3893 = vmatprep.subr.mxu0 0.0
        %3894 = vmatpush1.xpose.msra.mxu0 %v3891
        %3895 = vmatprep.subr.mxu0 0.0
        %3896 = vmatpush1.xpose.msra.mxu0 %v3889
        %3897 = vmatprep.subr.mxu0 0.0
        %3898 = vmatpush1.xpose.msra.mxu0 %v3887
        %3899 = vmatprep.subr.mxu0 0.0
        %3900 = vmatpush1.xpose.msra.mxu0 %v3885
        %3901 = vmatprep.subr.mxu0 0.0
        %3902 = vmatpush1.xpose.msra.mxu0 %v3883
        %3903 = vmatprep.subr.mxu0 0.0
        %3904 = vmatpush1.xpose.msra.mxu0 %v3881
        %3905 = vmatprep.subr.mxu0 0.0
        %3906 = vmatpush1.xpose.msra.mxu0 %v3879
        %3907 = vmatprep.subr.mxu0 0.0
        %3908 = vmatpush1.xpose.msra.mxu0 %v3877
        %3909 = vmatprep.subr.mxu0 0.0
        %3910 = vmatpush1.xpose.msra.mxu0 %v3875
        %3911 = vmatprep.subr.mxu0 0.0
        %3912 = vmatpush1.xpose.msra.mxu0 %v3873
        %3913 = vmatprep.subr.mxu0 0.0
        %3914 = vmatpush1.xpose.msra.mxu0 %v3871
        %3915 = vmatprep.subr.mxu0 0.0
        %3916 = vmatpush1.xpose.msra.mxu0 %v3869
        %3917 = vmatprep.subr.mxu0 0.0
        %3918 = vmatpush1.xpose.msra.mxu0 %v3867
        %3919 = vmatprep.subr.mxu0 0.0
        %3920 = vmatpush1.xpose.msra.mxu0 %v3865
        %3921 = vmatprep.subr.mxu0 0.0
        %3922 = vmatpush1.xpose.msra.mxu0 %v3863
        %3923 = vmatprep.subr.mxu0 0.0
        %3924 = vmatpush1.xpose.msra.mxu0 %v3861
        %3925 = vmatprep.subr.mxu0 0.0
        %3926 = vmatpush2.xpose.msra.mxu0 0.0
        %3927 = vmatprep.subr.mxu0 0.0
        %3928 = vmatpush2.xpose.msra.mxu0 0.0
        %3929 = vmatprep.subr.mxu0 0.0
        %3930 = vmatpush2.xpose.msra.mxu0 0.0
        %3931 = vmatprep.subr.mxu0 0.0
        %3932 = vmatpush2.xpose.msra.mxu0 0.0
        %3933 = vmatprep.subr.mxu0 0.0
        %3934 = vmatpush2.xpose.msra.mxu0 0.0
        %3935 = vmatprep.subr.mxu0 0.0
        %3936 = vmatpush2.xpose.msra.mxu0 0.0
        %3937 = vmatprep.subr.mxu0 0.0
        %3938 = vmatpush2.xpose.msra.mxu0 0.0
        %3939 = vmatprep.subr.mxu0 0.0
        %3940 = vmatpush2.xpose.msra.mxu0 0.0
        %3941 = vmatprep.subr.mxu0 0.0
        %3942 = vmatpush2.xpose.msra.mxu0 0.0
        %3943 = vmatprep.subr.mxu0 0.0
        %3944 = vmatpush2.xpose.msra.mxu0 0.0
        %3945 = vmatprep.subr.mxu0 0.0
        %3946 = vmatpush2.xpose.msra.mxu0 0.0
        %3947 = vmatprep.subr.mxu0 0.0
        %3948 = vmatpush2.xpose.msra.mxu0 0.0
        %3949 = vmatprep.subr.mxu0 0.0
        %3950 = vmatpush2.xpose.msra.mxu0 0.0
        %3951 = vmatprep.subr.mxu0 0.0
        %3952 = vmatpush2.xpose.msra.mxu0 0.0
        %3953 = vmatprep.subr.mxu0 0.0
        %3954 = vmatpush2.xpose.msra.mxu0 0.0
        %3955 = vmatprep.subr.mxu0 0.0
        %3956 = vmatpush2.xpose.msra.mxu0 0.0
        %3957 = vmatprep.mubr.f32.mxu0 0.0
        %3958 = vmatmul.mubr.f32.gmra.mxu0 %v3829
        %v3959 = vpop.f32.mrf.mxu0
        %v3960 = vadd.f32 %v334, %v3959
        %v3961 = vpop.f32.mrf.mxu0
        %3962 = vmatprep.mubr.f32.mxu0 0.0
        %3963 = vmatmul.mubr.f32.gmra.mxu0 %v3831
        %v3964 = vpop.f32.mrf.mxu0
        %v3965 = vadd.f32 %v335, %v3964
        %v3966 = vpop.f32.mrf.mxu0
        %3967 = vmatprep.mubr.f32.mxu0 0.0
        %3968 = vmatmul.mubr.f32.gmra.mxu0 %v3833
        %v3969 = vpop.f32.mrf.mxu0
        %v3970 = vadd.f32 %v336, %v3969
        %v3971 = vpop.f32.mrf.mxu0
        %3972 = vmatprep.mubr.f32.mxu0 0.0
        %3973 = vmatmul.mubr.f32.gmra.mxu0 %v3835
        %v3974 = vpop.f32.mrf.mxu0
        %v3975 = vadd.f32 %v337, %v3974
        %v3976 = vpop.f32.mrf.mxu0
        %3977 = vmatprep.mubr.f32.mxu0 0.0
        %3978 = vmatmul.mubr.f32.gmra.mxu0 %v3837
        %v3979 = vpop.f32.mrf.mxu0
        %v3980 = vadd.f32 %v338, %v3979
        %v3981 = vpop.f32.mrf.mxu0
        %3982 = vmatprep.mubr.f32.mxu0 0.0
        %3983 = vmatmul.mubr.f32.gmra.mxu0 %v3839
        %v3984 = vpop.f32.mrf.mxu0
        %v3985 = vadd.f32 %v339, %v3984
        %v3986 = vpop.f32.mrf.mxu0
        %3987 = vmatprep.mubr.f32.mxu0 0.0
        %3988 = vmatmul.mubr.f32.gmra.mxu0 %v3841
        %v3989 = vpop.f32.mrf.mxu0
        %v3990 = vadd.f32 %v340, %v3989
        %v3991 = vpop.f32.mrf.mxu0
        %3992 = vmatprep.mubr.f32.mxu0 0.0
        %3993 = vmatmul.mubr.f32.gmra.mxu0 %v3843
        %v3994 = vpop.f32.mrf.mxu0
        %v3995 = vadd.f32 %v341, %v3994
        %v3996 = vpop.f32.mrf.mxu0
        %3997 = vmatprep.mubr.f32.mxu0 0.0
        %3998 = vmatmul.mubr.f32.gmra.mxu0 %v3845
        %v3999 = vpop.f32.mrf.mxu0
        %v4000 = vadd.f32 %v342, %v3999
        %v4001 = vpop.f32.mrf.mxu0
        %4002 = vmatprep.mubr.f32.mxu0 0.0
        %4003 = vmatmul.mubr.f32.gmra.mxu0 %v3847
        %v4004 = vpop.f32.mrf.mxu0
        %v4005 = vadd.f32 %v343, %v4004
        %v4006 = vpop.f32.mrf.mxu0
        %4007 = vmatprep.mubr.f32.mxu0 0.0
        %4008 = vmatmul.mubr.f32.gmra.mxu0 %v3849
        %v4009 = vpop.f32.mrf.mxu0
        %v4010 = vadd.f32 %v344, %v4009
        %v4011 = vpop.f32.mrf.mxu0
        %4012 = vmatprep.mubr.f32.mxu0 0.0
        %4013 = vmatmul.mubr.f32.gmra.mxu0 %v3851
        %v4014 = vpop.f32.mrf.mxu0
        %v4015 = vadd.f32 %v345, %v4014
        %v4016 = vpop.f32.mrf.mxu0
        %4017 = vmatprep.mubr.f32.mxu0 0.0
        %4018 = vmatmul.mubr.f32.gmra.mxu0 %v3853
        %v4019 = vpop.f32.mrf.mxu0
        %v4020 = vadd.f32 %v346, %v4019
        %v4021 = vpop.f32.mrf.mxu0
        %4022 = vmatprep.mubr.f32.mxu0 0.0
        %4023 = vmatmul.mubr.f32.gmra.mxu0 %v3855
        %v4024 = vpop.f32.mrf.mxu0
        %v4025 = vadd.f32 %v347, %v4024
        %v4026 = vpop.f32.mrf.mxu0
        %4027 = vmatprep.mubr.f32.mxu0 0.0
        %4028 = vmatmul.mubr.f32.gmra.mxu0 %v3857
        %v4029 = vpop.f32.mrf.mxu0
        %v4030 = vadd.f32 %v348, %v4029
        %v4031 = vpop.f32.mrf.mxu0
        %4032 = vmatprep.mubr.f32.mxu0 0.0
        %4033 = vmatmul.mubr.f32.gmra.mxu0 %v3859
        %v4034 = vpop.f32.mrf.mxu0
        %v4035 = vadd.f32 %v349, %v4034
        %v4036 = vpop.f32.mrf.mxu0
        %4037 = vdwg.mxu0
        %4038 = vmax.xlane.f32.xlu0 %v3960
        %v4039 = vpop.xlane.xlu0 %4038
        %4040 = vmax.xlane.f32.xlu0 %v3965
        %v4041 = vpop.xlane.xlu0 %4040
        %4042 = vmax.xlane.f32.xlu0 %v3970
        %v4043 = vpop.xlane.xlu0 %4042
        %4044 = vmax.xlane.f32.xlu0 %v3975
        %v4045 = vpop.xlane.xlu0 %4044
        %4046 = vmax.xlane.f32.xlu0 %v3980
        %v4047 = vpop.xlane.xlu0 %4046
        %4048 = vmax.xlane.f32.xlu0 %v3985
        %v4049 = vpop.xlane.xlu0 %4048
        %4050 = vmax.xlane.f32.xlu0 %v3990
        %v4051 = vpop.xlane.xlu0 %4050
        %4052 = vmax.xlane.f32.xlu0 %v3995
        %v4053 = vpop.xlane.xlu0 %4052
        %4054 = vmax.xlane.f32.xlu0 %v4000
        %v4055 = vpop.xlane.xlu0 %4054
        %4056 = vmax.xlane.f32.xlu0 %v4005
        %v4057 = vpop.xlane.xlu0 %4056
        %4058 = vmax.xlane.f32.xlu0 %v4010
        %v4059 = vpop.xlane.xlu0 %4058
        %4060 = vmax.xlane.f32.xlu0 %v4015
        %v4061 = vpop.xlane.xlu0 %4060
        %4062 = vmax.xlane.f32.xlu0 %v4020
        %v4063 = vpop.xlane.xlu0 %4062
        %4064 = vmax.xlane.f32.xlu0 %v4025
        %v4065 = vpop.xlane.xlu0 %4064
        %4066 = vmax.xlane.f32.xlu0 %v4030
        %v4067 = vpop.xlane.xlu0 %4066
        %4068 = vmax.xlane.f32.xlu0 %v4035
        %v4069 = vpop.xlane.xlu0 %4068
        %v4070 = vsub.f32 %v3960, %v4039
        %v4071 = vsub.f32 %v3965, %v4041
        %v4072 = vsub.f32 %v3970, %v4043
        %v4073 = vsub.f32 %v3975, %v4045
        %v4074 = vsub.f32 %v3980, %v4047
        %v4075 = vsub.f32 %v3985, %v4049
        %v4076 = vsub.f32 %v3990, %v4051
        %v4077 = vsub.f32 %v3995, %v4053
        %v4078 = vsub.f32 %v4000, %v4055
        %v4079 = vsub.f32 %v4005, %v4057
        %v4080 = vsub.f32 %v4010, %v4059
        %v4081 = vsub.f32 %v4015, %v4061
        %v4082 = vsub.f32 %v4020, %v4063
        %v4083 = vsub.f32 %v4025, %v4065
        %v4084 = vsub.f32 %v4030, %v4067
        %v4085 = vsub.f32 %v4035, %v4069
        %v4086 = vmul.f32 %v4070, 1.442695
        %v4087 = vpow.pop %v4086
        %v4088 = vmul.f32 %v4071, 1.442695
        %v4089 = vpow.pop %v4088
        %v4090 = vmul.f32 %v4072, 1.442695
        %v4091 = vpow.pop %v4090
        %v4092 = vmul.f32 %v4073, 1.442695
        %v4093 = vpow.pop %v4092
        %v4094 = vmul.f32 %v4074, 1.442695
        %v4095 = vpow.pop %v4094
        %v4096 = vmul.f32 %v4075, 1.442695
        %v4097 = vpow.pop %v4096
        %v4098 = vmul.f32 %v4076, 1.442695
        %v4099 = vpow.pop %v4098
        %v4100 = vmul.f32 %v4077, 1.442695
        %v4101 = vpow.pop %v4100
        %v4102 = vmul.f32 %v4078, 1.442695
        %v4103 = vpow.pop %v4102
        %v4104 = vmul.f32 %v4079, 1.442695
        %v4105 = vpow.pop %v4104
        %v4106 = vmul.f32 %v4080, 1.442695
        %v4107 = vpow.pop %v4106
        %v4108 = vmul.f32 %v4081, 1.442695
        %v4109 = vpow.pop %v4108
        %v4110 = vmul.f32 %v4082, 1.442695
        %v4111 = vpow.pop %v4110
        %v4112 = vmul.f32 %v4083, 1.442695
        %v4113 = vpow.pop %v4112
        %v4114 = vmul.f32 %v4084, 1.442695
        %v4115 = vpow.pop %v4114
        %v4116 = vmul.f32 %v4085, 1.442695
        %v4117 = vpow.pop %v4116
        %4118 = vadd.xlane.f32.xlu0 %v4087
        %v4119 = vpop.xlane.xlu0 %4118
        %4120 = vadd.xlane.f32.xlu0 %v4089
        %v4121 = vpop.xlane.xlu0 %4120
        %4122 = vadd.xlane.f32.xlu0 %v4091
        %v4123 = vpop.xlane.xlu0 %4122
        %4124 = vadd.xlane.f32.xlu0 %v4093
        %v4125 = vpop.xlane.xlu0 %4124
        %4126 = vadd.xlane.f32.xlu0 %v4095
        %v4127 = vpop.xlane.xlu0 %4126
        %4128 = vadd.xlane.f32.xlu0 %v4097
        %v4129 = vpop.xlane.xlu0 %4128
        %4130 = vadd.xlane.f32.xlu0 %v4099
        %v4131 = vpop.xlane.xlu0 %4130
        %4132 = vadd.xlane.f32.xlu0 %v4101
        %v4133 = vpop.xlane.xlu0 %4132
        %4134 = vadd.xlane.f32.xlu0 %v4103
        %v4135 = vpop.xlane.xlu0 %4134
        %4136 = vadd.xlane.f32.xlu0 %v4105
        %v4137 = vpop.xlane.xlu0 %4136
        %4138 = vadd.xlane.f32.xlu0 %v4107
        %v4139 = vpop.xlane.xlu0 %4138
        %4140 = vadd.xlane.f32.xlu0 %v4109
        %v4141 = vpop.xlane.xlu0 %4140
        %4142 = vadd.xlane.f32.xlu0 %v4111
        %v4143 = vpop.xlane.xlu0 %4142
        %4144 = vadd.xlane.f32.xlu0 %v4113
        %v4145 = vpop.xlane.xlu0 %4144
        %4146 = vadd.xlane.f32.xlu0 %v4115
        %v4147 = vpop.xlane.xlu0 %4146
        %4148 = vadd.xlane.f32.xlu0 %v4117
        %v4149 = vpop.xlane.xlu0 %4148
        %v4150 = vrcp.pop %v4119
        %v4151 = vrcp.pop %v4121
        %v4152 = vrcp.pop %v4123
        %v4153 = vrcp.pop %v4125
        %v4154 = vrcp.pop %v4127
        %v4155 = vrcp.pop %v4129
        %v4156 = vrcp.pop %v4131
        %v4157 = vrcp.pop %v4133
        %v4158 = vrcp.pop %v4135
        %v4159 = vrcp.pop %v4137
        %v4160 = vrcp.pop %v4139
        %v4161 = vrcp.pop %v4141
        %v4162 = vrcp.pop %v4143
        %v4163 = vrcp.pop %v4145
        %v4164 = vrcp.pop %v4147
        %v4165 = vrcp.pop %v4149
        %v4166 = vmul.f32 %v4087, %v4150
        %v4167 = vmul.f32 %v4089, %v4151
        %v4168 = vmul.f32 %v4091, %v4152
        %v4169 = vmul.f32 %v4093, %v4153
        %v4170 = vmul.f32 %v4095, %v4154
        %v4171 = vmul.f32 %v4097, %v4155
        %v4172 = vmul.f32 %v4099, %v4156
        %v4173 = vmul.f32 %v4101, %v4157
        %v4174 = vmul.f32 %v4103, %v4158
        %v4175 = vmul.f32 %v4105, %v4159
        %v4176 = vmul.f32 %v4107, %v4160
        %v4177 = vmul.f32 %v4109, %v4161
        %v4178 = vmul.f32 %v4111, %v4162
        %v4179 = vmul.f32 %v4113, %v4163
        %v4180 = vmul.f32 %v4115, %v4164
        %v4181 = vmul.f32 %v4117, %v4165
        %4182 = vrot.lane.b32.xlu0 %v3093, 88
        %v4183 = vpop.permute.xlu0 %4182
        %4184 = vrot.lane.b32.xlu0 %v3098, 88
        %v4185 = vpop.permute.xlu0 %4184
        %4186 = vrot.lane.b32.xlu0 %v3103, 88
        %v4187 = vpop.permute.xlu0 %4186
        %4188 = vrot.lane.b32.xlu0 %v3108, 88
        %v4189 = vpop.permute.xlu0 %4188
        %4190 = vrot.lane.b32.xlu0 %v3113, 88
        %v4191 = vpop.permute.xlu0 %4190
        %4192 = vrot.lane.b32.xlu0 %v3118, 88
        %v4193 = vpop.permute.xlu0 %4192
        %4194 = vrot.lane.b32.xlu0 %v3123, 88
        %v4195 = vpop.permute.xlu0 %4194
        %4196 = vrot.lane.b32.xlu0 %v3128, 88
        %v4197 = vpop.permute.xlu0 %4196
        %4198 = vrot.lane.b32.xlu0 %v3133, 88
        %v4199 = vpop.permute.xlu0 %4198
        %4200 = vrot.lane.b32.xlu0 %v3138, 88
        %v4201 = vpop.permute.xlu0 %4200
        %4202 = vrot.lane.b32.xlu0 %v3143, 88
        %v4203 = vpop.permute.xlu0 %4202
        %4204 = vrot.lane.b32.xlu0 %v3148, 88
        %v4205 = vpop.permute.xlu0 %4204
        %4206 = vrot.lane.b32.xlu0 %v3153, 88
        %v4207 = vpop.permute.xlu0 %4206
        %4208 = vrot.lane.b32.xlu0 %v3158, 88
        %v4209 = vpop.permute.xlu0 %4208
        %4210 = vrot.lane.b32.xlu0 %v3163, 88
        %v4211 = vpop.permute.xlu0 %4210
        %4212 = vrot.lane.b32.xlu0 %v3168, 88
        %v4213 = vpop.permute.xlu0 %4212
        %4230 = vmatprep.subr.mxu0 0.0
        %4231 = vmatpush1.msra.mxu0 %v4213
        %4232 = vmatprep.subr.mxu0 0.0
        %4233 = vmatpush1.msra.mxu0 %v4211
        %4234 = vmatprep.subr.mxu0 0.0
        %4235 = vmatpush1.msra.mxu0 %v4209
        %4236 = vmatprep.subr.mxu0 0.0
        %4237 = vmatpush1.msra.mxu0 %v4207
        %4238 = vmatprep.subr.mxu0 0.0
        %4239 = vmatpush1.msra.mxu0 %v4205
        %4240 = vmatprep.subr.mxu0 0.0
        %4241 = vmatpush1.msra.mxu0 %v4203
        %4242 = vmatprep.subr.mxu0 0.0
        %4243 = vmatpush1.msra.mxu0 %v4201
        %4244 = vmatprep.subr.mxu0 0.0
        %4245 = vmatpush1.msra.mxu0 %v4199
        %4246 = vmatprep.subr.mxu0 0.0
        %4247 = vmatpush1.msra.mxu0 %v4197
        %4248 = vmatprep.subr.mxu0 0.0
        %4249 = vmatpush1.msra.mxu0 %v4195
        %4250 = vmatprep.subr.mxu0 0.0
        %4251 = vmatpush1.msra.mxu0 %v4193
        %4252 = vmatprep.subr.mxu0 0.0
        %4253 = vmatpush1.msra.mxu0 %v4191
        %4254 = vmatprep.subr.mxu0 0.0
        %4255 = vmatpush1.msra.mxu0 %v4189
        %4256 = vmatprep.subr.mxu0 0.0
        %4257 = vmatpush1.msra.mxu0 %v4187
        %4258 = vmatprep.subr.mxu0 0.0
        %4259 = vmatpush1.msra.mxu0 %v4185
        %4260 = vmatprep.subr.mxu0 0.0
        %4261 = vmatpush1.msra.mxu0 %v4183
        %4262 = vmatprep.subr.mxu0 0.0
        %4263 = vmatpush2.msra.mxu0 0.0
        %4264 = vmatprep.subr.mxu0 0.0
        %4265 = vmatpush2.msra.mxu0 0.0
        %4266 = vmatprep.subr.mxu0 0.0
        %4267 = vmatpush2.msra.mxu0 0.0
        %4268 = vmatprep.subr.mxu0 0.0
        %4269 = vmatpush2.msra.mxu0 0.0
        %4270 = vmatprep.subr.mxu0 0.0
        %4271 = vmatpush2.msra.mxu0 0.0
        %4272 = vmatprep.subr.mxu0 0.0
        %4273 = vmatpush2.msra.mxu0 0.0
        %4274 = vmatprep.subr.mxu0 0.0
        %4275 = vmatpush2.msra.mxu0 0.0
        %4276 = vmatprep.subr.mxu0 0.0
        %4277 = vmatpush2.msra.mxu0 0.0
        %4278 = vmatprep.subr.mxu0 0.0
        %4279 = vmatpush2.msra.mxu0 0.0
        %4280 = vmatprep.subr.mxu0 0.0
        %4281 = vmatpush2.msra.mxu0 0.0
        %4282 = vmatprep.subr.mxu0 0.0
        %4283 = vmatpush2.msra.mxu0 0.0
        %4284 = vmatprep.subr.mxu0 0.0
        %4285 = vmatpush2.msra.mxu0 0.0
        %4286 = vmatprep.subr.mxu0 0.0
        %4287 = vmatpush2.msra.mxu0 0.0
        %4288 = vmatprep.subr.mxu0 0.0
        %4289 = vmatpush2.msra.mxu0 0.0
        %4290 = vmatprep.subr.mxu0 0.0
        %4291 = vmatpush2.msra.mxu0 0.0
        %4292 = vmatprep.subr.mxu0 0.0
        %4293 = vmatpush2.msra.mxu0 0.0
        %4294 = vmatprep.mubr.f32.mxu0 0.0
        %4295 = vmatmul.mubr.f32.gmra.mxu0 %v4166
        %v4296 = vpop.f32.mrf.mxu0
        %v4297 = vadd.f32 0.0, %v4296
        %v4298 = vpop.f32.mrf.mxu0
        %4299 = vmatprep.mubr.f32.mxu0 0.0
        %4300 = vmatmul.mubr.f32.gmra.mxu0 %v4167
        %v4301 = vpop.f32.mrf.mxu0
        %v4302 = vadd.f32 0.0, %v4301
        %v4303 = vpop.f32.mrf.mxu0
        %4304 = vmatprep.mubr.f32.mxu0 0.0
        %4305 = vmatmul.mubr.f32.gmra.mxu0 %v4168
        %v4306 = vpop.f32.mrf.mxu0
        %v4307 = vadd.f32 0.0, %v4306
        %v4308 = vpop.f32.mrf.mxu0
        %4309 = vmatprep.mubr.f32.mxu0 0.0
        %4310 = vmatmul.mubr.f32.gmra.mxu0 %v4169
        %v4311 = vpop.f32.mrf.mxu0
        %v4312 = vadd.f32 0.0, %v4311
        %v4313 = vpop.f32.mrf.mxu0
        %4314 = vmatprep.mubr.f32.mxu0 0.0
        %4315 = vmatmul.mubr.f32.gmra.mxu0 %v4170
        %v4316 = vpop.f32.mrf.mxu0
        %v4317 = vadd.f32 0.0, %v4316
        %v4318 = vpop.f32.mrf.mxu0
        %4319 = vmatprep.mubr.f32.mxu0 0.0
        %4320 = vmatmul.mubr.f32.gmra.mxu0 %v4171
        %v4321 = vpop.f32.mrf.mxu0
        %v4322 = vadd.f32 0.0, %v4321
        %v4323 = vpop.f32.mrf.mxu0
        %4324 = vmatprep.mubr.f32.mxu0 0.0
        %4325 = vmatmul.mubr.f32.gmra.mxu0 %v4172
        %v4326 = vpop.f32.mrf.mxu0
        %v4327 = vadd.f32 0.0, %v4326
        %v4328 = vpop.f32.mrf.mxu0
        %4329 = vmatprep.mubr.f32.mxu0 0.0
        %4330 = vmatmul.mubr.f32.gmra.mxu0 %v4173
        %v4331 = vpop.f32.mrf.mxu0
        %v4332 = vadd.f32 0.0, %v4331
        %v4333 = vpop.f32.mrf.mxu0
        %4334 = vmatprep.mubr.f32.mxu0 0.0
        %4335 = vmatmul.mubr.f32.gmra.mxu0 %v4174
        %v4336 = vpop.f32.mrf.mxu0
        %v4337 = vadd.f32 0.0, %v4336
        %v4338 = vpop.f32.mrf.mxu0
        %4339 = vmatprep.mubr.f32.mxu0 0.0
        %4340 = vmatmul.mubr.f32.gmra.mxu0 %v4175
        %v4341 = vpop.f32.mrf.mxu0
        %v4342 = vadd.f32 0.0, %v4341
        %v4343 = vpop.f32.mrf.mxu0
        %4344 = vmatprep.mubr.f32.mxu0 0.0
        %4345 = vmatmul.mubr.f32.gmra.mxu0 %v4176
        %v4346 = vpop.f32.mrf.mxu0
        %v4347 = vadd.f32 0.0, %v4346
        %v4348 = vpop.f32.mrf.mxu0
        %4349 = vmatprep.mubr.f32.mxu0 0.0
        %4350 = vmatmul.mubr.f32.gmra.mxu0 %v4177
        %v4351 = vpop.f32.mrf.mxu0
        %v4352 = vadd.f32 0.0, %v4351
        %v4353 = vpop.f32.mrf.mxu0
        %4354 = vmatprep.mubr.f32.mxu0 0.0
        %4355 = vmatmul.mubr.f32.gmra.mxu0 %v4178
        %v4356 = vpop.f32.mrf.mxu0
        %v4357 = vadd.f32 0.0, %v4356
        %v4358 = vpop.f32.mrf.mxu0
        %4359 = vmatprep.mubr.f32.mxu0 0.0
        %4360 = vmatmul.mubr.f32.gmra.mxu0 %v4179
        %v4361 = vpop.f32.mrf.mxu0
        %v4362 = vadd.f32 0.0, %v4361
        %v4363 = vpop.f32.mrf.mxu0
        %4364 = vmatprep.mubr.f32.mxu0 0.0
        %4365 = vmatmul.mubr.f32.gmra.mxu0 %v4180
        %v4366 = vpop.f32.mrf.mxu0
        %v4367 = vadd.f32 0.0, %v4366
        %v4368 = vpop.f32.mrf.mxu0
        %4369 = vmatprep.mubr.f32.mxu0 0.0
        %4370 = vmatmul.mubr.f32.gmra.mxu0 %v4181
        %v4371 = vpop.f32.mrf.mxu0
        %v4372 = vadd.f32 0.0, %v4371
        %v4373 = vpop.f32.mrf.mxu0
        %4374 = vdwg.mxu0
        %4391 = vrot.lane.b32.xlu0 %v4297, 8
        %v4392 = vpop.permute.xlu0 %4391
        %4393 = vrot.lane.b32.xlu0 %v4302, 8
        %v4394 = vpop.permute.xlu0 %4393
        %4395 = vrot.lane.b32.xlu0 %v4307, 8
        %v4396 = vpop.permute.xlu0 %4395
        %4397 = vrot.lane.b32.xlu0 %v4312, 8
        %v4398 = vpop.permute.xlu0 %4397
        %4399 = vrot.lane.b32.xlu0 %v4317, 8
        %v4400 = vpop.permute.xlu0 %4399
        %4401 = vrot.lane.b32.xlu0 %v4322, 8
        %v4402 = vpop.permute.xlu0 %4401
        %4403 = vrot.lane.b32.xlu0 %v4327, 8
        %v4404 = vpop.permute.xlu0 %4403
        %4405 = vrot.lane.b32.xlu0 %v4332, 8
        %v4406 = vpop.permute.xlu0 %4405
        %4407 = vrot.lane.b32.xlu0 %v4337, 8
        %v4408 = vpop.permute.xlu0 %4407
        %4409 = vrot.lane.b32.xlu0 %v4342, 8
        %v4410 = vpop.permute.xlu0 %4409
        %4411 = vrot.lane.b32.xlu0 %v4347, 8
        %v4412 = vpop.permute.xlu0 %4411
        %4413 = vrot.lane.b32.xlu0 %v4352, 8
        %v4414 = vpop.permute.xlu0 %4413
        %4415 = vrot.lane.b32.xlu0 %v4357, 8
        %v4416 = vpop.permute.xlu0 %4415
        %4417 = vrot.lane.b32.xlu0 %v4362, 8
        %v4418 = vpop.permute.xlu0 %4417
        %4419 = vrot.lane.b32.xlu0 %v4367, 8
        %v4420 = vpop.permute.xlu0 %4419
        %4421 = vrot.lane.b32.xlu0 %v4372, 8
        %v4422 = vpop.permute.xlu0 %4421
        %v4439 = vsel %vm1050, %v3687, %v4392
        %v4440 = vsel %vm1050, %v3692, %v4394
        %v4441 = vsel %vm1050, %v3697, %v4396
        %v4442 = vsel %vm1050, %v3702, %v4398
        %v4443 = vsel %vm1050, %v3707, %v4400
        %v4444 = vsel %vm1050, %v3712, %v4402
        %v4445 = vsel %vm1050, %v3717, %v4404
        %v4446 = vsel %vm1050, %v3722, %v4406
        %v4447 = vsel %vm1050, %v3727, %v4408
        %v4448 = vsel %vm1050, %v3732, %v4410
        %v4449 = vsel %vm1050, %v3737, %v4412
        %v4450 = vsel %vm1050, %v3742, %v4414
        %v4451 = vsel %vm1050, %v3747, %v4416
        %v4452 = vsel %vm1050, %v3752, %v4418
        %v4453 = vsel %vm1050, %v3757, %v4420
        %v4454 = vsel %vm1050, %v3762, %v4422
        %v4455 = vld [vmem:[%s7] sm:$0xff]
        %v4456 = vld [vmem:[%s7 + $0x8] sm:$0xff]
        %v4457 = vld [vmem:[%s8] sm:$0x1]
        %v4459 = vlaneseq
        %v4460 = vshrl.u32 %v4459, 7
        %v4461 = vsub.s32 0, %v4460
        %v4462 = vrot.slane %v4457, %v4461
        %v4465 = vsel %vm375, %v4439, 0
        %v4468 = vsel %vm375, %v4440, 0
        %v4471 = vsel %vm375, %v4441, 0
        %v4474 = vsel %vm375, %v4442, 0
        %v4477 = vsel %vm375, %v4443, 0
        %v4480 = vsel %vm375, %v4444, 0
        %v4483 = vsel %vm375, %v4445, 0
        %v4486 = vsel %vm375, %v4446, 0
        %v4489 = vsel %vm375, %v4447, 0
        %v4492 = vsel %vm375, %v4448, 0
        %v4495 = vsel %vm375, %v4449, 0
        %v4498 = vsel %vm375, %v4450, 0
        %v4501 = vsel %vm375, %v4451, 0
        %v4504 = vsel %vm375, %v4452, 0
        %v4507 = vsel %vm375, %v4453, 0
        %v4510 = vsel %vm375, %v4454, 0
        %4512 = vmatprep.subr.mxu0 0.0
        %4513 = vmatpush1.msra.mxu0 0.0
        %4514 = vmatprep.subr.mxu0 0.0
        %4515 = vmatpush1.msra.mxu0 0.0
        %4516 = vmatprep.subr.mxu0 0.0
        %4517 = vmatpush1.msra.mxu0 0.0
        %4518 = vmatprep.subr.mxu0 0.0
        %4519 = vmatpush1.msra.mxu0 0.0
        %4520 = vmatprep.subr.mxu0 0.0
        %4521 = vmatpush1.msra.mxu0 0.0
        %4522 = vmatprep.subr.mxu0 0.0
        %4523 = vmatpush1.msra.mxu0 0.0
        %4524 = vmatprep.subr.mxu0 0.0
        %4525 = vmatpush1.msra.mxu0 0.0
        %4526 = vmatprep.subr.mxu0 0.0
        %4527 = vmatpush1.msra.mxu0 0.0
        %4528 = vmatprep.subr.mxu0 0.0
        %4529 = vmatpush1.msra.mxu0 0.0
        %4530 = vmatprep.subr.mxu0 0.0
        %4531 = vmatpush1.msra.mxu0 0.0
        %4532 = vmatprep.subr.mxu0 0.0
        %4533 = vmatpush1.msra.mxu0 0.0
        %4534 = vmatprep.subr.mxu0 0.0
        %4535 = vmatpush1.msra.mxu0 0.0
        %4536 = vmatprep.subr.mxu0 0.0
        %4537 = vmatpush1.msra.mxu0 0.0
        %4538 = vmatprep.subr.mxu0 0.0
        %4539 = vmatpush1.msra.mxu0 0.0
        %4540 = vmatprep.subr.mxu0 0.0
        %4541 = vmatpush1.msra.mxu0 %v4456
        %4542 = vmatprep.subr.mxu0 0.0
        %4543 = vmatpush1.msra.mxu0 %v4455
        %4544 = vmatprep.subr.mxu0 0.0
        %4545 = vmatpush2.msra.mxu0 0.0
        %4546 = vmatprep.subr.mxu0 0.0
        %4547 = vmatpush2.msra.mxu0 0.0
        %4548 = vmatprep.subr.mxu0 0.0
        %4549 = vmatpush2.msra.mxu0 0.0
        %4550 = vmatprep.subr.mxu0 0.0
        %4551 = vmatpush2.msra.mxu0 0.0
        %4552 = vmatprep.subr.mxu0 0.0
        %4553 = vmatpush2.msra.mxu0 0.0
        %4554 = vmatprep.subr.mxu0 0.0
        %4555 = vmatpush2.msra.mxu0 0.0
        %4556 = vmatprep.subr.mxu0 0.0
        %4557 = vmatpush2.msra.mxu0 0.0
        %4558 = vmatprep.subr.mxu0 0.0
        %4559 = vmatpush2.msra.mxu0 0.0
        %4560 = vmatprep.subr.mxu0 0.0
        %4561 = vmatpush2.msra.mxu0 0.0
        %4562 = vmatprep.subr.mxu0 0.0
        %4563 = vmatpush2.msra.mxu0 0.0
        %4564 = vmatprep.subr.mxu0 0.0
        %4565 = vmatpush2.msra.mxu0 0.0
        %4566 = vmatprep.subr.mxu0 0.0
        %4567 = vmatpush2.msra.mxu0 0.0
        %4568 = vmatprep.subr.mxu0 0.0
        %4569 = vmatpush2.msra.mxu0 0.0
        %4570 = vmatprep.subr.mxu0 0.0
        %4571 = vmatpush2.msra.mxu0 0.0
        %4572 = vmatprep.subr.mxu0 0.0
        %4573 = vmatpush2.msra.mxu0 0.0
        %4574 = vmatprep.subr.mxu0 0.0
        %4575 = vmatpush2.msra.mxu0 0.0
        %4576 = vmatprep.mubr.f32.mxu0 0.0
        %4577 = vmatmul.mubr.f32.gmra.mxu0 %v4465
        %v4578 = vpop.f32.mrf.mxu0
        %v4579 = vadd.f32 %v4462, %v4578
        %v4580 = vpop.f32.mrf.mxu0
        %4581 = vmatprep.mubr.f32.mxu0 0.0
        %4582 = vmatmul.mubr.f32.gmra.mxu0 %v4468
        %v4583 = vpop.f32.mrf.mxu0
        %v4584 = vadd.f32 %v4462, %v4583
        %v4585 = vpop.f32.mrf.mxu0
        %4586 = vmatprep.mubr.f32.mxu0 0.0
        %4587 = vmatmul.mubr.f32.gmra.mxu0 %v4471
        %v4588 = vpop.f32.mrf.mxu0
        %v4589 = vadd.f32 %v4462, %v4588
        %v4590 = vpop.f32.mrf.mxu0
        %4591 = vmatprep.mubr.f32.mxu0 0.0
        %4592 = vmatmul.mubr.f32.gmra.mxu0 %v4474
        %v4593 = vpop.f32.mrf.mxu0
        %v4594 = vadd.f32 %v4462, %v4593
        %v4595 = vpop.f32.mrf.mxu0
        %4596 = vmatprep.mubr.f32.mxu0 0.0
        %4597 = vmatmul.mubr.f32.gmra.mxu0 %v4477
        %v4598 = vpop.f32.mrf.mxu0
        %v4599 = vadd.f32 %v4462, %v4598
        %v4600 = vpop.f32.mrf.mxu0
        %4601 = vmatprep.mubr.f32.mxu0 0.0
        %4602 = vmatmul.mubr.f32.gmra.mxu0 %v4480
        %v4603 = vpop.f32.mrf.mxu0
        %v4604 = vadd.f32 %v4462, %v4603
        %v4605 = vpop.f32.mrf.mxu0
        %4606 = vmatprep.mubr.f32.mxu0 0.0
        %4607 = vmatmul.mubr.f32.gmra.mxu0 %v4483
        %v4608 = vpop.f32.mrf.mxu0
        %v4609 = vadd.f32 %v4462, %v4608
        %v4610 = vpop.f32.mrf.mxu0
        %4611 = vmatprep.mubr.f32.mxu0 0.0
        %4612 = vmatmul.mubr.f32.gmra.mxu0 %v4486
        %v4613 = vpop.f32.mrf.mxu0
        %v4614 = vadd.f32 %v4462, %v4613
        %v4615 = vpop.f32.mrf.mxu0
        %4616 = vmatprep.mubr.f32.mxu0 0.0
        %4617 = vmatmul.mubr.f32.gmra.mxu0 %v4489
        %v4618 = vpop.f32.mrf.mxu0
        %v4619 = vadd.f32 %v4462, %v4618
        %v4620 = vpop.f32.mrf.mxu0
        %4621 = vmatprep.mubr.f32.mxu0 0.0
        %4622 = vmatmul.mubr.f32.gmra.mxu0 %v4492
        %v4623 = vpop.f32.mrf.mxu0
        %v4624 = vadd.f32 %v4462, %v4623
        %v4625 = vpop.f32.mrf.mxu0
        %4626 = vmatprep.mubr.f32.mxu0 0.0
        %4627 = vmatmul.mubr.f32.gmra.mxu0 %v4495
        %v4628 = vpop.f32.mrf.mxu0
        %v4629 = vadd.f32 %v4462, %v4628
        %v4630 = vpop.f32.mrf.mxu0
        %4631 = vmatprep.mubr.f32.mxu0 0.0
        %4632 = vmatmul.mubr.f32.gmra.mxu0 %v4498
        %v4633 = vpop.f32.mrf.mxu0
        %v4634 = vadd.f32 %v4462, %v4633
        %v4635 = vpop.f32.mrf.mxu0
        %4636 = vmatprep.mubr.f32.mxu0 0.0
        %4637 = vmatmul.mubr.f32.gmra.mxu0 %v4501
        %v4638 = vpop.f32.mrf.mxu0
        %v4639 = vadd.f32 %v4462, %v4638
        %v4640 = vpop.f32.mrf.mxu0
        %4641 = vmatprep.mubr.f32.mxu0 0.0
        %4642 = vmatmul.mubr.f32.gmra.mxu0 %v4504
        %v4643 = vpop.f32.mrf.mxu0
        %v4644 = vadd.f32 %v4462, %v4643
        %v4645 = vpop.f32.mrf.mxu0
        %4646 = vmatprep.mubr.f32.mxu0 0.0
        %4647 = vmatmul.mubr.f32.gmra.mxu0 %v4507
        %v4648 = vpop.f32.mrf.mxu0
        %v4649 = vadd.f32 %v4462, %v4648
        %v4650 = vpop.f32.mrf.mxu0
        %4651 = vmatprep.mubr.f32.mxu0 0.0
        %4652 = vmatmul.mubr.f32.gmra.mxu0 %v4510
        %v4653 = vpop.f32.mrf.mxu0
        %v4654 = vadd.f32 %v4462, %v4653
        %v4655 = vpop.f32.mrf.mxu0
        %4656 = vdwg.mxu0
        %v4657 = vadd.f32 %v4579, %v2662
        %v4658 = vadd.f32 %v4584, %v2667
        %v4659 = vadd.f32 %v4589, %v2672
        %v4660 = vadd.f32 %v4594, %v2677
        %v4661 = vadd.f32 %v4599, %v2682
        %v4662 = vadd.f32 %v4604, %v2687
        %v4663 = vadd.f32 %v4609, %v2692
        %v4664 = vadd.f32 %v4614, %v2697
        %v4665 = vadd.f32 %v4619, %v2702
        %v4666 = vadd.f32 %v4624, %v2707
        %v4667 = vadd.f32 %v4629, %v2712
        %v4668 = vadd.f32 %v4634, %v2717
        %v4669 = vadd.f32 %v4639, %v2722
        %v4670 = vadd.f32 %v4644, %v2727
        %v4671 = vadd.f32 %v4649, %v2732
        %v4672 = vadd.f32 %v4654, %v2737
        %4673 = vst.msk [vmem:[%s326 + $0x80] sm:$0xff] %vm2505, %v4657
        %4674 = vst.msk [vmem:[%s326 + $0x88] sm:$0xff] %vm2505, %v4658
        %4675 = vst.msk [vmem:[%s326 + $0x90] sm:$0xff] %vm2505, %v4659
        %4676 = vst.msk [vmem:[%s326 + $0x98] sm:$0xff] %vm2505, %v4660
        %4677 = vst.msk [vmem:[%s326 + $0xa0] sm:$0xff] %vm2505, %v4661
        %4678 = vst.msk [vmem:[%s326 + $0xa8] sm:$0xff] %vm2505, %v4662
        %4679 = vst.msk [vmem:[%s326 + $0xb0] sm:$0xff] %vm2505, %v4663
        %4680 = vst.msk [vmem:[%s326 + $0xb8] sm:$0xff] %vm2505, %v4664
        %4681 = vst.msk [vmem:[%s326 + $0xc0] sm:$0xff] %vm2505, %v4665
        %4682 = vst.msk [vmem:[%s326 + $0xc8] sm:$0xff] %vm2505, %v4666
        %4683 = vst.msk [vmem:[%s326 + $0xd0] sm:$0xff] %vm2505, %v4667
        %4684 = vst.msk [vmem:[%s326 + $0xd8] sm:$0xff] %vm2505, %v4668
        %4685 = vst.msk [vmem:[%s326 + $0xe0] sm:$0xff] %vm2505, %v4669
        %4686 = vst.msk [vmem:[%s326 + $0xe8] sm:$0xff] %vm2505, %v4670
        %4687 = vst.msk [vmem:[%s326 + $0xf0] sm:$0xff] %vm2505, %v4671
        %4688 = vst.msk [vmem:[%s326 + $0xf8] sm:$0xff] %vm2505, %v4672
        %v4689 = vld [vmem:[%s331 + $0x100] sm:$0xff]
        %v4690 = vld [vmem:[%s331 + $0x108] sm:$0xff]
        %v4691 = vld [vmem:[%s331 + $0x110] sm:$0xff]
        %v4692 = vld [vmem:[%s331 + $0x118] sm:$0xff]
        %v4693 = vld [vmem:[%s331 + $0x120] sm:$0xff]
        %v4694 = vld [vmem:[%s331 + $0x128] sm:$0xff]
        %v4695 = vld [vmem:[%s331 + $0x130] sm:$0xff]
        %v4696 = vld [vmem:[%s331 + $0x138] sm:$0xff]
        %v4697 = vld [vmem:[%s331 + $0x140] sm:$0xff]
        %v4698 = vld [vmem:[%s331 + $0x148] sm:$0xff]
        %v4699 = vld [vmem:[%s331 + $0x150] sm:$0xff]
        %v4700 = vld [vmem:[%s331 + $0x158] sm:$0xff]
        %v4701 = vld [vmem:[%s331 + $0x160] sm:$0xff]
        %v4702 = vld [vmem:[%s331 + $0x168] sm:$0xff]
        %v4703 = vld [vmem:[%s331 + $0x170] sm:$0xff]
        %v4704 = vld [vmem:[%s331 + $0x178] sm:$0xff]
        %v4705 = vld [vmem:[%s1] sm:$0xff]
        %v4706 = vld [vmem:[%s1 + $0x8] sm:$0xff]
        %v4707 = vld [vmem:[%s2] sm:$0x1]
        %v4709 = vlaneseq
        %v4710 = vshrl.u32 %v4709, 7
        %v4711 = vsub.s32 0, %v4710
        %v4712 = vrot.slane %v4707, %v4711
        %v4715 = vsel %vm375, %v4689, 0
        %v4718 = vsel %vm375, %v4690, 0
        %v4721 = vsel %vm375, %v4691, 0
        %v4724 = vsel %vm375, %v4692, 0
        %v4727 = vsel %vm375, %v4693, 0
        %v4730 = vsel %vm375, %v4694, 0
        %v4733 = vsel %vm375, %v4695, 0
        %v4736 = vsel %vm375, %v4696, 0
        %v4739 = vsel %vm375, %v4697, 0
        %v4742 = vsel %vm375, %v4698, 0
        %v4745 = vsel %vm375, %v4699, 0
        %v4748 = vsel %vm375, %v4700, 0
        %v4751 = vsel %vm375, %v4701, 0
        %v4754 = vsel %vm375, %v4702, 0
        %v4757 = vsel %vm375, %v4703, 0
        %v4760 = vsel %vm375, %v4704, 0
        %4762 = vmatprep.subr.mxu0 0.0
        %4763 = vmatpush1.msra.mxu0 0.0
        %4764 = vmatprep.subr.mxu0 0.0
        %4765 = vmatpush1.msra.mxu0 0.0
        %4766 = vmatprep.subr.mxu0 0.0
        %4767 = vmatpush1.msra.mxu0 0.0
        %4768 = vmatprep.subr.mxu0 0.0
        %4769 = vmatpush1.msra.mxu0 0.0
        %4770 = vmatprep.subr.mxu0 0.0
        %4771 = vmatpush1.msra.mxu0 0.0
        %4772 = vmatprep.subr.mxu0 0.0
        %4773 = vmatpush1.msra.mxu0 0.0
        %4774 = vmatprep.subr.mxu0 0.0
        %4775 = vmatpush1.msra.mxu0 0.0
        %4776 = vmatprep.subr.mxu0 0.0
        %4777 = vmatpush1.msra.mxu0 0.0
        %4778 = vmatprep.subr.mxu0 0.0
        %4779 = vmatpush1.msra.mxu0 0.0
        %4780 = vmatprep.subr.mxu0 0.0
        %4781 = vmatpush1.msra.mxu0 0.0
        %4782 = vmatprep.subr.mxu0 0.0
        %4783 = vmatpush1.msra.mxu0 0.0
        %4784 = vmatprep.subr.mxu0 0.0
        %4785 = vmatpush1.msra.mxu0 0.0
        %4786 = vmatprep.subr.mxu0 0.0
        %4787 = vmatpush1.msra.mxu0 0.0
        %4788 = vmatprep.subr.mxu0 0.0
        %4789 = vmatpush1.msra.mxu0 0.0
        %4790 = vmatprep.subr.mxu0 0.0
        %4791 = vmatpush1.msra.mxu0 %v4706
        %4792 = vmatprep.subr.mxu0 0.0
        %4793 = vmatpush1.msra.mxu0 %v4705
        %4794 = vmatprep.subr.mxu0 0.0
        %4795 = vmatpush2.msra.mxu0 0.0
        %4796 = vmatprep.subr.mxu0 0.0
        %4797 = vmatpush2.msra.mxu0 0.0
        %4798 = vmatprep.subr.mxu0 0.0
        %4799 = vmatpush2.msra.mxu0 0.0
        %4800 = vmatprep.subr.mxu0 0.0
        %4801 = vmatpush2.msra.mxu0 0.0
        %4802 = vmatprep.subr.mxu0 0.0
        %4803 = vmatpush2.msra.mxu0 0.0
        %4804 = vmatprep.subr.mxu0 0.0
        %4805 = vmatpush2.msra.mxu0 0.0
        %4806 = vmatprep.subr.mxu0 0.0
        %4807 = vmatpush2.msra.mxu0 0.0
        %4808 = vmatprep.subr.mxu0 0.0
        %4809 = vmatpush2.msra.mxu0 0.0
        %4810 = vmatprep.subr.mxu0 0.0
        %4811 = vmatpush2.msra.mxu0 0.0
        %4812 = vmatprep.subr.mxu0 0.0
        %4813 = vmatpush2.msra.mxu0 0.0
        %4814 = vmatprep.subr.mxu0 0.0
        %4815 = vmatpush2.msra.mxu0 0.0
        %4816 = vmatprep.subr.mxu0 0.0
        %4817 = vmatpush2.msra.mxu0 0.0
        %4818 = vmatprep.subr.mxu0 0.0
        %4819 = vmatpush2.msra.mxu0 0.0
        %4820 = vmatprep.subr.mxu0 0.0
        %4821 = vmatpush2.msra.mxu0 0.0
        %4822 = vmatprep.subr.mxu0 0.0
        %4823 = vmatpush2.msra.mxu0 0.0
        %4824 = vmatprep.subr.mxu0 0.0
        %4825 = vmatpush2.msra.mxu0 0.0
        %4826 = vmatprep.mubr.f32.mxu0 0.0
        %4827 = vmatmul.mubr.f32.gmra.mxu0 %v4715
        %v4828 = vpop.f32.mrf.mxu0
        %v4829 = vadd.f32 %v4712, %v4828
        %v4830 = vpop.f32.mrf.mxu0
        %4831 = vmatprep.mubr.f32.mxu0 0.0
        %4832 = vmatmul.mubr.f32.gmra.mxu0 %v4718
        %v4833 = vpop.f32.mrf.mxu0
        %v4834 = vadd.f32 %v4712, %v4833
        %v4835 = vpop.f32.mrf.mxu0
        %4836 = vmatprep.mubr.f32.mxu0 0.0
        %4837 = vmatmul.mubr.f32.gmra.mxu0 %v4721
        %v4838 = vpop.f32.mrf.mxu0
        %v4839 = vadd.f32 %v4712, %v4838
        %v4840 = vpop.f32.mrf.mxu0
        %4841 = vmatprep.mubr.f32.mxu0 0.0
        %4842 = vmatmul.mubr.f32.gmra.mxu0 %v4724
        %v4843 = vpop.f32.mrf.mxu0
        %v4844 = vadd.f32 %v4712, %v4843
        %v4845 = vpop.f32.mrf.mxu0
        %4846 = vmatprep.mubr.f32.mxu0 0.0
        %4847 = vmatmul.mubr.f32.gmra.mxu0 %v4727
        %v4848 = vpop.f32.mrf.mxu0
        %v4849 = vadd.f32 %v4712, %v4848
        %v4850 = vpop.f32.mrf.mxu0
        %4851 = vmatprep.mubr.f32.mxu0 0.0
        %4852 = vmatmul.mubr.f32.gmra.mxu0 %v4730
        %v4853 = vpop.f32.mrf.mxu0
        %v4854 = vadd.f32 %v4712, %v4853
        %v4855 = vpop.f32.mrf.mxu0
        %4856 = vmatprep.mubr.f32.mxu0 0.0
        %4857 = vmatmul.mubr.f32.gmra.mxu0 %v4733
        %v4858 = vpop.f32.mrf.mxu0
        %v4859 = vadd.f32 %v4712, %v4858
        %v4860 = vpop.f32.mrf.mxu0
        %4861 = vmatprep.mubr.f32.mxu0 0.0
        %4862 = vmatmul.mubr.f32.gmra.mxu0 %v4736
        %v4863 = vpop.f32.mrf.mxu0
        %v4864 = vadd.f32 %v4712, %v4863
        %v4865 = vpop.f32.mrf.mxu0
        %4866 = vmatprep.mubr.f32.mxu0 0.0
        %4867 = vmatmul.mubr.f32.gmra.mxu0 %v4739
        %v4868 = vpop.f32.mrf.mxu0
        %v4869 = vadd.f32 %v4712, %v4868
        %v4870 = vpop.f32.mrf.mxu0
        %4871 = vmatprep.mubr.f32.mxu0 0.0
        %4872 = vmatmul.mubr.f32.gmra.mxu0 %v4742
        %v4873 = vpop.f32.mrf.mxu0
        %v4874 = vadd.f32 %v4712, %v4873
        %v4875 = vpop.f32.mrf.mxu0
        %4876 = vmatprep.mubr.f32.mxu0 0.0
        %4877 = vmatmul.mubr.f32.gmra.mxu0 %v4745
        %v4878 = vpop.f32.mrf.mxu0
        %v4879 = vadd.f32 %v4712, %v4878
        %v4880 = vpop.f32.mrf.mxu0
        %4881 = vmatprep.mubr.f32.mxu0 0.0
        %4882 = vmatmul.mubr.f32.gmra.mxu0 %v4748
        %v4883 = vpop.f32.mrf.mxu0
        %v4884 = vadd.f32 %v4712, %v4883
        %v4885 = vpop.f32.mrf.mxu0
        %4886 = vmatprep.mubr.f32.mxu0 0.0
        %4887 = vmatmul.mubr.f32.gmra.mxu0 %v4751
        %v4888 = vpop.f32.mrf.mxu0
        %v4889 = vadd.f32 %v4712, %v4888
        %v4890 = vpop.f32.mrf.mxu0
        %4891 = vmatprep.mubr.f32.mxu0 0.0
        %4892 = vmatmul.mubr.f32.gmra.mxu0 %v4754
        %v4893 = vpop.f32.mrf.mxu0
        %v4894 = vadd.f32 %v4712, %v4893
        %v4895 = vpop.f32.mrf.mxu0
        %4896 = vmatprep.mubr.f32.mxu0 0.0
        %4897 = vmatmul.mubr.f32.gmra.mxu0 %v4757
        %v4898 = vpop.f32.mrf.mxu0
        %v4899 = vadd.f32 %v4712, %v4898
        %v4900 = vpop.f32.mrf.mxu0
        %4901 = vmatprep.mubr.f32.mxu0 0.0
        %4902 = vmatmul.mubr.f32.gmra.mxu0 %v4760
        %v4903 = vpop.f32.mrf.mxu0
        %v4904 = vadd.f32 %v4712, %v4903
        %v4905 = vpop.f32.mrf.mxu0
        %4906 = vdwg.mxu0
        %v4907 = vld [vmem:[%s3] sm:$0xff]
        %v4908 = vld [vmem:[%s3 + $0x8] sm:$0xff]
        %v4909 = vld [vmem:[%s4] sm:$0x1]
        %v4911 = vlaneseq
        %v4912 = vshrl.u32 %v4911, 7
        %v4913 = vsub.s32 0, %v4912
        %v4914 = vrot.slane %v4909, %v4913
        %4916 = vmatprep.subr.mxu0 0.0
        %4917 = vmatpush1.msra.mxu0 0.0
        %4918 = vmatprep.subr.mxu0 0.0
        %4919 = vmatpush1.msra.mxu0 0.0
        %4920 = vmatprep.subr.mxu0 0.0
        %4921 = vmatpush1.msra.mxu0 0.0
        %4922 = vmatprep.subr.mxu0 0.0
        %4923 = vmatpush1.msra.mxu0 0.0
        %4924 = vmatprep.subr.mxu0 0.0
        %4925 = vmatpush1.msra.mxu0 0.0
        %4926 = vmatprep.subr.mxu0 0.0
        %4927 = vmatpush1.msra.mxu0 0.0
        %4928 = vmatprep.subr.mxu0 0.0
        %4929 = vmatpush1.msra.mxu0 0.0
        %4930 = vmatprep.subr.mxu0 0.0
        %4931 = vmatpush1.msra.mxu0 0.0
        %4932 = vmatprep.subr.mxu0 0.0
        %4933 = vmatpush1.msra.mxu0 0.0
        %4934 = vmatprep.subr.mxu0 0.0
        %4935 = vmatpush1.msra.mxu0 0.0
        %4936 = vmatprep.subr.mxu0 0.0
        %4937 = vmatpush1.msra.mxu0 0.0
        %4938 = vmatprep.subr.mxu0 0.0
        %4939 = vmatpush1.msra.mxu0 0.0
        %4940 = vmatprep.subr.mxu0 0.0
        %4941 = vmatpush1.msra.mxu0 0.0
        %4942 = vmatprep.subr.mxu0 0.0
        %4943 = vmatpush1.msra.mxu0 0.0
        %4944 = vmatprep.subr.mxu0 0.0
        %4945 = vmatpush1.msra.mxu0 %v4908
        %4946 = vmatprep.subr.mxu0 0.0
        %4947 = vmatpush1.msra.mxu0 %v4907
        %4948 = vmatprep.subr.mxu0 0.0
        %4949 = vmatpush2.msra.mxu0 0.0
        %4950 = vmatprep.subr.mxu0 0.0
        %4951 = vmatpush2.msra.mxu0 0.0
        %4952 = vmatprep.subr.mxu0 0.0
        %4953 = vmatpush2.msra.mxu0 0.0
        %4954 = vmatprep.subr.mxu0 0.0
        %4955 = vmatpush2.msra.mxu0 0.0
        %4956 = vmatprep.subr.mxu0 0.0
        %4957 = vmatpush2.msra.mxu0 0.0
        %4958 = vmatprep.subr.mxu0 0.0
        %4959 = vmatpush2.msra.mxu0 0.0
        %4960 = vmatprep.subr.mxu0 0.0
        %4961 = vmatpush2.msra.mxu0 0.0
        %4962 = vmatprep.subr.mxu0 0.0
        %4963 = vmatpush2.msra.mxu0 0.0
        %4964 = vmatprep.subr.mxu0 0.0
        %4965 = vmatpush2.msra.mxu0 0.0
        %4966 = vmatprep.subr.mxu0 0.0
        %4967 = vmatpush2.msra.mxu0 0.0
        %4968 = vmatprep.subr.mxu0 0.0
        %4969 = vmatpush2.msra.mxu0 0.0
        %4970 = vmatprep.subr.mxu0 0.0
        %4971 = vmatpush2.msra.mxu0 0.0
        %4972 = vmatprep.subr.mxu0 0.0
        %4973 = vmatpush2.msra.mxu0 0.0
        %4974 = vmatprep.subr.mxu0 0.0
        %4975 = vmatpush2.msra.mxu0 0.0
        %4976 = vmatprep.subr.mxu0 0.0
        %4977 = vmatpush2.msra.mxu0 0.0
        %4978 = vmatprep.subr.mxu0 0.0
        %4979 = vmatpush2.msra.mxu0 0.0
        %4980 = vmatprep.mubr.f32.mxu0 0.0
        %4981 = vmatmul.mubr.f32.gmra.mxu0 %v4715
        %v4982 = vpop.f32.mrf.mxu0
        %v4983 = vadd.f32 %v4914, %v4982
        %v4984 = vpop.f32.mrf.mxu0
        %4985 = vmatprep.mubr.f32.mxu0 0.0
        %4986 = vmatmul.mubr.f32.gmra.mxu0 %v4718
        %v4987 = vpop.f32.mrf.mxu0
        %v4988 = vadd.f32 %v4914, %v4987
        %v4989 = vpop.f32.mrf.mxu0
        %4990 = vmatprep.mubr.f32.mxu0 0.0
        %4991 = vmatmul.mubr.f32.gmra.mxu0 %v4721
        %v4992 = vpop.f32.mrf.mxu0
        %v4993 = vadd.f32 %v4914, %v4992
        %v4994 = vpop.f32.mrf.mxu0
        %4995 = vmatprep.mubr.f32.mxu0 0.0
        %4996 = vmatmul.mubr.f32.gmra.mxu0 %v4724
        %v4997 = vpop.f32.mrf.mxu0
        %v4998 = vadd.f32 %v4914, %v4997
        %v4999 = vpop.f32.mrf.mxu0
        %5000 = vmatprep.mubr.f32.mxu0 0.0
        %5001 = vmatmul.mubr.f32.gmra.mxu0 %v4727
        %v5002 = vpop.f32.mrf.mxu0
        %v5003 = vadd.f32 %v4914, %v5002
        %v5004 = vpop.f32.mrf.mxu0
        %5005 = vmatprep.mubr.f32.mxu0 0.0
        %5006 = vmatmul.mubr.f32.gmra.mxu0 %v4730
        %v5007 = vpop.f32.mrf.mxu0
        %v5008 = vadd.f32 %v4914, %v5007
        %v5009 = vpop.f32.mrf.mxu0
        %5010 = vmatprep.mubr.f32.mxu0 0.0
        %5011 = vmatmul.mubr.f32.gmra.mxu0 %v4733
        %v5012 = vpop.f32.mrf.mxu0
        %v5013 = vadd.f32 %v4914, %v5012
        %v5014 = vpop.f32.mrf.mxu0
        %5015 = vmatprep.mubr.f32.mxu0 0.0
        %5016 = vmatmul.mubr.f32.gmra.mxu0 %v4736
        %v5017 = vpop.f32.mrf.mxu0
        %v5018 = vadd.f32 %v4914, %v5017
        %v5019 = vpop.f32.mrf.mxu0
        %5020 = vmatprep.mubr.f32.mxu0 0.0
        %5021 = vmatmul.mubr.f32.gmra.mxu0 %v4739
        %v5022 = vpop.f32.mrf.mxu0
        %v5023 = vadd.f32 %v4914, %v5022
        %v5024 = vpop.f32.mrf.mxu0
        %5025 = vmatprep.mubr.f32.mxu0 0.0
        %5026 = vmatmul.mubr.f32.gmra.mxu0 %v4742
        %v5027 = vpop.f32.mrf.mxu0
        %v5028 = vadd.f32 %v4914, %v5027
        %v5029 = vpop.f32.mrf.mxu0
        %5030 = vmatprep.mubr.f32.mxu0 0.0
        %5031 = vmatmul.mubr.f32.gmra.mxu0 %v4745
        %v5032 = vpop.f32.mrf.mxu0
        %v5033 = vadd.f32 %v4914, %v5032
        %v5034 = vpop.f32.mrf.mxu0
        %5035 = vmatprep.mubr.f32.mxu0 0.0
        %5036 = vmatmul.mubr.f32.gmra.mxu0 %v4748
        %v5037 = vpop.f32.mrf.mxu0
        %v5038 = vadd.f32 %v4914, %v5037
        %v5039 = vpop.f32.mrf.mxu0
        %5040 = vmatprep.mubr.f32.mxu0 0.0
        %5041 = vmatmul.mubr.f32.gmra.mxu0 %v4751
        %v5042 = vpop.f32.mrf.mxu0
        %v5043 = vadd.f32 %v4914, %v5042
        %v5044 = vpop.f32.mrf.mxu0
        %5045 = vmatprep.mubr.f32.mxu0 0.0
        %5046 = vmatmul.mubr.f32.gmra.mxu0 %v4754
        %v5047 = vpop.f32.mrf.mxu0
        %v5048 = vadd.f32 %v4914, %v5047
        %v5049 = vpop.f32.mrf.mxu0
        %5050 = vmatprep.mubr.f32.mxu0 0.0
        %5051 = vmatmul.mubr.f32.gmra.mxu0 %v4757
        %v5052 = vpop.f32.mrf.mxu0
        %v5053 = vadd.f32 %v4914, %v5052
        %v5054 = vpop.f32.mrf.mxu0
        %5055 = vmatprep.mubr.f32.mxu0 0.0
        %5056 = vmatmul.mubr.f32.gmra.mxu0 %v4760
        %v5057 = vpop.f32.mrf.mxu0
        %v5058 = vadd.f32 %v4914, %v5057
        %v5059 = vpop.f32.mrf.mxu0
        %5060 = vdwg.mxu0
        %v5061 = vmul.f32 %v4983, 0.5
        %v5062 = vmul.f32 %v4988, 0.5
        %v5063 = vmul.f32 %v4993, 0.5
        %v5064 = vmul.f32 %v4998, 0.5
        %v5065 = vmul.f32 %v5003, 0.5
        %v5066 = vmul.f32 %v5008, 0.5
        %v5067 = vmul.f32 %v5013, 0.5
        %v5068 = vmul.f32 %v5018, 0.5
        %v5069 = vmul.f32 %v5023, 0.5
        %v5070 = vmul.f32 %v5028, 0.5
        %v5071 = vmul.f32 %v5033, 0.5
        %v5072 = vmul.f32 %v5038, 0.5
        %v5073 = vmul.f32 %v5043, 0.5
        %v5074 = vmul.f32 %v5048, 0.5
        %v5075 = vmul.f32 %v5053, 0.5
        %v5076 = vmul.f32 %v5058, 0.5
        %v5077 = vmul.f32 %v4983, 0.70710677
        %v5078 = vmul.f32 %v4988, 0.70710677
        %v5079 = vmul.f32 %v4993, 0.70710677
        %v5080 = vmul.f32 %v4998, 0.70710677
        %v5081 = vmul.f32 %v5003, 0.70710677
        %v5082 = vmul.f32 %v5008, 0.70710677
        %v5083 = vmul.f32 %v5013, 0.70710677
        %v5084 = vmul.f32 %v5018, 0.70710677
        %v5085 = vmul.f32 %v5023, 0.70710677
        %v5086 = vmul.f32 %v5028, 0.70710677
        %v5087 = vmul.f32 %v5033, 0.70710677
        %v5088 = vmul.f32 %v5038, 0.70710677
        %v5089 = vmul.f32 %v5043, 0.70710677
        %v5090 = vmul.f32 %v5048, 0.70710677
        %v5091 = vmul.f32 %v5053, 0.70710677
        %v5092 = vmul.f32 %v5058, 0.70710677
        %v5093 = verf.f32.pop %v5077
        %v5094 = verf.f32.pop %v5078
        %v5095 = verf.f32.pop %v5079
        %v5096 = verf.f32.pop %v5080
        %v5097 = verf.f32.pop %v5081
        %v5098 = verf.f32.pop %v5082
        %v5099 = verf.f32.pop %v5083
        %v5100 = verf.f32.pop %v5084
        %v5101 = verf.f32.pop %v5085
        %v5102 = verf.f32.pop %v5086
        %v5103 = verf.f32.pop %v5087
        %v5104 = verf.f32.pop %v5088
        %v5105 = verf.f32.pop %v5089
        %v5106 = verf.f32.pop %v5090
        %v5107 = verf.f32.pop %v5091
        %v5108 = verf.f32.pop %v5092
        %v5109 = vadd.f32 %v5093, 1.0
        %v5110 = vadd.f32 %v5094, 1.0
        %v5111 = vadd.f32 %v5095, 1.0
        %v5112 = vadd.f32 %v5096, 1.0
        %v5113 = vadd.f32 %v5097, 1.0
        %v5114 = vadd.f32 %v5098, 1.0
        %v5115 = vadd.f32 %v5099, 1.0
        %v5116 = vadd.f32 %v5100, 1.0
        %v5117 = vadd.f32 %v5101, 1.0
        %v5118 = vadd.f32 %v5102, 1.0
        %v5119 = vadd.f32 %v5103, 1.0
        %v5120 = vadd.f32 %v5104, 1.0
        %v5121 = vadd.f32 %v5105, 1.0
        %v5122 = vadd.f32 %v5106, 1.0
        %v5123 = vadd.f32 %v5107, 1.0
        %v5124 = vadd.f32 %v5108, 1.0
        %v5125 = vmul.f32 %v5061, %v5109
        %v5126 = vmul.f32 %v5062, %v5110
        %v5127 = vmul.f32 %v5063, %v5111
        %v5128 = vmul.f32 %v5064, %v5112
        %v5129 = vmul.f32 %v5065, %v5113
        %v5130 = vmul.f32 %v5066, %v5114
        %v5131 = vmul.f32 %v5067, %v5115
        %v5132 = vmul.f32 %v5068, %v5116
        %v5133 = vmul.f32 %v5069, %v5117
        %v5134 = vmul.f32 %v5070, %v5118
        %v5135 = vmul.f32 %v5071, %v5119
        %v5136 = vmul.f32 %v5072, %v5120
        %v5137 = vmul.f32 %v5073, %v5121
        %v5138 = vmul.f32 %v5074, %v5122
        %v5139 = vmul.f32 %v5075, %v5123
        %v5140 = vmul.f32 %v5076, %v5124
        %v5141 = vld [vmem:[%s5] sm:$0xf]
        %v5143 = vsel %vm804, %v5125, 0
        %v5146 = vsel %vm804, %v5126, 0
        %v5149 = vsel %vm804, %v5127, 0
        %v5152 = vsel %vm804, %v5128, 0
        %v5155 = vsel %vm804, %v5129, 0
        %v5158 = vsel %vm804, %v5130, 0
        %v5161 = vsel %vm804, %v5131, 0
        %v5164 = vsel %vm804, %v5132, 0
        %v5167 = vsel %vm804, %v5133, 0
        %v5170 = vsel %vm804, %v5134, 0
        %v5173 = vsel %vm804, %v5135, 0
        %v5176 = vsel %vm804, %v5136, 0
        %v5179 = vsel %vm804, %v5137, 0
        %v5182 = vsel %vm804, %v5138, 0
        %v5185 = vsel %vm804, %v5139, 0
        %v5188 = vsel %vm804, %v5140, 0
        %v5191 = vsel %vm853, %v5141, 0
        %5193 = vmatprep.subr.mxu0 0.0
        %5194 = vmatpush1.msra.mxu0 0.0
        %5195 = vmatprep.subr.mxu0 0.0
        %5196 = vmatpush1.msra.mxu0 0.0
        %5197 = vmatprep.subr.mxu0 0.0
        %5198 = vmatpush1.msra.mxu0 0.0
        %5199 = vmatprep.subr.mxu0 0.0
        %5200 = vmatpush1.msra.mxu0 0.0
        %5201 = vmatprep.subr.mxu0 0.0
        %5202 = vmatpush1.msra.mxu0 0.0
        %5203 = vmatprep.subr.mxu0 0.0
        %5204 = vmatpush1.msra.mxu0 0.0
        %5205 = vmatprep.subr.mxu0 0.0
        %5206 = vmatpush1.msra.mxu0 0.0
        %5207 = vmatprep.subr.mxu0 0.0
        %5208 = vmatpush1.msra.mxu0 0.0
        %5209 = vmatprep.subr.mxu0 0.0
        %5210 = vmatpush1.msra.mxu0 0.0
        %5211 = vmatprep.subr.mxu0 0.0
        %5212 = vmatpush1.msra.mxu0 0.0
        %5213 = vmatprep.subr.mxu0 0.0
        %5214 = vmatpush1.msra.mxu0 0.0
        %5215 = vmatprep.subr.mxu0 0.0
        %5216 = vmatpush1.msra.mxu0 0.0
        %5217 = vmatprep.subr.mxu0 0.0
        %5218 = vmatpush1.msra.mxu0 0.0
        %5219 = vmatprep.subr.mxu0 0.0
        %5220 = vmatpush1.msra.mxu0 0.0
        %5221 = vmatprep.subr.mxu0 0.0
        %5222 = vmatpush1.msra.mxu0 0.0
        %5223 = vmatprep.subr.mxu0 0.0
        %5224 = vmatpush1.msra.mxu0 %v5191
        %5225 = vmatprep.subr.mxu0 0.0
        %5226 = vmatpush2.msra.mxu0 0.0
        %5227 = vmatprep.subr.mxu0 0.0
        %5228 = vmatpush2.msra.mxu0 0.0
        %5229 = vmatprep.subr.mxu0 0.0
        %5230 = vmatpush2.msra.mxu0 0.0
        %5231 = vmatprep.subr.mxu0 0.0
        %5232 = vmatpush2.msra.mxu0 0.0
        %5233 = vmatprep.subr.mxu0 0.0
        %5234 = vmatpush2.msra.mxu0 0.0
        %5235 = vmatprep.subr.mxu0 0.0
        %5236 = vmatpush2.msra.mxu0 0.0
        %5237 = vmatprep.subr.mxu0 0.0
        %5238 = vmatpush2.msra.mxu0 0.0
        %5239 = vmatprep.subr.mxu0 0.0
        %5240 = vmatpush2.msra.mxu0 0.0
        %5241 = vmatprep.subr.mxu0 0.0
        %5242 = vmatpush2.msra.mxu0 0.0
        %5243 = vmatprep.subr.mxu0 0.0
        %5244 = vmatpush2.msra.mxu0 0.0
        %5245 = vmatprep.subr.mxu0 0.0
        %5246 = vmatpush2.msra.mxu0 0.0
        %5247 = vmatprep.subr.mxu0 0.0
        %5248 = vmatpush2.msra.mxu0 0.0
        %5249 = vmatprep.subr.mxu0 0.0
        %5250 = vmatpush2.msra.mxu0 0.0
        %5251 = vmatprep.subr.mxu0 0.0
        %5252 = vmatpush2.msra.mxu0 0.0
        %5253 = vmatprep.subr.mxu0 0.0
        %5254 = vmatpush2.msra.mxu0 0.0
        %5255 = vmatprep.subr.mxu0 0.0
        %5256 = vmatpush2.msra.mxu0 0.0
        %5257 = vmatprep.mubr.f32.mxu0 0.0
        %5258 = vmatmul.mubr.f32.gmra.mxu0 %v5143
        %v5259 = vpop.f32.mrf.mxu0
        %v5260 = vadd.f32 0.0, %v5259
        %v5261 = vpop.f32.mrf.mxu0
        %5262 = vmatprep.mubr.f32.mxu0 0.0
        %5263 = vmatmul.mubr.f32.gmra.mxu0 %v5146
        %v5264 = vpop.f32.mrf.mxu0
        %v5265 = vadd.f32 0.0, %v5264
        %v5266 = vpop.f32.mrf.mxu0
        %5267 = vmatprep.mubr.f32.mxu0 0.0
        %5268 = vmatmul.mubr.f32.gmra.mxu0 %v5149
        %v5269 = vpop.f32.mrf.mxu0
        %v5270 = vadd.f32 0.0, %v5269
        %v5271 = vpop.f32.mrf.mxu0
        %5272 = vmatprep.mubr.f32.mxu0 0.0
        %5273 = vmatmul.mubr.f32.gmra.mxu0 %v5152
        %v5274 = vpop.f32.mrf.mxu0
        %v5275 = vadd.f32 0.0, %v5274
        %v5276 = vpop.f32.mrf.mxu0
        %5277 = vmatprep.mubr.f32.mxu0 0.0
        %5278 = vmatmul.mubr.f32.gmra.mxu0 %v5155
        %v5279 = vpop.f32.mrf.mxu0
        %v5280 = vadd.f32 0.0, %v5279
        %v5281 = vpop.f32.mrf.mxu0
        %5282 = vmatprep.mubr.f32.mxu0 0.0
        %5283 = vmatmul.mubr.f32.gmra.mxu0 %v5158
        %v5284 = vpop.f32.mrf.mxu0
        %v5285 = vadd.f32 0.0, %v5284
        %v5286 = vpop.f32.mrf.mxu0
        %5287 = vmatprep.mubr.f32.mxu0 0.0
        %5288 = vmatmul.mubr.f32.gmra.mxu0 %v5161
        %v5289 = vpop.f32.mrf.mxu0
        %v5290 = vadd.f32 0.0, %v5289
        %v5291 = vpop.f32.mrf.mxu0
        %5292 = vmatprep.mubr.f32.mxu0 0.0
        %5293 = vmatmul.mubr.f32.gmra.mxu0 %v5164
        %v5294 = vpop.f32.mrf.mxu0
        %v5295 = vadd.f32 0.0, %v5294
        %v5296 = vpop.f32.mrf.mxu0
        %5297 = vmatprep.mubr.f32.mxu0 0.0
        %5298 = vmatmul.mubr.f32.gmra.mxu0 %v5167
        %v5299 = vpop.f32.mrf.mxu0
        %v5300 = vadd.f32 0.0, %v5299
        %v5301 = vpop.f32.mrf.mxu0
        %5302 = vmatprep.mubr.f32.mxu0 0.0
        %5303 = vmatmul.mubr.f32.gmra.mxu0 %v5170
        %v5304 = vpop.f32.mrf.mxu0
        %v5305 = vadd.f32 0.0, %v5304
        %v5306 = vpop.f32.mrf.mxu0
        %5307 = vmatprep.mubr.f32.mxu0 0.0
        %5308 = vmatmul.mubr.f32.gmra.mxu0 %v5173
        %v5309 = vpop.f32.mrf.mxu0
        %v5310 = vadd.f32 0.0, %v5309
        %v5311 = vpop.f32.mrf.mxu0
        %5312 = vmatprep.mubr.f32.mxu0 0.0
        %5313 = vmatmul.mubr.f32.gmra.mxu0 %v5176
        %v5314 = vpop.f32.mrf.mxu0
        %v5315 = vadd.f32 0.0, %v5314
        %v5316 = vpop.f32.mrf.mxu0
        %5317 = vmatprep.mubr.f32.mxu0 0.0
        %5318 = vmatmul.mubr.f32.gmra.mxu0 %v5179
        %v5319 = vpop.f32.mrf.mxu0
        %v5320 = vadd.f32 0.0, %v5319
        %v5321 = vpop.f32.mrf.mxu0
        %5322 = vmatprep.mubr.f32.mxu0 0.0
        %5323 = vmatmul.mubr.f32.gmra.mxu0 %v5182
        %v5324 = vpop.f32.mrf.mxu0
        %v5325 = vadd.f32 0.0, %v5324
        %v5326 = vpop.f32.mrf.mxu0
        %5327 = vmatprep.mubr.f32.mxu0 0.0
        %5328 = vmatmul.mubr.f32.gmra.mxu0 %v5185
        %v5329 = vpop.f32.mrf.mxu0
        %v5330 = vadd.f32 0.0, %v5329
        %v5331 = vpop.f32.mrf.mxu0
        %5332 = vmatprep.mubr.f32.mxu0 0.0
        %5333 = vmatmul.mubr.f32.gmra.mxu0 %v5188
        %v5334 = vpop.f32.mrf.mxu0
        %v5335 = vadd.f32 0.0, %v5334
        %v5336 = vpop.f32.mrf.mxu0
        %5337 = vdwg.mxu0
        %5354 = vrot.lane.b32.xlu0 %v5260, 112
        %v5355 = vpop.permute.xlu0 %5354
        %5356 = vrot.lane.b32.xlu0 %v5265, 112
        %v5357 = vpop.permute.xlu0 %5356
        %5358 = vrot.lane.b32.xlu0 %v5270, 112
        %v5359 = vpop.permute.xlu0 %5358
        %5360 = vrot.lane.b32.xlu0 %v5275, 112
        %v5361 = vpop.permute.xlu0 %5360
        %5362 = vrot.lane.b32.xlu0 %v5280, 112
        %v5363 = vpop.permute.xlu0 %5362
        %5364 = vrot.lane.b32.xlu0 %v5285, 112
        %v5365 = vpop.permute.xlu0 %5364
        %5366 = vrot.lane.b32.xlu0 %v5290, 112
        %v5367 = vpop.permute.xlu0 %5366
        %5368 = vrot.lane.b32.xlu0 %v5295, 112
        %v5369 = vpop.permute.xlu0 %5368
        %5370 = vrot.lane.b32.xlu0 %v5300, 112
        %v5371 = vpop.permute.xlu0 %5370
        %5372 = vrot.lane.b32.xlu0 %v5305, 112
        %v5373 = vpop.permute.xlu0 %5372
        %5374 = vrot.lane.b32.xlu0 %v5310, 112
        %v5375 = vpop.permute.xlu0 %5374
        %5376 = vrot.lane.b32.xlu0 %v5315, 112
        %v5377 = vpop.permute.xlu0 %5376
        %5378 = vrot.lane.b32.xlu0 %v5320, 112
        %v5379 = vpop.permute.xlu0 %5378
        %5380 = vrot.lane.b32.xlu0 %v5325, 112
        %v5381 = vpop.permute.xlu0 %5380
        %5382 = vrot.lane.b32.xlu0 %v5330, 112
        %v5383 = vpop.permute.xlu0 %5382
        %5384 = vrot.lane.b32.xlu0 %v5335, 112
        %v5385 = vpop.permute.xlu0 %5384
        %v5386 = vsel %vm1050, %v5260, 0
        %v5388 = vsel %vm1050, %v5265, 0
        %v5390 = vsel %vm1050, %v5270, 0
        %v5392 = vsel %vm1050, %v5275, 0
        %v5394 = vsel %vm1050, %v5280, 0
        %v5396 = vsel %vm1050, %v5285, 0
        %v5398 = vsel %vm1050, %v5290, 0
        %v5400 = vsel %vm1050, %v5295, 0
        %v5402 = vsel %vm1050, %v5300, 0
        %v5404 = vsel %vm1050, %v5305, 0
        %v5406 = vsel %vm1050, %v5310, 0
        %v5408 = vsel %vm1050, %v5315, 0
        %v5410 = vsel %vm1050, %v5320, 0
        %v5412 = vsel %vm1050, %v5325, 0
        %v5414 = vsel %vm1050, %v5330, 0
        %v5416 = vsel %vm1050, %v5335, 0
        %v5418 = vsel %vm1050, %v5355, 0
        %v5420 = vsel %vm1050, %v5357, 0
        %v5422 = vsel %vm1050, %v5359, 0
        %v5424 = vsel %vm1050, %v5361, 0
        %v5426 = vsel %vm1050, %v5363, 0
        %v5428 = vsel %vm1050, %v5365, 0
        %v5430 = vsel %vm1050, %v5367, 0
        %v5432 = vsel %vm1050, %v5369, 0
        %v5434 = vsel %vm1050, %v5371, 0
        %v5436 = vsel %vm1050, %v5373, 0
        %v5438 = vsel %vm1050, %v5375, 0
        %v5440 = vsel %vm1050, %v5377, 0
        %v5442 = vsel %vm1050, %v5379, 0
        %v5444 = vsel %vm1050, %v5381, 0
        %v5446 = vsel %vm1050, %v5383, 0
        %v5448 = vsel %vm1050, %v5385, 0
        %5450 = vmatprep.subr.mxu0 0.0
        %5451 = vmatpush1.xpose.msra.mxu0 %v5448
        %5452 = vmatprep.subr.mxu0 0.0
        %5453 = vmatpush1.xpose.msra.mxu0 %v5446
        %5454 = vmatprep.subr.mxu0 0.0
        %5455 = vmatpush1.xpose.msra.mxu0 %v5444
        %5456 = vmatprep.subr.mxu0 0.0
        %5457 = vmatpush1.xpose.msra.mxu0 %v5442
        %5458 = vmatprep.subr.mxu0 0.0
        %5459 = vmatpush1.xpose.msra.mxu0 %v5440
        %5460 = vmatprep.subr.mxu0 0.0
        %5461 = vmatpush1.xpose.msra.mxu0 %v5438
        %5462 = vmatprep.subr.mxu0 0.0
        %5463 = vmatpush1.xpose.msra.mxu0 %v5436
        %5464 = vmatprep.subr.mxu0 0.0
        %5465 = vmatpush1.xpose.msra.mxu0 %v5434
        %5466 = vmatprep.subr.mxu0 0.0
        %5467 = vmatpush1.xpose.msra.mxu0 %v5432
        %5468 = vmatprep.subr.mxu0 0.0
        %5469 = vmatpush1.xpose.msra.mxu0 %v5430
        %5470 = vmatprep.subr.mxu0 0.0
        %5471 = vmatpush1.xpose.msra.mxu0 %v5428
        %5472 = vmatprep.subr.mxu0 0.0
        %5473 = vmatpush1.xpose.msra.mxu0 %v5426
        %5474 = vmatprep.subr.mxu0 0.0
        %5475 = vmatpush1.xpose.msra.mxu0 %v5424
        %5476 = vmatprep.subr.mxu0 0.0
        %5477 = vmatpush1.xpose.msra.mxu0 %v5422
        %5478 = vmatprep.subr.mxu0 0.0
        %5479 = vmatpush1.xpose.msra.mxu0 %v5420
        %5480 = vmatprep.subr.mxu0 0.0
        %5481 = vmatpush1.xpose.msra.mxu0 %v5418
        %5482 = vmatprep.subr.mxu0 0.0
        %5483 = vmatpush2.xpose.msra.mxu0 0.0
        %5484 = vmatprep.subr.mxu0 0.0
        %5485 = vmatpush2.xpose.msra.mxu0 0.0
        %5486 = vmatprep.subr.mxu0 0.0
        %5487 = vmatpush2.xpose.msra.mxu0 0.0
        %5488 = vmatprep.subr.mxu0 0.0
        %5489 = vmatpush2.xpose.msra.mxu0 0.0
        %5490 = vmatprep.subr.mxu0 0.0
        %5491 = vmatpush2.xpose.msra.mxu0 0.0
        %5492 = vmatprep.subr.mxu0 0.0
        %5493 = vmatpush2.xpose.msra.mxu0 0.0
        %5494 = vmatprep.subr.mxu0 0.0
        %5495 = vmatpush2.xpose.msra.mxu0 0.0
        %5496 = vmatprep.subr.mxu0 0.0
        %5497 = vmatpush2.xpose.msra.mxu0 0.0
        %5498 = vmatprep.subr.mxu0 0.0
        %5499 = vmatpush2.xpose.msra.mxu0 0.0
        %5500 = vmatprep.subr.mxu0 0.0
        %5501 = vmatpush2.xpose.msra.mxu0 0.0
        %5502 = vmatprep.subr.mxu0 0.0
        %5503 = vmatpush2.xpose.msra.mxu0 0.0
        %5504 = vmatprep.subr.mxu0 0.0
        %5505 = vmatpush2.xpose.msra.mxu0 0.0
        %5506 = vmatprep.subr.mxu0 0.0
        %5507 = vmatpush2.xpose.msra.mxu0 0.0
        %5508 = vmatprep.subr.mxu0 0.0
        %5509 = vmatpush2.xpose.msra.mxu0 0.0
        %5510 = vmatprep.subr.mxu0 0.0
        %5511 = vmatpush2.xpose.msra.mxu0 0.0
        %5512 = vmatprep.subr.mxu0 0.0
        %5513 = vmatpush2.xpose.msra.mxu0 0.0
        %5514 = vmatprep.mubr.f32.mxu0 0.0
        %5515 = vmatmul.mubr.f32.gmra.mxu0 %v5386
        %v5516 = vpop.f32.mrf.mxu0
        %v5517 = vadd.f32 %v334, %v5516
        %v5518 = vpop.f32.mrf.mxu0
        %5519 = vmatprep.mubr.f32.mxu0 0.0
        %5520 = vmatmul.mubr.f32.gmra.mxu0 %v5388
        %v5521 = vpop.f32.mrf.mxu0
        %v5522 = vadd.f32 %v335, %v5521
        %v5523 = vpop.f32.mrf.mxu0
        %5524 = vmatprep.mubr.f32.mxu0 0.0
        %5525 = vmatmul.mubr.f32.gmra.mxu0 %v5390
        %v5526 = vpop.f32.mrf.mxu0
        %v5527 = vadd.f32 %v336, %v5526
        %v5528 = vpop.f32.mrf.mxu0
        %5529 = vmatprep.mubr.f32.mxu0 0.0
        %5530 = vmatmul.mubr.f32.gmra.mxu0 %v5392
        %v5531 = vpop.f32.mrf.mxu0
        %v5532 = vadd.f32 %v337, %v5531
        %v5533 = vpop.f32.mrf.mxu0
        %5534 = vmatprep.mubr.f32.mxu0 0.0
        %5535 = vmatmul.mubr.f32.gmra.mxu0 %v5394
        %v5536 = vpop.f32.mrf.mxu0
        %v5537 = vadd.f32 %v338, %v5536
        %v5538 = vpop.f32.mrf.mxu0
        %5539 = vmatprep.mubr.f32.mxu0 0.0
        %5540 = vmatmul.mubr.f32.gmra.mxu0 %v5396
        %v5541 = vpop.f32.mrf.mxu0
        %v5542 = vadd.f32 %v339, %v5541
        %v5543 = vpop.f32.mrf.mxu0
        %5544 = vmatprep.mubr.f32.mxu0 0.0
        %5545 = vmatmul.mubr.f32.gmra.mxu0 %v5398
        %v5546 = vpop.f32.mrf.mxu0
        %v5547 = vadd.f32 %v340, %v5546
        %v5548 = vpop.f32.mrf.mxu0
        %5549 = vmatprep.mubr.f32.mxu0 0.0
        %5550 = vmatmul.mubr.f32.gmra.mxu0 %v5400
        %v5551 = vpop.f32.mrf.mxu0
        %v5552 = vadd.f32 %v341, %v5551
        %v5553 = vpop.f32.mrf.mxu0
        %5554 = vmatprep.mubr.f32.mxu0 0.0
        %5555 = vmatmul.mubr.f32.gmra.mxu0 %v5402
        %v5556 = vpop.f32.mrf.mxu0
        %v5557 = vadd.f32 %v342, %v5556
        %v5558 = vpop.f32.mrf.mxu0
        %5559 = vmatprep.mubr.f32.mxu0 0.0
        %5560 = vmatmul.mubr.f32.gmra.mxu0 %v5404
        %v5561 = vpop.f32.mrf.mxu0
        %v5562 = vadd.f32 %v343, %v5561
        %v5563 = vpop.f32.mrf.mxu0
        %5564 = vmatprep.mubr.f32.mxu0 0.0
        %5565 = vmatmul.mubr.f32.gmra.mxu0 %v5406
        %v5566 = vpop.f32.mrf.mxu0
        %v5567 = vadd.f32 %v344, %v5566
        %v5568 = vpop.f32.mrf.mxu0
        %5569 = vmatprep.mubr.f32.mxu0 0.0
        %5570 = vmatmul.mubr.f32.gmra.mxu0 %v5408
        %v5571 = vpop.f32.mrf.mxu0
        %v5572 = vadd.f32 %v345, %v5571
        %v5573 = vpop.f32.mrf.mxu0
        %5574 = vmatprep.mubr.f32.mxu0 0.0
        %5575 = vmatmul.mubr.f32.gmra.mxu0 %v5410
        %v5576 = vpop.f32.mrf.mxu0
        %v5577 = vadd.f32 %v346, %v5576
        %v5578 = vpop.f32.mrf.mxu0
        %5579 = vmatprep.mubr.f32.mxu0 0.0
        %5580 = vmatmul.mubr.f32.gmra.mxu0 %v5412
        %v5581 = vpop.f32.mrf.mxu0
        %v5582 = vadd.f32 %v347, %v5581
        %v5583 = vpop.f32.mrf.mxu0
        %5584 = vmatprep.mubr.f32.mxu0 0.0
        %5585 = vmatmul.mubr.f32.gmra.mxu0 %v5414
        %v5586 = vpop.f32.mrf.mxu0
        %v5587 = vadd.f32 %v348, %v5586
        %v5588 = vpop.f32.mrf.mxu0
        %5589 = vmatprep.mubr.f32.mxu0 0.0
        %5590 = vmatmul.mubr.f32.gmra.mxu0 %v5416
        %v5591 = vpop.f32.mrf.mxu0
        %v5592 = vadd.f32 %v349, %v5591
        %v5593 = vpop.f32.mrf.mxu0
        %5594 = vdwg.mxu0
        %5595 = vmax.xlane.f32.xlu0 %v5517
        %v5596 = vpop.xlane.xlu0 %5595
        %5597 = vmax.xlane.f32.xlu0 %v5522
        %v5598 = vpop.xlane.xlu0 %5597
        %5599 = vmax.xlane.f32.xlu0 %v5527
        %v5600 = vpop.xlane.xlu0 %5599
        %5601 = vmax.xlane.f32.xlu0 %v5532
        %v5602 = vpop.xlane.xlu0 %5601
        %5603 = vmax.xlane.f32.xlu0 %v5537
        %v5604 = vpop.xlane.xlu0 %5603
        %5605 = vmax.xlane.f32.xlu0 %v5542
        %v5606 = vpop.xlane.xlu0 %5605
        %5607 = vmax.xlane.f32.xlu0 %v5547
        %v5608 = vpop.xlane.xlu0 %5607
        %5609 = vmax.xlane.f32.xlu0 %v5552
        %v5610 = vpop.xlane.xlu0 %5609
        %5611 = vmax.xlane.f32.xlu0 %v5557
        %v5612 = vpop.xlane.xlu0 %5611
        %5613 = vmax.xlane.f32.xlu0 %v5562
        %v5614 = vpop.xlane.xlu0 %5613
        %5615 = vmax.xlane.f32.xlu0 %v5567
        %v5616 = vpop.xlane.xlu0 %5615
        %5617 = vmax.xlane.f32.xlu0 %v5572
        %v5618 = vpop.xlane.xlu0 %5617
        %5619 = vmax.xlane.f32.xlu0 %v5577
        %v5620 = vpop.xlane.xlu0 %5619
        %5621 = vmax.xlane.f32.xlu0 %v5582
        %v5622 = vpop.xlane.xlu0 %5621
        %5623 = vmax.xlane.f32.xlu0 %v5587
        %v5624 = vpop.xlane.xlu0 %5623
        %5625 = vmax.xlane.f32.xlu0 %v5592
        %v5626 = vpop.xlane.xlu0 %5625
        %v5627 = vsub.f32 %v5517, %v5596
        %v5628 = vsub.f32 %v5522, %v5598
        %v5629 = vsub.f32 %v5527, %v5600
        %v5630 = vsub.f32 %v5532, %v5602
        %v5631 = vsub.f32 %v5537, %v5604
        %v5632 = vsub.f32 %v5542, %v5606
        %v5633 = vsub.f32 %v5547, %v5608
        %v5634 = vsub.f32 %v5552, %v5610
        %v5635 = vsub.f32 %v5557, %v5612
        %v5636 = vsub.f32 %v5562, %v5614
        %v5637 = vsub.f32 %v5567, %v5616
        %v5638 = vsub.f32 %v5572, %v5618
        %v5639 = vsub.f32 %v5577, %v5620
        %v5640 = vsub.f32 %v5582, %v5622
        %v5641 = vsub.f32 %v5587, %v5624
        %v5642 = vsub.f32 %v5592, %v5626
        %v5643 = vmul.f32 %v5627, 1.442695
        %v5644 = vpow.pop %v5643
        %v5645 = vmul.f32 %v5628, 1.442695
        %v5646 = vpow.pop %v5645
        %v5647 = vmul.f32 %v5629, 1.442695
        %v5648 = vpow.pop %v5647
        %v5649 = vmul.f32 %v5630, 1.442695
        %v5650 = vpow.pop %v5649
        %v5651 = vmul.f32 %v5631, 1.442695
        %v5652 = vpow.pop %v5651
        %v5653 = vmul.f32 %v5632, 1.442695
        %v5654 = vpow.pop %v5653
        %v5655 = vmul.f32 %v5633, 1.442695
        %v5656 = vpow.pop %v5655
        %v5657 = vmul.f32 %v5634, 1.442695
        %v5658 = vpow.pop %v5657
        %v5659 = vmul.f32 %v5635, 1.442695
        %v5660 = vpow.pop %v5659
        %v5661 = vmul.f32 %v5636, 1.442695
        %v5662 = vpow.pop %v5661
        %v5663 = vmul.f32 %v5637, 1.442695
        %v5664 = vpow.pop %v5663
        %v5665 = vmul.f32 %v5638, 1.442695
        %v5666 = vpow.pop %v5665
        %v5667 = vmul.f32 %v5639, 1.442695
        %v5668 = vpow.pop %v5667
        %v5669 = vmul.f32 %v5640, 1.442695
        %v5670 = vpow.pop %v5669
        %v5671 = vmul.f32 %v5641, 1.442695
        %v5672 = vpow.pop %v5671
        %v5673 = vmul.f32 %v5642, 1.442695
        %v5674 = vpow.pop %v5673
        %5675 = vadd.xlane.f32.xlu0 %v5644
        %v5676 = vpop.xlane.xlu0 %5675
        %5677 = vadd.xlane.f32.xlu0 %v5646
        %v5678 = vpop.xlane.xlu0 %5677
        %5679 = vadd.xlane.f32.xlu0 %v5648
        %v5680 = vpop.xlane.xlu0 %5679
        %5681 = vadd.xlane.f32.xlu0 %v5650
        %v5682 = vpop.xlane.xlu0 %5681
        %5683 = vadd.xlane.f32.xlu0 %v5652
        %v5684 = vpop.xlane.xlu0 %5683
        %5685 = vadd.xlane.f32.xlu0 %v5654
        %v5686 = vpop.xlane.xlu0 %5685
        %5687 = vadd.xlane.f32.xlu0 %v5656
        %v5688 = vpop.xlane.xlu0 %5687
        %5689 = vadd.xlane.f32.xlu0 %v5658
        %v5690 = vpop.xlane.xlu0 %5689
        %5691 = vadd.xlane.f32.xlu0 %v5660
        %v5692 = vpop.xlane.xlu0 %5691
        %5693 = vadd.xlane.f32.xlu0 %v5662
        %v5694 = vpop.xlane.xlu0 %5693
        %5695 = vadd.xlane.f32.xlu0 %v5664
        %v5696 = vpop.xlane.xlu0 %5695
        %5697 = vadd.xlane.f32.xlu0 %v5666
        %v5698 = vpop.xlane.xlu0 %5697
        %5699 = vadd.xlane.f32.xlu0 %v5668
        %v5700 = vpop.xlane.xlu0 %5699
        %5701 = vadd.xlane.f32.xlu0 %v5670
        %v5702 = vpop.xlane.xlu0 %5701
        %5703 = vadd.xlane.f32.xlu0 %v5672
        %v5704 = vpop.xlane.xlu0 %5703
        %5705 = vadd.xlane.f32.xlu0 %v5674
        %v5706 = vpop.xlane.xlu0 %5705
        %v5707 = vrcp.pop %v5676
        %v5708 = vrcp.pop %v5678
        %v5709 = vrcp.pop %v5680
        %v5710 = vrcp.pop %v5682
        %v5711 = vrcp.pop %v5684
        %v5712 = vrcp.pop %v5686
        %v5713 = vrcp.pop %v5688
        %v5714 = vrcp.pop %v5690
        %v5715 = vrcp.pop %v5692
        %v5716 = vrcp.pop %v5694
        %v5717 = vrcp.pop %v5696
        %v5718 = vrcp.pop %v5698
        %v5719 = vrcp.pop %v5700
        %v5720 = vrcp.pop %v5702
        %v5721 = vrcp.pop %v5704
        %v5722 = vrcp.pop %v5706
        %v5723 = vmul.f32 %v5644, %v5707
        %v5724 = vmul.f32 %v5646, %v5708
        %v5725 = vmul.f32 %v5648, %v5709
        %v5726 = vmul.f32 %v5650, %v5710
        %v5727 = vmul.f32 %v5652, %v5711
        %v5728 = vmul.f32 %v5654, %v5712
        %v5729 = vmul.f32 %v5656, %v5713
        %v5730 = vmul.f32 %v5658, %v5714
        %v5731 = vmul.f32 %v5660, %v5715
        %v5732 = vmul.f32 %v5662, %v5716
        %v5733 = vmul.f32 %v5664, %v5717
        %v5734 = vmul.f32 %v5666, %v5718
        %v5735 = vmul.f32 %v5668, %v5719
        %v5736 = vmul.f32 %v5670, %v5720
        %v5737 = vmul.f32 %v5672, %v5721
        %v5738 = vmul.f32 %v5674, %v5722
        %5739 = vrot.lane.b32.xlu0 %v5260, 96
        %v5740 = vpop.permute.xlu0 %5739
        %5741 = vrot.lane.b32.xlu0 %v5265, 96
        %v5742 = vpop.permute.xlu0 %5741
        %5743 = vrot.lane.b32.xlu0 %v5270, 96
        %v5744 = vpop.permute.xlu0 %5743
        %5745 = vrot.lane.b32.xlu0 %v5275, 96
        %v5746 = vpop.permute.xlu0 %5745
        %5747 = vrot.lane.b32.xlu0 %v5280, 96
        %v5748 = vpop.permute.xlu0 %5747
        %5749 = vrot.lane.b32.xlu0 %v5285, 96
        %v5750 = vpop.permute.xlu0 %5749
        %5751 = vrot.lane.b32.xlu0 %v5290, 96
        %v5752 = vpop.permute.xlu0 %5751
        %5753 = vrot.lane.b32.xlu0 %v5295, 96
        %v5754 = vpop.permute.xlu0 %5753
        %5755 = vrot.lane.b32.xlu0 %v5300, 96
        %v5756 = vpop.permute.xlu0 %5755
        %5757 = vrot.lane.b32.xlu0 %v5305, 96
        %v5758 = vpop.permute.xlu0 %5757
        %5759 = vrot.lane.b32.xlu0 %v5310, 96
        %v5760 = vpop.permute.xlu0 %5759
        %5761 = vrot.lane.b32.xlu0 %v5315, 96
        %v5762 = vpop.permute.xlu0 %5761
        %5763 = vrot.lane.b32.xlu0 %v5320, 96
        %v5764 = vpop.permute.xlu0 %5763
        %5765 = vrot.lane.b32.xlu0 %v5325, 96
        %v5766 = vpop.permute.xlu0 %5765
        %5767 = vrot.lane.b32.xlu0 %v5330, 96
        %v5768 = vpop.permute.xlu0 %5767
        %5769 = vrot.lane.b32.xlu0 %v5335, 96
        %v5770 = vpop.permute.xlu0 %5769
        %5787 = vmatprep.subr.mxu0 0.0
        %5788 = vmatpush1.msra.mxu0 %v5770
        %5789 = vmatprep.subr.mxu0 0.0
        %5790 = vmatpush1.msra.mxu0 %v5768
        %5791 = vmatprep.subr.mxu0 0.0
        %5792 = vmatpush1.msra.mxu0 %v5766
        %5793 = vmatprep.subr.mxu0 0.0
        %5794 = vmatpush1.msra.mxu0 %v5764
        %5795 = vmatprep.subr.mxu0 0.0
        %5796 = vmatpush1.msra.mxu0 %v5762
        %5797 = vmatprep.subr.mxu0 0.0
        %5798 = vmatpush1.msra.mxu0 %v5760
        %5799 = vmatprep.subr.mxu0 0.0
        %5800 = vmatpush1.msra.mxu0 %v5758
        %5801 = vmatprep.subr.mxu0 0.0
        %5802 = vmatpush1.msra.mxu0 %v5756
        %5803 = vmatprep.subr.mxu0 0.0
        %5804 = vmatpush1.msra.mxu0 %v5754
        %5805 = vmatprep.subr.mxu0 0.0
        %5806 = vmatpush1.msra.mxu0 %v5752
        %5807 = vmatprep.subr.mxu0 0.0
        %5808 = vmatpush1.msra.mxu0 %v5750
        %5809 = vmatprep.subr.mxu0 0.0
        %5810 = vmatpush1.msra.mxu0 %v5748
        %5811 = vmatprep.subr.mxu0 0.0
        %5812 = vmatpush1.msra.mxu0 %v5746
        %5813 = vmatprep.subr.mxu0 0.0
        %5814 = vmatpush1.msra.mxu0 %v5744
        %5815 = vmatprep.subr.mxu0 0.0
        %5816 = vmatpush1.msra.mxu0 %v5742
        %5817 = vmatprep.subr.mxu0 0.0
        %5818 = vmatpush1.msra.mxu0 %v5740
        %5819 = vmatprep.subr.mxu0 0.0
        %5820 = vmatpush2.msra.mxu0 0.0
        %5821 = vmatprep.subr.mxu0 0.0
        %5822 = vmatpush2.msra.mxu0 0.0
        %5823 = vmatprep.subr.mxu0 0.0
        %5824 = vmatpush2.msra.mxu0 0.0
        %5825 = vmatprep.subr.mxu0 0.0
        %5826 = vmatpush2.msra.mxu0 0.0
        %5827 = vmatprep.subr.mxu0 0.0
        %5828 = vmatpush2.msra.mxu0 0.0
        %5829 = vmatprep.subr.mxu0 0.0
        %5830 = vmatpush2.msra.mxu0 0.0
        %5831 = vmatprep.subr.mxu0 0.0
        %5832 = vmatpush2.msra.mxu0 0.0
        %5833 = vmatprep.subr.mxu0 0.0
        %5834 = vmatpush2.msra.mxu0 0.0
        %5835 = vmatprep.subr.mxu0 0.0
        %5836 = vmatpush2.msra.mxu0 0.0
        %5837 = vmatprep.subr.mxu0 0.0
        %5838 = vmatpush2.msra.mxu0 0.0
        %5839 = vmatprep.subr.mxu0 0.0
        %5840 = vmatpush2.msra.mxu0 0.0
        %5841 = vmatprep.subr.mxu0 0.0
        %5842 = vmatpush2.msra.mxu0 0.0
        %5843 = vmatprep.subr.mxu0 0.0
        %5844 = vmatpush2.msra.mxu0 0.0
        %5845 = vmatprep.subr.mxu0 0.0
        %5846 = vmatpush2.msra.mxu0 0.0
        %5847 = vmatprep.subr.mxu0 0.0
        %5848 = vmatpush2.msra.mxu0 0.0
        %5849 = vmatprep.subr.mxu0 0.0
        %5850 = vmatpush2.msra.mxu0 0.0
        %5851 = vmatprep.mubr.f32.mxu0 0.0
        %5852 = vmatmul.mubr.f32.gmra.mxu0 %v5723
        %v5853 = vpop.f32.mrf.mxu0
        %v5854 = vadd.f32 0.0, %v5853
        %v5855 = vpop.f32.mrf.mxu0
        %5856 = vmatprep.mubr.f32.mxu0 0.0
        %5857 = vmatmul.mubr.f32.gmra.mxu0 %v5724
        %v5858 = vpop.f32.mrf.mxu0
        %v5859 = vadd.f32 0.0, %v5858
        %v5860 = vpop.f32.mrf.mxu0
        %5861 = vmatprep.mubr.f32.mxu0 0.0
        %5862 = vmatmul.mubr.f32.gmra.mxu0 %v5725
        %v5863 = vpop.f32.mrf.mxu0
        %v5864 = vadd.f32 0.0, %v5863
        %v5865 = vpop.f32.mrf.mxu0
        %5866 = vmatprep.mubr.f32.mxu0 0.0
        %5867 = vmatmul.mubr.f32.gmra.mxu0 %v5726
        %v5868 = vpop.f32.mrf.mxu0
        %v5869 = vadd.f32 0.0, %v5868
        %v5870 = vpop.f32.mrf.mxu0
        %5871 = vmatprep.mubr.f32.mxu0 0.0
        %5872 = vmatmul.mubr.f32.gmra.mxu0 %v5727
        %v5873 = vpop.f32.mrf.mxu0
        %v5874 = vadd.f32 0.0, %v5873
        %v5875 = vpop.f32.mrf.mxu0
        %5876 = vmatprep.mubr.f32.mxu0 0.0
        %5877 = vmatmul.mubr.f32.gmra.mxu0 %v5728
        %v5878 = vpop.f32.mrf.mxu0
        %v5879 = vadd.f32 0.0, %v5878
        %v5880 = vpop.f32.mrf.mxu0
        %5881 = vmatprep.mubr.f32.mxu0 0.0
        %5882 = vmatmul.mubr.f32.gmra.mxu0 %v5729
        %v5883 = vpop.f32.mrf.mxu0
        %v5884 = vadd.f32 0.0, %v5883
        %v5885 = vpop.f32.mrf.mxu0
        %5886 = vmatprep.mubr.f32.mxu0 0.0
        %5887 = vmatmul.mubr.f32.gmra.mxu0 %v5730
        %v5888 = vpop.f32.mrf.mxu0
        %v5889 = vadd.f32 0.0, %v5888
        %v5890 = vpop.f32.mrf.mxu0
        %5891 = vmatprep.mubr.f32.mxu0 0.0
        %5892 = vmatmul.mubr.f32.gmra.mxu0 %v5731
        %v5893 = vpop.f32.mrf.mxu0
        %v5894 = vadd.f32 0.0, %v5893
        %v5895 = vpop.f32.mrf.mxu0
        %5896 = vmatprep.mubr.f32.mxu0 0.0
        %5897 = vmatmul.mubr.f32.gmra.mxu0 %v5732
        %v5898 = vpop.f32.mrf.mxu0
        %v5899 = vadd.f32 0.0, %v5898
        %v5900 = vpop.f32.mrf.mxu0
        %5901 = vmatprep.mubr.f32.mxu0 0.0
        %5902 = vmatmul.mubr.f32.gmra.mxu0 %v5733
        %v5903 = vpop.f32.mrf.mxu0
        %v5904 = vadd.f32 0.0, %v5903
        %v5905 = vpop.f32.mrf.mxu0
        %5906 = vmatprep.mubr.f32.mxu0 0.0
        %5907 = vmatmul.mubr.f32.gmra.mxu0 %v5734
        %v5908 = vpop.f32.mrf.mxu0
        %v5909 = vadd.f32 0.0, %v5908
        %v5910 = vpop.f32.mrf.mxu0
        %5911 = vmatprep.mubr.f32.mxu0 0.0
        %5912 = vmatmul.mubr.f32.gmra.mxu0 %v5735
        %v5913 = vpop.f32.mrf.mxu0
        %v5914 = vadd.f32 0.0, %v5913
        %v5915 = vpop.f32.mrf.mxu0
        %5916 = vmatprep.mubr.f32.mxu0 0.0
        %5917 = vmatmul.mubr.f32.gmra.mxu0 %v5736
        %v5918 = vpop.f32.mrf.mxu0
        %v5919 = vadd.f32 0.0, %v5918
        %v5920 = vpop.f32.mrf.mxu0
        %5921 = vmatprep.mubr.f32.mxu0 0.0
        %5922 = vmatmul.mubr.f32.gmra.mxu0 %v5737
        %v5923 = vpop.f32.mrf.mxu0
        %v5924 = vadd.f32 0.0, %v5923
        %v5925 = vpop.f32.mrf.mxu0
        %5926 = vmatprep.mubr.f32.mxu0 0.0
        %5927 = vmatmul.mubr.f32.gmra.mxu0 %v5738
        %v5928 = vpop.f32.mrf.mxu0
        %v5929 = vadd.f32 0.0, %v5928
        %v5930 = vpop.f32.mrf.mxu0
        %5931 = vdwg.mxu0
        %5932 = vrot.lane.b32.xlu0 %v5260, 120
        %v5933 = vpop.permute.xlu0 %5932
        %5934 = vrot.lane.b32.xlu0 %v5265, 120
        %v5935 = vpop.permute.xlu0 %5934
        %5936 = vrot.lane.b32.xlu0 %v5270, 120
        %v5937 = vpop.permute.xlu0 %5936
        %5938 = vrot.lane.b32.xlu0 %v5275, 120
        %v5939 = vpop.permute.xlu0 %5938
        %5940 = vrot.lane.b32.xlu0 %v5280, 120
        %v5941 = vpop.permute.xlu0 %5940
        %5942 = vrot.lane.b32.xlu0 %v5285, 120
        %v5943 = vpop.permute.xlu0 %5942
        %5944 = vrot.lane.b32.xlu0 %v5290, 120
        %v5945 = vpop.permute.xlu0 %5944
        %5946 = vrot.lane.b32.xlu0 %v5295, 120
        %v5947 = vpop.permute.xlu0 %5946
        %5948 = vrot.lane.b32.xlu0 %v5300, 120
        %v5949 = vpop.permute.xlu0 %5948
        %5950 = vrot.lane.b32.xlu0 %v5305, 120
        %v5951 = vpop.permute.xlu0 %5950
        %5952 = vrot.lane.b32.xlu0 %v5310, 120
        %v5953 = vpop.permute.xlu0 %5952
        %5954 = vrot.lane.b32.xlu0 %v5315, 120
        %v5955 = vpop.permute.xlu0 %5954
        %5956 = vrot.lane.b32.xlu0 %v5320, 120
        %v5957 = vpop.permute.xlu0 %5956
        %5958 = vrot.lane.b32.xlu0 %v5325, 120
        %v5959 = vpop.permute.xlu0 %5958
        %5960 = vrot.lane.b32.xlu0 %v5330, 120
        %v5961 = vpop.permute.xlu0 %5960
        %5962 = vrot.lane.b32.xlu0 %v5335, 120
        %v5963 = vpop.permute.xlu0 %5962
        %5964 = vrot.lane.b32.xlu0 %v5260, 104
        %v5965 = vpop.permute.xlu0 %5964
        %5966 = vrot.lane.b32.xlu0 %v5265, 104
        %v5967 = vpop.permute.xlu0 %5966
        %5968 = vrot.lane.b32.xlu0 %v5270, 104
        %v5969 = vpop.permute.xlu0 %5968
        %5970 = vrot.lane.b32.xlu0 %v5275, 104
        %v5971 = vpop.permute.xlu0 %5970
        %5972 = vrot.lane.b32.xlu0 %v5280, 104
        %v5973 = vpop.permute.xlu0 %5972
        %5974 = vrot.lane.b32.xlu0 %v5285, 104
        %v5975 = vpop.permute.xlu0 %5974
        %5976 = vrot.lane.b32.xlu0 %v5290, 104
        %v5977 = vpop.permute.xlu0 %5976
        %5978 = vrot.lane.b32.xlu0 %v5295, 104
        %v5979 = vpop.permute.xlu0 %5978
        %5980 = vrot.lane.b32.xlu0 %v5300, 104
        %v5981 = vpop.permute.xlu0 %5980
        %5982 = vrot.lane.b32.xlu0 %v5305, 104
        %v5983 = vpop.permute.xlu0 %5982
        %5984 = vrot.lane.b32.xlu0 %v5310, 104
        %v5985 = vpop.permute.xlu0 %5984
        %5986 = vrot.lane.b32.xlu0 %v5315, 104
        %v5987 = vpop.permute.xlu0 %5986
        %5988 = vrot.lane.b32.xlu0 %v5320, 104
        %v5989 = vpop.permute.xlu0 %5988
        %5990 = vrot.lane.b32.xlu0 %v5325, 104
        %v5991 = vpop.permute.xlu0 %5990
        %5992 = vrot.lane.b32.xlu0 %v5330, 104
        %v5993 = vpop.permute.xlu0 %5992
        %5994 = vrot.lane.b32.xlu0 %v5335, 104
        %v5995 = vpop.permute.xlu0 %5994
        %v5996 = vsel %vm1050, %v5933, 0
        %v5998 = vsel %vm1050, %v5935, 0
        %v6000 = vsel %vm1050, %v5937, 0
        %v6002 = vsel %vm1050, %v5939, 0
        %v6004 = vsel %vm1050, %v5941, 0
        %v6006 = vsel %vm1050, %v5943, 0
        %v6008 = vsel %vm1050, %v5945, 0
        %v6010 = vsel %vm1050, %v5947, 0
        %v6012 = vsel %vm1050, %v5949, 0
        %v6014 = vsel %vm1050, %v5951, 0
        %v6016 = vsel %vm1050, %v5953, 0
        %v6018 = vsel %vm1050, %v5955, 0
        %v6020 = vsel %vm1050, %v5957, 0
        %v6022 = vsel %vm1050, %v5959, 0
        %v6024 = vsel %vm1050, %v5961, 0
        %v6026 = vsel %vm1050, %v5963, 0
        %v6028 = vsel %vm1050, %v5965, 0
        %v6030 = vsel %vm1050, %v5967, 0
        %v6032 = vsel %vm1050, %v5969, 0
        %v6034 = vsel %vm1050, %v5971, 0
        %v6036 = vsel %vm1050, %v5973, 0
        %v6038 = vsel %vm1050, %v5975, 0
        %v6040 = vsel %vm1050, %v5977, 0
        %v6042 = vsel %vm1050, %v5979, 0
        %v6044 = vsel %vm1050, %v5981, 0
        %v6046 = vsel %vm1050, %v5983, 0
        %v6048 = vsel %vm1050, %v5985, 0
        %v6050 = vsel %vm1050, %v5987, 0
        %v6052 = vsel %vm1050, %v5989, 0
        %v6054 = vsel %vm1050, %v5991, 0
        %v6056 = vsel %vm1050, %v5993, 0
        %v6058 = vsel %vm1050, %v5995, 0
        %6060 = vmatprep.subr.mxu0 0.0
        %6061 = vmatpush1.xpose.msra.mxu0 %v6058
        %6062 = vmatprep.subr.mxu0 0.0
        %6063 = vmatpush1.xpose.msra.mxu0 %v6056
        %6064 = vmatprep.subr.mxu0 0.0
        %6065 = vmatpush1.xpose.msra.mxu0 %v6054
        %6066 = vmatprep.subr.mxu0 0.0
        %6067 = vmatpush1.xpose.msra.mxu0 %v6052
        %6068 = vmatprep.subr.mxu0 0.0
        %6069 = vmatpush1.xpose.msra.mxu0 %v6050
        %6070 = vmatprep.subr.mxu0 0.0
        %6071 = vmatpush1.xpose.msra.mxu0 %v6048
        %6072 = vmatprep.subr.mxu0 0.0
        %6073 = vmatpush1.xpose.msra.mxu0 %v6046
        %6074 = vmatprep.subr.mxu0 0.0
        %6075 = vmatpush1.xpose.msra.mxu0 %v6044
        %6076 = vmatprep.subr.mxu0 0.0
        %6077 = vmatpush1.xpose.msra.mxu0 %v6042
        %6078 = vmatprep.subr.mxu0 0.0
        %6079 = vmatpush1.xpose.msra.mxu0 %v6040
        %6080 = vmatprep.subr.mxu0 0.0
        %6081 = vmatpush1.xpose.msra.mxu0 %v6038
        %6082 = vmatprep.subr.mxu0 0.0
        %6083 = vmatpush1.xpose.msra.mxu0 %v6036
        %6084 = vmatprep.subr.mxu0 0.0
        %6085 = vmatpush1.xpose.msra.mxu0 %v6034
        %6086 = vmatprep.subr.mxu0 0.0
        %6087 = vmatpush1.xpose.msra.mxu0 %v6032
        %6088 = vmatprep.subr.mxu0 0.0
        %6089 = vmatpush1.xpose.msra.mxu0 %v6030
        %6090 = vmatprep.subr.mxu0 0.0
        %6091 = vmatpush1.xpose.msra.mxu0 %v6028
        %6092 = vmatprep.subr.mxu0 0.0
        %6093 = vmatpush2.xpose.msra.mxu0 0.0
        %6094 = vmatprep.subr.mxu0 0.0
        %6095 = vmatpush2.xpose.msra.mxu0 0.0
        %6096 = vmatprep.subr.mxu0 0.0
        %6097 = vmatpush2.xpose.msra.mxu0 0.0
        %6098 = vmatprep.subr.mxu0 0.0
        %6099 = vmatpush2.xpose.msra.mxu0 0.0
        %6100 = vmatprep.subr.mxu0 0.0
        %6101 = vmatpush2.xpose.msra.mxu0 0.0
        %6102 = vmatprep.subr.mxu0 0.0
        %6103 = vmatpush2.xpose.msra.mxu0 0.0
        %6104 = vmatprep.subr.mxu0 0.0
        %6105 = vmatpush2.xpose.msra.mxu0 0.0
        %6106 = vmatprep.subr.mxu0 0.0
        %6107 = vmatpush2.xpose.msra.mxu0 0.0
        %6108 = vmatprep.subr.mxu0 0.0
        %6109 = vmatpush2.xpose.msra.mxu0 0.0
        %6110 = vmatprep.subr.mxu0 0.0
        %6111 = vmatpush2.xpose.msra.mxu0 0.0
        %6112 = vmatprep.subr.mxu0 0.0
        %6113 = vmatpush2.xpose.msra.mxu0 0.0
        %6114 = vmatprep.subr.mxu0 0.0
        %6115 = vmatpush2.xpose.msra.mxu0 0.0
        %6116 = vmatprep.subr.mxu0 0.0
        %6117 = vmatpush2.xpose.msra.mxu0 0.0
        %6118 = vmatprep.subr.mxu0 0.0
        %6119 = vmatpush2.xpose.msra.mxu0 0.0
        %6120 = vmatprep.subr.mxu0 0.0
        %6121 = vmatpush2.xpose.msra.mxu0 0.0
        %6122 = vmatprep.subr.mxu0 0.0
        %6123 = vmatpush2.xpose.msra.mxu0 0.0
        %6124 = vmatprep.mubr.f32.mxu0 0.0
        %6125 = vmatmul.mubr.f32.gmra.mxu0 %v5996
        %v6126 = vpop.f32.mrf.mxu0
        %v6127 = vadd.f32 %v334, %v6126
        %v6128 = vpop.f32.mrf.mxu0
        %6129 = vmatprep.mubr.f32.mxu0 0.0
        %6130 = vmatmul.mubr.f32.gmra.mxu0 %v5998
        %v6131 = vpop.f32.mrf.mxu0
        %v6132 = vadd.f32 %v335, %v6131
        %v6133 = vpop.f32.mrf.mxu0
        %6134 = vmatprep.mubr.f32.mxu0 0.0
        %6135 = vmatmul.mubr.f32.gmra.mxu0 %v6000
        %v6136 = vpop.f32.mrf.mxu0
        %v6137 = vadd.f32 %v336, %v6136
        %v6138 = vpop.f32.mrf.mxu0
        %6139 = vmatprep.mubr.f32.mxu0 0.0
        %6140 = vmatmul.mubr.f32.gmra.mxu0 %v6002
        %v6141 = vpop.f32.mrf.mxu0
        %v6142 = vadd.f32 %v337, %v6141
        %v6143 = vpop.f32.mrf.mxu0
        %6144 = vmatprep.mubr.f32.mxu0 0.0
        %6145 = vmatmul.mubr.f32.gmra.mxu0 %v6004
        %v6146 = vpop.f32.mrf.mxu0
        %v6147 = vadd.f32 %v338, %v6146
        %v6148 = vpop.f32.mrf.mxu0
        %6149 = vmatprep.mubr.f32.mxu0 0.0
        %6150 = vmatmul.mubr.f32.gmra.mxu0 %v6006
        %v6151 = vpop.f32.mrf.mxu0
        %v6152 = vadd.f32 %v339, %v6151
        %v6153 = vpop.f32.mrf.mxu0
        %6154 = vmatprep.mubr.f32.mxu0 0.0
        %6155 = vmatmul.mubr.f32.gmra.mxu0 %v6008
        %v6156 = vpop.f32.mrf.mxu0
        %v6157 = vadd.f32 %v340, %v6156
        %v6158 = vpop.f32.mrf.mxu0
        %6159 = vmatprep.mubr.f32.mxu0 0.0
        %6160 = vmatmul.mubr.f32.gmra.mxu0 %v6010
        %v6161 = vpop.f32.mrf.mxu0
        %v6162 = vadd.f32 %v341, %v6161
        %v6163 = vpop.f32.mrf.mxu0
        %6164 = vmatprep.mubr.f32.mxu0 0.0
        %6165 = vmatmul.mubr.f32.gmra.mxu0 %v6012
        %v6166 = vpop.f32.mrf.mxu0
        %v6167 = vadd.f32 %v342, %v6166
        %v6168 = vpop.f32.mrf.mxu0
        %6169 = vmatprep.mubr.f32.mxu0 0.0
        %6170 = vmatmul.mubr.f32.gmra.mxu0 %v6014
        %v6171 = vpop.f32.mrf.mxu0
        %v6172 = vadd.f32 %v343, %v6171
        %v6173 = vpop.f32.mrf.mxu0
        %6174 = vmatprep.mubr.f32.mxu0 0.0
        %6175 = vmatmul.mubr.f32.gmra.mxu0 %v6016
        %v6176 = vpop.f32.mrf.mxu0
        %v6177 = vadd.f32 %v344, %v6176
        %v6178 = vpop.f32.mrf.mxu0
        %6179 = vmatprep.mubr.f32.mxu0 0.0
        %6180 = vmatmul.mubr.f32.gmra.mxu0 %v6018
        %v6181 = vpop.f32.mrf.mxu0
        %v6182 = vadd.f32 %v345, %v6181
        %v6183 = vpop.f32.mrf.mxu0
        %6184 = vmatprep.mubr.f32.mxu0 0.0
        %6185 = vmatmul.mubr.f32.gmra.mxu0 %v6020
        %v6186 = vpop.f32.mrf.mxu0
        %v6187 = vadd.f32 %v346, %v6186
        %v6188 = vpop.f32.mrf.mxu0
        %6189 = vmatprep.mubr.f32.mxu0 0.0
        %6190 = vmatmul.mubr.f32.gmra.mxu0 %v6022
        %v6191 = vpop.f32.mrf.mxu0
        %v6192 = vadd.f32 %v347, %v6191
        %v6193 = vpop.f32.mrf.mxu0
        %6194 = vmatprep.mubr.f32.mxu0 0.0
        %6195 = vmatmul.mubr.f32.gmra.mxu0 %v6024
        %v6196 = vpop.f32.mrf.mxu0
        %v6197 = vadd.f32 %v348, %v6196
        %v6198 = vpop.f32.mrf.mxu0
        %6199 = vmatprep.mubr.f32.mxu0 0.0
        %6200 = vmatmul.mubr.f32.gmra.mxu0 %v6026
        %v6201 = vpop.f32.mrf.mxu0
        %v6202 = vadd.f32 %v349, %v6201
        %v6203 = vpop.f32.mrf.mxu0
        %6204 = vdwg.mxu0
        %6205 = vmax.xlane.f32.xlu0 %v6127
        %v6206 = vpop.xlane.xlu0 %6205
        %6207 = vmax.xlane.f32.xlu0 %v6132
        %v6208 = vpop.xlane.xlu0 %6207
        %6209 = vmax.xlane.f32.xlu0 %v6137
        %v6210 = vpop.xlane.xlu0 %6209
        %6211 = vmax.xlane.f32.xlu0 %v6142
        %v6212 = vpop.xlane.xlu0 %6211
        %6213 = vmax.xlane.f32.xlu0 %v6147
        %v6214 = vpop.xlane.xlu0 %6213
        %6215 = vmax.xlane.f32.xlu0 %v6152
        %v6216 = vpop.xlane.xlu0 %6215
        %6217 = vmax.xlane.f32.xlu0 %v6157
        %v6218 = vpop.xlane.xlu0 %6217
        %6219 = vmax.xlane.f32.xlu0 %v6162
        %v6220 = vpop.xlane.xlu0 %6219
        %6221 = vmax.xlane.f32.xlu0 %v6167
        %v6222 = vpop.xlane.xlu0 %6221
        %6223 = vmax.xlane.f32.xlu0 %v6172
        %v6224 = vpop.xlane.xlu0 %6223
        %6225 = vmax.xlane.f32.xlu0 %v6177
        %v6226 = vpop.xlane.xlu0 %6225
        %6227 = vmax.xlane.f32.xlu0 %v6182
        %v6228 = vpop.xlane.xlu0 %6227
        %6229 = vmax.xlane.f32.xlu0 %v6187
        %v6230 = vpop.xlane.xlu0 %6229
        %6231 = vmax.xlane.f32.xlu0 %v6192
        %v6232 = vpop.xlane.xlu0 %6231
        %6233 = vmax.xlane.f32.xlu0 %v6197
        %v6234 = vpop.xlane.xlu0 %6233
        %6235 = vmax.xlane.f32.xlu0 %v6202
        %v6236 = vpop.xlane.xlu0 %6235
        %v6237 = vsub.f32 %v6127, %v6206
        %v6238 = vsub.f32 %v6132, %v6208
        %v6239 = vsub.f32 %v6137, %v6210
        %v6240 = vsub.f32 %v6142, %v6212
        %v6241 = vsub.f32 %v6147, %v6214
        %v6242 = vsub.f32 %v6152, %v6216
        %v6243 = vsub.f32 %v6157, %v6218
        %v6244 = vsub.f32 %v6162, %v6220
        %v6245 = vsub.f32 %v6167, %v6222
        %v6246 = vsub.f32 %v6172, %v6224
        %v6247 = vsub.f32 %v6177, %v6226
        %v6248 = vsub.f32 %v6182, %v6228
        %v6249 = vsub.f32 %v6187, %v6230
        %v6250 = vsub.f32 %v6192, %v6232
        %v6251 = vsub.f32 %v6197, %v6234
        %v6252 = vsub.f32 %v6202, %v6236
        %v6253 = vmul.f32 %v6237, 1.442695
        %v6254 = vpow.pop %v6253
        %v6255 = vmul.f32 %v6238, 1.442695
        %v6256 = vpow.pop %v6255
        %v6257 = vmul.f32 %v6239, 1.442695
        %v6258 = vpow.pop %v6257
        %v6259 = vmul.f32 %v6240, 1.442695
        %v6260 = vpow.pop %v6259
        %v6261 = vmul.f32 %v6241, 1.442695
        %v6262 = vpow.pop %v6261
        %v6263 = vmul.f32 %v6242, 1.442695
        %v6264 = vpow.pop %v6263
        %v6265 = vmul.f32 %v6243, 1.442695
        %v6266 = vpow.pop %v6265
        %v6267 = vmul.f32 %v6244, 1.442695
        %v6268 = vpow.pop %v6267
        %v6269 = vmul.f32 %v6245, 1.442695
        %v6270 = vpow.pop %v6269
        %v6271 = vmul.f32 %v6246, 1.442695
        %v6272 = vpow.pop %v6271
        %v6273 = vmul.f32 %v6247, 1.442695
        %v6274 = vpow.pop %v6273
        %v6275 = vmul.f32 %v6248, 1.442695
        %v6276 = vpow.pop %v6275
        %v6277 = vmul.f32 %v6249, 1.442695
        %v6278 = vpow.pop %v6277
        %v6279 = vmul.f32 %v6250, 1.442695
        %v6280 = vpow.pop %v6279
        %v6281 = vmul.f32 %v6251, 1.442695
        %v6282 = vpow.pop %v6281
        %v6283 = vmul.f32 %v6252, 1.442695
        %v6284 = vpow.pop %v6283
        %6285 = vadd.xlane.f32.xlu0 %v6254
        %v6286 = vpop.xlane.xlu0 %6285
        %6287 = vadd.xlane.f32.xlu0 %v6256
        %v6288 = vpop.xlane.xlu0 %6287
        %6289 = vadd.xlane.f32.xlu0 %v6258
        %v6290 = vpop.xlane.xlu0 %6289
        %6291 = vadd.xlane.f32.xlu0 %v6260
        %v6292 = vpop.xlane.xlu0 %6291
        %6293 = vadd.xlane.f32.xlu0 %v6262
        %v6294 = vpop.xlane.xlu0 %6293
        %6295 = vadd.xlane.f32.xlu0 %v6264
        %v6296 = vpop.xlane.xlu0 %6295
        %6297 = vadd.xlane.f32.xlu0 %v6266
        %v6298 = vpop.xlane.xlu0 %6297
        %6299 = vadd.xlane.f32.xlu0 %v6268
        %v6300 = vpop.xlane.xlu0 %6299
        %6301 = vadd.xlane.f32.xlu0 %v6270
        %v6302 = vpop.xlane.xlu0 %6301
        %6303 = vadd.xlane.f32.xlu0 %v6272
        %v6304 = vpop.xlane.xlu0 %6303
        %6305 = vadd.xlane.f32.xlu0 %v6274
        %v6306 = vpop.xlane.xlu0 %6305
        %6307 = vadd.xlane.f32.xlu0 %v6276
        %v6308 = vpop.xlane.xlu0 %6307
        %6309 = vadd.xlane.f32.xlu0 %v6278
        %v6310 = vpop.xlane.xlu0 %6309
        %6311 = vadd.xlane.f32.xlu0 %v6280
        %v6312 = vpop.xlane.xlu0 %6311
        %6313 = vadd.xlane.f32.xlu0 %v6282
        %v6314 = vpop.xlane.xlu0 %6313
        %6315 = vadd.xlane.f32.xlu0 %v6284
        %v6316 = vpop.xlane.xlu0 %6315
        %v6317 = vrcp.pop %v6286
        %v6318 = vrcp.pop %v6288
        %v6319 = vrcp.pop %v6290
        %v6320 = vrcp.pop %v6292
        %v6321 = vrcp.pop %v6294
        %v6322 = vrcp.pop %v6296
        %v6323 = vrcp.pop %v6298
        %v6324 = vrcp.pop %v6300
        %v6325 = vrcp.pop %v6302
        %v6326 = vrcp.pop %v6304
        %v6327 = vrcp.pop %v6306
        %v6328 = vrcp.pop %v6308
        %v6329 = vrcp.pop %v6310
        %v6330 = vrcp.pop %v6312
        %v6331 = vrcp.pop %v6314
        %v6332 = vrcp.pop %v6316
        %v6333 = vmul.f32 %v6254, %v6317
        %v6334 = vmul.f32 %v6256, %v6318
        %v6335 = vmul.f32 %v6258, %v6319
        %v6336 = vmul.f32 %v6260, %v6320
        %v6337 = vmul.f32 %v6262, %v6321
        %v6338 = vmul.f32 %v6264, %v6322
        %v6339 = vmul.f32 %v6266, %v6323
        %v6340 = vmul.f32 %v6268, %v6324
        %v6341 = vmul.f32 %v6270, %v6325
        %v6342 = vmul.f32 %v6272, %v6326
        %v6343 = vmul.f32 %v6274, %v6327
        %v6344 = vmul.f32 %v6276, %v6328
        %v6345 = vmul.f32 %v6278, %v6329
        %v6346 = vmul.f32 %v6280, %v6330
        %v6347 = vmul.f32 %v6282, %v6331
        %v6348 = vmul.f32 %v6284, %v6332
        %6349 = vrot.lane.b32.xlu0 %v5260, 88
        %v6350 = vpop.permute.xlu0 %6349
        %6351 = vrot.lane.b32.xlu0 %v5265, 88
        %v6352 = vpop.permute.xlu0 %6351
        %6353 = vrot.lane.b32.xlu0 %v5270, 88
        %v6354 = vpop.permute.xlu0 %6353
        %6355 = vrot.lane.b32.xlu0 %v5275, 88
        %v6356 = vpop.permute.xlu0 %6355
        %6357 = vrot.lane.b32.xlu0 %v5280, 88
        %v6358 = vpop.permute.xlu0 %6357
        %6359 = vrot.lane.b32.xlu0 %v5285, 88
        %v6360 = vpop.permute.xlu0 %6359
        %6361 = vrot.lane.b32.xlu0 %v5290, 88
        %v6362 = vpop.permute.xlu0 %6361
        %6363 = vrot.lane.b32.xlu0 %v5295, 88
        %v6364 = vpop.permute.xlu0 %6363
        %6365 = vrot.lane.b32.xlu0 %v5300, 88
        %v6366 = vpop.permute.xlu0 %6365
        %6367 = vrot.lane.b32.xlu0 %v5305, 88
        %v6368 = vpop.permute.xlu0 %6367
        %6369 = vrot.lane.b32.xlu0 %v5310, 88
        %v6370 = vpop.permute.xlu0 %6369
        %6371 = vrot.lane.b32.xlu0 %v5315, 88
        %v6372 = vpop.permute.xlu0 %6371
        %6373 = vrot.lane.b32.xlu0 %v5320, 88
        %v6374 = vpop.permute.xlu0 %6373
        %6375 = vrot.lane.b32.xlu0 %v5325, 88
        %v6376 = vpop.permute.xlu0 %6375
        %6377 = vrot.lane.b32.xlu0 %v5330, 88
        %v6378 = vpop.permute.xlu0 %6377
        %6379 = vrot.lane.b32.xlu0 %v5335, 88
        %v6380 = vpop.permute.xlu0 %6379
        %6397 = vmatprep.subr.mxu0 0.0
        %6398 = vmatpush1.msra.mxu0 %v6380
        %6399 = vmatprep.subr.mxu0 0.0
        %6400 = vmatpush1.msra.mxu0 %v6378
        %6401 = vmatprep.subr.mxu0 0.0
        %6402 = vmatpush1.msra.mxu0 %v6376
        %6403 = vmatprep.subr.mxu0 0.0
        %6404 = vmatpush1.msra.mxu0 %v6374
        %6405 = vmatprep.subr.mxu0 0.0
        %6406 = vmatpush1.msra.mxu0 %v6372
        %6407 = vmatprep.subr.mxu0 0.0
        %6408 = vmatpush1.msra.mxu0 %v6370
        %6409 = vmatprep.subr.mxu0 0.0
        %6410 = vmatpush1.msra.mxu0 %v6368
        %6411 = vmatprep.subr.mxu0 0.0
        %6412 = vmatpush1.msra.mxu0 %v6366
        %6413 = vmatprep.subr.mxu0 0.0
        %6414 = vmatpush1.msra.mxu0 %v6364
        %6415 = vmatprep.subr.mxu0 0.0
        %6416 = vmatpush1.msra.mxu0 %v6362
        %6417 = vmatprep.subr.mxu0 0.0
        %6418 = vmatpush1.msra.mxu0 %v6360
        %6419 = vmatprep.subr.mxu0 0.0
        %6420 = vmatpush1.msra.mxu0 %v6358
        %6421 = vmatprep.subr.mxu0 0.0
        %6422 = vmatpush1.msra.mxu0 %v6356
        %6423 = vmatprep.subr.mxu0 0.0
        %6424 = vmatpush1.msra.mxu0 %v6354
        %6425 = vmatprep.subr.mxu0 0.0
        %6426 = vmatpush1.msra.mxu0 %v6352
        %6427 = vmatprep.subr.mxu0 0.0
        %6428 = vmatpush1.msra.mxu0 %v6350
        %6429 = vmatprep.subr.mxu0 0.0
        %6430 = vmatpush2.msra.mxu0 0.0
        %6431 = vmatprep.subr.mxu0 0.0
        %6432 = vmatpush2.msra.mxu0 0.0
        %6433 = vmatprep.subr.mxu0 0.0
        %6434 = vmatpush2.msra.mxu0 0.0
        %6435 = vmatprep.subr.mxu0 0.0
        %6436 = vmatpush2.msra.mxu0 0.0
        %6437 = vmatprep.subr.mxu0 0.0
        %6438 = vmatpush2.msra.mxu0 0.0
        %6439 = vmatprep.subr.mxu0 0.0
        %6440 = vmatpush2.msra.mxu0 0.0
        %6441 = vmatprep.subr.mxu0 0.0
        %6442 = vmatpush2.msra.mxu0 0.0
        %6443 = vmatprep.subr.mxu0 0.0
        %6444 = vmatpush2.msra.mxu0 0.0
        %6445 = vmatprep.subr.mxu0 0.0
        %6446 = vmatpush2.msra.mxu0 0.0
        %6447 = vmatprep.subr.mxu0 0.0
        %6448 = vmatpush2.msra.mxu0 0.0
        %6449 = vmatprep.subr.mxu0 0.0
        %6450 = vmatpush2.msra.mxu0 0.0
        %6451 = vmatprep.subr.mxu0 0.0
        %6452 = vmatpush2.msra.mxu0 0.0
        %6453 = vmatprep.subr.mxu0 0.0
        %6454 = vmatpush2.msra.mxu0 0.0
        %6455 = vmatprep.subr.mxu0 0.0
        %6456 = vmatpush2.msra.mxu0 0.0
        %6457 = vmatprep.subr.mxu0 0.0
        %6458 = vmatpush2.msra.mxu0 0.0
        %6459 = vmatprep.subr.mxu0 0.0
        %6460 = vmatpush2.msra.mxu0 0.0
        %6461 = vmatprep.mubr.f32.mxu0 0.0
        %6462 = vmatmul.mubr.f32.gmra.mxu0 %v6333
        %v6463 = vpop.f32.mrf.mxu0
        %v6464 = vadd.f32 0.0, %v6463
        %v6465 = vpop.f32.mrf.mxu0
        %6466 = vmatprep.mubr.f32.mxu0 0.0
        %6467 = vmatmul.mubr.f32.gmra.mxu0 %v6334
        %v6468 = vpop.f32.mrf.mxu0
        %v6469 = vadd.f32 0.0, %v6468
        %v6470 = vpop.f32.mrf.mxu0
        %6471 = vmatprep.mubr.f32.mxu0 0.0
        %6472 = vmatmul.mubr.f32.gmra.mxu0 %v6335
        %v6473 = vpop.f32.mrf.mxu0
        %v6474 = vadd.f32 0.0, %v6473
        %v6475 = vpop.f32.mrf.mxu0
        %6476 = vmatprep.mubr.f32.mxu0 0.0
        %6477 = vmatmul.mubr.f32.gmra.mxu0 %v6336
        %v6478 = vpop.f32.mrf.mxu0
        %v6479 = vadd.f32 0.0, %v6478
        %v6480 = vpop.f32.mrf.mxu0
        %6481 = vmatprep.mubr.f32.mxu0 0.0
        %6482 = vmatmul.mubr.f32.gmra.mxu0 %v6337
        %v6483 = vpop.f32.mrf.mxu0
        %v6484 = vadd.f32 0.0, %v6483
        %v6485 = vpop.f32.mrf.mxu0
        %6486 = vmatprep.mubr.f32.mxu0 0.0
        %6487 = vmatmul.mubr.f32.gmra.mxu0 %v6338
        %v6488 = vpop.f32.mrf.mxu0
        %v6489 = vadd.f32 0.0, %v6488
        %v6490 = vpop.f32.mrf.mxu0
        %6491 = vmatprep.mubr.f32.mxu0 0.0
        %6492 = vmatmul.mubr.f32.gmra.mxu0 %v6339
        %v6493 = vpop.f32.mrf.mxu0
        %v6494 = vadd.f32 0.0, %v6493
        %v6495 = vpop.f32.mrf.mxu0
        %6496 = vmatprep.mubr.f32.mxu0 0.0
        %6497 = vmatmul.mubr.f32.gmra.mxu0 %v6340
        %v6498 = vpop.f32.mrf.mxu0
        %v6499 = vadd.f32 0.0, %v6498
        %v6500 = vpop.f32.mrf.mxu0
        %6501 = vmatprep.mubr.f32.mxu0 0.0
        %6502 = vmatmul.mubr.f32.gmra.mxu0 %v6341
        %v6503 = vpop.f32.mrf.mxu0
        %v6504 = vadd.f32 0.0, %v6503
        %v6505 = vpop.f32.mrf.mxu0
        %6506 = vmatprep.mubr.f32.mxu0 0.0
        %6507 = vmatmul.mubr.f32.gmra.mxu0 %v6342
        %v6508 = vpop.f32.mrf.mxu0
        %v6509 = vadd.f32 0.0, %v6508
        %v6510 = vpop.f32.mrf.mxu0
        %6511 = vmatprep.mubr.f32.mxu0 0.0
        %6512 = vmatmul.mubr.f32.gmra.mxu0 %v6343
        %v6513 = vpop.f32.mrf.mxu0
        %v6514 = vadd.f32 0.0, %v6513
        %v6515 = vpop.f32.mrf.mxu0
        %6516 = vmatprep.mubr.f32.mxu0 0.0
        %6517 = vmatmul.mubr.f32.gmra.mxu0 %v6344
        %v6518 = vpop.f32.mrf.mxu0
        %v6519 = vadd.f32 0.0, %v6518
        %v6520 = vpop.f32.mrf.mxu0
        %6521 = vmatprep.mubr.f32.mxu0 0.0
        %6522 = vmatmul.mubr.f32.gmra.mxu0 %v6345
        %v6523 = vpop.f32.mrf.mxu0
        %v6524 = vadd.f32 0.0, %v6523
        %v6525 = vpop.f32.mrf.mxu0
        %6526 = vmatprep.mubr.f32.mxu0 0.0
        %6527 = vmatmul.mubr.f32.gmra.mxu0 %v6346
        %v6528 = vpop.f32.mrf.mxu0
        %v6529 = vadd.f32 0.0, %v6528
        %v6530 = vpop.f32.mrf.mxu0
        %6531 = vmatprep.mubr.f32.mxu0 0.0
        %6532 = vmatmul.mubr.f32.gmra.mxu0 %v6347
        %v6533 = vpop.f32.mrf.mxu0
        %v6534 = vadd.f32 0.0, %v6533
        %v6535 = vpop.f32.mrf.mxu0
        %6536 = vmatprep.mubr.f32.mxu0 0.0
        %6537 = vmatmul.mubr.f32.gmra.mxu0 %v6348
        %v6538 = vpop.f32.mrf.mxu0
        %v6539 = vadd.f32 0.0, %v6538
        %v6540 = vpop.f32.mrf.mxu0
        %6541 = vdwg.mxu0
        %6558 = vrot.lane.b32.xlu0 %v6464, 8
        %v6559 = vpop.permute.xlu0 %6558
        %6560 = vrot.lane.b32.xlu0 %v6469, 8
        %v6561 = vpop.permute.xlu0 %6560
        %6562 = vrot.lane.b32.xlu0 %v6474, 8
        %v6563 = vpop.permute.xlu0 %6562
        %6564 = vrot.lane.b32.xlu0 %v6479, 8
        %v6565 = vpop.permute.xlu0 %6564
        %6566 = vrot.lane.b32.xlu0 %v6484, 8
        %v6567 = vpop.permute.xlu0 %6566
        %6568 = vrot.lane.b32.xlu0 %v6489, 8
        %v6569 = vpop.permute.xlu0 %6568
        %6570 = vrot.lane.b32.xlu0 %v6494, 8
        %v6571 = vpop.permute.xlu0 %6570
        %6572 = vrot.lane.b32.xlu0 %v6499, 8
        %v6573 = vpop.permute.xlu0 %6572
        %6574 = vrot.lane.b32.xlu0 %v6504, 8
        %v6575 = vpop.permute.xlu0 %6574
        %6576 = vrot.lane.b32.xlu0 %v6509, 8
        %v6577 = vpop.permute.xlu0 %6576
        %6578 = vrot.lane.b32.xlu0 %v6514, 8
        %v6579 = vpop.permute.xlu0 %6578
        %6580 = vrot.lane.b32.xlu0 %v6519, 8
        %v6581 = vpop.permute.xlu0 %6580
        %6582 = vrot.lane.b32.xlu0 %v6524, 8
        %v6583 = vpop.permute.xlu0 %6582
        %6584 = vrot.lane.b32.xlu0 %v6529, 8
        %v6585 = vpop.permute.xlu0 %6584
        %6586 = vrot.lane.b32.xlu0 %v6534, 8
        %v6587 = vpop.permute.xlu0 %6586
        %6588 = vrot.lane.b32.xlu0 %v6539, 8
        %v6589 = vpop.permute.xlu0 %6588
        %v6606 = vsel %vm1050, %v5854, %v6559
        %v6607 = vsel %vm1050, %v5859, %v6561
        %v6608 = vsel %vm1050, %v5864, %v6563
        %v6609 = vsel %vm1050, %v5869, %v6565
        %v6610 = vsel %vm1050, %v5874, %v6567
        %v6611 = vsel %vm1050, %v5879, %v6569
        %v6612 = vsel %vm1050, %v5884, %v6571
        %v6613 = vsel %vm1050, %v5889, %v6573
        %v6614 = vsel %vm1050, %v5894, %v6575
        %v6615 = vsel %vm1050, %v5899, %v6577
        %v6616 = vsel %vm1050, %v5904, %v6579
        %v6617 = vsel %vm1050, %v5909, %v6581
        %v6618 = vsel %vm1050, %v5914, %v6583
        %v6619 = vsel %vm1050, %v5919, %v6585
        %v6620 = vsel %vm1050, %v5924, %v6587
        %v6621 = vsel %vm1050, %v5929, %v6589
        %v6622 = vld [vmem:[%s7] sm:$0xff]
        %v6623 = vld [vmem:[%s7 + $0x8] sm:$0xff]
        %v6624 = vld [vmem:[%s8] sm:$0x1]
        %v6626 = vlaneseq
        %v6627 = vshrl.u32 %v6626, 7
        %v6628 = vsub.s32 0, %v6627
        %v6629 = vrot.slane %v6624, %v6628
        %v6632 = vsel %vm375, %v6606, 0
        %v6635 = vsel %vm375, %v6607, 0
        %v6638 = vsel %vm375, %v6608, 0
        %v6641 = vsel %vm375, %v6609, 0
        %v6644 = vsel %vm375, %v6610, 0
        %v6647 = vsel %vm375, %v6611, 0
        %v6650 = vsel %vm375, %v6612, 0
        %v6653 = vsel %vm375, %v6613, 0
        %v6656 = vsel %vm375, %v6614, 0
        %v6659 = vsel %vm375, %v6615, 0
        %v6662 = vsel %vm375, %v6616, 0
        %v6665 = vsel %vm375, %v6617, 0
        %v6668 = vsel %vm375, %v6618, 0
        %v6671 = vsel %vm375, %v6619, 0
        %v6674 = vsel %vm375, %v6620, 0
        %v6677 = vsel %vm375, %v6621, 0
        %6679 = vmatprep.subr.mxu0 0.0
        %6680 = vmatpush1.msra.mxu0 0.0
        %6681 = vmatprep.subr.mxu0 0.0
        %6682 = vmatpush1.msra.mxu0 0.0
        %6683 = vmatprep.subr.mxu0 0.0
        %6684 = vmatpush1.msra.mxu0 0.0
        %6685 = vmatprep.subr.mxu0 0.0
        %6686 = vmatpush1.msra.mxu0 0.0
        %6687 = vmatprep.subr.mxu0 0.0
        %6688 = vmatpush1.msra.mxu0 0.0
        %6689 = vmatprep.subr.mxu0 0.0
        %6690 = vmatpush1.msra.mxu0 0.0
        %6691 = vmatprep.subr.mxu0 0.0
        %6692 = vmatpush1.msra.mxu0 0.0
        %6693 = vmatprep.subr.mxu0 0.0
        %6694 = vmatpush1.msra.mxu0 0.0
        %6695 = vmatprep.subr.mxu0 0.0
        %6696 = vmatpush1.msra.mxu0 0.0
        %6697 = vmatprep.subr.mxu0 0.0
        %6698 = vmatpush1.msra.mxu0 0.0
        %6699 = vmatprep.subr.mxu0 0.0
        %6700 = vmatpush1.msra.mxu0 0.0
        %6701 = vmatprep.subr.mxu0 0.0
        %6702 = vmatpush1.msra.mxu0 0.0
        %6703 = vmatprep.subr.mxu0 0.0
        %6704 = vmatpush1.msra.mxu0 0.0
        %6705 = vmatprep.subr.mxu0 0.0
        %6706 = vmatpush1.msra.mxu0 0.0
        %6707 = vmatprep.subr.mxu0 0.0
        %6708 = vmatpush1.msra.mxu0 %v6623
        %6709 = vmatprep.subr.mxu0 0.0
        %6710 = vmatpush1.msra.mxu0 %v6622
        %6711 = vmatprep.subr.mxu0 0.0
        %6712 = vmatpush2.msra.mxu0 0.0
        %6713 = vmatprep.subr.mxu0 0.0
        %6714 = vmatpush2.msra.mxu0 0.0
        %6715 = vmatprep.subr.mxu0 0.0
        %6716 = vmatpush2.msra.mxu0 0.0
        %6717 = vmatprep.subr.mxu0 0.0
        %6718 = vmatpush2.msra.mxu0 0.0
        %6719 = vmatprep.subr.mxu0 0.0
        %6720 = vmatpush2.msra.mxu0 0.0
        %6721 = vmatprep.subr.mxu0 0.0
        %6722 = vmatpush2.msra.mxu0 0.0
        %6723 = vmatprep.subr.mxu0 0.0
        %6724 = vmatpush2.msra.mxu0 0.0
        %6725 = vmatprep.subr.mxu0 0.0
        %6726 = vmatpush2.msra.mxu0 0.0
        %6727 = vmatprep.subr.mxu0 0.0
        %6728 = vmatpush2.msra.mxu0 0.0
        %6729 = vmatprep.subr.mxu0 0.0
        %6730 = vmatpush2.msra.mxu0 0.0
        %6731 = vmatprep.subr.mxu0 0.0
        %6732 = vmatpush2.msra.mxu0 0.0
        %6733 = vmatprep.subr.mxu0 0.0
        %6734 = vmatpush2.msra.mxu0 0.0
        %6735 = vmatprep.subr.mxu0 0.0
        %6736 = vmatpush2.msra.mxu0 0.0
        %6737 = vmatprep.subr.mxu0 0.0
        %6738 = vmatpush2.msra.mxu0 0.0
        %6739 = vmatprep.subr.mxu0 0.0
        %6740 = vmatpush2.msra.mxu0 0.0
        %6741 = vmatprep.subr.mxu0 0.0
        %6742 = vmatpush2.msra.mxu0 0.0
        %6743 = vmatprep.mubr.f32.mxu0 0.0
        %6744 = vmatmul.mubr.f32.gmra.mxu0 %v6632
        %v6745 = vpop.f32.mrf.mxu0
        %v6746 = vadd.f32 %v6629, %v6745
        %v6747 = vpop.f32.mrf.mxu0
        %6748 = vmatprep.mubr.f32.mxu0 0.0
        %6749 = vmatmul.mubr.f32.gmra.mxu0 %v6635
        %v6750 = vpop.f32.mrf.mxu0
        %v6751 = vadd.f32 %v6629, %v6750
        %v6752 = vpop.f32.mrf.mxu0
        %6753 = vmatprep.mubr.f32.mxu0 0.0
        %6754 = vmatmul.mubr.f32.gmra.mxu0 %v6638
        %v6755 = vpop.f32.mrf.mxu0
        %v6756 = vadd.f32 %v6629, %v6755
        %v6757 = vpop.f32.mrf.mxu0
        %6758 = vmatprep.mubr.f32.mxu0 0.0
        %6759 = vmatmul.mubr.f32.gmra.mxu0 %v6641
        %v6760 = vpop.f32.mrf.mxu0
        %v6761 = vadd.f32 %v6629, %v6760
        %v6762 = vpop.f32.mrf.mxu0
        %6763 = vmatprep.mubr.f32.mxu0 0.0
        %6764 = vmatmul.mubr.f32.gmra.mxu0 %v6644
        %v6765 = vpop.f32.mrf.mxu0
        %v6766 = vadd.f32 %v6629, %v6765
        %v6767 = vpop.f32.mrf.mxu0
        %6768 = vmatprep.mubr.f32.mxu0 0.0
        %6769 = vmatmul.mubr.f32.gmra.mxu0 %v6647
        %v6770 = vpop.f32.mrf.mxu0
        %v6771 = vadd.f32 %v6629, %v6770
        %v6772 = vpop.f32.mrf.mxu0
        %6773 = vmatprep.mubr.f32.mxu0 0.0
        %6774 = vmatmul.mubr.f32.gmra.mxu0 %v6650
        %v6775 = vpop.f32.mrf.mxu0
        %v6776 = vadd.f32 %v6629, %v6775
        %v6777 = vpop.f32.mrf.mxu0
        %6778 = vmatprep.mubr.f32.mxu0 0.0
        %6779 = vmatmul.mubr.f32.gmra.mxu0 %v6653
        %v6780 = vpop.f32.mrf.mxu0
        %v6781 = vadd.f32 %v6629, %v6780
        %v6782 = vpop.f32.mrf.mxu0
        %6783 = vmatprep.mubr.f32.mxu0 0.0
        %6784 = vmatmul.mubr.f32.gmra.mxu0 %v6656
        %v6785 = vpop.f32.mrf.mxu0
        %v6786 = vadd.f32 %v6629, %v6785
        %v6787 = vpop.f32.mrf.mxu0
        %6788 = vmatprep.mubr.f32.mxu0 0.0
        %6789 = vmatmul.mubr.f32.gmra.mxu0 %v6659
        %v6790 = vpop.f32.mrf.mxu0
        %v6791 = vadd.f32 %v6629, %v6790
        %v6792 = vpop.f32.mrf.mxu0
        %6793 = vmatprep.mubr.f32.mxu0 0.0
        %6794 = vmatmul.mubr.f32.gmra.mxu0 %v6662
        %v6795 = vpop.f32.mrf.mxu0
        %v6796 = vadd.f32 %v6629, %v6795
        %v6797 = vpop.f32.mrf.mxu0
        %6798 = vmatprep.mubr.f32.mxu0 0.0
        %6799 = vmatmul.mubr.f32.gmra.mxu0 %v6665
        %v6800 = vpop.f32.mrf.mxu0
        %v6801 = vadd.f32 %v6629, %v6800
        %v6802 = vpop.f32.mrf.mxu0
        %6803 = vmatprep.mubr.f32.mxu0 0.0
        %6804 = vmatmul.mubr.f32.gmra.mxu0 %v6668
        %v6805 = vpop.f32.mrf.mxu0
        %v6806 = vadd.f32 %v6629, %v6805
        %v6807 = vpop.f32.mrf.mxu0
        %6808 = vmatprep.mubr.f32.mxu0 0.0
        %6809 = vmatmul.mubr.f32.gmra.mxu0 %v6671
        %v6810 = vpop.f32.mrf.mxu0
        %v6811 = vadd.f32 %v6629, %v6810
        %v6812 = vpop.f32.mrf.mxu0
        %6813 = vmatprep.mubr.f32.mxu0 0.0
        %6814 = vmatmul.mubr.f32.gmra.mxu0 %v6674
        %v6815 = vpop.f32.mrf.mxu0
        %v6816 = vadd.f32 %v6629, %v6815
        %v6817 = vpop.f32.mrf.mxu0
        %6818 = vmatprep.mubr.f32.mxu0 0.0
        %6819 = vmatmul.mubr.f32.gmra.mxu0 %v6677
        %v6820 = vpop.f32.mrf.mxu0
        %v6821 = vadd.f32 %v6629, %v6820
        %v6822 = vpop.f32.mrf.mxu0
        %6823 = vdwg.mxu0
        %v6824 = vadd.f32 %v6746, %v4829
        %v6825 = vadd.f32 %v6751, %v4834
        %v6826 = vadd.f32 %v6756, %v4839
        %v6827 = vadd.f32 %v6761, %v4844
        %v6828 = vadd.f32 %v6766, %v4849
        %v6829 = vadd.f32 %v6771, %v4854
        %v6830 = vadd.f32 %v6776, %v4859
        %v6831 = vadd.f32 %v6781, %v4864
        %v6832 = vadd.f32 %v6786, %v4869
        %v6833 = vadd.f32 %v6791, %v4874
        %v6834 = vadd.f32 %v6796, %v4879
        %v6835 = vadd.f32 %v6801, %v4884
        %v6836 = vadd.f32 %v6806, %v4889
        %v6837 = vadd.f32 %v6811, %v4894
        %v6838 = vadd.f32 %v6816, %v4899
        %v6839 = vadd.f32 %v6821, %v4904
        %6840 = vst.msk [vmem:[%s326 + $0x100] sm:$0xff] %vm2505, %v6824
        %6841 = vst.msk [vmem:[%s326 + $0x108] sm:$0xff] %vm2505, %v6825
        %6842 = vst.msk [vmem:[%s326 + $0x110] sm:$0xff] %vm2505, %v6826
        %6843 = vst.msk [vmem:[%s326 + $0x118] sm:$0xff] %vm2505, %v6827
        %6844 = vst.msk [vmem:[%s326 + $0x120] sm:$0xff] %vm2505, %v6828
        %6845 = vst.msk [vmem:[%s326 + $0x128] sm:$0xff] %vm2505, %v6829
        %6846 = vst.msk [vmem:[%s326 + $0x130] sm:$0xff] %vm2505, %v6830
        %6847 = vst.msk [vmem:[%s326 + $0x138] sm:$0xff] %vm2505, %v6831
        %6848 = vst.msk [vmem:[%s326 + $0x140] sm:$0xff] %vm2505, %v6832
        %6849 = vst.msk [vmem:[%s326 + $0x148] sm:$0xff] %vm2505, %v6833
        %6850 = vst.msk [vmem:[%s326 + $0x150] sm:$0xff] %vm2505, %v6834
        %6851 = vst.msk [vmem:[%s326 + $0x158] sm:$0xff] %vm2505, %v6835
        %6852 = vst.msk [vmem:[%s326 + $0x160] sm:$0xff] %vm2505, %v6836
        %6853 = vst.msk [vmem:[%s326 + $0x168] sm:$0xff] %vm2505, %v6837
        %6854 = vst.msk [vmem:[%s326 + $0x170] sm:$0xff] %vm2505, %v6838
        %6855 = vst.msk [vmem:[%s326 + $0x178] sm:$0xff] %vm2505, %v6839
        %v6856 = vld [vmem:[%s331 + $0x180] sm:$0xff]
        %v6857 = vld [vmem:[%s331 + $0x188] sm:$0xff]
        %v6858 = vld [vmem:[%s331 + $0x190] sm:$0xff]
        %v6859 = vld [vmem:[%s331 + $0x198] sm:$0xff]
        %v6860 = vld [vmem:[%s331 + $0x1a0] sm:$0xff]
        %v6861 = vld [vmem:[%s331 + $0x1a8] sm:$0xff]
        %v6862 = vld [vmem:[%s331 + $0x1b0] sm:$0xff]
        %v6863 = vld [vmem:[%s331 + $0x1b8] sm:$0xff]
        %v6864 = vld [vmem:[%s331 + $0x1c0] sm:$0xff]
        %v6865 = vld [vmem:[%s331 + $0x1c8] sm:$0xff]
        %v6866 = vld [vmem:[%s331 + $0x1d0] sm:$0xff]
        %v6867 = vld [vmem:[%s331 + $0x1d8] sm:$0xff]
        %v6868 = vld [vmem:[%s331 + $0x1e0] sm:$0xff]
        %v6869 = vld [vmem:[%s331 + $0x1e8] sm:$0xff]
        %v6870 = vld [vmem:[%s331 + $0x1f0] sm:$0xff]
        %v6871 = vld [vmem:[%s331 + $0x1f8] sm:$0xff]
        %v6872 = vld [vmem:[%s1] sm:$0xff]
        %v6873 = vld [vmem:[%s1 + $0x8] sm:$0xff]
        %v6874 = vld [vmem:[%s2] sm:$0x1]
        %v6876 = vlaneseq
        %v6877 = vshrl.u32 %v6876, 7
        %v6878 = vsub.s32 0, %v6877
        %v6879 = vrot.slane %v6874, %v6878
        %v6882 = vsel %vm375, %v6856, 0
        %v6885 = vsel %vm375, %v6857, 0
        %v6888 = vsel %vm375, %v6858, 0
        %v6891 = vsel %vm375, %v6859, 0
        %v6894 = vsel %vm375, %v6860, 0
        %v6897 = vsel %vm375, %v6861, 0
        %v6900 = vsel %vm375, %v6862, 0
        %v6903 = vsel %vm375, %v6863, 0
        %v6906 = vsel %vm375, %v6864, 0
        %v6909 = vsel %vm375, %v6865, 0
        %v6912 = vsel %vm375, %v6866, 0
        %v6915 = vsel %vm375, %v6867, 0
        %v6918 = vsel %vm375, %v6868, 0
        %v6921 = vsel %vm375, %v6869, 0
        %v6924 = vsel %vm375, %v6870, 0
        %v6927 = vsel %vm375, %v6871, 0
        %6929 = vmatprep.subr.mxu0 0.0
        %6930 = vmatpush1.msra.mxu0 0.0
        %6931 = vmatprep.subr.mxu0 0.0
        %6932 = vmatpush1.msra.mxu0 0.0
        %6933 = vmatprep.subr.mxu0 0.0
        %6934 = vmatpush1.msra.mxu0 0.0
        %6935 = vmatprep.subr.mxu0 0.0
        %6936 = vmatpush1.msra.mxu0 0.0
        %6937 = vmatprep.subr.mxu0 0.0
        %6938 = vmatpush1.msra.mxu0 0.0
        %6939 = vmatprep.subr.mxu0 0.0
        %6940 = vmatpush1.msra.mxu0 0.0
        %6941 = vmatprep.subr.mxu0 0.0
        %6942 = vmatpush1.msra.mxu0 0.0
        %6943 = vmatprep.subr.mxu0 0.0
        %6944 = vmatpush1.msra.mxu0 0.0
        %6945 = vmatprep.subr.mxu0 0.0
        %6946 = vmatpush1.msra.mxu0 0.0
        %6947 = vmatprep.subr.mxu0 0.0
        %6948 = vmatpush1.msra.mxu0 0.0
        %6949 = vmatprep.subr.mxu0 0.0
        %6950 = vmatpush1.msra.mxu0 0.0
        %6951 = vmatprep.subr.mxu0 0.0
        %6952 = vmatpush1.msra.mxu0 0.0
        %6953 = vmatprep.subr.mxu0 0.0
        %6954 = vmatpush1.msra.mxu0 0.0
        %6955 = vmatprep.subr.mxu0 0.0
        %6956 = vmatpush1.msra.mxu0 0.0
        %6957 = vmatprep.subr.mxu0 0.0
        %6958 = vmatpush1.msra.mxu0 %v6873
        %6959 = vmatprep.subr.mxu0 0.0
        %6960 = vmatpush1.msra.mxu0 %v6872
        %6961 = vmatprep.subr.mxu0 0.0
        %6962 = vmatpush2.msra.mxu0 0.0
        %6963 = vmatprep.subr.mxu0 0.0
        %6964 = vmatpush2.msra.mxu0 0.0
        %6965 = vmatprep.subr.mxu0 0.0
        %6966 = vmatpush2.msra.mxu0 0.0
        %6967 = vmatprep.subr.mxu0 0.0
        %6968 = vmatpush2.msra.mxu0 0.0
        %6969 = vmatprep.subr.mxu0 0.0
        %6970 = vmatpush2.msra.mxu0 0.0
        %6971 = vmatprep.subr.mxu0 0.0
        %6972 = vmatpush2.msra.mxu0 0.0
        %6973 = vmatprep.subr.mxu0 0.0
        %6974 = vmatpush2.msra.mxu0 0.0
        %6975 = vmatprep.subr.mxu0 0.0
        %6976 = vmatpush2.msra.mxu0 0.0
        %6977 = vmatprep.subr.mxu0 0.0
        %6978 = vmatpush2.msra.mxu0 0.0
        %6979 = vmatprep.subr.mxu0 0.0
        %6980 = vmatpush2.msra.mxu0 0.0
        %6981 = vmatprep.subr.mxu0 0.0
        %6982 = vmatpush2.msra.mxu0 0.0
        %6983 = vmatprep.subr.mxu0 0.0
        %6984 = vmatpush2.msra.mxu0 0.0
        %6985 = vmatprep.subr.mxu0 0.0
        %6986 = vmatpush2.msra.mxu0 0.0
        %6987 = vmatprep.subr.mxu0 0.0
        %6988 = vmatpush2.msra.mxu0 0.0
        %6989 = vmatprep.subr.mxu0 0.0
        %6990 = vmatpush2.msra.mxu0 0.0
        %6991 = vmatprep.subr.mxu0 0.0
        %6992 = vmatpush2.msra.mxu0 0.0
        %6993 = vmatprep.mubr.f32.mxu0 0.0
        %6994 = vmatmul.mubr.f32.gmra.mxu0 %v6882
        %v6995 = vpop.f32.mrf.mxu0
        %v6996 = vadd.f32 %v6879, %v6995
        %v6997 = vpop.f32.mrf.mxu0
        %6998 = vmatprep.mubr.f32.mxu0 0.0
        %6999 = vmatmul.mubr.f32.gmra.mxu0 %v6885
        %v7000 = vpop.f32.mrf.mxu0
        %v7001 = vadd.f32 %v6879, %v7000
        %v7002 = vpop.f32.mrf.mxu0
        %7003 = vmatprep.mubr.f32.mxu0 0.0
        %7004 = vmatmul.mubr.f32.gmra.mxu0 %v6888
        %v7005 = vpop.f32.mrf.mxu0
        %v7006 = vadd.f32 %v6879, %v7005
        %v7007 = vpop.f32.mrf.mxu0
        %7008 = vmatprep.mubr.f32.mxu0 0.0
        %7009 = vmatmul.mubr.f32.gmra.mxu0 %v6891
        %v7010 = vpop.f32.mrf.mxu0
        %v7011 = vadd.f32 %v6879, %v7010
        %v7012 = vpop.f32.mrf.mxu0
        %7013 = vmatprep.mubr.f32.mxu0 0.0
        %7014 = vmatmul.mubr.f32.gmra.mxu0 %v6894
        %v7015 = vpop.f32.mrf.mxu0
        %v7016 = vadd.f32 %v6879, %v7015
        %v7017 = vpop.f32.mrf.mxu0
        %7018 = vmatprep.mubr.f32.mxu0 0.0
        %7019 = vmatmul.mubr.f32.gmra.mxu0 %v6897
        %v7020 = vpop.f32.mrf.mxu0
        %v7021 = vadd.f32 %v6879, %v7020
        %v7022 = vpop.f32.mrf.mxu0
        %7023 = vmatprep.mubr.f32.mxu0 0.0
        %7024 = vmatmul.mubr.f32.gmra.mxu0 %v6900
        %v7025 = vpop.f32.mrf.mxu0
        %v7026 = vadd.f32 %v6879, %v7025
        %v7027 = vpop.f32.mrf.mxu0
        %7028 = vmatprep.mubr.f32.mxu0 0.0
        %7029 = vmatmul.mubr.f32.gmra.mxu0 %v6903
        %v7030 = vpop.f32.mrf.mxu0
        %v7031 = vadd.f32 %v6879, %v7030
        %v7032 = vpop.f32.mrf.mxu0
        %7033 = vmatprep.mubr.f32.mxu0 0.0
        %7034 = vmatmul.mubr.f32.gmra.mxu0 %v6906
        %v7035 = vpop.f32.mrf.mxu0
        %v7036 = vadd.f32 %v6879, %v7035
        %v7037 = vpop.f32.mrf.mxu0
        %7038 = vmatprep.mubr.f32.mxu0 0.0
        %7039 = vmatmul.mubr.f32.gmra.mxu0 %v6909
        %v7040 = vpop.f32.mrf.mxu0
        %v7041 = vadd.f32 %v6879, %v7040
        %v7042 = vpop.f32.mrf.mxu0
        %7043 = vmatprep.mubr.f32.mxu0 0.0
        %7044 = vmatmul.mubr.f32.gmra.mxu0 %v6912
        %v7045 = vpop.f32.mrf.mxu0
        %v7046 = vadd.f32 %v6879, %v7045
        %v7047 = vpop.f32.mrf.mxu0
        %7048 = vmatprep.mubr.f32.mxu0 0.0
        %7049 = vmatmul.mubr.f32.gmra.mxu0 %v6915
        %v7050 = vpop.f32.mrf.mxu0
        %v7051 = vadd.f32 %v6879, %v7050
        %v7052 = vpop.f32.mrf.mxu0
        %7053 = vmatprep.mubr.f32.mxu0 0.0
        %7054 = vmatmul.mubr.f32.gmra.mxu0 %v6918
        %v7055 = vpop.f32.mrf.mxu0
        %v7056 = vadd.f32 %v6879, %v7055
        %v7057 = vpop.f32.mrf.mxu0
        %7058 = vmatprep.mubr.f32.mxu0 0.0
        %7059 = vmatmul.mubr.f32.gmra.mxu0 %v6921
        %v7060 = vpop.f32.mrf.mxu0
        %v7061 = vadd.f32 %v6879, %v7060
        %v7062 = vpop.f32.mrf.mxu0
        %7063 = vmatprep.mubr.f32.mxu0 0.0
        %7064 = vmatmul.mubr.f32.gmra.mxu0 %v6924
        %v7065 = vpop.f32.mrf.mxu0
        %v7066 = vadd.f32 %v6879, %v7065
        %v7067 = vpop.f32.mrf.mxu0
        %7068 = vmatprep.mubr.f32.mxu0 0.0
        %7069 = vmatmul.mubr.f32.gmra.mxu0 %v6927
        %v7070 = vpop.f32.mrf.mxu0
        %v7071 = vadd.f32 %v6879, %v7070
        %v7072 = vpop.f32.mrf.mxu0
        %7073 = vdwg.mxu0
        %v7074 = vld [vmem:[%s3] sm:$0xff]
        %v7075 = vld [vmem:[%s3 + $0x8] sm:$0xff]
        %v7076 = vld [vmem:[%s4] sm:$0x1]
        %v7078 = vlaneseq
        %v7079 = vshrl.u32 %v7078, 7
        %v7080 = vsub.s32 0, %v7079
        %v7081 = vrot.slane %v7076, %v7080
        %7083 = vmatprep.subr.mxu0 0.0
        %7084 = vmatpush1.msra.mxu0 0.0
        %7085 = vmatprep.subr.mxu0 0.0
        %7086 = vmatpush1.msra.mxu0 0.0
        %7087 = vmatprep.subr.mxu0 0.0
        %7088 = vmatpush1.msra.mxu0 0.0
        %7089 = vmatprep.subr.mxu0 0.0
        %7090 = vmatpush1.msra.mxu0 0.0
        %7091 = vmatprep.subr.mxu0 0.0
        %7092 = vmatpush1.msra.mxu0 0.0
        %7093 = vmatprep.subr.mxu0 0.0
        %7094 = vmatpush1.msra.mxu0 0.0
        %7095 = vmatprep.subr.mxu0 0.0
        %7096 = vmatpush1.msra.mxu0 0.0
        %7097 = vmatprep.subr.mxu0 0.0
        %7098 = vmatpush1.msra.mxu0 0.0
        %7099 = vmatprep.subr.mxu0 0.0
        %7100 = vmatpush1.msra.mxu0 0.0
        %7101 = vmatprep.subr.mxu0 0.0
        %7102 = vmatpush1.msra.mxu0 0.0
        %7103 = vmatprep.subr.mxu0 0.0
        %7104 = vmatpush1.msra.mxu0 0.0
        %7105 = vmatprep.subr.mxu0 0.0
        %7106 = vmatpush1.msra.mxu0 0.0
        %7107 = vmatprep.subr.mxu0 0.0
        %7108 = vmatpush1.msra.mxu0 0.0
        %7109 = vmatprep.subr.mxu0 0.0
        %7110 = vmatpush1.msra.mxu0 0.0
        %7111 = vmatprep.subr.mxu0 0.0
        %7112 = vmatpush1.msra.mxu0 %v7075
        %7113 = vmatprep.subr.mxu0 0.0
        %7114 = vmatpush1.msra.mxu0 %v7074
        %7115 = vmatprep.subr.mxu0 0.0
        %7116 = vmatpush2.msra.mxu0 0.0
        %7117 = vmatprep.subr.mxu0 0.0
        %7118 = vmatpush2.msra.mxu0 0.0
        %7119 = vmatprep.subr.mxu0 0.0
        %7120 = vmatpush2.msra.mxu0 0.0
        %7121 = vmatprep.subr.mxu0 0.0
        %7122 = vmatpush2.msra.mxu0 0.0
        %7123 = vmatprep.subr.mxu0 0.0
        %7124 = vmatpush2.msra.mxu0 0.0
        %7125 = vmatprep.subr.mxu0 0.0
        %7126 = vmatpush2.msra.mxu0 0.0
        %7127 = vmatprep.subr.mxu0 0.0
        %7128 = vmatpush2.msra.mxu0 0.0
        %7129 = vmatprep.subr.mxu0 0.0
        %7130 = vmatpush2.msra.mxu0 0.0
        %7131 = vmatprep.subr.mxu0 0.0
        %7132 = vmatpush2.msra.mxu0 0.0
        %7133 = vmatprep.subr.mxu0 0.0
        %7134 = vmatpush2.msra.mxu0 0.0
        %7135 = vmatprep.subr.mxu0 0.0
        %7136 = vmatpush2.msra.mxu0 0.0
        %7137 = vmatprep.subr.mxu0 0.0
        %7138 = vmatpush2.msra.mxu0 0.0
        %7139 = vmatprep.subr.mxu0 0.0
        %7140 = vmatpush2.msra.mxu0 0.0
        %7141 = vmatprep.subr.mxu0 0.0
        %7142 = vmatpush2.msra.mxu0 0.0
        %7143 = vmatprep.subr.mxu0 0.0
        %7144 = vmatpush2.msra.mxu0 0.0
        %7145 = vmatprep.subr.mxu0 0.0
        %7146 = vmatpush2.msra.mxu0 0.0
        %7147 = vmatprep.mubr.f32.mxu0 0.0
        %7148 = vmatmul.mubr.f32.gmra.mxu0 %v6882
        %v7149 = vpop.f32.mrf.mxu0
        %v7150 = vadd.f32 %v7081, %v7149
        %v7151 = vpop.f32.mrf.mxu0
        %7152 = vmatprep.mubr.f32.mxu0 0.0
        %7153 = vmatmul.mubr.f32.gmra.mxu0 %v6885
        %v7154 = vpop.f32.mrf.mxu0
        %v7155 = vadd.f32 %v7081, %v7154
        %v7156 = vpop.f32.mrf.mxu0
        %7157 = vmatprep.mubr.f32.mxu0 0.0
        %7158 = vmatmul.mubr.f32.gmra.mxu0 %v6888
        %v7159 = vpop.f32.mrf.mxu0
        %v7160 = vadd.f32 %v7081, %v7159
        %v7161 = vpop.f32.mrf.mxu0
        %7162 = vmatprep.mubr.f32.mxu0 0.0
        %7163 = vmatmul.mubr.f32.gmra.mxu0 %v6891
        %v7164 = vpop.f32.mrf.mxu0
        %v7165 = vadd.f32 %v7081, %v7164
        %v7166 = vpop.f32.mrf.mxu0
        %7167 = vmatprep.mubr.f32.mxu0 0.0
        %7168 = vmatmul.mubr.f32.gmra.mxu0 %v6894
        %v7169 = vpop.f32.mrf.mxu0
        %v7170 = vadd.f32 %v7081, %v7169
        %v7171 = vpop.f32.mrf.mxu0
        %7172 = vmatprep.mubr.f32.mxu0 0.0
        %7173 = vmatmul.mubr.f32.gmra.mxu0 %v6897
        %v7174 = vpop.f32.mrf.mxu0
        %v7175 = vadd.f32 %v7081, %v7174
        %v7176 = vpop.f32.mrf.mxu0
        %7177 = vmatprep.mubr.f32.mxu0 0.0
        %7178 = vmatmul.mubr.f32.gmra.mxu0 %v6900
        %v7179 = vpop.f32.mrf.mxu0
        %v7180 = vadd.f32 %v7081, %v7179
        %v7181 = vpop.f32.mrf.mxu0
        %7182 = vmatprep.mubr.f32.mxu0 0.0
        %7183 = vmatmul.mubr.f32.gmra.mxu0 %v6903
        %v7184 = vpop.f32.mrf.mxu0
        %v7185 = vadd.f32 %v7081, %v7184
        %v7186 = vpop.f32.mrf.mxu0
        %7187 = vmatprep.mubr.f32.mxu0 0.0
        %7188 = vmatmul.mubr.f32.gmra.mxu0 %v6906
        %v7189 = vpop.f32.mrf.mxu0
        %v7190 = vadd.f32 %v7081, %v7189
        %v7191 = vpop.f32.mrf.mxu0
        %7192 = vmatprep.mubr.f32.mxu0 0.0
        %7193 = vmatmul.mubr.f32.gmra.mxu0 %v6909
        %v7194 = vpop.f32.mrf.mxu0
        %v7195 = vadd.f32 %v7081, %v7194
        %v7196 = vpop.f32.mrf.mxu0
        %7197 = vmatprep.mubr.f32.mxu0 0.0
        %7198 = vmatmul.mubr.f32.gmra.mxu0 %v6912
        %v7199 = vpop.f32.mrf.mxu0
        %v7200 = vadd.f32 %v7081, %v7199
        %v7201 = vpop.f32.mrf.mxu0
        %7202 = vmatprep.mubr.f32.mxu0 0.0
        %7203 = vmatmul.mubr.f32.gmra.mxu0 %v6915
        %v7204 = vpop.f32.mrf.mxu0
        %v7205 = vadd.f32 %v7081, %v7204
        %v7206 = vpop.f32.mrf.mxu0
        %7207 = vmatprep.mubr.f32.mxu0 0.0
        %7208 = vmatmul.mubr.f32.gmra.mxu0 %v6918
        %v7209 = vpop.f32.mrf.mxu0
        %v7210 = vadd.f32 %v7081, %v7209
        %v7211 = vpop.f32.mrf.mxu0
        %7212 = vmatprep.mubr.f32.mxu0 0.0
        %7213 = vmatmul.mubr.f32.gmra.mxu0 %v6921
        %v7214 = vpop.f32.mrf.mxu0
        %v7215 = vadd.f32 %v7081, %v7214
        %v7216 = vpop.f32.mrf.mxu0
        %7217 = vmatprep.mubr.f32.mxu0 0.0
        %7218 = vmatmul.mubr.f32.gmra.mxu0 %v6924
        %v7219 = vpop.f32.mrf.mxu0
        %v7220 = vadd.f32 %v7081, %v7219
        %v7221 = vpop.f32.mrf.mxu0
        %7222 = vmatprep.mubr.f32.mxu0 0.0
        %7223 = vmatmul.mubr.f32.gmra.mxu0 %v6927
        %v7224 = vpop.f32.mrf.mxu0
        %v7225 = vadd.f32 %v7081, %v7224
        %v7226 = vpop.f32.mrf.mxu0
        %7227 = vdwg.mxu0
        %v7228 = vmul.f32 %v7150, 0.5
        %v7229 = vmul.f32 %v7155, 0.5
        %v7230 = vmul.f32 %v7160, 0.5
        %v7231 = vmul.f32 %v7165, 0.5
        %v7232 = vmul.f32 %v7170, 0.5
        %v7233 = vmul.f32 %v7175, 0.5
        %v7234 = vmul.f32 %v7180, 0.5
        %v7235 = vmul.f32 %v7185, 0.5
        %v7236 = vmul.f32 %v7190, 0.5
        %v7237 = vmul.f32 %v7195, 0.5
        %v7238 = vmul.f32 %v7200, 0.5
        %v7239 = vmul.f32 %v7205, 0.5
        %v7240 = vmul.f32 %v7210, 0.5
        %v7241 = vmul.f32 %v7215, 0.5
        %v7242 = vmul.f32 %v7220, 0.5
        %v7243 = vmul.f32 %v7225, 0.5
        %v7244 = vmul.f32 %v7150, 0.70710677
        %v7245 = vmul.f32 %v7155, 0.70710677
        %v7246 = vmul.f32 %v7160, 0.70710677
        %v7247 = vmul.f32 %v7165, 0.70710677
        %v7248 = vmul.f32 %v7170, 0.70710677
        %v7249 = vmul.f32 %v7175, 0.70710677
        %v7250 = vmul.f32 %v7180, 0.70710677
        %v7251 = vmul.f32 %v7185, 0.70710677
        %v7252 = vmul.f32 %v7190, 0.70710677
        %v7253 = vmul.f32 %v7195, 0.70710677
        %v7254 = vmul.f32 %v7200, 0.70710677
        %v7255 = vmul.f32 %v7205, 0.70710677
        %v7256 = vmul.f32 %v7210, 0.70710677
        %v7257 = vmul.f32 %v7215, 0.70710677
        %v7258 = vmul.f32 %v7220, 0.70710677
        %v7259 = vmul.f32 %v7225, 0.70710677
        %v7260 = verf.f32.pop %v7244
        %v7261 = verf.f32.pop %v7245
        %v7262 = verf.f32.pop %v7246
        %v7263 = verf.f32.pop %v7247
        %v7264 = verf.f32.pop %v7248
        %v7265 = verf.f32.pop %v7249
        %v7266 = verf.f32.pop %v7250
        %v7267 = verf.f32.pop %v7251
        %v7268 = verf.f32.pop %v7252
        %v7269 = verf.f32.pop %v7253
        %v7270 = verf.f32.pop %v7254
        %v7271 = verf.f32.pop %v7255
        %v7272 = verf.f32.pop %v7256
        %v7273 = verf.f32.pop %v7257
        %v7274 = verf.f32.pop %v7258
        %v7275 = verf.f32.pop %v7259
        %v7276 = vadd.f32 %v7260, 1.0
        %v7277 = vadd.f32 %v7261, 1.0
        %v7278 = vadd.f32 %v7262, 1.0
        %v7279 = vadd.f32 %v7263, 1.0
        %v7280 = vadd.f32 %v7264, 1.0
        %v7281 = vadd.f32 %v7265, 1.0
        %v7282 = vadd.f32 %v7266, 1.0
        %v7283 = vadd.f32 %v7267, 1.0
        %v7284 = vadd.f32 %v7268, 1.0
        %v7285 = vadd.f32 %v7269, 1.0
        %v7286 = vadd.f32 %v7270, 1.0
        %v7287 = vadd.f32 %v7271, 1.0
        %v7288 = vadd.f32 %v7272, 1.0
        %v7289 = vadd.f32 %v7273, 1.0
        %v7290 = vadd.f32 %v7274, 1.0
        %v7291 = vadd.f32 %v7275, 1.0
        %v7292 = vmul.f32 %v7228, %v7276
        %v7293 = vmul.f32 %v7229, %v7277
        %v7294 = vmul.f32 %v7230, %v7278
        %v7295 = vmul.f32 %v7231, %v7279
        %v7296 = vmul.f32 %v7232, %v7280
        %v7297 = vmul.f32 %v7233, %v7281
        %v7298 = vmul.f32 %v7234, %v7282
        %v7299 = vmul.f32 %v7235, %v7283
        %v7300 = vmul.f32 %v7236, %v7284
        %v7301 = vmul.f32 %v7237, %v7285
        %v7302 = vmul.f32 %v7238, %v7286
        %v7303 = vmul.f32 %v7239, %v7287
        %v7304 = vmul.f32 %v7240, %v7288
        %v7305 = vmul.f32 %v7241, %v7289
        %v7306 = vmul.f32 %v7242, %v7290
        %v7307 = vmul.f32 %v7243, %v7291
        %v7308 = vld [vmem:[%s5] sm:$0xf]
        %v7310 = vsel %vm804, %v7292, 0
        %v7313 = vsel %vm804, %v7293, 0
        %v7316 = vsel %vm804, %v7294, 0
        %v7319 = vsel %vm804, %v7295, 0
        %v7322 = vsel %vm804, %v7296, 0
        %v7325 = vsel %vm804, %v7297, 0
        %v7328 = vsel %vm804, %v7298, 0
        %v7331 = vsel %vm804, %v7299, 0
        %v7334 = vsel %vm804, %v7300, 0
        %v7337 = vsel %vm804, %v7301, 0
        %v7340 = vsel %vm804, %v7302, 0
        %v7343 = vsel %vm804, %v7303, 0
        %v7346 = vsel %vm804, %v7304, 0
        %v7349 = vsel %vm804, %v7305, 0
        %v7352 = vsel %vm804, %v7306, 0
        %v7355 = vsel %vm804, %v7307, 0
        %v7358 = vsel %vm853, %v7308, 0
        %7360 = vmatprep.subr.mxu0 0.0
        %7361 = vmatpush1.msra.mxu0 0.0
        %7362 = vmatprep.subr.mxu0 0.0
        %7363 = vmatpush1.msra.mxu0 0.0
        %7364 = vmatprep.subr.mxu0 0.0
        %7365 = vmatpush1.msra.mxu0 0.0
        %7366 = vmatprep.subr.mxu0 0.0
        %7367 = vmatpush1.msra.mxu0 0.0
        %7368 = vmatprep.subr.mxu0 0.0
        %7369 = vmatpush1.msra.mxu0 0.0
        %7370 = vmatprep.subr.mxu0 0.0
        %7371 = vmatpush1.msra.mxu0 0.0
        %7372 = vmatprep.subr.mxu0 0.0
        %7373 = vmatpush1.msra.mxu0 0.0
        %7374 = vmatprep.subr.mxu0 0.0
        %7375 = vmatpush1.msra.mxu0 0.0
        %7376 = vmatprep.subr.mxu0 0.0
        %7377 = vmatpush1.msra.mxu0 0.0
        %7378 = vmatprep.subr.mxu0 0.0
        %7379 = vmatpush1.msra.mxu0 0.0
        %7380 = vmatprep.subr.mxu0 0.0
        %7381 = vmatpush1.msra.mxu0 0.0
        %7382 = vmatprep.subr.mxu0 0.0
        %7383 = vmatpush1.msra.mxu0 0.0
        %7384 = vmatprep.subr.mxu0 0.0
        %7385 = vmatpush1.msra.mxu0 0.0
        %7386 = vmatprep.subr.mxu0 0.0
        %7387 = vmatpush1.msra.mxu0 0.0
        %7388 = vmatprep.subr.mxu0 0.0
        %7389 = vmatpush1.msra.mxu0 0.0
        %7390 = vmatprep.subr.mxu0 0.0
        %7391 = vmatpush1.msra.mxu0 %v7358
        %7392 = vmatprep.subr.mxu0 0.0
        %7393 = vmatpush2.msra.mxu0 0.0
        %7394 = vmatprep.subr.mxu0 0.0
        %7395 = vmatpush2.msra.mxu0 0.0
        %7396 = vmatprep.subr.mxu0 0.0
        %7397 = vmatpush2.msra.mxu0 0.0
        %7398 = vmatprep.subr.mxu0 0.0
        %7399 = vmatpush2.msra.mxu0 0.0
        %7400 = vmatprep.subr.mxu0 0.0
        %7401 = vmatpush2.msra.mxu0 0.0
        %7402 = vmatprep.subr.mxu0 0.0
        %7403 = vmatpush2.msra.mxu0 0.0
        %7404 = vmatprep.subr.mxu0 0.0
        %7405 = vmatpush2.msra.mxu0 0.0
        %7406 = vmatprep.subr.mxu0 0.0
        %7407 = vmatpush2.msra.mxu0 0.0
        %7408 = vmatprep.subr.mxu0 0.0
        %7409 = vmatpush2.msra.mxu0 0.0
        %7410 = vmatprep.subr.mxu0 0.0
        %7411 = vmatpush2.msra.mxu0 0.0
        %7412 = vmatprep.subr.mxu0 0.0
        %7413 = vmatpush2.msra.mxu0 0.0
        %7414 = vmatprep.subr.mxu0 0.0
        %7415 = vmatpush2.msra.mxu0 0.0
        %7416 = vmatprep.subr.mxu0 0.0
        %7417 = vmatpush2.msra.mxu0 0.0
        %7418 = vmatprep.subr.mxu0 0.0
        %7419 = vmatpush2.msra.mxu0 0.0
        %7420 = vmatprep.subr.mxu0 0.0
        %7421 = vmatpush2.msra.mxu0 0.0
        %7422 = vmatprep.subr.mxu0 0.0
        %7423 = vmatpush2.msra.mxu0 0.0
        %7424 = vmatprep.mubr.f32.mxu0 0.0
        %7425 = vmatmul.mubr.f32.gmra.mxu0 %v7310
        %v7426 = vpop.f32.mrf.mxu0
        %v7427 = vadd.f32 0.0, %v7426
        %v7428 = vpop.f32.mrf.mxu0
        %7429 = vmatprep.mubr.f32.mxu0 0.0
        %7430 = vmatmul.mubr.f32.gmra.mxu0 %v7313
        %v7431 = vpop.f32.mrf.mxu0
        %v7432 = vadd.f32 0.0, %v7431
        %v7433 = vpop.f32.mrf.mxu0
        %7434 = vmatprep.mubr.f32.mxu0 0.0
        %7435 = vmatmul.mubr.f32.gmra.mxu0 %v7316
        %v7436 = vpop.f32.mrf.mxu0
        %v7437 = vadd.f32 0.0, %v7436
        %v7438 = vpop.f32.mrf.mxu0
        %7439 = vmatprep.mubr.f32.mxu0 0.0
        %7440 = vmatmul.mubr.f32.gmra.mxu0 %v7319
        %v7441 = vpop.f32.mrf.mxu0
        %v7442 = vadd.f32 0.0, %v7441
        %v7443 = vpop.f32.mrf.mxu0
        %7444 = vmatprep.mubr.f32.mxu0 0.0
        %7445 = vmatmul.mubr.f32.gmra.mxu0 %v7322
        %v7446 = vpop.f32.mrf.mxu0
        %v7447 = vadd.f32 0.0, %v7446
        %v7448 = vpop.f32.mrf.mxu0
        %7449 = vmatprep.mubr.f32.mxu0 0.0
        %7450 = vmatmul.mubr.f32.gmra.mxu0 %v7325
        %v7451 = vpop.f32.mrf.mxu0
        %v7452 = vadd.f32 0.0, %v7451
        %v7453 = vpop.f32.mrf.mxu0
        %7454 = vmatprep.mubr.f32.mxu0 0.0
        %7455 = vmatmul.mubr.f32.gmra.mxu0 %v7328
        %v7456 = vpop.f32.mrf.mxu0
        %v7457 = vadd.f32 0.0, %v7456
        %v7458 = vpop.f32.mrf.mxu0
        %7459 = vmatprep.mubr.f32.mxu0 0.0
        %7460 = vmatmul.mubr.f32.gmra.mxu0 %v7331
        %v7461 = vpop.f32.mrf.mxu0
        %v7462 = vadd.f32 0.0, %v7461
        %v7463 = vpop.f32.mrf.mxu0
        %7464 = vmatprep.mubr.f32.mxu0 0.0
        %7465 = vmatmul.mubr.f32.gmra.mxu0 %v7334
        %v7466 = vpop.f32.mrf.mxu0
        %v7467 = vadd.f32 0.0, %v7466
        %v7468 = vpop.f32.mrf.mxu0
        %7469 = vmatprep.mubr.f32.mxu0 0.0
        %7470 = vmatmul.mubr.f32.gmra.mxu0 %v7337
        %v7471 = vpop.f32.mrf.mxu0
        %v7472 = vadd.f32 0.0, %v7471
        %v7473 = vpop.f32.mrf.mxu0
        %7474 = vmatprep.mubr.f32.mxu0 0.0
        %7475 = vmatmul.mubr.f32.gmra.mxu0 %v7340
        %v7476 = vpop.f32.mrf.mxu0
        %v7477 = vadd.f32 0.0, %v7476
        %v7478 = vpop.f32.mrf.mxu0
        %7479 = vmatprep.mubr.f32.mxu0 0.0
        %7480 = vmatmul.mubr.f32.gmra.mxu0 %v7343
        %v7481 = vpop.f32.mrf.mxu0
        %v7482 = vadd.f32 0.0, %v7481
        %v7483 = vpop.f32.mrf.mxu0
        %7484 = vmatprep.mubr.f32.mxu0 0.0
        %7485 = vmatmul.mubr.f32.gmra.mxu0 %v7346
        %v7486 = vpop.f32.mrf.mxu0
        %v7487 = vadd.f32 0.0, %v7486
        %v7488 = vpop.f32.mrf.mxu0
        %7489 = vmatprep.mubr.f32.mxu0 0.0
        %7490 = vmatmul.mubr.f32.gmra.mxu0 %v7349
        %v7491 = vpop.f32.mrf.mxu0
        %v7492 = vadd.f32 0.0, %v7491
        %v7493 = vpop.f32.mrf.mxu0
        %7494 = vmatprep.mubr.f32.mxu0 0.0
        %7495 = vmatmul.mubr.f32.gmra.mxu0 %v7352
        %v7496 = vpop.f32.mrf.mxu0
        %v7497 = vadd.f32 0.0, %v7496
        %v7498 = vpop.f32.mrf.mxu0
        %7499 = vmatprep.mubr.f32.mxu0 0.0
        %7500 = vmatmul.mubr.f32.gmra.mxu0 %v7355
        %v7501 = vpop.f32.mrf.mxu0
        %v7502 = vadd.f32 0.0, %v7501
        %v7503 = vpop.f32.mrf.mxu0
        %7504 = vdwg.mxu0
        %7521 = vrot.lane.b32.xlu0 %v7427, 112
        %v7522 = vpop.permute.xlu0 %7521
        %7523 = vrot.lane.b32.xlu0 %v7432, 112
        %v7524 = vpop.permute.xlu0 %7523
        %7525 = vrot.lane.b32.xlu0 %v7437, 112
        %v7526 = vpop.permute.xlu0 %7525
        %7527 = vrot.lane.b32.xlu0 %v7442, 112
        %v7528 = vpop.permute.xlu0 %7527
        %7529 = vrot.lane.b32.xlu0 %v7447, 112
        %v7530 = vpop.permute.xlu0 %7529
        %7531 = vrot.lane.b32.xlu0 %v7452, 112
        %v7532 = vpop.permute.xlu0 %7531
        %7533 = vrot.lane.b32.xlu0 %v7457, 112
        %v7534 = vpop.permute.xlu0 %7533
        %7535 = vrot.lane.b32.xlu0 %v7462, 112
        %v7536 = vpop.permute.xlu0 %7535
        %7537 = vrot.lane.b32.xlu0 %v7467, 112
        %v7538 = vpop.permute.xlu0 %7537
        %7539 = vrot.lane.b32.xlu0 %v7472, 112
        %v7540 = vpop.permute.xlu0 %7539
        %7541 = vrot.lane.b32.xlu0 %v7477, 112
        %v7542 = vpop.permute.xlu0 %7541
        %7543 = vrot.lane.b32.xlu0 %v7482, 112
        %v7544 = vpop.permute.xlu0 %7543
        %7545 = vrot.lane.b32.xlu0 %v7487, 112
        %v7546 = vpop.permute.xlu0 %7545
        %7547 = vrot.lane.b32.xlu0 %v7492, 112
        %v7548 = vpop.permute.xlu0 %7547
        %7549 = vrot.lane.b32.xlu0 %v7497, 112
        %v7550 = vpop.permute.xlu0 %7549
        %7551 = vrot.lane.b32.xlu0 %v7502, 112
        %v7552 = vpop.permute.xlu0 %7551
        %v7553 = vsel %vm1050, %v7427, 0
        %v7555 = vsel %vm1050, %v7432, 0
        %v7557 = vsel %vm1050, %v7437, 0
        %v7559 = vsel %vm1050, %v7442, 0
        %v7561 = vsel %vm1050, %v7447, 0
        %v7563 = vsel %vm1050, %v7452, 0
        %v7565 = vsel %vm1050, %v7457, 0
        %v7567 = vsel %vm1050, %v7462, 0
        %v7569 = vsel %vm1050, %v7467, 0
        %v7571 = vsel %vm1050, %v7472, 0
        %v7573 = vsel %vm1050, %v7477, 0
        %v7575 = vsel %vm1050, %v7482, 0
        %v7577 = vsel %vm1050, %v7487, 0
        %v7579 = vsel %vm1050, %v7492, 0
        %v7581 = vsel %vm1050, %v7497, 0
        %v7583 = vsel %vm1050, %v7502, 0
        %v7585 = vsel %vm1050, %v7522, 0
        %v7587 = vsel %vm1050, %v7524, 0
        %v7589 = vsel %vm1050, %v7526, 0
        %v7591 = vsel %vm1050, %v7528, 0
        %v7593 = vsel %vm1050, %v7530, 0
        %v7595 = vsel %vm1050, %v7532, 0
        %v7597 = vsel %vm1050, %v7534, 0
        %v7599 = vsel %vm1050, %v7536, 0
        %v7601 = vsel %vm1050, %v7538, 0
        %v7603 = vsel %vm1050, %v7540, 0
        %v7605 = vsel %vm1050, %v7542, 0
        %v7607 = vsel %vm1050, %v7544, 0
        %v7609 = vsel %vm1050, %v7546, 0
        %v7611 = vsel %vm1050, %v7548, 0
        %v7613 = vsel %vm1050, %v7550, 0
        %v7615 = vsel %vm1050, %v7552, 0
        %7617 = vmatprep.subr.mxu0 0.0
        %7618 = vmatpush1.xpose.msra.mxu0 %v7615
        %7619 = vmatprep.subr.mxu0 0.0
        %7620 = vmatpush1.xpose.msra.mxu0 %v7613
        %7621 = vmatprep.subr.mxu0 0.0
        %7622 = vmatpush1.xpose.msra.mxu0 %v7611
        %7623 = vmatprep.subr.mxu0 0.0
        %7624 = vmatpush1.xpose.msra.mxu0 %v7609
        %7625 = vmatprep.subr.mxu0 0.0
        %7626 = vmatpush1.xpose.msra.mxu0 %v7607
        %7627 = vmatprep.subr.mxu0 0.0
        %7628 = vmatpush1.xpose.msra.mxu0 %v7605
        %7629 = vmatprep.subr.mxu0 0.0
        %7630 = vmatpush1.xpose.msra.mxu0 %v7603
        %7631 = vmatprep.subr.mxu0 0.0
        %7632 = vmatpush1.xpose.msra.mxu0 %v7601
        %7633 = vmatprep.subr.mxu0 0.0
        %7634 = vmatpush1.xpose.msra.mxu0 %v7599
        %7635 = vmatprep.subr.mxu0 0.0
        %7636 = vmatpush1.xpose.msra.mxu0 %v7597
        %7637 = vmatprep.subr.mxu0 0.0
        %7638 = vmatpush1.xpose.msra.mxu0 %v7595
        %7639 = vmatprep.subr.mxu0 0.0
        %7640 = vmatpush1.xpose.msra.mxu0 %v7593
        %7641 = vmatprep.subr.mxu0 0.0
        %7642 = vmatpush1.xpose.msra.mxu0 %v7591
        %7643 = vmatprep.subr.mxu0 0.0
        %7644 = vmatpush1.xpose.msra.mxu0 %v7589
        %7645 = vmatprep.subr.mxu0 0.0
        %7646 = vmatpush1.xpose.msra.mxu0 %v7587
        %7647 = vmatprep.subr.mxu0 0.0
        %7648 = vmatpush1.xpose.msra.mxu0 %v7585
        %7649 = vmatprep.subr.mxu0 0.0
        %7650 = vmatpush2.xpose.msra.mxu0 0.0
        %7651 = vmatprep.subr.mxu0 0.0
        %7652 = vmatpush2.xpose.msra.mxu0 0.0
        %7653 = vmatprep.subr.mxu0 0.0
        %7654 = vmatpush2.xpose.msra.mxu0 0.0
        %7655 = vmatprep.subr.mxu0 0.0
        %7656 = vmatpush2.xpose.msra.mxu0 0.0
        %7657 = vmatprep.subr.mxu0 0.0
        %7658 = vmatpush2.xpose.msra.mxu0 0.0
        %7659 = vmatprep.subr.mxu0 0.0
        %7660 = vmatpush2.xpose.msra.mxu0 0.0
        %7661 = vmatprep.subr.mxu0 0.0
        %7662 = vmatpush2.xpose.msra.mxu0 0.0
        %7663 = vmatprep.subr.mxu0 0.0
        %7664 = vmatpush2.xpose.msra.mxu0 0.0
        %7665 = vmatprep.subr.mxu0 0.0
        %7666 = vmatpush2.xpose.msra.mxu0 0.0
        %7667 = vmatprep.subr.mxu0 0.0
        %7668 = vmatpush2.xpose.msra.mxu0 0.0
        %7669 = vmatprep.subr.mxu0 0.0
        %7670 = vmatpush2.xpose.msra.mxu0 0.0
        %7671 = vmatprep.subr.mxu0 0.0
        %7672 = vmatpush2.xpose.msra.mxu0 0.0
        %7673 = vmatprep.subr.mxu0 0.0
        %7674 = vmatpush2.xpose.msra.mxu0 0.0
        %7675 = vmatprep.subr.mxu0 0.0
        %7676 = vmatpush2.xpose.msra.mxu0 0.0
        %7677 = vmatprep.subr.mxu0 0.0
        %7678 = vmatpush2.xpose.msra.mxu0 0.0
        %7679 = vmatprep.subr.mxu0 0.0
        %7680 = vmatpush2.xpose.msra.mxu0 0.0
        %7681 = vmatprep.mubr.f32.mxu0 0.0
        %7682 = vmatmul.mubr.f32.gmra.mxu0 %v7553
        %v7683 = vpop.f32.mrf.mxu0
        %v7684 = vadd.f32 %v334, %v7683
        %v7685 = vpop.f32.mrf.mxu0
        %7686 = vmatprep.mubr.f32.mxu0 0.0
        %7687 = vmatmul.mubr.f32.gmra.mxu0 %v7555
        %v7688 = vpop.f32.mrf.mxu0
        %v7689 = vadd.f32 %v335, %v7688
        %v7690 = vpop.f32.mrf.mxu0
        %7691 = vmatprep.mubr.f32.mxu0 0.0
        %7692 = vmatmul.mubr.f32.gmra.mxu0 %v7557
        %v7693 = vpop.f32.mrf.mxu0
        %v7694 = vadd.f32 %v336, %v7693
        %v7695 = vpop.f32.mrf.mxu0
        %7696 = vmatprep.mubr.f32.mxu0 0.0
        %7697 = vmatmul.mubr.f32.gmra.mxu0 %v7559
        %v7698 = vpop.f32.mrf.mxu0
        %v7699 = vadd.f32 %v337, %v7698
        %v7700 = vpop.f32.mrf.mxu0
        %7701 = vmatprep.mubr.f32.mxu0 0.0
        %7702 = vmatmul.mubr.f32.gmra.mxu0 %v7561
        %v7703 = vpop.f32.mrf.mxu0
        %v7704 = vadd.f32 %v338, %v7703
        %v7705 = vpop.f32.mrf.mxu0
        %7706 = vmatprep.mubr.f32.mxu0 0.0
        %7707 = vmatmul.mubr.f32.gmra.mxu0 %v7563
        %v7708 = vpop.f32.mrf.mxu0
        %v7709 = vadd.f32 %v339, %v7708
        %v7710 = vpop.f32.mrf.mxu0
        %7711 = vmatprep.mubr.f32.mxu0 0.0
        %7712 = vmatmul.mubr.f32.gmra.mxu0 %v7565
        %v7713 = vpop.f32.mrf.mxu0
        %v7714 = vadd.f32 %v340, %v7713
        %v7715 = vpop.f32.mrf.mxu0
        %7716 = vmatprep.mubr.f32.mxu0 0.0
        %7717 = vmatmul.mubr.f32.gmra.mxu0 %v7567
        %v7718 = vpop.f32.mrf.mxu0
        %v7719 = vadd.f32 %v341, %v7718
        %v7720 = vpop.f32.mrf.mxu0
        %7721 = vmatprep.mubr.f32.mxu0 0.0
        %7722 = vmatmul.mubr.f32.gmra.mxu0 %v7569
        %v7723 = vpop.f32.mrf.mxu0
        %v7724 = vadd.f32 %v342, %v7723
        %v7725 = vpop.f32.mrf.mxu0
        %7726 = vmatprep.mubr.f32.mxu0 0.0
        %7727 = vmatmul.mubr.f32.gmra.mxu0 %v7571
        %v7728 = vpop.f32.mrf.mxu0
        %v7729 = vadd.f32 %v343, %v7728
        %v7730 = vpop.f32.mrf.mxu0
        %7731 = vmatprep.mubr.f32.mxu0 0.0
        %7732 = vmatmul.mubr.f32.gmra.mxu0 %v7573
        %v7733 = vpop.f32.mrf.mxu0
        %v7734 = vadd.f32 %v344, %v7733
        %v7735 = vpop.f32.mrf.mxu0
        %7736 = vmatprep.mubr.f32.mxu0 0.0
        %7737 = vmatmul.mubr.f32.gmra.mxu0 %v7575
        %v7738 = vpop.f32.mrf.mxu0
        %v7739 = vadd.f32 %v345, %v7738
        %v7740 = vpop.f32.mrf.mxu0
        %7741 = vmatprep.mubr.f32.mxu0 0.0
        %7742 = vmatmul.mubr.f32.gmra.mxu0 %v7577
        %v7743 = vpop.f32.mrf.mxu0
        %v7744 = vadd.f32 %v346, %v7743
        %v7745 = vpop.f32.mrf.mxu0
        %7746 = vmatprep.mubr.f32.mxu0 0.0
        %7747 = vmatmul.mubr.f32.gmra.mxu0 %v7579
        %v7748 = vpop.f32.mrf.mxu0
        %v7749 = vadd.f32 %v347, %v7748
        %v7750 = vpop.f32.mrf.mxu0
        %7751 = vmatprep.mubr.f32.mxu0 0.0
        %7752 = vmatmul.mubr.f32.gmra.mxu0 %v7581
        %v7753 = vpop.f32.mrf.mxu0
        %v7754 = vadd.f32 %v348, %v7753
        %v7755 = vpop.f32.mrf.mxu0
        %7756 = vmatprep.mubr.f32.mxu0 0.0
        %7757 = vmatmul.mubr.f32.gmra.mxu0 %v7583
        %v7758 = vpop.f32.mrf.mxu0
        %v7759 = vadd.f32 %v349, %v7758
        %v7760 = vpop.f32.mrf.mxu0
        %7761 = vdwg.mxu0
        %7762 = vmax.xlane.f32.xlu0 %v7684
        %v7763 = vpop.xlane.xlu0 %7762
        %7764 = vmax.xlane.f32.xlu0 %v7689
        %v7765 = vpop.xlane.xlu0 %7764
        %7766 = vmax.xlane.f32.xlu0 %v7694
        %v7767 = vpop.xlane.xlu0 %7766
        %7768 = vmax.xlane.f32.xlu0 %v7699
        %v7769 = vpop.xlane.xlu0 %7768
        %7770 = vmax.xlane.f32.xlu0 %v7704
        %v7771 = vpop.xlane.xlu0 %7770
        %7772 = vmax.xlane.f32.xlu0 %v7709
        %v7773 = vpop.xlane.xlu0 %7772
        %7774 = vmax.xlane.f32.xlu0 %v7714
        %v7775 = vpop.xlane.xlu0 %7774
        %7776 = vmax.xlane.f32.xlu0 %v7719
        %v7777 = vpop.xlane.xlu0 %7776
        %7778 = vmax.xlane.f32.xlu0 %v7724
        %v7779 = vpop.xlane.xlu0 %7778
        %7780 = vmax.xlane.f32.xlu0 %v7729
        %v7781 = vpop.xlane.xlu0 %7780
        %7782 = vmax.xlane.f32.xlu0 %v7734
        %v7783 = vpop.xlane.xlu0 %7782
        %7784 = vmax.xlane.f32.xlu0 %v7739
        %v7785 = vpop.xlane.xlu0 %7784
        %7786 = vmax.xlane.f32.xlu0 %v7744
        %v7787 = vpop.xlane.xlu0 %7786
        %7788 = vmax.xlane.f32.xlu0 %v7749
        %v7789 = vpop.xlane.xlu0 %7788
        %7790 = vmax.xlane.f32.xlu0 %v7754
        %v7791 = vpop.xlane.xlu0 %7790
        %7792 = vmax.xlane.f32.xlu0 %v7759
        %v7793 = vpop.xlane.xlu0 %7792
        %v7794 = vsub.f32 %v7684, %v7763
        %v7795 = vsub.f32 %v7689, %v7765
        %v7796 = vsub.f32 %v7694, %v7767
        %v7797 = vsub.f32 %v7699, %v7769
        %v7798 = vsub.f32 %v7704, %v7771
        %v7799 = vsub.f32 %v7709, %v7773
        %v7800 = vsub.f32 %v7714, %v7775
        %v7801 = vsub.f32 %v7719, %v7777
        %v7802 = vsub.f32 %v7724, %v7779
        %v7803 = vsub.f32 %v7729, %v7781
        %v7804 = vsub.f32 %v7734, %v7783
        %v7805 = vsub.f32 %v7739, %v7785
        %v7806 = vsub.f32 %v7744, %v7787
        %v7807 = vsub.f32 %v7749, %v7789
        %v7808 = vsub.f32 %v7754, %v7791
        %v7809 = vsub.f32 %v7759, %v7793
        %v7810 = vmul.f32 %v7794, 1.442695
        %v7811 = vpow.pop %v7810
        %v7812 = vmul.f32 %v7795, 1.442695
        %v7813 = vpow.pop %v7812
        %v7814 = vmul.f32 %v7796, 1.442695
        %v7815 = vpow.pop %v7814
        %v7816 = vmul.f32 %v7797, 1.442695
        %v7817 = vpow.pop %v7816
        %v7818 = vmul.f32 %v7798, 1.442695
        %v7819 = vpow.pop %v7818
        %v7820 = vmul.f32 %v7799, 1.442695
        %v7821 = vpow.pop %v7820
        %v7822 = vmul.f32 %v7800, 1.442695
        %v7823 = vpow.pop %v7822
        %v7824 = vmul.f32 %v7801, 1.442695
        %v7825 = vpow.pop %v7824
        %v7826 = vmul.f32 %v7802, 1.442695
        %v7827 = vpow.pop %v7826
        %v7828 = vmul.f32 %v7803, 1.442695
        %v7829 = vpow.pop %v7828
        %v7830 = vmul.f32 %v7804, 1.442695
        %v7831 = vpow.pop %v7830
        %v7832 = vmul.f32 %v7805, 1.442695
        %v7833 = vpow.pop %v7832
        %v7834 = vmul.f32 %v7806, 1.442695
        %v7835 = vpow.pop %v7834
        %v7836 = vmul.f32 %v7807, 1.442695
        %v7837 = vpow.pop %v7836
        %v7838 = vmul.f32 %v7808, 1.442695
        %v7839 = vpow.pop %v7838
        %v7840 = vmul.f32 %v7809, 1.442695
        %v7841 = vpow.pop %v7840
        %7842 = vadd.xlane.f32.xlu0 %v7811
        %v7843 = vpop.xlane.xlu0 %7842
        %7844 = vadd.xlane.f32.xlu0 %v7813
        %v7845 = vpop.xlane.xlu0 %7844
        %7846 = vadd.xlane.f32.xlu0 %v7815
        %v7847 = vpop.xlane.xlu0 %7846
        %7848 = vadd.xlane.f32.xlu0 %v7817
        %v7849 = vpop.xlane.xlu0 %7848
        %7850 = vadd.xlane.f32.xlu0 %v7819
        %v7851 = vpop.xlane.xlu0 %7850
        %7852 = vadd.xlane.f32.xlu0 %v7821
        %v7853 = vpop.xlane.xlu0 %7852
        %7854 = vadd.xlane.f32.xlu0 %v7823
        %v7855 = vpop.xlane.xlu0 %7854
        %7856 = vadd.xlane.f32.xlu0 %v7825
        %v7857 = vpop.xlane.xlu0 %7856
        %7858 = vadd.xlane.f32.xlu0 %v7827
        %v7859 = vpop.xlane.xlu0 %7858
        %7860 = vadd.xlane.f32.xlu0 %v7829
        %v7861 = vpop.xlane.xlu0 %7860
        %7862 = vadd.xlane.f32.xlu0 %v7831
        %v7863 = vpop.xlane.xlu0 %7862
        %7864 = vadd.xlane.f32.xlu0 %v7833
        %v7865 = vpop.xlane.xlu0 %7864
        %7866 = vadd.xlane.f32.xlu0 %v7835
        %v7867 = vpop.xlane.xlu0 %7866
        %7868 = vadd.xlane.f32.xlu0 %v7837
        %v7869 = vpop.xlane.xlu0 %7868
        %7870 = vadd.xlane.f32.xlu0 %v7839
        %v7871 = vpop.xlane.xlu0 %7870
        %7872 = vadd.xlane.f32.xlu0 %v7841
        %v7873 = vpop.xlane.xlu0 %7872
        %v7874 = vrcp.pop %v7843
        %v7875 = vrcp.pop %v7845
        %v7876 = vrcp.pop %v7847
        %v7877 = vrcp.pop %v7849
        %v7878 = vrcp.pop %v7851
        %v7879 = vrcp.pop %v7853
        %v7880 = vrcp.pop %v7855
        %v7881 = vrcp.pop %v7857
        %v7882 = vrcp.pop %v7859
        %v7883 = vrcp.pop %v7861
        %v7884 = vrcp.pop %v7863
        %v7885 = vrcp.pop %v7865
        %v7886 = vrcp.pop %v7867
        %v7887 = vrcp.pop %v7869
        %v7888 = vrcp.pop %v7871
        %v7889 = vrcp.pop %v7873
        %v7890 = vmul.f32 %v7811, %v7874
        %v7891 = vmul.f32 %v7813, %v7875
        %v7892 = vmul.f32 %v7815, %v7876
        %v7893 = vmul.f32 %v7817, %v7877
        %v7894 = vmul.f32 %v7819, %v7878
        %v7895 = vmul.f32 %v7821, %v7879
        %v7896 = vmul.f32 %v7823, %v7880
        %v7897 = vmul.f32 %v7825, %v7881
        %v7898 = vmul.f32 %v7827, %v7882
        %v7899 = vmul.f32 %v7829, %v7883
        %v7900 = vmul.f32 %v7831, %v7884
        %v7901 = vmul.f32 %v7833, %v7885
        %v7902 = vmul.f32 %v7835, %v7886
        %v7903 = vmul.f32 %v7837, %v7887
        %v7904 = vmul.f32 %v7839, %v7888
        %v7905 = vmul.f32 %v7841, %v7889
        %7906 = vrot.lane.b32.xlu0 %v7427, 96
        %v7907 = vpop.permute.xlu0 %7906
        %7908 = vrot.lane.b32.xlu0 %v7432, 96
        %v7909 = vpop.permute.xlu0 %7908
        %7910 = vrot.lane.b32.xlu0 %v7437, 96
        %v7911 = vpop.permute.xlu0 %7910
        %7912 = vrot.lane.b32.xlu0 %v7442, 96
        %v7913 = vpop.permute.xlu0 %7912
        %7914 = vrot.lane.b32.xlu0 %v7447, 96
        %v7915 = vpop.permute.xlu0 %7914
        %7916 = vrot.lane.b32.xlu0 %v7452, 96
        %v7917 = vpop.permute.xlu0 %7916
        %7918 = vrot.lane.b32.xlu0 %v7457, 96
        %v7919 = vpop.permute.xlu0 %7918
        %7920 = vrot.lane.b32.xlu0 %v7462, 96
        %v7921 = vpop.permute.xlu0 %7920
        %7922 = vrot.lane.b32.xlu0 %v7467, 96
        %v7923 = vpop.permute.xlu0 %7922
        %7924 = vrot.lane.b32.xlu0 %v7472, 96
        %v7925 = vpop.permute.xlu0 %7924
        %7926 = vrot.lane.b32.xlu0 %v7477, 96
        %v7927 = vpop.permute.xlu0 %7926
        %7928 = vrot.lane.b32.xlu0 %v7482, 96
        %v7929 = vpop.permute.xlu0 %7928
        %7930 = vrot.lane.b32.xlu0 %v7487, 96
        %v7931 = vpop.permute.xlu0 %7930
        %7932 = vrot.lane.b32.xlu0 %v7492, 96
        %v7933 = vpop.permute.xlu0 %7932
        %7934 = vrot.lane.b32.xlu0 %v7497, 96
        %v7935 = vpop.permute.xlu0 %7934
        %7936 = vrot.lane.b32.xlu0 %v7502, 96
        %v7937 = vpop.permute.xlu0 %7936
        %7954 = vmatprep.subr.mxu0 0.0
        %7955 = vmatpush1.msra.mxu0 %v7937
        %7956 = vmatprep.subr.mxu0 0.0
        %7957 = vmatpush1.msra.mxu0 %v7935
        %7958 = vmatprep.subr.mxu0 0.0
        %7959 = vmatpush1.msra.mxu0 %v7933
        %7960 = vmatprep.subr.mxu0 0.0
        %7961 = vmatpush1.msra.mxu0 %v7931
        %7962 = vmatprep.subr.mxu0 0.0
        %7963 = vmatpush1.msra.mxu0 %v7929
        %7964 = vmatprep.subr.mxu0 0.0
        %7965 = vmatpush1.msra.mxu0 %v7927
        %7966 = vmatprep.subr.mxu0 0.0
        %7967 = vmatpush1.msra.mxu0 %v7925
        %7968 = vmatprep.subr.mxu0 0.0
        %7969 = vmatpush1.msra.mxu0 %v7923
        %7970 = vmatprep.subr.mxu0 0.0
        %7971 = vmatpush1.msra.mxu0 %v7921
        %7972 = vmatprep.subr.mxu0 0.0
        %7973 = vmatpush1.msra.mxu0 %v7919
        %7974 = vmatprep.subr.mxu0 0.0
        %7975 = vmatpush1.msra.mxu0 %v7917
        %7976 = vmatprep.subr.mxu0 0.0
        %7977 = vmatpush1.msra.mxu0 %v7915
        %7978 = vmatprep.subr.mxu0 0.0
        %7979 = vmatpush1.msra.mxu0 %v7913
        %7980 = vmatprep.subr.mxu0 0.0
        %7981 = vmatpush1.msra.mxu0 %v7911
        %7982 = vmatprep.subr.mxu0 0.0
        %7983 = vmatpush1.msra.mxu0 %v7909
        %7984 = vmatprep.subr.mxu0 0.0
        %7985 = vmatpush1.msra.mxu0 %v7907
        %7986 = vmatprep.subr.mxu0 0.0
        %7987 = vmatpush2.msra.mxu0 0.0
        %7988 = vmatprep.subr.mxu0 0.0
        %7989 = vmatpush2.msra.mxu0 0.0
        %7990 = vmatprep.subr.mxu0 0.0
        %7991 = vmatpush2.msra.mxu0 0.0
        %7992 = vmatprep.subr.mxu0 0.0
        %7993 = vmatpush2.msra.mxu0 0.0
        %7994 = vmatprep.subr.mxu0 0.0
        %7995 = vmatpush2.msra.mxu0 0.0
        %7996 = vmatprep.subr.mxu0 0.0
        %7997 = vmatpush2.msra.mxu0 0.0
        %7998 = vmatprep.subr.mxu0 0.0
        %7999 = vmatpush2.msra.mxu0 0.0
        %8000 = vmatprep.subr.mxu0 0.0
        %8001 = vmatpush2.msra.mxu0 0.0
        %8002 = vmatprep.subr.mxu0 0.0
        %8003 = vmatpush2.msra.mxu0 0.0
        %8004 = vmatprep.subr.mxu0 0.0
        %8005 = vmatpush2.msra.mxu0 0.0
        %8006 = vmatprep.subr.mxu0 0.0
        %8007 = vmatpush2.msra.mxu0 0.0
        %8008 = vmatprep.subr.mxu0 0.0
        %8009 = vmatpush2.msra.mxu0 0.0
        %8010 = vmatprep.subr.mxu0 0.0
        %8011 = vmatpush2.msra.mxu0 0.0
        %8012 = vmatprep.subr.mxu0 0.0
        %8013 = vmatpush2.msra.mxu0 0.0
        %8014 = vmatprep.subr.mxu0 0.0
        %8015 = vmatpush2.msra.mxu0 0.0
        %8016 = vmatprep.subr.mxu0 0.0
        %8017 = vmatpush2.msra.mxu0 0.0
        %8018 = vmatprep.mubr.f32.mxu0 0.0
        %8019 = vmatmul.mubr.f32.gmra.mxu0 %v7890
        %v8020 = vpop.f32.mrf.mxu0
        %v8021 = vadd.f32 0.0, %v8020
        %v8022 = vpop.f32.mrf.mxu0
        %8023 = vmatprep.mubr.f32.mxu0 0.0
        %8024 = vmatmul.mubr.f32.gmra.mxu0 %v7891
        %v8025 = vpop.f32.mrf.mxu0
        %v8026 = vadd.f32 0.0, %v8025
        %v8027 = vpop.f32.mrf.mxu0
        %8028 = vmatprep.mubr.f32.mxu0 0.0
        %8029 = vmatmul.mubr.f32.gmra.mxu0 %v7892
        %v8030 = vpop.f32.mrf.mxu0
        %v8031 = vadd.f32 0.0, %v8030
        %v8032 = vpop.f32.mrf.mxu0
        %8033 = vmatprep.mubr.f32.mxu0 0.0
        %8034 = vmatmul.mubr.f32.gmra.mxu0 %v7893
        %v8035 = vpop.f32.mrf.mxu0
        %v8036 = vadd.f32 0.0, %v8035
        %v8037 = vpop.f32.mrf.mxu0
        %8038 = vmatprep.mubr.f32.mxu0 0.0
        %8039 = vmatmul.mubr.f32.gmra.mxu0 %v7894
        %v8040 = vpop.f32.mrf.mxu0
        %v8041 = vadd.f32 0.0, %v8040
        %v8042 = vpop.f32.mrf.mxu0
        %8043 = vmatprep.mubr.f32.mxu0 0.0
        %8044 = vmatmul.mubr.f32.gmra.mxu0 %v7895
        %v8045 = vpop.f32.mrf.mxu0
        %v8046 = vadd.f32 0.0, %v8045
        %v8047 = vpop.f32.mrf.mxu0
        %8048 = vmatprep.mubr.f32.mxu0 0.0
        %8049 = vmatmul.mubr.f32.gmra.mxu0 %v7896
        %v8050 = vpop.f32.mrf.mxu0
        %v8051 = vadd.f32 0.0, %v8050
        %v8052 = vpop.f32.mrf.mxu0
        %8053 = vmatprep.mubr.f32.mxu0 0.0
        %8054 = vmatmul.mubr.f32.gmra.mxu0 %v7897
        %v8055 = vpop.f32.mrf.mxu0
        %v8056 = vadd.f32 0.0, %v8055
        %v8057 = vpop.f32.mrf.mxu0
        %8058 = vmatprep.mubr.f32.mxu0 0.0
        %8059 = vmatmul.mubr.f32.gmra.mxu0 %v7898
        %v8060 = vpop.f32.mrf.mxu0
        %v8061 = vadd.f32 0.0, %v8060
        %v8062 = vpop.f32.mrf.mxu0
        %8063 = vmatprep.mubr.f32.mxu0 0.0
        %8064 = vmatmul.mubr.f32.gmra.mxu0 %v7899
        %v8065 = vpop.f32.mrf.mxu0
        %v8066 = vadd.f32 0.0, %v8065
        %v8067 = vpop.f32.mrf.mxu0
        %8068 = vmatprep.mubr.f32.mxu0 0.0
        %8069 = vmatmul.mubr.f32.gmra.mxu0 %v7900
        %v8070 = vpop.f32.mrf.mxu0
        %v8071 = vadd.f32 0.0, %v8070
        %v8072 = vpop.f32.mrf.mxu0
        %8073 = vmatprep.mubr.f32.mxu0 0.0
        %8074 = vmatmul.mubr.f32.gmra.mxu0 %v7901
        %v8075 = vpop.f32.mrf.mxu0
        %v8076 = vadd.f32 0.0, %v8075
        %v8077 = vpop.f32.mrf.mxu0
        %8078 = vmatprep.mubr.f32.mxu0 0.0
        %8079 = vmatmul.mubr.f32.gmra.mxu0 %v7902
        %v8080 = vpop.f32.mrf.mxu0
        %v8081 = vadd.f32 0.0, %v8080
        %v8082 = vpop.f32.mrf.mxu0
        %8083 = vmatprep.mubr.f32.mxu0 0.0
        %8084 = vmatmul.mubr.f32.gmra.mxu0 %v7903
        %v8085 = vpop.f32.mrf.mxu0
        %v8086 = vadd.f32 0.0, %v8085
        %v8087 = vpop.f32.mrf.mxu0
        %8088 = vmatprep.mubr.f32.mxu0 0.0
        %8089 = vmatmul.mubr.f32.gmra.mxu0 %v7904
        %v8090 = vpop.f32.mrf.mxu0
        %v8091 = vadd.f32 0.0, %v8090
        %v8092 = vpop.f32.mrf.mxu0
        %8093 = vmatprep.mubr.f32.mxu0 0.0
        %8094 = vmatmul.mubr.f32.gmra.mxu0 %v7905
        %v8095 = vpop.f32.mrf.mxu0
        %v8096 = vadd.f32 0.0, %v8095
        %v8097 = vpop.f32.mrf.mxu0
        %8098 = vdwg.mxu0
        %8099 = vrot.lane.b32.xlu0 %v7427, 120
        %v8100 = vpop.permute.xlu0 %8099
        %8101 = vrot.lane.b32.xlu0 %v7432, 120
        %v8102 = vpop.permute.xlu0 %8101
        %8103 = vrot.lane.b32.xlu0 %v7437, 120
        %v8104 = vpop.permute.xlu0 %8103
        %8105 = vrot.lane.b32.xlu0 %v7442, 120
        %v8106 = vpop.permute.xlu0 %8105
        %8107 = vrot.lane.b32.xlu0 %v7447, 120
        %v8108 = vpop.permute.xlu0 %8107
        %8109 = vrot.lane.b32.xlu0 %v7452, 120
        %v8110 = vpop.permute.xlu0 %8109
        %8111 = vrot.lane.b32.xlu0 %v7457, 120
        %v8112 = vpop.permute.xlu0 %8111
        %8113 = vrot.lane.b32.xlu0 %v7462, 120
        %v8114 = vpop.permute.xlu0 %8113
        %8115 = vrot.lane.b32.xlu0 %v7467, 120
        %v8116 = vpop.permute.xlu0 %8115
        %8117 = vrot.lane.b32.xlu0 %v7472, 120
        %v8118 = vpop.permute.xlu0 %8117
        %8119 = vrot.lane.b32.xlu0 %v7477, 120
        %v8120 = vpop.permute.xlu0 %8119
        %8121 = vrot.lane.b32.xlu0 %v7482, 120
        %v8122 = vpop.permute.xlu0 %8121
        %8123 = vrot.lane.b32.xlu0 %v7487, 120
        %v8124 = vpop.permute.xlu0 %8123
        %8125 = vrot.lane.b32.xlu0 %v7492, 120
        %v8126 = vpop.permute.xlu0 %8125
        %8127 = vrot.lane.b32.xlu0 %v7497, 120
        %v8128 = vpop.permute.xlu0 %8127
        %8129 = vrot.lane.b32.xlu0 %v7502, 120
        %v8130 = vpop.permute.xlu0 %8129
        %8131 = vrot.lane.b32.xlu0 %v7427, 104
        %v8132 = vpop.permute.xlu0 %8131
        %8133 = vrot.lane.b32.xlu0 %v7432, 104
        %v8134 = vpop.permute.xlu0 %8133
        %8135 = vrot.lane.b32.xlu0 %v7437, 104
        %v8136 = vpop.permute.xlu0 %8135
        %8137 = vrot.lane.b32.xlu0 %v7442, 104
        %v8138 = vpop.permute.xlu0 %8137
        %8139 = vrot.lane.b32.xlu0 %v7447, 104
        %v8140 = vpop.permute.xlu0 %8139
        %8141 = vrot.lane.b32.xlu0 %v7452, 104
        %v8142 = vpop.permute.xlu0 %8141
        %8143 = vrot.lane.b32.xlu0 %v7457, 104
        %v8144 = vpop.permute.xlu0 %8143
        %8145 = vrot.lane.b32.xlu0 %v7462, 104
        %v8146 = vpop.permute.xlu0 %8145
        %8147 = vrot.lane.b32.xlu0 %v7467, 104
        %v8148 = vpop.permute.xlu0 %8147
        %8149 = vrot.lane.b32.xlu0 %v7472, 104
        %v8150 = vpop.permute.xlu0 %8149
        %8151 = vrot.lane.b32.xlu0 %v7477, 104
        %v8152 = vpop.permute.xlu0 %8151
        %8153 = vrot.lane.b32.xlu0 %v7482, 104
        %v8154 = vpop.permute.xlu0 %8153
        %8155 = vrot.lane.b32.xlu0 %v7487, 104
        %v8156 = vpop.permute.xlu0 %8155
        %8157 = vrot.lane.b32.xlu0 %v7492, 104
        %v8158 = vpop.permute.xlu0 %8157
        %8159 = vrot.lane.b32.xlu0 %v7497, 104
        %v8160 = vpop.permute.xlu0 %8159
        %8161 = vrot.lane.b32.xlu0 %v7502, 104
        %v8162 = vpop.permute.xlu0 %8161
        %v8163 = vsel %vm1050, %v8100, 0
        %v8165 = vsel %vm1050, %v8102, 0
        %v8167 = vsel %vm1050, %v8104, 0
        %v8169 = vsel %vm1050, %v8106, 0
        %v8171 = vsel %vm1050, %v8108, 0
        %v8173 = vsel %vm1050, %v8110, 0
        %v8175 = vsel %vm1050, %v8112, 0
        %v8177 = vsel %vm1050, %v8114, 0
        %v8179 = vsel %vm1050, %v8116, 0
        %v8181 = vsel %vm1050, %v8118, 0
        %v8183 = vsel %vm1050, %v8120, 0
        %v8185 = vsel %vm1050, %v8122, 0
        %v8187 = vsel %vm1050, %v8124, 0
        %v8189 = vsel %vm1050, %v8126, 0
        %v8191 = vsel %vm1050, %v8128, 0
        %v8193 = vsel %vm1050, %v8130, 0
        %v8195 = vsel %vm1050, %v8132, 0
        %v8197 = vsel %vm1050, %v8134, 0
        %v8199 = vsel %vm1050, %v8136, 0
        %v8201 = vsel %vm1050, %v8138, 0
        %v8203 = vsel %vm1050, %v8140, 0
        %v8205 = vsel %vm1050, %v8142, 0
        %v8207 = vsel %vm1050, %v8144, 0
        %v8209 = vsel %vm1050, %v8146, 0
        %v8211 = vsel %vm1050, %v8148, 0
        %v8213 = vsel %vm1050, %v8150, 0
        %v8215 = vsel %vm1050, %v8152, 0
        %v8217 = vsel %vm1050, %v8154, 0
        %v8219 = vsel %vm1050, %v8156, 0
        %v8221 = vsel %vm1050, %v8158, 0
        %v8223 = vsel %vm1050, %v8160, 0
        %v8225 = vsel %vm1050, %v8162, 0
        %8227 = vmatprep.subr.mxu0 0.0
        %8228 = vmatpush1.xpose.msra.mxu0 %v8225
        %8229 = vmatprep.subr.mxu0 0.0
        %8230 = vmatpush1.xpose.msra.mxu0 %v8223
        %8231 = vmatprep.subr.mxu0 0.0
        %8232 = vmatpush1.xpose.msra.mxu0 %v8221
        %8233 = vmatprep.subr.mxu0 0.0
        %8234 = vmatpush1.xpose.msra.mxu0 %v8219
        %8235 = vmatprep.subr.mxu0 0.0
        %8236 = vmatpush1.xpose.msra.mxu0 %v8217
        %8237 = vmatprep.subr.mxu0 0.0
        %8238 = vmatpush1.xpose.msra.mxu0 %v8215
        %8239 = vmatprep.subr.mxu0 0.0
        %8240 = vmatpush1.xpose.msra.mxu0 %v8213
        %8241 = vmatprep.subr.mxu0 0.0
        %8242 = vmatpush1.xpose.msra.mxu0 %v8211
        %8243 = vmatprep.subr.mxu0 0.0
        %8244 = vmatpush1.xpose.msra.mxu0 %v8209
        %8245 = vmatprep.subr.mxu0 0.0
        %8246 = vmatpush1.xpose.msra.mxu0 %v8207
        %8247 = vmatprep.subr.mxu0 0.0
        %8248 = vmatpush1.xpose.msra.mxu0 %v8205
        %8249 = vmatprep.subr.mxu0 0.0
        %8250 = vmatpush1.xpose.msra.mxu0 %v8203
        %8251 = vmatprep.subr.mxu0 0.0
        %8252 = vmatpush1.xpose.msra.mxu0 %v8201
        %8253 = vmatprep.subr.mxu0 0.0
        %8254 = vmatpush1.xpose.msra.mxu0 %v8199
        %8255 = vmatprep.subr.mxu0 0.0
        %8256 = vmatpush1.xpose.msra.mxu0 %v8197
        %8257 = vmatprep.subr.mxu0 0.0
        %8258 = vmatpush1.xpose.msra.mxu0 %v8195
        %8259 = vmatprep.subr.mxu0 0.0
        %8260 = vmatpush2.xpose.msra.mxu0 0.0
        %8261 = vmatprep.subr.mxu0 0.0
        %8262 = vmatpush2.xpose.msra.mxu0 0.0
        %8263 = vmatprep.subr.mxu0 0.0
        %8264 = vmatpush2.xpose.msra.mxu0 0.0
        %8265 = vmatprep.subr.mxu0 0.0
        %8266 = vmatpush2.xpose.msra.mxu0 0.0
        %8267 = vmatprep.subr.mxu0 0.0
        %8268 = vmatpush2.xpose.msra.mxu0 0.0
        %8269 = vmatprep.subr.mxu0 0.0
        %8270 = vmatpush2.xpose.msra.mxu0 0.0
        %8271 = vmatprep.subr.mxu0 0.0
        %8272 = vmatpush2.xpose.msra.mxu0 0.0
        %8273 = vmatprep.subr.mxu0 0.0
        %8274 = vmatpush2.xpose.msra.mxu0 0.0
        %8275 = vmatprep.subr.mxu0 0.0
        %8276 = vmatpush2.xpose.msra.mxu0 0.0
        %8277 = vmatprep.subr.mxu0 0.0
        %8278 = vmatpush2.xpose.msra.mxu0 0.0
        %8279 = vmatprep.subr.mxu0 0.0
        %8280 = vmatpush2.xpose.msra.mxu0 0.0
        %8281 = vmatprep.subr.mxu0 0.0
        %8282 = vmatpush2.xpose.msra.mxu0 0.0
        %8283 = vmatprep.subr.mxu0 0.0
        %8284 = vmatpush2.xpose.msra.mxu0 0.0
        %8285 = vmatprep.subr.mxu0 0.0
        %8286 = vmatpush2.xpose.msra.mxu0 0.0
        %8287 = vmatprep.subr.mxu0 0.0
        %8288 = vmatpush2.xpose.msra.mxu0 0.0
        %8289 = vmatprep.subr.mxu0 0.0
        %8290 = vmatpush2.xpose.msra.mxu0 0.0
        %8291 = vmatprep.mubr.f32.mxu0 0.0
        %8292 = vmatmul.mubr.f32.gmra.mxu0 %v8163
        %v8293 = vpop.f32.mrf.mxu0
        %v8294 = vadd.f32 %v334, %v8293
        %v8295 = vpop.f32.mrf.mxu0
        %8296 = vmatprep.mubr.f32.mxu0 0.0
        %8297 = vmatmul.mubr.f32.gmra.mxu0 %v8165
        %v8298 = vpop.f32.mrf.mxu0
        %v8299 = vadd.f32 %v335, %v8298
        %v8300 = vpop.f32.mrf.mxu0
        %8301 = vmatprep.mubr.f32.mxu0 0.0
        %8302 = vmatmul.mubr.f32.gmra.mxu0 %v8167
        %v8303 = vpop.f32.mrf.mxu0
        %v8304 = vadd.f32 %v336, %v8303
        %v8305 = vpop.f32.mrf.mxu0
        %8306 = vmatprep.mubr.f32.mxu0 0.0
        %8307 = vmatmul.mubr.f32.gmra.mxu0 %v8169
        %v8308 = vpop.f32.mrf.mxu0
        %v8309 = vadd.f32 %v337, %v8308
        %v8310 = vpop.f32.mrf.mxu0
        %8311 = vmatprep.mubr.f32.mxu0 0.0
        %8312 = vmatmul.mubr.f32.gmra.mxu0 %v8171
        %v8313 = vpop.f32.mrf.mxu0
        %v8314 = vadd.f32 %v338, %v8313
        %v8315 = vpop.f32.mrf.mxu0
        %8316 = vmatprep.mubr.f32.mxu0 0.0
        %8317 = vmatmul.mubr.f32.gmra.mxu0 %v8173
        %v8318 = vpop.f32.mrf.mxu0
        %v8319 = vadd.f32 %v339, %v8318
        %v8320 = vpop.f32.mrf.mxu0
        %8321 = vmatprep.mubr.f32.mxu0 0.0
        %8322 = vmatmul.mubr.f32.gmra.mxu0 %v8175
        %v8323 = vpop.f32.mrf.mxu0
        %v8324 = vadd.f32 %v340, %v8323
        %v8325 = vpop.f32.mrf.mxu0
        %8326 = vmatprep.mubr.f32.mxu0 0.0
        %8327 = vmatmul.mubr.f32.gmra.mxu0 %v8177
        %v8328 = vpop.f32.mrf.mxu0
        %v8329 = vadd.f32 %v341, %v8328
        %v8330 = vpop.f32.mrf.mxu0
        %8331 = vmatprep.mubr.f32.mxu0 0.0
        %8332 = vmatmul.mubr.f32.gmra.mxu0 %v8179
        %v8333 = vpop.f32.mrf.mxu0
        %v8334 = vadd.f32 %v342, %v8333
        %v8335 = vpop.f32.mrf.mxu0
        %8336 = vmatprep.mubr.f32.mxu0 0.0
        %8337 = vmatmul.mubr.f32.gmra.mxu0 %v8181
        %v8338 = vpop.f32.mrf.mxu0
        %v8339 = vadd.f32 %v343, %v8338
        %v8340 = vpop.f32.mrf.mxu0
        %8341 = vmatprep.mubr.f32.mxu0 0.0
        %8342 = vmatmul.mubr.f32.gmra.mxu0 %v8183
        %v8343 = vpop.f32.mrf.mxu0
        %v8344 = vadd.f32 %v344, %v8343
        %v8345 = vpop.f32.mrf.mxu0
        %8346 = vmatprep.mubr.f32.mxu0 0.0
        %8347 = vmatmul.mubr.f32.gmra.mxu0 %v8185
        %v8348 = vpop.f32.mrf.mxu0
        %v8349 = vadd.f32 %v345, %v8348
        %v8350 = vpop.f32.mrf.mxu0
        %8351 = vmatprep.mubr.f32.mxu0 0.0
        %8352 = vmatmul.mubr.f32.gmra.mxu0 %v8187
        %v8353 = vpop.f32.mrf.mxu0
        %v8354 = vadd.f32 %v346, %v8353
        %v8355 = vpop.f32.mrf.mxu0
        %8356 = vmatprep.mubr.f32.mxu0 0.0
        %8357 = vmatmul.mubr.f32.gmra.mxu0 %v8189
        %v8358 = vpop.f32.mrf.mxu0
        %v8359 = vadd.f32 %v347, %v8358
        %v8360 = vpop.f32.mrf.mxu0
        %8361 = vmatprep.mubr.f32.mxu0 0.0
        %8362 = vmatmul.mubr.f32.gmra.mxu0 %v8191
        %v8363 = vpop.f32.mrf.mxu0
        %v8364 = vadd.f32 %v348, %v8363
        %v8365 = vpop.f32.mrf.mxu0
        %8366 = vmatprep.mubr.f32.mxu0 0.0
        %8367 = vmatmul.mubr.f32.gmra.mxu0 %v8193
        %v8368 = vpop.f32.mrf.mxu0
        %v8369 = vadd.f32 %v349, %v8368
        %v8370 = vpop.f32.mrf.mxu0
        %8371 = vdwg.mxu0
        %8372 = vmax.xlane.f32.xlu0 %v8294
        %v8373 = vpop.xlane.xlu0 %8372
        %8374 = vmax.xlane.f32.xlu0 %v8299
        %v8375 = vpop.xlane.xlu0 %8374
        %8376 = vmax.xlane.f32.xlu0 %v8304
        %v8377 = vpop.xlane.xlu0 %8376
        %8378 = vmax.xlane.f32.xlu0 %v8309
        %v8379 = vpop.xlane.xlu0 %8378
        %8380 = vmax.xlane.f32.xlu0 %v8314
        %v8381 = vpop.xlane.xlu0 %8380
        %8382 = vmax.xlane.f32.xlu0 %v8319
        %v8383 = vpop.xlane.xlu0 %8382
        %8384 = vmax.xlane.f32.xlu0 %v8324
        %v8385 = vpop.xlane.xlu0 %8384
        %8386 = vmax.xlane.f32.xlu0 %v8329
        %v8387 = vpop.xlane.xlu0 %8386
        %8388 = vmax.xlane.f32.xlu0 %v8334
        %v8389 = vpop.xlane.xlu0 %8388
        %8390 = vmax.xlane.f32.xlu0 %v8339
        %v8391 = vpop.xlane.xlu0 %8390
        %8392 = vmax.xlane.f32.xlu0 %v8344
        %v8393 = vpop.xlane.xlu0 %8392
        %8394 = vmax.xlane.f32.xlu0 %v8349
        %v8395 = vpop.xlane.xlu0 %8394
        %8396 = vmax.xlane.f32.xlu0 %v8354
        %v8397 = vpop.xlane.xlu0 %8396
        %8398 = vmax.xlane.f32.xlu0 %v8359
        %v8399 = vpop.xlane.xlu0 %8398
        %8400 = vmax.xlane.f32.xlu0 %v8364
        %v8401 = vpop.xlane.xlu0 %8400
        %8402 = vmax.xlane.f32.xlu0 %v8369
        %v8403 = vpop.xlane.xlu0 %8402
        %v8404 = vsub.f32 %v8294, %v8373
        %v8405 = vsub.f32 %v8299, %v8375
        %v8406 = vsub.f32 %v8304, %v8377
        %v8407 = vsub.f32 %v8309, %v8379
        %v8408 = vsub.f32 %v8314, %v8381
        %v8409 = vsub.f32 %v8319, %v8383
        %v8410 = vsub.f32 %v8324, %v8385
        %v8411 = vsub.f32 %v8329, %v8387
        %v8412 = vsub.f32 %v8334, %v8389
        %v8413 = vsub.f32 %v8339, %v8391
        %v8414 = vsub.f32 %v8344, %v8393
        %v8415 = vsub.f32 %v8349, %v8395
        %v8416 = vsub.f32 %v8354, %v8397
        %v8417 = vsub.f32 %v8359, %v8399
        %v8418 = vsub.f32 %v8364, %v8401
        %v8419 = vsub.f32 %v8369, %v8403
        %v8420 = vmul.f32 %v8404, 1.442695
        %v8421 = vpow.pop %v8420
        %v8422 = vmul.f32 %v8405, 1.442695
        %v8423 = vpow.pop %v8422
        %v8424 = vmul.f32 %v8406, 1.442695
        %v8425 = vpow.pop %v8424
        %v8426 = vmul.f32 %v8407, 1.442695
        %v8427 = vpow.pop %v8426
        %v8428 = vmul.f32 %v8408, 1.442695
        %v8429 = vpow.pop %v8428
        %v8430 = vmul.f32 %v8409, 1.442695
        %v8431 = vpow.pop %v8430
        %v8432 = vmul.f32 %v8410, 1.442695
        %v8433 = vpow.pop %v8432
        %v8434 = vmul.f32 %v8411, 1.442695
        %v8435 = vpow.pop %v8434
        %v8436 = vmul.f32 %v8412, 1.442695
        %v8437 = vpow.pop %v8436
        %v8438 = vmul.f32 %v8413, 1.442695
        %v8439 = vpow.pop %v8438
        %v8440 = vmul.f32 %v8414, 1.442695
        %v8441 = vpow.pop %v8440
        %v8442 = vmul.f32 %v8415, 1.442695
        %v8443 = vpow.pop %v8442
        %v8444 = vmul.f32 %v8416, 1.442695
        %v8445 = vpow.pop %v8444
        %v8446 = vmul.f32 %v8417, 1.442695
        %v8447 = vpow.pop %v8446
        %v8448 = vmul.f32 %v8418, 1.442695
        %v8449 = vpow.pop %v8448
        %v8450 = vmul.f32 %v8419, 1.442695
        %v8451 = vpow.pop %v8450
        %8452 = vadd.xlane.f32.xlu0 %v8421
        %v8453 = vpop.xlane.xlu0 %8452
        %8454 = vadd.xlane.f32.xlu0 %v8423
        %v8455 = vpop.xlane.xlu0 %8454
        %8456 = vadd.xlane.f32.xlu0 %v8425
        %v8457 = vpop.xlane.xlu0 %8456
        %8458 = vadd.xlane.f32.xlu0 %v8427
        %v8459 = vpop.xlane.xlu0 %8458
        %8460 = vadd.xlane.f32.xlu0 %v8429
        %v8461 = vpop.xlane.xlu0 %8460
        %8462 = vadd.xlane.f32.xlu0 %v8431
        %v8463 = vpop.xlane.xlu0 %8462
        %8464 = vadd.xlane.f32.xlu0 %v8433
        %v8465 = vpop.xlane.xlu0 %8464
        %8466 = vadd.xlane.f32.xlu0 %v8435
        %v8467 = vpop.xlane.xlu0 %8466
        %8468 = vadd.xlane.f32.xlu0 %v8437
        %v8469 = vpop.xlane.xlu0 %8468
        %8470 = vadd.xlane.f32.xlu0 %v8439
        %v8471 = vpop.xlane.xlu0 %8470
        %8472 = vadd.xlane.f32.xlu0 %v8441
        %v8473 = vpop.xlane.xlu0 %8472
        %8474 = vadd.xlane.f32.xlu0 %v8443
        %v8475 = vpop.xlane.xlu0 %8474
        %8476 = vadd.xlane.f32.xlu0 %v8445
        %v8477 = vpop.xlane.xlu0 %8476
        %8478 = vadd.xlane.f32.xlu0 %v8447
        %v8479 = vpop.xlane.xlu0 %8478
        %8480 = vadd.xlane.f32.xlu0 %v8449
        %v8481 = vpop.xlane.xlu0 %8480
        %8482 = vadd.xlane.f32.xlu0 %v8451
        %v8483 = vpop.xlane.xlu0 %8482
        %v8484 = vrcp.pop %v8453
        %v8485 = vrcp.pop %v8455
        %v8486 = vrcp.pop %v8457
        %v8487 = vrcp.pop %v8459
        %v8488 = vrcp.pop %v8461
        %v8489 = vrcp.pop %v8463
        %v8490 = vrcp.pop %v8465
        %v8491 = vrcp.pop %v8467
        %v8492 = vrcp.pop %v8469
        %v8493 = vrcp.pop %v8471
        %v8494 = vrcp.pop %v8473
        %v8495 = vrcp.pop %v8475
        %v8496 = vrcp.pop %v8477
        %v8497 = vrcp.pop %v8479
        %v8498 = vrcp.pop %v8481
        %v8499 = vrcp.pop %v8483
        %v8500 = vmul.f32 %v8421, %v8484
        %v8501 = vmul.f32 %v8423, %v8485
        %v8502 = vmul.f32 %v8425, %v8486
        %v8503 = vmul.f32 %v8427, %v8487
        %v8504 = vmul.f32 %v8429, %v8488
        %v8505 = vmul.f32 %v8431, %v8489
        %v8506 = vmul.f32 %v8433, %v8490
        %v8507 = vmul.f32 %v8435, %v8491
        %v8508 = vmul.f32 %v8437, %v8492
        %v8509 = vmul.f32 %v8439, %v8493
        %v8510 = vmul.f32 %v8441, %v8494
        %v8511 = vmul.f32 %v8443, %v8495
        %v8512 = vmul.f32 %v8445, %v8496
        %v8513 = vmul.f32 %v8447, %v8497
        %v8514 = vmul.f32 %v8449, %v8498
        %v8515 = vmul.f32 %v8451, %v8499
        %8516 = vrot.lane.b32.xlu0 %v7427, 88
        %v8517 = vpop.permute.xlu0 %8516
        %8518 = vrot.lane.b32.xlu0 %v7432, 88
        %v8519 = vpop.permute.xlu0 %8518
        %8520 = vrot.lane.b32.xlu0 %v7437, 88
        %v8521 = vpop.permute.xlu0 %8520
        %8522 = vrot.lane.b32.xlu0 %v7442, 88
        %v8523 = vpop.permute.xlu0 %8522
        %8524 = vrot.lane.b32.xlu0 %v7447, 88
        %v8525 = vpop.permute.xlu0 %8524
        %8526 = vrot.lane.b32.xlu0 %v7452, 88
        %v8527 = vpop.permute.xlu0 %8526
        %8528 = vrot.lane.b32.xlu0 %v7457, 88
        %v8529 = vpop.permute.xlu0 %8528
        %8530 = vrot.lane.b32.xlu0 %v7462, 88
        %v8531 = vpop.permute.xlu0 %8530
        %8532 = vrot.lane.b32.xlu0 %v7467, 88
        %v8533 = vpop.permute.xlu0 %8532
        %8534 = vrot.lane.b32.xlu0 %v7472, 88
        %v8535 = vpop.permute.xlu0 %8534
        %8536 = vrot.lane.b32.xlu0 %v7477, 88
        %v8537 = vpop.permute.xlu0 %8536
        %8538 = vrot.lane.b32.xlu0 %v7482, 88
        %v8539 = vpop.permute.xlu0 %8538
        %8540 = vrot.lane.b32.xlu0 %v7487, 88
        %v8541 = vpop.permute.xlu0 %8540
        %8542 = vrot.lane.b32.xlu0 %v7492, 88
        %v8543 = vpop.permute.xlu0 %8542
        %8544 = vrot.lane.b32.xlu0 %v7497, 88
        %v8545 = vpop.permute.xlu0 %8544
        %8546 = vrot.lane.b32.xlu0 %v7502, 88
        %v8547 = vpop.permute.xlu0 %8546
        %8564 = vmatprep.subr.mxu0 0.0
        %8565 = vmatpush1.msra.mxu0 %v8547
        %8566 = vmatprep.subr.mxu0 0.0
        %8567 = vmatpush1.msra.mxu0 %v8545
        %8568 = vmatprep.subr.mxu0 0.0
        %8569 = vmatpush1.msra.mxu0 %v8543
        %8570 = vmatprep.subr.mxu0 0.0
        %8571 = vmatpush1.msra.mxu0 %v8541
        %8572 = vmatprep.subr.mxu0 0.0
        %8573 = vmatpush1.msra.mxu0 %v8539
        %8574 = vmatprep.subr.mxu0 0.0
        %8575 = vmatpush1.msra.mxu0 %v8537
        %8576 = vmatprep.subr.mxu0 0.0
        %8577 = vmatpush1.msra.mxu0 %v8535
        %8578 = vmatprep.subr.mxu0 0.0
        %8579 = vmatpush1.msra.mxu0 %v8533
        %8580 = vmatprep.subr.mxu0 0.0
        %8581 = vmatpush1.msra.mxu0 %v8531
        %8582 = vmatprep.subr.mxu0 0.0
        %8583 = vmatpush1.msra.mxu0 %v8529
        %8584 = vmatprep.subr.mxu0 0.0
        %8585 = vmatpush1.msra.mxu0 %v8527
        %8586 = vmatprep.subr.mxu0 0.0
        %8587 = vmatpush1.msra.mxu0 %v8525
        %8588 = vmatprep.subr.mxu0 0.0
        %8589 = vmatpush1.msra.mxu0 %v8523
        %8590 = vmatprep.subr.mxu0 0.0
        %8591 = vmatpush1.msra.mxu0 %v8521
        %8592 = vmatprep.subr.mxu0 0.0
        %8593 = vmatpush1.msra.mxu0 %v8519
        %8594 = vmatprep.subr.mxu0 0.0
        %8595 = vmatpush1.msra.mxu0 %v8517
        %8596 = vmatprep.subr.mxu0 0.0
        %8597 = vmatpush2.msra.mxu0 0.0
        %8598 = vmatprep.subr.mxu0 0.0
        %8599 = vmatpush2.msra.mxu0 0.0
        %8600 = vmatprep.subr.mxu0 0.0
        %8601 = vmatpush2.msra.mxu0 0.0
        %8602 = vmatprep.subr.mxu0 0.0
        %8603 = vmatpush2.msra.mxu0 0.0
        %8604 = vmatprep.subr.mxu0 0.0
        %8605 = vmatpush2.msra.mxu0 0.0
        %8606 = vmatprep.subr.mxu0 0.0
        %8607 = vmatpush2.msra.mxu0 0.0
        %8608 = vmatprep.subr.mxu0 0.0
        %8609 = vmatpush2.msra.mxu0 0.0
        %8610 = vmatprep.subr.mxu0 0.0
        %8611 = vmatpush2.msra.mxu0 0.0
        %8612 = vmatprep.subr.mxu0 0.0
        %8613 = vmatpush2.msra.mxu0 0.0
        %8614 = vmatprep.subr.mxu0 0.0
        %8615 = vmatpush2.msra.mxu0 0.0
        %8616 = vmatprep.subr.mxu0 0.0
        %8617 = vmatpush2.msra.mxu0 0.0
        %8618 = vmatprep.subr.mxu0 0.0
        %8619 = vmatpush2.msra.mxu0 0.0
        %8620 = vmatprep.subr.mxu0 0.0
        %8621 = vmatpush2.msra.mxu0 0.0
        %8622 = vmatprep.subr.mxu0 0.0
        %8623 = vmatpush2.msra.mxu0 0.0
        %8624 = vmatprep.subr.mxu0 0.0
        %8625 = vmatpush2.msra.mxu0 0.0
        %8626 = vmatprep.subr.mxu0 0.0
        %8627 = vmatpush2.msra.mxu0 0.0
        %8628 = vmatprep.mubr.f32.mxu0 0.0
        %8629 = vmatmul.mubr.f32.gmra.mxu0 %v8500
        %v8630 = vpop.f32.mrf.mxu0
        %v8631 = vadd.f32 0.0, %v8630
        %v8632 = vpop.f32.mrf.mxu0
        %8633 = vmatprep.mubr.f32.mxu0 0.0
        %8634 = vmatmul.mubr.f32.gmra.mxu0 %v8501
        %v8635 = vpop.f32.mrf.mxu0
        %v8636 = vadd.f32 0.0, %v8635
        %v8637 = vpop.f32.mrf.mxu0
        %8638 = vmatprep.mubr.f32.mxu0 0.0
        %8639 = vmatmul.mubr.f32.gmra.mxu0 %v8502
        %v8640 = vpop.f32.mrf.mxu0
        %v8641 = vadd.f32 0.0, %v8640
        %v8642 = vpop.f32.mrf.mxu0
        %8643 = vmatprep.mubr.f32.mxu0 0.0
        %8644 = vmatmul.mubr.f32.gmra.mxu0 %v8503
        %v8645 = vpop.f32.mrf.mxu0
        %v8646 = vadd.f32 0.0, %v8645
        %v8647 = vpop.f32.mrf.mxu0
        %8648 = vmatprep.mubr.f32.mxu0 0.0
        %8649 = vmatmul.mubr.f32.gmra.mxu0 %v8504
        %v8650 = vpop.f32.mrf.mxu0
        %v8651 = vadd.f32 0.0, %v8650
        %v8652 = vpop.f32.mrf.mxu0
        %8653 = vmatprep.mubr.f32.mxu0 0.0
        %8654 = vmatmul.mubr.f32.gmra.mxu0 %v8505
        %v8655 = vpop.f32.mrf.mxu0
        %v8656 = vadd.f32 0.0, %v8655
        %v8657 = vpop.f32.mrf.mxu0
        %8658 = vmatprep.mubr.f32.mxu0 0.0
        %8659 = vmatmul.mubr.f32.gmra.mxu0 %v8506
        %v8660 = vpop.f32.mrf.mxu0
        %v8661 = vadd.f32 0.0, %v8660
        %v8662 = vpop.f32.mrf.mxu0
        %8663 = vmatprep.mubr.f32.mxu0 0.0
        %8664 = vmatmul.mubr.f32.gmra.mxu0 %v8507
        %v8665 = vpop.f32.mrf.mxu0
        %v8666 = vadd.f32 0.0, %v8665
        %v8667 = vpop.f32.mrf.mxu0
        %8668 = vmatprep.mubr.f32.mxu0 0.0
        %8669 = vmatmul.mubr.f32.gmra.mxu0 %v8508
        %v8670 = vpop.f32.mrf.mxu0
        %v8671 = vadd.f32 0.0, %v8670
        %v8672 = vpop.f32.mrf.mxu0
        %8673 = vmatprep.mubr.f32.mxu0 0.0
        %8674 = vmatmul.mubr.f32.gmra.mxu0 %v8509
        %v8675 = vpop.f32.mrf.mxu0
        %v8676 = vadd.f32 0.0, %v8675
        %v8677 = vpop.f32.mrf.mxu0
        %8678 = vmatprep.mubr.f32.mxu0 0.0
        %8679 = vmatmul.mubr.f32.gmra.mxu0 %v8510
        %v8680 = vpop.f32.mrf.mxu0
        %v8681 = vadd.f32 0.0, %v8680
        %v8682 = vpop.f32.mrf.mxu0
        %8683 = vmatprep.mubr.f32.mxu0 0.0
        %8684 = vmatmul.mubr.f32.gmra.mxu0 %v8511
        %v8685 = vpop.f32.mrf.mxu0
        %v8686 = vadd.f32 0.0, %v8685
        %v8687 = vpop.f32.mrf.mxu0
        %8688 = vmatprep.mubr.f32.mxu0 0.0
        %8689 = vmatmul.mubr.f32.gmra.mxu0 %v8512
        %v8690 = vpop.f32.mrf.mxu0
        %v8691 = vadd.f32 0.0, %v8690
        %v8692 = vpop.f32.mrf.mxu0
        %8693 = vmatprep.mubr.f32.mxu0 0.0
        %8694 = vmatmul.mubr.f32.gmra.mxu0 %v8513
        %v8695 = vpop.f32.mrf.mxu0
        %v8696 = vadd.f32 0.0, %v8695
        %v8697 = vpop.f32.mrf.mxu0
        %8698 = vmatprep.mubr.f32.mxu0 0.0
        %8699 = vmatmul.mubr.f32.gmra.mxu0 %v8514
        %v8700 = vpop.f32.mrf.mxu0
        %v8701 = vadd.f32 0.0, %v8700
        %v8702 = vpop.f32.mrf.mxu0
        %8703 = vmatprep.mubr.f32.mxu0 0.0
        %8704 = vmatmul.mubr.f32.gmra.mxu0 %v8515
        %v8705 = vpop.f32.mrf.mxu0
        %v8706 = vadd.f32 0.0, %v8705
        %v8707 = vpop.f32.mrf.mxu0
        %8708 = vdwg.mxu0
        %8725 = vrot.lane.b32.xlu0 %v8631, 8
        %v8726 = vpop.permute.xlu0 %8725
        %8727 = vrot.lane.b32.xlu0 %v8636, 8
        %v8728 = vpop.permute.xlu0 %8727
        %8729 = vrot.lane.b32.xlu0 %v8641, 8
        %v8730 = vpop.permute.xlu0 %8729
        %8731 = vrot.lane.b32.xlu0 %v8646, 8
        %v8732 = vpop.permute.xlu0 %8731
        %8733 = vrot.lane.b32.xlu0 %v8651, 8
        %v8734 = vpop.permute.xlu0 %8733
        %8735 = vrot.lane.b32.xlu0 %v8656, 8
        %v8736 = vpop.permute.xlu0 %8735
        %8737 = vrot.lane.b32.xlu0 %v8661, 8
        %v8738 = vpop.permute.xlu0 %8737
        %8739 = vrot.lane.b32.xlu0 %v8666, 8
        %v8740 = vpop.permute.xlu0 %8739
        %8741 = vrot.lane.b32.xlu0 %v8671, 8
        %v8742 = vpop.permute.xlu0 %8741
        %8743 = vrot.lane.b32.xlu0 %v8676, 8
        %v8744 = vpop.permute.xlu0 %8743
        %8745 = vrot.lane.b32.xlu0 %v8681, 8
        %v8746 = vpop.permute.xlu0 %8745
        %8747 = vrot.lane.b32.xlu0 %v8686, 8
        %v8748 = vpop.permute.xlu0 %8747
        %8749 = vrot.lane.b32.xlu0 %v8691, 8
        %v8750 = vpop.permute.xlu0 %8749
        %8751 = vrot.lane.b32.xlu0 %v8696, 8
        %v8752 = vpop.permute.xlu0 %8751
        %8753 = vrot.lane.b32.xlu0 %v8701, 8
        %v8754 = vpop.permute.xlu0 %8753
        %8755 = vrot.lane.b32.xlu0 %v8706, 8
        %v8756 = vpop.permute.xlu0 %8755
        %v8773 = vsel %vm1050, %v8021, %v8726
        %v8774 = vsel %vm1050, %v8026, %v8728
        %v8775 = vsel %vm1050, %v8031, %v8730
        %v8776 = vsel %vm1050, %v8036, %v8732
        %v8777 = vsel %vm1050, %v8041, %v8734
        %v8778 = vsel %vm1050, %v8046, %v8736
        %v8779 = vsel %vm1050, %v8051, %v8738
        %v8780 = vsel %vm1050, %v8056, %v8740
        %v8781 = vsel %vm1050, %v8061, %v8742
        %v8782 = vsel %vm1050, %v8066, %v8744
        %v8783 = vsel %vm1050, %v8071, %v8746
        %v8784 = vsel %vm1050, %v8076, %v8748
        %v8785 = vsel %vm1050, %v8081, %v8750
        %v8786 = vsel %vm1050, %v8086, %v8752
        %v8787 = vsel %vm1050, %v8091, %v8754
        %v8788 = vsel %vm1050, %v8096, %v8756
        %v8789 = vld [vmem:[%s7] sm:$0xff]
        %v8790 = vld [vmem:[%s7 + $0x8] sm:$0xff]
        %v8791 = vld [vmem:[%s8] sm:$0x1]
        %v8793 = vlaneseq
        %v8794 = vshrl.u32 %v8793, 7
        %v8795 = vsub.s32 0, %v8794
        %v8796 = vrot.slane %v8791, %v8795
        %v8799 = vsel %vm375, %v8773, 0
        %v8802 = vsel %vm375, %v8774, 0
        %v8805 = vsel %vm375, %v8775, 0
        %v8808 = vsel %vm375, %v8776, 0
        %v8811 = vsel %vm375, %v8777, 0
        %v8814 = vsel %vm375, %v8778, 0
        %v8817 = vsel %vm375, %v8779, 0
        %v8820 = vsel %vm375, %v8780, 0
        %v8823 = vsel %vm375, %v8781, 0
        %v8826 = vsel %vm375, %v8782, 0
        %v8829 = vsel %vm375, %v8783, 0
        %v8832 = vsel %vm375, %v8784, 0
        %v8835 = vsel %vm375, %v8785, 0
        %v8838 = vsel %vm375, %v8786, 0
        %v8841 = vsel %vm375, %v8787, 0
        %v8844 = vsel %vm375, %v8788, 0
        %8846 = vmatprep.subr.mxu0 0.0
        %8847 = vmatpush1.msra.mxu0 0.0
        %8848 = vmatprep.subr.mxu0 0.0
        %8849 = vmatpush1.msra.mxu0 0.0
        %8850 = vmatprep.subr.mxu0 0.0
        %8851 = vmatpush1.msra.mxu0 0.0
        %8852 = vmatprep.subr.mxu0 0.0
        %8853 = vmatpush1.msra.mxu0 0.0
        %8854 = vmatprep.subr.mxu0 0.0
        %8855 = vmatpush1.msra.mxu0 0.0
        %8856 = vmatprep.subr.mxu0 0.0
        %8857 = vmatpush1.msra.mxu0 0.0
        %8858 = vmatprep.subr.mxu0 0.0
        %8859 = vmatpush1.msra.mxu0 0.0
        %8860 = vmatprep.subr.mxu0 0.0
        %8861 = vmatpush1.msra.mxu0 0.0
        %8862 = vmatprep.subr.mxu0 0.0
        %8863 = vmatpush1.msra.mxu0 0.0
        %8864 = vmatprep.subr.mxu0 0.0
        %8865 = vmatpush1.msra.mxu0 0.0
        %8866 = vmatprep.subr.mxu0 0.0
        %8867 = vmatpush1.msra.mxu0 0.0
        %8868 = vmatprep.subr.mxu0 0.0
        %8869 = vmatpush1.msra.mxu0 0.0
        %8870 = vmatprep.subr.mxu0 0.0
        %8871 = vmatpush1.msra.mxu0 0.0
        %8872 = vmatprep.subr.mxu0 0.0
        %8873 = vmatpush1.msra.mxu0 0.0
        %8874 = vmatprep.subr.mxu0 0.0
        %8875 = vmatpush1.msra.mxu0 %v8790
        %8876 = vmatprep.subr.mxu0 0.0
        %8877 = vmatpush1.msra.mxu0 %v8789
        %8878 = vmatprep.subr.mxu0 0.0
        %8879 = vmatpush2.msra.mxu0 0.0
        %8880 = vmatprep.subr.mxu0 0.0
        %8881 = vmatpush2.msra.mxu0 0.0
        %8882 = vmatprep.subr.mxu0 0.0
        %8883 = vmatpush2.msra.mxu0 0.0
        %8884 = vmatprep.subr.mxu0 0.0
        %8885 = vmatpush2.msra.mxu0 0.0
        %8886 = vmatprep.subr.mxu0 0.0
        %8887 = vmatpush2.msra.mxu0 0.0
        %8888 = vmatprep.subr.mxu0 0.0
        %8889 = vmatpush2.msra.mxu0 0.0
        %8890 = vmatprep.subr.mxu0 0.0
        %8891 = vmatpush2.msra.mxu0 0.0
        %8892 = vmatprep.subr.mxu0 0.0
        %8893 = vmatpush2.msra.mxu0 0.0
        %8894 = vmatprep.subr.mxu0 0.0
        %8895 = vmatpush2.msra.mxu0 0.0
        %8896 = vmatprep.subr.mxu0 0.0
        %8897 = vmatpush2.msra.mxu0 0.0
        %8898 = vmatprep.subr.mxu0 0.0
        %8899 = vmatpush2.msra.mxu0 0.0
        %8900 = vmatprep.subr.mxu0 0.0
        %8901 = vmatpush2.msra.mxu0 0.0
        %8902 = vmatprep.subr.mxu0 0.0
        %8903 = vmatpush2.msra.mxu0 0.0
        %8904 = vmatprep.subr.mxu0 0.0
        %8905 = vmatpush2.msra.mxu0 0.0
        %8906 = vmatprep.subr.mxu0 0.0
        %8907 = vmatpush2.msra.mxu0 0.0
        %8908 = vmatprep.subr.mxu0 0.0
        %8909 = vmatpush2.msra.mxu0 0.0
        %8910 = vmatprep.mubr.f32.mxu0 0.0
        %8911 = vmatmul.mubr.f32.gmra.mxu0 %v8799
        %v8912 = vpop.f32.mrf.mxu0
        %v8913 = vadd.f32 %v8796, %v8912
        %v8914 = vpop.f32.mrf.mxu0
        %8915 = vmatprep.mubr.f32.mxu0 0.0
        %8916 = vmatmul.mubr.f32.gmra.mxu0 %v8802
        %v8917 = vpop.f32.mrf.mxu0
        %v8918 = vadd.f32 %v8796, %v8917
        %v8919 = vpop.f32.mrf.mxu0
        %8920 = vmatprep.mubr.f32.mxu0 0.0
        %8921 = vmatmul.mubr.f32.gmra.mxu0 %v8805
        %v8922 = vpop.f32.mrf.mxu0
        %v8923 = vadd.f32 %v8796, %v8922
        %v8924 = vpop.f32.mrf.mxu0
        %8925 = vmatprep.mubr.f32.mxu0 0.0
        %8926 = vmatmul.mubr.f32.gmra.mxu0 %v8808
        %v8927 = vpop.f32.mrf.mxu0
        %v8928 = vadd.f32 %v8796, %v8927
        %v8929 = vpop.f32.mrf.mxu0
        %8930 = vmatprep.mubr.f32.mxu0 0.0
        %8931 = vmatmul.mubr.f32.gmra.mxu0 %v8811
        %v8932 = vpop.f32.mrf.mxu0
        %v8933 = vadd.f32 %v8796, %v8932
        %v8934 = vpop.f32.mrf.mxu0
        %8935 = vmatprep.mubr.f32.mxu0 0.0
        %8936 = vmatmul.mubr.f32.gmra.mxu0 %v8814
        %v8937 = vpop.f32.mrf.mxu0
        %v8938 = vadd.f32 %v8796, %v8937
        %v8939 = vpop.f32.mrf.mxu0
        %8940 = vmatprep.mubr.f32.mxu0 0.0
        %8941 = vmatmul.mubr.f32.gmra.mxu0 %v8817
        %v8942 = vpop.f32.mrf.mxu0
        %v8943 = vadd.f32 %v8796, %v8942
        %v8944 = vpop.f32.mrf.mxu0
        %8945 = vmatprep.mubr.f32.mxu0 0.0
        %8946 = vmatmul.mubr.f32.gmra.mxu0 %v8820
        %v8947 = vpop.f32.mrf.mxu0
        %v8948 = vadd.f32 %v8796, %v8947
        %v8949 = vpop.f32.mrf.mxu0
        %8950 = vmatprep.mubr.f32.mxu0 0.0
        %8951 = vmatmul.mubr.f32.gmra.mxu0 %v8823
        %v8952 = vpop.f32.mrf.mxu0
        %v8953 = vadd.f32 %v8796, %v8952
        %v8954 = vpop.f32.mrf.mxu0
        %8955 = vmatprep.mubr.f32.mxu0 0.0
        %8956 = vmatmul.mubr.f32.gmra.mxu0 %v8826
        %v8957 = vpop.f32.mrf.mxu0
        %v8958 = vadd.f32 %v8796, %v8957
        %v8959 = vpop.f32.mrf.mxu0
        %8960 = vmatprep.mubr.f32.mxu0 0.0
        %8961 = vmatmul.mubr.f32.gmra.mxu0 %v8829
        %v8962 = vpop.f32.mrf.mxu0
        %v8963 = vadd.f32 %v8796, %v8962
        %v8964 = vpop.f32.mrf.mxu0
        %8965 = vmatprep.mubr.f32.mxu0 0.0
        %8966 = vmatmul.mubr.f32.gmra.mxu0 %v8832
        %v8967 = vpop.f32.mrf.mxu0
        %v8968 = vadd.f32 %v8796, %v8967
        %v8969 = vpop.f32.mrf.mxu0
        %8970 = vmatprep.mubr.f32.mxu0 0.0
        %8971 = vmatmul.mubr.f32.gmra.mxu0 %v8835
        %v8972 = vpop.f32.mrf.mxu0
        %v8973 = vadd.f32 %v8796, %v8972
        %v8974 = vpop.f32.mrf.mxu0
        %8975 = vmatprep.mubr.f32.mxu0 0.0
        %8976 = vmatmul.mubr.f32.gmra.mxu0 %v8838
        %v8977 = vpop.f32.mrf.mxu0
        %v8978 = vadd.f32 %v8796, %v8977
        %v8979 = vpop.f32.mrf.mxu0
        %8980 = vmatprep.mubr.f32.mxu0 0.0
        %8981 = vmatmul.mubr.f32.gmra.mxu0 %v8841
        %v8982 = vpop.f32.mrf.mxu0
        %v8983 = vadd.f32 %v8796, %v8982
        %v8984 = vpop.f32.mrf.mxu0
        %8985 = vmatprep.mubr.f32.mxu0 0.0
        %8986 = vmatmul.mubr.f32.gmra.mxu0 %v8844
        %v8987 = vpop.f32.mrf.mxu0
        %v8988 = vadd.f32 %v8796, %v8987
        %v8989 = vpop.f32.mrf.mxu0
        %8990 = vdwg.mxu0
        %v8991 = vadd.f32 %v8913, %v6996
        %v8992 = vadd.f32 %v8918, %v7001
        %v8993 = vadd.f32 %v8923, %v7006
        %v8994 = vadd.f32 %v8928, %v7011
        %v8995 = vadd.f32 %v8933, %v7016
        %v8996 = vadd.f32 %v8938, %v7021
        %v8997 = vadd.f32 %v8943, %v7026
        %v8998 = vadd.f32 %v8948, %v7031
        %v8999 = vadd.f32 %v8953, %v7036
        %v9000 = vadd.f32 %v8958, %v7041
        %v9001 = vadd.f32 %v8963, %v7046
        %v9002 = vadd.f32 %v8968, %v7051
        %v9003 = vadd.f32 %v8973, %v7056
        %v9004 = vadd.f32 %v8978, %v7061
        %v9005 = vadd.f32 %v8983, %v7066
        %v9006 = vadd.f32 %v8988, %v7071
        %9007 = vst.msk [vmem:[%s326 + $0x180] sm:$0xff] %vm2505, %v8991
        %9008 = vst.msk [vmem:[%s326 + $0x188] sm:$0xff] %vm2505, %v8992
        %9009 = vst.msk [vmem:[%s326 + $0x190] sm:$0xff] %vm2505, %v8993
        %9010 = vst.msk [vmem:[%s326 + $0x198] sm:$0xff] %vm2505, %v8994
        %9011 = vst.msk [vmem:[%s326 + $0x1a0] sm:$0xff] %vm2505, %v8995
        %9012 = vst.msk [vmem:[%s326 + $0x1a8] sm:$0xff] %vm2505, %v8996
        %9013 = vst.msk [vmem:[%s326 + $0x1b0] sm:$0xff] %vm2505, %v8997
        %9014 = vst.msk [vmem:[%s326 + $0x1b8] sm:$0xff] %vm2505, %v8998
        %9015 = vst.msk [vmem:[%s326 + $0x1c0] sm:$0xff] %vm2505, %v8999
        %9016 = vst.msk [vmem:[%s326 + $0x1c8] sm:$0xff] %vm2505, %v9000
        %9017 = vst.msk [vmem:[%s326 + $0x1d0] sm:$0xff] %vm2505, %v9001
        %9018 = vst.msk [vmem:[%s326 + $0x1d8] sm:$0xff] %vm2505, %v9002
        %9019 = vst.msk [vmem:[%s326 + $0x1e0] sm:$0xff] %vm2505, %v9003
        %9020 = vst.msk [vmem:[%s326 + $0x1e8] sm:$0xff] %vm2505, %v9004
        %9021 = vst.msk [vmem:[%s326 + $0x1f0] sm:$0xff] %vm2505, %v9005
        %9022 = vst.msk [vmem:[%s326 + $0x1f8] sm:$0xff] %vm2505, %v9006
        %s9023 = sand.u32 %s225, 1
        %s9024 = scalar_lea.sflag [#allocation3], %s9023
        %s9025 = sand.u32 %s225, 1
        %s9026 = smul.addr %s9025, 512
        %s9027 = scalar_lea.vmem [#allocation2], %s9026
        // Predicated region
        $region57: #{attention_block_a_forward.1} parent=55 // pred_check
          %p9028 = pneg %p235
        $region58: #{attention_block_a_forward.1} parent=55 // pred_check_branch
          %9030 = sbr.rel (%p9028) target = $region60
        $region59: #{attention_block_a_forward.1} parent=55 // pred_region
          %s9031 = smul.u32 64, %s23
          %s9033 = ssub.s32 8192, 8192
          %9034 = vsyncadd %s9024, %s9033
          %s9035 = smul.addr %s9031, 128
          %s9036 = scalar_lea.hbm %s9, %s9035
          %s9037 = sshll.u32 %s9027, 4
          %s9038 = int_to_ptr.vmem [resolvable:$true] %s9037
          %9043 = dma.vmem_to_hbm [thread:$0]  %s9038, 8192, %s9036, %s9024, 128, 128, 8
        $region60: #{attention_block_a_forward.1} parent=55 // pred_fallthru
          _
      $region56: #{attention_block_a_forward.1} parent=5 // pred_fallthru
        _
      %p9044 = scmp.le.s32.totalorder 2, %s18
      // Predicated region
      $region61: #{attention_block_a_forward.1} parent=5 // pred_check
        %p9045 = pneg %p9044
      $region62: #{attention_block_a_forward.1} parent=5 // pred_check_branch
        %9047 = sbr.rel (%p9045) target = $region64
      $region63: #{attention_block_a_forward.1} parent=5 // pred_region
        %s9048 = ssub.s32 %s18, 2
        // Predicated region
        $region65: #{attention_block_a_forward.1} parent=63 // pred_check
          %p9049 = pneg %p241
        $region66: #{attention_block_a_forward.1} parent=63 // pred_check_branch
          %9051 = sbr.rel (%p9049) target = $region68
        $region67: #{attention_block_a_forward.1} parent=63 // pred_region
          %s9052 = sand.u32 %s226, 1
          %s9053 = scalar_lea.sflag [#allocation3], %s9052
          %s9054 = sand.u32 %s226, 1
          %s9055 = smul.addr %s9054, 512
          %s9056 = scalar_lea.vmem [#allocation2], %s9055
          %9057 = dma.done %s9053, 8192
        $region68: #{attention_block_a_forward.1} parent=63 // pred_fallthru
          _
      $region64: #{attention_block_a_forward.1} parent=5 // pred_fallthru
        _
    $region6: #{attention_block_a_forward.1} parent=1 // loop_footer
      %s22 = sadd.s32 1, %s18
    $region7: #{attention_block_a_forward.1} parent=1 // loop_footer_branch
      %17 = sbr.rel target = $region3
    $region8: #{attention_block_a_forward.1} parent=1 // loop_exit
      _
    %9058 = vsyncpa [#allocation3], 1
    %s9059 = scalar_lea.sflag [#allocation3], 1
    %9060 = vsyncpa %s9059, 1

</llo_original>
